<compile_context>
chip_gen: v5e
topology: v5e:2x2
jax: 0.10.0
libtpu: 0.0.40
codegen_flags: <defaults>
</compile_context>

<pallas_src>
import jax
import jax.numpy as jnp
from jax.experimental import pallas as pl
from jax.experimental.pallas import tpu as pltpu


# ----------------------------------------------------------------------------
# Pallas kernel: fused 1x1 q/k/v conv + criss-cross energies + joint softmax
#                + gamma * (out_H + out_W) + residual, Bblk batch items / step
# ----------------------------------------------------------------------------
def cc_kernel(x_ref, wqkv_ref, bqkv_ref, mask_ref, gamma_ref, o_ref):
    Bblk, H, W, C = x_ref.shape
    C8 = C // 8
    M = Bblk * H * W
    nbW = Bblk * H          # batch count of the W-direction (row) energies
    nbH = Bblk * W          # batch count of the H-direction (column) energies

    x = x_ref[...]                                          # (Bblk, H, W, C) f32

    # --- fused q/k/v projection of the row-major AND transposed views --------
    # rows [0, M)   : (b, h, w) ordering  -> row-direction  q/k/v
    # rows [M, 2*M) : (b, w, h) ordering  -> column-direction q/k/v
    x2 = x.reshape(M, C)
    xT2 = [jnp.transpose(x[b], (1, 0, 2)).reshape(W * H, C) for b in range(Bblk)]
    x_all = jnp.concatenate([x2] + xT2, axis=0).astype(jnp.bfloat16)       # (2M, C)

    wqkv = wqkv_ref[...]                                    # (C, Fp) bf16, cols = [v|q|k|pad]
    bqkv = bqkv_ref[...]                                    # (1, Fp) f32
    proj_all = jnp.dot(x_all, wqkv,
                       preferred_element_type=jnp.float32) + bqkv          # (2M, Fp) f32

    v_all = proj_all[:, :C]                                 # (2M, C)    value (lane-aligned)
    qk_all = proj_all[:, C:C + 2 * C8]                      # (2M, 2*C8) query|key, one slice

    mask = mask_ref[...]                                    # (H, H) f32, -1e30 diagonal

    # --- criss-cross energies (bf16 MXU inputs, f32 accumulation) ------------
    if H == W:
        # single batched einsum covering both directions (one dispatch)
        qk3 = qk_all.reshape(2 * nbW, W, 2 * C8).astype(jnp.bfloat16)
        e_all = jnp.einsum('bik,bjk->bij', qk3[..., :C8], qk3[..., C8:],
                           preferred_element_type=jnp.float32)             # (2*Bblk*S, S, S)
        eW = e_all[:nbW]                                    # (Bblk*H, W, W)
        eH = e_all[nbW:]                                    # (Bblk*W, H, H)
    else:
        qk3r = qk_all[:M].reshape(nbW, W, 2 * C8).astype(jnp.bfloat16)
        qk3c = qk_all[M:].reshape(nbH, H, 2 * C8).astype(jnp.bfloat16)
        eW = jnp.einsum('bik,bjk->bij', qk3r[..., :C8], qk3r[..., C8:],
                        preferred_element_type=jnp.float32)                # (Bblk*H, W, W)
        eH = jnp.einsum('bik,bjk->bij', qk3c[..., :C8], qk3c[..., C8:],
                        preferred_element_type=jnp.float32)                # (Bblk*W, H, H)
    eH = eH + mask[None, :, :]                              # INF(): mask h == h'

    # --- joint softmax over the concatenated (H + W) energies, f32 math ------
    mW3 = jnp.max(eW, axis=-1).reshape(Bblk, H, W)
    mH3 = jnp.max(eH, axis=-1).reshape(Bblk, W, H)
    m_parts = [jnp.maximum(mW3[b], mH3[b].T) for b in range(Bblk)]         # (H, W) each
    m_hw = jnp.concatenate(m_parts, axis=0)                 # (Bblk*H, W)
    m_wh = jnp.concatenate([p.T for p in m_parts], axis=0)  # (Bblk*W, H)

    pW = jnp.exp(eW - m_hw[:, :, None])                     # (Bblk*H, W, W)
    pH = jnp.exp(eH - m_wh[:, :, None])                     # (Bblk*W, H, H)

    sW3 = jnp.sum(pW, axis=-1).reshape(Bblk, H, W)
    sH3 = jnp.sum(pH, axis=-1).reshape(Bblk, W, H)
    inv_s = [pl.reciprocal(sW3[b] + sH3[b].T, approx=True)  # (H, W) each (EUP slot)
             for b in range(Bblk)]

    # --- unnormalized attention outputs (1/s applied once at the end) --------
    if H == W:
        p_all = jnp.concatenate([pW, pH], axis=0).astype(jnp.bfloat16)     # (2*Bblk*S, S, S)
        v3 = v_all.reshape(2 * nbW, W, C).astype(jnp.bfloat16)             # (2*Bblk*S, S, C)
        out_all = jnp.einsum('bij,bjc->bic', p_all, v3,
                             preferred_element_type=jnp.float32)           # (2*Bblk*S, S, C)
        outW = out_all[:nbW]                                # (Bblk*H, W, C)
        outHT = out_all[nbW:]                               # (Bblk*W, H, C)
    else:
        v3r = v_all[:M].reshape(nbW, W, C).astype(jnp.bfloat16)
        v3c = v_all[M:].reshape(nbH, H, C).astype(jnp.bfloat16)
        outW = jnp.einsum('bij,bjc->bic', pW.astype(jnp.bfloat16), v3r,
                          preferred_element_type=jnp.float32)              # (Bblk*H, W, C)
        outHT = jnp.einsum('bij,bjc->bic', pH.astype(jnp.bfloat16), v3c,
                           preferred_element_type=jnp.float32)             # (Bblk*W, H, C)

    # --- gamma * (out_H + out_W) / s + residual, per batch item --------------
    gamma = gamma_ref[0]
    for b in range(Bblk):
        oW_b = outW[b * H:(b + 1) * H]                                      # (H, W, C)
        oH_b = jnp.transpose(outHT[b * W:(b + 1) * W], (1, 0, 2))           # (H, W, C)
        o_b = gamma * ((oH_b + oW_b) * inv_s[b][:, :, None]) + x[b]
        o_ref[b] = o_b.astype(o_ref.dtype)


def _pick_block_batch(n):
    # biggest divisor of N capped at 4 that still leaves >= 4 grid steps
    # (>= 2 per TensorCore under v7x megacore); otherwise the biggest <= 4.
    divs = [d for d in (4, 2, 1) if n % d == 0]
    for d in divs:
        if n // d >= 4:
            return d
    return divs[0]


def criss_cross_attention_nhwc(x_nhwc, wqkv_bf16, bqkv, mask, gamma, block_batch=None):
    N, H, W, C = x_nhwc.shape
    Fp = wqkv_bf16.shape[1]
    Bblk = _pick_block_batch(N) if block_batch is None else block_batch
    assert N % Bblk == 0
    return pl.pallas_call(
        cc_kernel,
        out_shape=jax.ShapeDtypeStruct((N, H, W, C), x_nhwc.dtype),
        grid_spec=pltpu.PrefetchScalarGridSpec(
            num_scalar_prefetch=0,
            grid=(N // Bblk,),
            in_specs=[
                pl.BlockSpec((Bblk, H, W, C), lambda b: (b, 0, 0, 0)),  # x (NHWC block)
                pl.BlockSpec((C, Fp), lambda b: (0, 0)),                # fused [v|q|k] weight (bf16)
                pl.BlockSpec((1, Fp), lambda b: (0, 0)),                # fused bias (f32)
                pl.BlockSpec((H, H), lambda b: (0, 0)),                 # diagonal -1e30 mask
                pl.BlockSpec(memory_space=pltpu.MemorySpace.SMEM),      # gamma (1,) scalar
            ],
            out_specs=pl.BlockSpec((Bblk, H, W, C), lambda b: (b, 0, 0, 0)),
        ),
        compiler_params=pltpu.CompilerParams(
            dimension_semantics=("parallel",),           # batch blocks are independent
            vmem_limit_bytes=32 * 1024 * 1024,
        ),
    )(x_nhwc, wqkv_bf16, bqkv, mask, gamma)


# ----------------------------------------------------------------------------
# Module wrapper (parameter setup in plain JAX)
# ----------------------------------------------------------------------------
class CrissCrossAttentionPallas:
    """Pallas port of CrissCrossAttention.forward (NCHW interface)."""

    def __init__(self, in_dim, key=jax.random.PRNGKey(42), gamma=0.1):
        assert in_dim % 8 == 0, "in_dim must be divisible by 8 (query/key conv out = in_dim // 8)"
        C = in_dim
        C8 = C // 8
        ks = jax.random.split(key, 6)
        # 1x1 conv weights stored as (C_in, C_out) matmul matrices (f32 masters)
        self.wq = 0.05 * jax.random.normal(ks[0], (C, C8), jnp.float32)
        self.bq = 0.05 * jax.random.normal(ks[1], (C8,), jnp.float32)
        self.wk = 0.05 * jax.random.normal(ks[2], (C, C8), jnp.float32)
        self.bk = 0.05 * jax.random.normal(ks[3], (C8,), jnp.float32)
        self.wv = 0.05 * jax.random.normal(ks[4], (C, C), jnp.float32)
        self.bv = 0.05 * jax.random.normal(ks[5], (C,), jnp.float32)

        # fused [v | q | k] projection, zero-padded to a 128-lane multiple
        F = C + 2 * C8
        Fp = ((F + 127) // 128) * 128
        w = jnp.concatenate([self.wv, self.wq, self.wk], axis=1)            # (C, F)
        b = jnp.concatenate([self.bv, self.bq, self.bk], axis=0)            # (F,)
        self.wqkv = jnp.pad(w, ((0, 0), (0, Fp - F))).astype(jnp.bfloat16)
        self.bqkv = jnp.pad(b, (0, Fp - F)).reshape(1, Fp).astype(jnp.float32)
        # PyTorch initializes gamma to 0 (output == input); use a nonzero value
        # here so the attention path is actually exercised.
        self.gamma = jnp.array([gamma], jnp.float32)
        self.in_dim = C

    def __call__(self, x_nchw):
        # NCHW (PyTorch convention) -> NHWC for the kernel, back at the end.
        x_nhwc = jnp.transpose(x_nchw, (0, 2, 3, 1))
        H = x_nhwc.shape[1]
        # INF(): additive -1e30 on the h == h' diagonal, built once outside the kernel
        mask = jnp.where(jnp.eye(H, dtype=jnp.bool_),
                         jnp.float32(-1e30), jnp.float32(0.0))
        out = criss_cross_attention_nhwc(x_nhwc, self.wqkv, self.bqkv, mask, self.gamma)
        return jnp.transpose(out, (0, 3, 1, 2))


# ----------------------------------------------------------------------------
# Pure-JAX f32 reference of the PyTorch forward (sanity check only)
# ----------------------------------------------------------------------------
def criss_cross_attention_reference(x_nchw, wq, bq, wk, bk, wv, bv, gamma):
    N, C, H, W = x_nchw.shape
    xf = jnp.transpose(x_nchw, (0, 2, 3, 1))                 # (N, H, W, C)
    q = xf @ wq + bq
    k = xf @ wk + bk
    v = xf @ wv + bv
    eH = jnp.einsum('nhwc,njwc->nhwj', q, k)
    eH = eH + jnp.where(jnp.eye(H, dtype=jnp.bool_), -jnp.inf, 0.0)[None, :, None, :]
    eW = jnp.einsum('nhwc,nhjc->nhwj', q, k)
    att = jax.nn.softmax(jnp.concatenate([eH, eW], axis=-1), axis=-1)
    outH = jnp.einsum('nhwj,njwc->nhwc', att[..., :H], v)
    outW = jnp.einsum('nhwj,nhjc->nhwc', att[..., H:], v)
    out = gamma * (outH + outW) + xf
    return jnp.transpose(out, (0, 3, 1, 2))


# ----------------------------------------------------------------------------
if __name__ == "__main__":
    N, C, H, W = 2, 64, 16, 16          # small shapes; C divisible by 8 (C8 = 8)
    attn = CrissCrossAttentionPallas(in_dim=C, key=jax.random.PRNGKey(42), gamma=0.1)

    x = jax.random.normal(jax.random.PRNGKey(0), (N, C, H, W), jnp.float32)
    out = attn(x)
    jax.block_until_ready(out)

    assert out.shape == x.shape
    assert bool(jnp.all(jnp.isfinite(out)))

    # loose-tolerance check vs. the f32 reference (kernel uses bf16 MXU inputs
    # and an approximate reciprocal, so small deviations are expected)
    ref = criss_cross_attention_reference(
        x, attn.wq, attn.bq, attn.wk, attn.bk, attn.wv, attn.bv, float(attn.gamma[0]))
    assert bool(jnp.allclose(out, ref, atol=5e-2, rtol=5e-2))
    print("KERNEL_OK")
</pallas_src>

<mosaic_0001>
module attributes {stable_mosaic.version = 11 : i64} {
  func.func @cc_kernel(%arg0: i32, %arg1: memref<2x16x16x64xf32, #tpu.memory_space<vmem>>, %arg2: memref<64x128xbf16, #tpu.memory_space<vmem>>, %arg3: memref<1x128xf32, #tpu.memory_space<vmem>>, %arg4: memref<16x16xf32, #tpu.memory_space<vmem>>, %arg5: memref<1xf32, #tpu.memory_space<smem>>, %arg6: memref<2x16x16x64xf32, #tpu.memory_space<vmem>>) attributes {dimension_semantics = [#tpu.dimension_semantics<parallel>], iteration_bounds = array<i64: 1>, scalar_prefetch = 0 : i64, scratch_operands = 0 : i64, tpu.core_type = #tpu.core_type<tc>, window_params = [{transform_indices = @transform_0, window_bounds = array<i64: 2, 16, 16, 64>}, {pipeline_mode = #tpu.pipeline_mode<synchronous>, transform_indices = @transform_1, window_bounds = array<i64: 64, 128>}, {pipeline_mode = #tpu.pipeline_mode<synchronous>, transform_indices = @transform_2, window_bounds = array<i64: 1, 128>}, {pipeline_mode = #tpu.pipeline_mode<synchronous>, transform_indices = @transform_3, window_bounds = array<i64: 16, 16>}, {transform_indices = @transform_4, window_bounds = array<i64: 1>}, {transform_indices = @transform_5, window_bounds = array<i64: 2, 16, 16, 64>}]} {
    %c0 = arith.constant 0 : index
    %c0_0 = arith.constant 0 : index
    %c0_1 = arith.constant 0 : index
    %c0_2 = arith.constant 0 : index
    %0 = vector.load %arg1[%c0, %c0_0, %c0_1, %c0_2] : memref<2x16x16x64xf32, #tpu.memory_space<vmem>>, vector<2x16x16x64xf32>
    %1 = vector.shape_cast %0 : vector<2x16x16x64xf32> to vector<512x64xf32>
    %2 = vector.extract_strided_slice %0 {offsets = [0, 0, 0, 0], sizes = [1, 16, 16, 64], strides = [1, 1, 1, 1]} : vector<2x16x16x64xf32> to vector<1x16x16x64xf32>
    %3 = vector.shape_cast %2 : vector<1x16x16x64xf32> to vector<16x16x64xf32>
    %4 = tpu.transpose %3, [1, 0, 2] : vector<16x16x64xf32> -> vector<16x16x64xf32>
    %5 = vector.shape_cast %4 : vector<16x16x64xf32> to vector<256x64xf32>
    %6 = vector.extract_strided_slice %0 {offsets = [1, 0, 0, 0], sizes = [1, 16, 16, 64], strides = [1, 1, 1, 1]} : vector<2x16x16x64xf32> to vector<1x16x16x64xf32>
    %7 = vector.shape_cast %6 : vector<1x16x16x64xf32> to vector<16x16x64xf32>
    %8 = tpu.transpose %7, [1, 0, 2] : vector<16x16x64xf32> -> vector<16x16x64xf32>
    %9 = vector.shape_cast %8 : vector<16x16x64xf32> to vector<256x64xf32>
    %10 = tpu.concatenate %1, %5, %9 in 0 : vector<512x64xf32>, vector<256x64xf32>, vector<256x64xf32> -> vector<1024x64xf32>
    %11 = arith.truncf %10 : vector<1024x64xf32> to vector<1024x64xbf16>
    %c0_3 = arith.constant 0 : index
    %c0_4 = arith.constant 0 : index
    %12 = vector.load %arg2[%c0_3, %c0_4] : memref<64x128xbf16, #tpu.memory_space<vmem>>, vector<64x128xbf16>
    %c0_5 = arith.constant 0 : index
    %c0_6 = arith.constant 0 : index
    %13 = vector.load %arg3[%c0_5, %c0_6] : memref<1x128xf32, #tpu.memory_space<vmem>>, vector<1x128xf32>
    %cst = arith.constant dense<0.000000e+00> : vector<1024x128xf32>
    %14 = tpu.matmul %11, %12, %cst {dimension_numbers = #tpu.dot_dimension_numbers<[1], [0], [0], [1], [0, 0, 1, 1], [], []>} : vector<1024x64xbf16>, vector<64x128xbf16>, vector<1024x128xf32> -> vector<1024x128xf32>
    %15 = vector.broadcast %13 : vector<1x128xf32> to vector<1024x128xf32>
    %16 = arith.addf %14, %15 : vector<1024x128xf32>
    %17 = vector.extract_strided_slice %16 {offsets = [0, 0], sizes = [1024, 64], strides = [1, 1]} : vector<1024x128xf32> to vector<1024x64xf32>
    %18 = vector.extract_strided_slice %16 {offsets = [0, 64], sizes = [1024, 16], strides = [1, 1]} : vector<1024x128xf32> to vector<1024x16xf32>
    %c0_7 = arith.constant 0 : index
    %c0_8 = arith.constant 0 : index
    %19 = vector.load %arg4[%c0_7, %c0_8] : memref<16x16xf32, #tpu.memory_space<vmem>>, vector<16x16xf32>
    %20 = vector.shape_cast %18 : vector<1024x16xf32> to vector<64x16x16xf32>
    %21 = arith.truncf %20 : vector<64x16x16xf32> to vector<64x16x16xbf16>
    %22 = vector.extract_strided_slice %21 {offsets = [0, 0, 0], sizes = [64, 16, 8], strides = [1, 1, 1]} : vector<64x16x16xbf16> to vector<64x16x8xbf16>
    %23 = vector.extract_strided_slice %21 {offsets = [0, 0, 8], sizes = [64, 16, 8], strides = [1, 1, 1]} : vector<64x16x16xbf16> to vector<64x16x8xbf16>
    "tpu.trace_start"() <{level = 10 : i32, message = "bik,bjk->bij"}> : () -> ()
    %cst_9 = arith.constant dense<0.000000e+00> : vector<64x16x16xf32>
    %24 = tpu.matmul %22, %23, %cst_9 {dimension_numbers = #tpu.dot_dimension_numbers<[2], [2], [1], [1], [0, 0, 0, 1, 1, 1], [0], [0]>} : vector<64x16x8xbf16>, vector<64x16x8xbf16>, vector<64x16x16xf32> -> vector<64x16x16xf32>
    "tpu.trace_stop"() : () -> ()
    %25 = vector.extract_strided_slice %24 {offsets = [0, 0, 0], sizes = [32, 16, 16], strides = [1, 1, 1]} : vector<64x16x16xf32> to vector<32x16x16xf32>
    %26 = vector.extract_strided_slice %24 {offsets = [32, 0, 0], sizes = [32, 16, 16], strides = [1, 1, 1]} : vector<64x16x16xf32> to vector<32x16x16xf32>
    %27 = vector.shape_cast %19 : vector<16x16xf32> to vector<1x16x16xf32>
    %28 = vector.broadcast %27 : vector<1x16x16xf32> to vector<32x16x16xf32>
    %29 = arith.addf %26, %28 : vector<32x16x16xf32>
    %cst_10 = arith.constant dense<0xFF800000> : vector<32x16xf32>
    %30 = vector.multi_reduction <maximumf>, %25, %cst_10 [2] : vector<32x16x16xf32> to vector<32x16xf32>
    %31 = vector.shape_cast %30 : vector<32x16xf32> to vector<2x16x16xf32>
    %cst_11 = arith.constant dense<0xFF800000> : vector<32x16xf32>
    %32 = vector.multi_reduction <maximumf>, %29, %cst_11 [2] : vector<32x16x16xf32> to vector<32x16xf32>
    %33 = vector.shape_cast %32 : vector<32x16xf32> to vector<2x16x16xf32>
    %34 = vector.extract_strided_slice %31 {offsets = [0, 0, 0], sizes = [1, 16, 16], strides = [1, 1, 1]} : vector<2x16x16xf32> to vector<1x16x16xf32>
    %35 = vector.shape_cast %34 : vector<1x16x16xf32> to vector<16x16xf32>
    %36 = vector.extract_strided_slice %33 {offsets = [0, 0, 0], sizes = [1, 16, 16], strides = [1, 1, 1]} : vector<2x16x16xf32> to vector<1x16x16xf32>
    %37 = vector.shape_cast %36 : vector<1x16x16xf32> to vector<16x16xf32>
    %38 = tpu.transpose %37, [1, 0] : vector<16x16xf32> -> vector<16x16xf32>
    %39 = arith.maximumf %35, %38 : vector<16x16xf32>
    %40 = vector.extract_strided_slice %31 {offsets = [1, 0, 0], sizes = [1, 16, 16], strides = [1, 1, 1]} : vector<2x16x16xf32> to vector<1x16x16xf32>
    %41 = vector.shape_cast %40 : vector<1x16x16xf32> to vector<16x16xf32>
    %42 = vector.extract_strided_slice %33 {offsets = [1, 0, 0], sizes = [1, 16, 16], strides = [1, 1, 1]} : vector<2x16x16xf32> to vector<1x16x16xf32>
    %43 = vector.shape_cast %42 : vector<1x16x16xf32> to vector<16x16xf32>
    %44 = tpu.transpose %43, [1, 0] : vector<16x16xf32> -> vector<16x16xf32>
    %45 = arith.maximumf %41, %44 : vector<16x16xf32>
    %46 = tpu.concatenate %39, %45 in 0 : vector<16x16xf32>, vector<16x16xf32> -> vector<32x16xf32>
    %47 = tpu.transpose %39, [1, 0] : vector<16x16xf32> -> vector<16x16xf32>
    %48 = tpu.transpose %45, [1, 0] : vector<16x16xf32> -> vector<16x16xf32>
    %49 = tpu.concatenate %47, %48 in 0 : vector<16x16xf32>, vector<16x16xf32> -> vector<32x16xf32>
    %50 = vector.shape_cast %46 : vector<32x16xf32> to vector<32x16x1xf32>
    %51 = vector.broadcast %50 : vector<32x16x1xf32> to vector<32x16x16xf32>
    %52 = arith.subf %25, %51 : vector<32x16x16xf32>
    %53 = math.exp %52 : vector<32x16x16xf32>
    %54 = vector.shape_cast %49 : vector<32x16xf32> to vector<32x16x1xf32>
    %55 = vector.broadcast %54 : vector<32x16x1xf32> to vector<32x16x16xf32>
    %56 = arith.subf %29, %55 : vector<32x16x16xf32>
    %57 = math.exp %56 : vector<32x16x16xf32>
    %cst_12 = arith.constant dense<0.000000e+00> : vector<32x16xf32>
    %58 = vector.multi_reduction <add>, %53, %cst_12 [2] : vector<32x16x16xf32> to vector<32x16xf32>
    %59 = vector.shape_cast %58 : vector<32x16xf32> to vector<2x16x16xf32>
    %cst_13 = arith.constant dense<0.000000e+00> : vector<32x16xf32>
    %60 = vector.multi_reduction <add>, %57, %cst_13 [2] : vector<32x16x16xf32> to vector<32x16xf32>
    %61 = vector.shape_cast %60 : vector<32x16xf32> to vector<2x16x16xf32>
    %62 = vector.extract_strided_slice %59 {offsets = [0, 0, 0], sizes = [1, 16, 16], strides = [1, 1, 1]} : vector<2x16x16xf32> to vector<1x16x16xf32>
    %63 = vector.shape_cast %62 : vector<1x16x16xf32> to vector<16x16xf32>
    %64 = vector.extract_strided_slice %61 {offsets = [0, 0, 0], sizes = [1, 16, 16], strides = [1, 1, 1]} : vector<2x16x16xf32> to vector<1x16x16xf32>
    %65 = vector.shape_cast %64 : vector<1x16x16xf32> to vector<16x16xf32>
    %66 = tpu.transpose %65, [1, 0] : vector<16x16xf32> -> vector<16x16xf32>
    %67 = arith.addf %63, %66 : vector<16x16xf32>
    %68 = tpu.reciprocal %67 {approx = true} : vector<16x16xf32> -> vector<16x16xf32>
    %69 = vector.extract_strided_slice %59 {offsets = [1, 0, 0], sizes = [1, 16, 16], strides = [1, 1, 1]} : vector<2x16x16xf32> to vector<1x16x16xf32>
    %70 = vector.shape_cast %69 : vector<1x16x16xf32> to vector<16x16xf32>
    %71 = vector.extract_strided_slice %61 {offsets = [1, 0, 0], sizes = [1, 16, 16], strides = [1, 1, 1]} : vector<2x16x16xf32> to vector<1x16x16xf32>
    %72 = vector.shape_cast %71 : vector<1x16x16xf32> to vector<16x16xf32>
    %73 = tpu.transpose %72, [1, 0] : vector<16x16xf32> -> vector<16x16xf32>
    %74 = arith.addf %70, %73 : vector<16x16xf32>
    %75 = tpu.reciprocal %74 {approx = true} : vector<16x16xf32> -> vector<16x16xf32>
    %76 = tpu.concatenate %53, %57 in 0 : vector<32x16x16xf32>, vector<32x16x16xf32> -> vector<64x16x16xf32>
    %77 = arith.truncf %76 : vector<64x16x16xf32> to vector<64x16x16xbf16>
    %78 = vector.shape_cast %17 : vector<1024x64xf32> to vector<64x16x64xf32>
    %79 = arith.truncf %78 : vector<64x16x64xf32> to vector<64x16x64xbf16>
    "tpu.trace_start"() <{level = 10 : i32, message = "bij,bjc->bic"}> : () -> ()
    %cst_14 = arith.constant dense<0.000000e+00> : vector<64x16x64xf32>
    %80 = tpu.matmul %77, %79, %cst_14 {dimension_numbers = #tpu.dot_dimension_numbers<[2], [1], [1], [2], [0, 0, 0, 1, 1, 2], [0], [0]>} : vector<64x16x16xbf16>, vector<64x16x64xbf16>, vector<64x16x64xf32> -> vector<64x16x64xf32>
    "tpu.trace_stop"() : () -> ()
    %81 = vector.extract_strided_slice %80 {offsets = [0, 0, 0], sizes = [32, 16, 64], strides = [1, 1, 1]} : vector<64x16x64xf32> to vector<32x16x64xf32>
    %82 = vector.extract_strided_slice %80 {offsets = [32, 0, 0], sizes = [32, 16, 64], strides = [1, 1, 1]} : vector<64x16x64xf32> to vector<32x16x64xf32>
    %c0_15 = arith.constant 0 : index
    %83 = memref.load %arg5[%c0_15] : memref<1xf32, #tpu.memory_space<smem>>
    %84 = vector.extract_strided_slice %81 {offsets = [0, 0, 0], sizes = [16, 16, 64], strides = [1, 1, 1]} : vector<32x16x64xf32> to vector<16x16x64xf32>
    %85 = vector.extract_strided_slice %82 {offsets = [0, 0, 0], sizes = [16, 16, 64], strides = [1, 1, 1]} : vector<32x16x64xf32> to vector<16x16x64xf32>
    %86 = tpu.transpose %85, [1, 0, 2] : vector<16x16x64xf32> -> vector<16x16x64xf32>
    %87 = arith.addf %86, %84 : vector<16x16x64xf32>
    %88 = vector.shape_cast %68 : vector<16x16xf32> to vector<16x16x1xf32>
    %89 = vector.broadcast %88 : vector<16x16x1xf32> to vector<16x16x64xf32>
    %90 = arith.mulf %87, %89 : vector<16x16x64xf32>
    %91 = vector.broadcast %83 : f32 to vector<16x16x64xf32>
    %92 = arith.mulf %91, %90 : vector<16x16x64xf32>
    %93 = vector.extract_strided_slice %0 {offsets = [0, 0, 0, 0], sizes = [1, 16, 16, 64], strides = [1, 1, 1, 1]} : vector<2x16x16x64xf32> to vector<1x16x16x64xf32>
    %94 = vector.shape_cast %93 : vector<1x16x16x64xf32> to vector<16x16x64xf32>
    %95 = arith.addf %92, %94 : vector<16x16x64xf32>
    %c0_16 = arith.constant 0 : index
    %c0_17 = arith.constant 0 : index
    %c0_18 = arith.constant 0 : index
    %c0_19 = arith.constant 0 : index
    %96 = vector.load %arg6[%c0_16, %c0_17, %c0_18, %c0_19] : memref<2x16x16x64xf32, #tpu.memory_space<vmem>>, vector<1x16x16x64xf32>
    %97 = vector.shape_cast %96 : vector<1x16x16x64xf32> to vector<16x16x64xf32>
    %98 = vector.shape_cast %95 : vector<16x16x64xf32> to vector<1x16x16x64xf32>
    tpu.vector_store %arg6[%c0_16, %c0_17, %c0_18, %c0_19], %98 {strides = array<i32>} : memref<2x16x16x64xf32, #tpu.memory_space<vmem>>, vector<1x16x16x64xf32>,
    %99 = vector.extract_strided_slice %81 {offsets = [16, 0, 0], sizes = [16, 16, 64], strides = [1, 1, 1]} : vector<32x16x64xf32> to vector<16x16x64xf32>
    %100 = vector.extract_strided_slice %82 {offsets = [16, 0, 0], sizes = [16, 16, 64], strides = [1, 1, 1]} : vector<32x16x64xf32> to vector<16x16x64xf32>
    %101 = tpu.transpose %100, [1, 0, 2] : vector<16x16x64xf32> -> vector<16x16x64xf32>
    %102 = arith.addf %101, %99 : vector<16x16x64xf32>
    %103 = vector.shape_cast %75 : vector<16x16xf32> to vector<16x16x1xf32>
    %104 = vector.broadcast %103 : vector<16x16x1xf32> to vector<16x16x64xf32>
    %105 = arith.mulf %102, %104 : vector<16x16x64xf32>
    %106 = vector.broadcast %83 : f32 to vector<16x16x64xf32>
    %107 = arith.mulf %106, %105 : vector<16x16x64xf32>
    %108 = vector.extract_strided_slice %0 {offsets = [1, 0, 0, 0], sizes = [1, 16, 16, 64], strides = [1, 1, 1, 1]} : vector<2x16x16x64xf32> to vector<1x16x16x64xf32>
    %109 = vector.shape_cast %108 : vector<1x16x16x64xf32> to vector<16x16x64xf32>
    %110 = arith.addf %107, %109 : vector<16x16x64xf32>
    %c1 = arith.constant 1 : index
    %c0_20 = arith.constant 0 : index
    %c0_21 = arith.constant 0 : index
    %c0_22 = arith.constant 0 : index
    %111 = vector.load %arg6[%c1, %c0_20, %c0_21, %c0_22] : memref<2x16x16x64xf32, #tpu.memory_space<vmem>>, vector<1x16x16x64xf32>
    %112 = vector.shape_cast %111 : vector<1x16x16x64xf32> to vector<16x16x64xf32>
    %113 = vector.shape_cast %110 : vector<16x16x64xf32> to vector<1x16x16x64xf32>
    tpu.vector_store %arg6[%c1, %c0_20, %c0_21, %c0_22], %113 {strides = array<i32>} : memref<2x16x16x64xf32, #tpu.memory_space<vmem>>, vector<1x16x16x64xf32>,
    return
  }
  func.func @transform_0(%arg0: i32) -> (i32, i32, i32, i32) {
    %c0_i32 = arith.constant 0 : i32
    %c0_i32_0 = arith.constant 0 : i32
    %c0_i32_1 = arith.constant 0 : i32
    %c0_i32_2 = arith.constant 0 : i32
    return %arg0, %c0_i32, %c0_i32_0, %c0_i32_1 : i32, i32, i32, i32
  }
  func.func @transform_1(%arg0: i32) -> (i32, i32) {
    %c0_i32 = arith.constant 0 : i32
    %c0_i32_0 = arith.constant 0 : i32
    %c0_i32_1 = arith.constant 0 : i32
    return %c0_i32, %c0_i32_0 : i32, i32
  }
  func.func @transform_2(%arg0: i32) -> (i32, i32) {
    %c0_i32 = arith.constant 0 : i32
    %c0_i32_0 = arith.constant 0 : i32
    %c0_i32_1 = arith.constant 0 : i32
    return %c0_i32, %c0_i32_0 : i32, i32
  }
  func.func @transform_3(%arg0: i32) -> (i32, i32) {
    %c0_i32 = arith.constant 0 : i32
    %c0_i32_0 = arith.constant 0 : i32
    %c0_i32_1 = arith.constant 0 : i32
    return %c0_i32, %c0_i32_0 : i32, i32
  }
  func.func @transform_4(%arg0: i32) -> i32 {
    %c0_i32 = arith.constant 0 : i32
    %c0_i32_0 = arith.constant 0 : i32
    return %c0_i32 : i32
  }
  func.func @transform_5(%arg0: i32) -> (i32, i32, i32, i32) {
    %c0_i32 = arith.constant 0 : i32
    %c0_i32_0 = arith.constant 0 : i32
    %c0_i32_1 = arith.constant 0 : i32
    %c0_i32_2 = arith.constant 0 : i32
    return %arg0, %c0_i32, %c0_i32_0, %c0_i32_1 : i32, i32, i32, i32
  }
}

</mosaic_0001>

<llo_original>
// kernel: tpu_custom_call.1
$region0: #{tpu_custom_call.1}
  #allocation0 [shape = 'u32[]', space=smem, size = 0x4, offset = 0x4, fixed_abs, tag = 'smem constant byte address 0x4 - core index']
  #allocation1 [shape = 'u32[72,128]{1,0:T(1,128)}', space=vmem, size = 0x9000, scoped, tag = 'internal scratch']
  #allocation2 [shape = 'f32[1]{0:T(128)S(6)}', space=smem, size = 0x200, scoped, tag = 'scoped memory for tpu_custom_call.1']
  %s0 = inlined_call_operand.hbm [shape: f32[2,16,16,64], index: 0, kind: input, shape index: {}]
  %s1 = inlined_call_operand.hbm [shape: bf16[64,128], index: 1, kind: input, shape index: {}]
  %s2 = inlined_call_operand.vmem [shape: f32[1,128], index: 2, kind: input, shape index: {}]
  %s3 = inlined_call_operand.hbm [shape: f32[16,16], index: 3, kind: input, shape index: {}]
  %s4 = inlined_call_operand.<no memory space> [shape: f32[1], index: 4, kind: input, shape index: {}]
  %s5 = inlined_call_operand.hbm [shape: f32[2,16,16,64], index: 5, kind: output, shape index: {}]
  %s6 = sld [smem:[#allocation0]]
  $region42: #{tpu_custom_call.1} parent=0
    _
  %s8 = ssub.s32 1, %s6
  %s9 = scalar_select 0, %s8, %s6
  %10 = sst [smem:[#allocation2]] %s4
  $region1: #{tpu_custom_call.1} parent=0
    #allocation3 [shape = 'u8[262144]{0}', space=vmem, size = 0x40000, scoped, tag = 'input window, operand 0, single buffered']
    #allocation4 [shape = 's32[1]{0}', space=sflag, size = 0x4, scoped, tag = 'scoped memory for tpu_custom_call.1']
    #allocation5 [shape = 's32[1]{0}', space=sflag, size = 0x4, scoped, tag = 'scoped memory for tpu_custom_call.1']
    #allocation6 [shape = 'u8[16384]{0}', space=vmem, size = 0x4000, scoped, tag = 'input window, operand 1, single buffered']
    #allocation7 [shape = 's32[1]{0}', space=sflag, size = 0x4, scoped, tag = 'scoped memory for tpu_custom_call.1']
    #allocation8 [shape = 'u8[8192]{0}', space=vmem, size = 0x2000, scoped, tag = 'input window, operand 3, single buffered']
    #allocation9 [shape = 'u8[262144]{0}', space=vmem, size = 0x40000, scoped, tag = 'output window, operand 0, single buffered']
    %11 = vsyncpa [#allocation4], 0
    %12 = vsyncpa [#allocation7], 0
    %13 = vsyncpa [#allocation5], 0
    // Predicated region
    $region2: #{tpu_custom_call.1} parent=1 // pred_check
      _
    $region3: #{tpu_custom_call.1} parent=1 // pred_check_branch
      %15 = sbr.rel (0) target = $region5
    $region4: #{tpu_custom_call.1} parent=1 // pred_region
      %17 = vsyncadd [#allocation4], 0
      %s18 = sshll.u32 %s0, 4
      %s19 = int_to_ptr.hbm [resolvable:$true] %s18
      %s20 = sshll.u32 [#allocation3], 4
      %s21 = int_to_ptr.vmem [resolvable:$true] %s20
      %26 = dma.hbm_to_vmem [thread:$0]  %s19, 8192, %s21, [#allocation4], 128, 128, 8
    $region5: #{tpu_custom_call.1} parent=1 // pred_fallthru
      _
    // Predicated region
    $region6: #{tpu_custom_call.1} parent=1 // pred_check
      _
    $region7: #{tpu_custom_call.1} parent=1 // pred_check_branch
      %28 = sbr.rel (0) target = $region9
    $region8: #{tpu_custom_call.1} parent=1 // pred_region
      %30 = vsyncadd [#allocation7], 0
      %s31 = sshll.u32 %s1, 4
      %s32 = int_to_ptr.hbm [resolvable:$true] %s31
      %s33 = sshll.u32 [#allocation6], 4
      %s34 = int_to_ptr.vmem [resolvable:$true] %s33
      %39 = dma.hbm_to_vmem [thread:$0]  %s32, 512, %s34, [#allocation7], 64, 64, 4
    $region9: #{tpu_custom_call.1} parent=1 // pred_fallthru
      _
    // Predicated region
    $region10: #{tpu_custom_call.1} parent=1 // pred_check
      _
    $region11: #{tpu_custom_call.1} parent=1 // pred_check_branch
      %41 = sbr.rel (0) target = $region13
    $region12: #{tpu_custom_call.1} parent=1 // pred_region
      _
    $region13: #{tpu_custom_call.1} parent=1 // pred_fallthru
      _
    // Predicated region
    $region14: #{tpu_custom_call.1} parent=1 // pred_check
      _
    $region15: #{tpu_custom_call.1} parent=1 // pred_check_branch
      %43 = sbr.rel (0) target = $region17
    $region16: #{tpu_custom_call.1} parent=1 // pred_region
      %45 = vsyncadd [#allocation7], 0
      %s46 = sshll.u32 %s3, 4
      %s47 = int_to_ptr.hbm [resolvable:$true] %s46
      %s48 = sshll.u32 [#allocation8], 4
      %s49 = int_to_ptr.vmem [resolvable:$true] %s48
      %54 = dma.hbm_to_vmem [thread:$0]  %s47, 256, %s49, [#allocation7], 128, 128, 8
    $region17: #{tpu_custom_call.1} parent=1 // pred_fallthru
      _
    // Predicated region
    $region18: #{tpu_custom_call.1} parent=1 // pred_check
      _
    $region19: #{tpu_custom_call.1} parent=1 // pred_check_branch
      %56 = sbr.rel (0) target = $region21
    $region20: #{tpu_custom_call.1} parent=1 // pred_region
      _
    $region21: #{tpu_custom_call.1} parent=1 // pred_fallthru
      _
    // Predicated region
    $region22: #{tpu_custom_call.1} parent=1 // pred_check
      _
    $region23: #{tpu_custom_call.1} parent=1 // pred_check_branch
      %58 = sbr.rel (0) target = $region25
    $region24: #{tpu_custom_call.1} parent=1 // pred_region
      %60 = dma.done [#allocation4], 8192
    $region25: #{tpu_custom_call.1} parent=1 // pred_fallthru
      _
    // Predicated region
    $region26: #{tpu_custom_call.1} parent=1 // pred_check
      _
    $region27: #{tpu_custom_call.1} parent=1 // pred_check_branch
      %62 = sbr.rel (0) target = $region29
    $region28: #{tpu_custom_call.1} parent=1 // pred_region
      %64 = dma.done [#allocation7], 512
    $region29: #{tpu_custom_call.1} parent=1 // pred_fallthru
      _
    // Predicated region
    $region30: #{tpu_custom_call.1} parent=1 // pred_check
      _
    $region31: #{tpu_custom_call.1} parent=1 // pred_check_branch
      %66 = sbr.rel (0) target = $region33
    $region32: #{tpu_custom_call.1} parent=1 // pred_region
      %68 = dma.done [#allocation7], 256
    $region33: #{tpu_custom_call.1} parent=1 // pred_fallthru
      _
    %v70 = vld [vmem:[#allocation3] sm:$0xff]
    %v71 = vld [vmem:[#allocation3 + $0x8] sm:$0xff]
    %v72 = vld [vmem:[#allocation3 + $0x10] sm:$0xff]
    %v73 = vld [vmem:[#allocation3 + $0x18] sm:$0xff]
    %v74 = vld [vmem:[#allocation3 + $0x20] sm:$0xff]
    %v75 = vld [vmem:[#allocation3 + $0x28] sm:$0xff]
    %v76 = vld [vmem:[#allocation3 + $0x30] sm:$0xff]
    %v77 = vld [vmem:[#allocation3 + $0x38] sm:$0xff]
    %v78 = vld [vmem:[#allocation3 + $0x40] sm:$0xff]
    %v79 = vld [vmem:[#allocation3 + $0x48] sm:$0xff]
    %v80 = vld [vmem:[#allocation3 + $0x50] sm:$0xff]
    %v81 = vld [vmem:[#allocation3 + $0x58] sm:$0xff]
    %v82 = vld [vmem:[#allocation3 + $0x60] sm:$0xff]
    %v83 = vld [vmem:[#allocation3 + $0x68] sm:$0xff]
    %v84 = vld [vmem:[#allocation3 + $0x70] sm:$0xff]
    %v85 = vld [vmem:[#allocation3 + $0x78] sm:$0xff]
    %v86 = vld [vmem:[#allocation3 + $0x80] sm:$0xff]
    %v87 = vld [vmem:[#allocation3 + $0x88] sm:$0xff]
    %v88 = vld [vmem:[#allocation3 + $0x90] sm:$0xff]
    %v89 = vld [vmem:[#allocation3 + $0x98] sm:$0xff]
    %v90 = vld [vmem:[#allocation3 + $0xa0] sm:$0xff]
    %v91 = vld [vmem:[#allocation3 + $0xa8] sm:$0xff]
    %v92 = vld [vmem:[#allocation3 + $0xb0] sm:$0xff]
    %v93 = vld [vmem:[#allocation3 + $0xb8] sm:$0xff]
    %v94 = vld [vmem:[#allocation3 + $0xc0] sm:$0xff]
    %v95 = vld [vmem:[#allocation3 + $0xc8] sm:$0xff]
    %v96 = vld [vmem:[#allocation3 + $0xd0] sm:$0xff]
    %v97 = vld [vmem:[#allocation3 + $0xd8] sm:$0xff]
    %v98 = vld [vmem:[#allocation3 + $0xe0] sm:$0xff]
    %v99 = vld [vmem:[#allocation3 + $0xe8] sm:$0xff]
    %v100 = vld [vmem:[#allocation3 + $0xf0] sm:$0xff]
    %v101 = vld [vmem:[#allocation3 + $0xf8] sm:$0xff]
    %v102 = vld [vmem:[#allocation3 + $0x100] sm:$0xff]
    %v103 = vld [vmem:[#allocation3 + $0x108] sm:$0xff]
    %v104 = vld [vmem:[#allocation3 + $0x110] sm:$0xff]
    %v105 = vld [vmem:[#allocation3 + $0x118] sm:$0xff]
    %v106 = vld [vmem:[#allocation3 + $0x120] sm:$0xff]
    %v107 = vld [vmem:[#allocation3 + $0x128] sm:$0xff]
    %v108 = vld [vmem:[#allocation3 + $0x130] sm:$0xff]
    %v109 = vld [vmem:[#allocation3 + $0x138] sm:$0xff]
    %v110 = vld [vmem:[#allocation3 + $0x140] sm:$0xff]
    %v111 = vld [vmem:[#allocation3 + $0x148] sm:$0xff]
    %v112 = vld [vmem:[#allocation3 + $0x150] sm:$0xff]
    %v113 = vld [vmem:[#allocation3 + $0x158] sm:$0xff]
    %v114 = vld [vmem:[#allocation3 + $0x160] sm:$0xff]
    %v115 = vld [vmem:[#allocation3 + $0x168] sm:$0xff]
    %v116 = vld [vmem:[#allocation3 + $0x170] sm:$0xff]
    %v117 = vld [vmem:[#allocation3 + $0x178] sm:$0xff]
    %v118 = vld [vmem:[#allocation3 + $0x180] sm:$0xff]
    %v119 = vld [vmem:[#allocation3 + $0x188] sm:$0xff]
    %v120 = vld [vmem:[#allocation3 + $0x190] sm:$0xff]
    %v121 = vld [vmem:[#allocation3 + $0x198] sm:$0xff]
    %v122 = vld [vmem:[#allocation3 + $0x1a0] sm:$0xff]
    %v123 = vld [vmem:[#allocation3 + $0x1a8] sm:$0xff]
    %v124 = vld [vmem:[#allocation3 + $0x1b0] sm:$0xff]
    %v125 = vld [vmem:[#allocation3 + $0x1b8] sm:$0xff]
    %v126 = vld [vmem:[#allocation3 + $0x1c0] sm:$0xff]
    %v127 = vld [vmem:[#allocation3 + $0x1c8] sm:$0xff]
    %v128 = vld [vmem:[#allocation3 + $0x1d0] sm:$0xff]
    %v129 = vld [vmem:[#allocation3 + $0x1d8] sm:$0xff]
    %v130 = vld [vmem:[#allocation3 + $0x1e0] sm:$0xff]
    %v131 = vld [vmem:[#allocation3 + $0x1e8] sm:$0xff]
    %v132 = vld [vmem:[#allocation3 + $0x1f0] sm:$0xff]
    %v133 = vld [vmem:[#allocation3 + $0x1f8] sm:$0xff]
    %v134 = vrot.slane %v74, 4
    %vm135 = vcmask 1047556
    %v136 = vsel %vm135, %v134, %v70
    %v137 = vrot.slane %v70, 4
    %v138 = vsel %vm135, %v74, %v137
    %v140 = vunpack.c.l.s4 1983009808
    %v141 = vunpack.c.0.s8 %v140
    %v142 = vperm.slane %v136, %v141
    %v144 = vunpack.c.l.s4 1983009808
    %v145 = vunpack.c.0.s8 %v144
    %v146 = vperm.slane %v138, %v145
    %v147 = vrot.slane %v76, 4
    %v148 = vsel %vm135, %v147, %v72
    %v149 = vrot.slane %v72, 4
    %v150 = vsel %vm135, %v76, %v149
    %v152 = vunpack.c.l.s4 1983009808
    %v153 = vunpack.c.0.s8 %v152
    %v154 = vperm.slane %v148, %v153
    %v156 = vunpack.c.l.s4 1983009808
    %v157 = vunpack.c.0.s8 %v156
    %v158 = vperm.slane %v150, %v157
    %v159 = vrot.slane %v82, 4
    %v160 = vsel %vm135, %v159, %v78
    %v161 = vrot.slane %v78, 4
    %v162 = vsel %vm135, %v82, %v161
    %v164 = vunpack.c.l.s4 1983009808
    %v165 = vunpack.c.0.s8 %v164
    %v166 = vperm.slane %v160, %v165
    %v168 = vunpack.c.l.s4 1983009808
    %v169 = vunpack.c.0.s8 %v168
    %v170 = vperm.slane %v162, %v169
    %v171 = vrot.slane %v84, 4
    %v172 = vsel %vm135, %v171, %v80
    %v173 = vrot.slane %v80, 4
    %v174 = vsel %vm135, %v84, %v173
    %v176 = vunpack.c.l.s4 1983009808
    %v177 = vunpack.c.0.s8 %v176
    %v178 = vperm.slane %v172, %v177
    %v180 = vunpack.c.l.s4 1983009808
    %v181 = vunpack.c.0.s8 %v180
    %v182 = vperm.slane %v174, %v181
    %v183 = vrot.slane %v154, 4
    %v184 = vsel %vm135, %v183, %v142
    %v185 = vrot.slane %v142, 4
    %v186 = vsel %vm135, %v154, %v185
    %v188 = vunpack.c.l.s4 1934713408
    %v189 = vunpack.c.0.s8 %v188
    %v190 = vperm.slane %v184, %v189
    %v192 = vunpack.c.l.s4 1934713408
    %v193 = vunpack.c.0.s8 %v192
    %v194 = vperm.slane %v186, %v193
    %v195 = vrot.slane %v158, 4
    %v196 = vsel %vm135, %v195, %v146
    %v197 = vrot.slane %v146, 4
    %v198 = vsel %vm135, %v158, %v197
    %v200 = vunpack.c.l.s4 1934713408
    %v201 = vunpack.c.0.s8 %v200
    %v202 = vperm.slane %v196, %v201
    %v204 = vunpack.c.l.s4 1934713408
    %v205 = vunpack.c.0.s8 %v204
    %v206 = vperm.slane %v198, %v205
    %v207 = vrot.slane %v178, 4
    %v208 = vsel %vm135, %v207, %v166
    %v209 = vrot.slane %v166, 4
    %v210 = vsel %vm135, %v178, %v209
    %v212 = vunpack.c.l.s4 1934713408
    %v213 = vunpack.c.0.s8 %v212
    %v214 = vperm.slane %v208, %v213
    %v216 = vunpack.c.l.s4 1934713408
    %v217 = vunpack.c.0.s8 %v216
    %v218 = vperm.slane %v210, %v217
    %v219 = vrot.slane %v182, 4
    %v220 = vsel %vm135, %v219, %v170
    %v221 = vrot.slane %v170, 4
    %v222 = vsel %vm135, %v182, %v221
    %v224 = vunpack.c.l.s4 1934713408
    %v225 = vunpack.c.0.s8 %v224
    %v226 = vperm.slane %v220, %v225
    %v228 = vunpack.c.l.s4 1934713408
    %v229 = vunpack.c.0.s8 %v228
    %v230 = vperm.slane %v222, %v229
    %v231 = vrot.slane %v214, 4
    %v232 = vsel %vm135, %v231, %v190
    %v233 = vrot.slane %v190, 4
    %v234 = vsel %vm135, %v214, %v233
    %v235 = vrot.slane %v218, 4
    %v236 = vsel %vm135, %v235, %v194
    %v237 = vrot.slane %v194, 4
    %v238 = vsel %vm135, %v218, %v237
    %v239 = vrot.slane %v226, 4
    %v240 = vsel %vm135, %v239, %v202
    %v241 = vrot.slane %v202, 4
    %v242 = vsel %vm135, %v226, %v241
    %v243 = vrot.slane %v230, 4
    %v244 = vsel %vm135, %v243, %v206
    %v245 = vrot.slane %v206, 4
    %v246 = vsel %vm135, %v230, %v245
    %v247 = vrot.slane %v90, 4
    %v248 = vsel %vm135, %v247, %v86
    %v249 = vrot.slane %v86, 4
    %v250 = vsel %vm135, %v90, %v249
    %v252 = vunpack.c.l.s4 1983009808
    %v253 = vunpack.c.0.s8 %v252
    %v254 = vperm.slane %v248, %v253
    %v256 = vunpack.c.l.s4 1983009808
    %v257 = vunpack.c.0.s8 %v256
    %v258 = vperm.slane %v250, %v257
    %v259 = vrot.slane %v92, 4
    %v260 = vsel %vm135, %v259, %v88
    %v261 = vrot.slane %v88, 4
    %v262 = vsel %vm135, %v92, %v261
    %v264 = vunpack.c.l.s4 1983009808
    %v265 = vunpack.c.0.s8 %v264
    %v266 = vperm.slane %v260, %v265
    %v268 = vunpack.c.l.s4 1983009808
    %v269 = vunpack.c.0.s8 %v268
    %v270 = vperm.slane %v262, %v269
    %v271 = vrot.slane %v98, 4
    %v272 = vsel %vm135, %v271, %v94
    %v273 = vrot.slane %v94, 4
    %v274 = vsel %vm135, %v98, %v273
    %v276 = vunpack.c.l.s4 1983009808
    %v277 = vunpack.c.0.s8 %v276
    %v278 = vperm.slane %v272, %v277
    %v280 = vunpack.c.l.s4 1983009808
    %v281 = vunpack.c.0.s8 %v280
    %v282 = vperm.slane %v274, %v281
    %v283 = vrot.slane %v100, 4
    %v284 = vsel %vm135, %v283, %v96
    %v285 = vrot.slane %v96, 4
    %v286 = vsel %vm135, %v100, %v285
    %v288 = vunpack.c.l.s4 1983009808
    %v289 = vunpack.c.0.s8 %v288
    %v290 = vperm.slane %v284, %v289
    %v292 = vunpack.c.l.s4 1983009808
    %v293 = vunpack.c.0.s8 %v292
    %v294 = vperm.slane %v286, %v293
    %v295 = vrot.slane %v266, 4
    %v296 = vsel %vm135, %v295, %v254
    %v297 = vrot.slane %v254, 4
    %v298 = vsel %vm135, %v266, %v297
    %v300 = vunpack.c.l.s4 1934713408
    %v301 = vunpack.c.0.s8 %v300
    %v302 = vperm.slane %v296, %v301
    %v304 = vunpack.c.l.s4 1934713408
    %v305 = vunpack.c.0.s8 %v304
    %v306 = vperm.slane %v298, %v305
    %v307 = vrot.slane %v270, 4
    %v308 = vsel %vm135, %v307, %v258
    %v309 = vrot.slane %v258, 4
    %v310 = vsel %vm135, %v270, %v309
    %v312 = vunpack.c.l.s4 1934713408
    %v313 = vunpack.c.0.s8 %v312
    %v314 = vperm.slane %v308, %v313
    %v316 = vunpack.c.l.s4 1934713408
    %v317 = vunpack.c.0.s8 %v316
    %v318 = vperm.slane %v310, %v317
    %v319 = vrot.slane %v290, 4
    %v320 = vsel %vm135, %v319, %v278
    %v321 = vrot.slane %v278, 4
    %v322 = vsel %vm135, %v290, %v321
    %v324 = vunpack.c.l.s4 1934713408
    %v325 = vunpack.c.0.s8 %v324
    %v326 = vperm.slane %v320, %v325
    %v328 = vunpack.c.l.s4 1934713408
    %v329 = vunpack.c.0.s8 %v328
    %v330 = vperm.slane %v322, %v329
    %v331 = vrot.slane %v294, 4
    %v332 = vsel %vm135, %v331, %v282
    %v333 = vrot.slane %v282, 4
    %v334 = vsel %vm135, %v294, %v333
    %v336 = vunpack.c.l.s4 1934713408
    %v337 = vunpack.c.0.s8 %v336
    %v338 = vperm.slane %v332, %v337
    %v340 = vunpack.c.l.s4 1934713408
    %v341 = vunpack.c.0.s8 %v340
    %v342 = vperm.slane %v334, %v341
    %v343 = vrot.slane %v326, 4
    %v344 = vsel %vm135, %v343, %v302
    %v345 = vrot.slane %v302, 4
    %v346 = vsel %vm135, %v326, %v345
    %v347 = vrot.slane %v330, 4
    %v348 = vsel %vm135, %v347, %v306
    %v349 = vrot.slane %v306, 4
    %v350 = vsel %vm135, %v330, %v349
    %v351 = vrot.slane %v338, 4
    %v352 = vsel %vm135, %v351, %v314
    %v353 = vrot.slane %v314, 4
    %v354 = vsel %vm135, %v338, %v353
    %v355 = vrot.slane %v342, 4
    %v356 = vsel %vm135, %v355, %v318
    %v357 = vrot.slane %v318, 4
    %v358 = vsel %vm135, %v342, %v357
    %v359 = vrot.slane %v75, 4
    %v360 = vsel %vm135, %v359, %v71
    %v361 = vrot.slane %v71, 4
    %v362 = vsel %vm135, %v75, %v361
    %v364 = vunpack.c.l.s4 1983009808
    %v365 = vunpack.c.0.s8 %v364
    %v366 = vperm.slane %v360, %v365
    %v368 = vunpack.c.l.s4 1983009808
    %v369 = vunpack.c.0.s8 %v368
    %v370 = vperm.slane %v362, %v369
    %v371 = vrot.slane %v77, 4
    %v372 = vsel %vm135, %v371, %v73
    %v373 = vrot.slane %v73, 4
    %v374 = vsel %vm135, %v77, %v373
    %v376 = vunpack.c.l.s4 1983009808
    %v377 = vunpack.c.0.s8 %v376
    %v378 = vperm.slane %v372, %v377
    %v380 = vunpack.c.l.s4 1983009808
    %v381 = vunpack.c.0.s8 %v380
    %v382 = vperm.slane %v374, %v381
    %v383 = vrot.slane %v83, 4
    %v384 = vsel %vm135, %v383, %v79
    %v385 = vrot.slane %v79, 4
    %v386 = vsel %vm135, %v83, %v385
    %v388 = vunpack.c.l.s4 1983009808
    %v389 = vunpack.c.0.s8 %v388
    %v390 = vperm.slane %v384, %v389
    %v392 = vunpack.c.l.s4 1983009808
    %v393 = vunpack.c.0.s8 %v392
    %v394 = vperm.slane %v386, %v393
    %v395 = vrot.slane %v85, 4
    %v396 = vsel %vm135, %v395, %v81
    %v397 = vrot.slane %v81, 4
    %v398 = vsel %vm135, %v85, %v397
    %v400 = vunpack.c.l.s4 1983009808
    %v401 = vunpack.c.0.s8 %v400
    %v402 = vperm.slane %v396, %v401
    %v404 = vunpack.c.l.s4 1983009808
    %v405 = vunpack.c.0.s8 %v404
    %v406 = vperm.slane %v398, %v405
    %v407 = vrot.slane %v378, 4
    %v408 = vsel %vm135, %v407, %v366
    %v409 = vrot.slane %v366, 4
    %v410 = vsel %vm135, %v378, %v409
    %v412 = vunpack.c.l.s4 1934713408
    %v413 = vunpack.c.0.s8 %v412
    %v414 = vperm.slane %v408, %v413
    %v416 = vunpack.c.l.s4 1934713408
    %v417 = vunpack.c.0.s8 %v416
    %v418 = vperm.slane %v410, %v417
    %v419 = vrot.slane %v382, 4
    %v420 = vsel %vm135, %v419, %v370
    %v421 = vrot.slane %v370, 4
    %v422 = vsel %vm135, %v382, %v421
    %v424 = vunpack.c.l.s4 1934713408
    %v425 = vunpack.c.0.s8 %v424
    %v426 = vperm.slane %v420, %v425
    %v428 = vunpack.c.l.s4 1934713408
    %v429 = vunpack.c.0.s8 %v428
    %v430 = vperm.slane %v422, %v429
    %v431 = vrot.slane %v402, 4
    %v432 = vsel %vm135, %v431, %v390
    %v433 = vrot.slane %v390, 4
    %v434 = vsel %vm135, %v402, %v433
    %v436 = vunpack.c.l.s4 1934713408
    %v437 = vunpack.c.0.s8 %v436
    %v438 = vperm.slane %v432, %v437
    %v440 = vunpack.c.l.s4 1934713408
    %v441 = vunpack.c.0.s8 %v440
    %v442 = vperm.slane %v434, %v441
    %v443 = vrot.slane %v406, 4
    %v444 = vsel %vm135, %v443, %v394
    %v445 = vrot.slane %v394, 4
    %v446 = vsel %vm135, %v406, %v445
    %v448 = vunpack.c.l.s4 1934713408
    %v449 = vunpack.c.0.s8 %v448
    %v450 = vperm.slane %v444, %v449
    %v452 = vunpack.c.l.s4 1934713408
    %v453 = vunpack.c.0.s8 %v452
    %v454 = vperm.slane %v446, %v453
    %v455 = vrot.slane %v438, 4
    %v456 = vsel %vm135, %v455, %v414
    %v457 = vrot.slane %v414, 4
    %v458 = vsel %vm135, %v438, %v457
    %v459 = vrot.slane %v442, 4
    %v460 = vsel %vm135, %v459, %v418
    %v461 = vrot.slane %v418, 4
    %v462 = vsel %vm135, %v442, %v461
    %v463 = vrot.slane %v450, 4
    %v464 = vsel %vm135, %v463, %v426
    %v465 = vrot.slane %v426, 4
    %v466 = vsel %vm135, %v450, %v465
    %v467 = vrot.slane %v454, 4
    %v468 = vsel %vm135, %v467, %v430
    %v469 = vrot.slane %v430, 4
    %v470 = vsel %vm135, %v454, %v469
    %v471 = vrot.slane %v91, 4
    %v472 = vsel %vm135, %v471, %v87
    %v473 = vrot.slane %v87, 4
    %v474 = vsel %vm135, %v91, %v473
    %v476 = vunpack.c.l.s4 1983009808
    %v477 = vunpack.c.0.s8 %v476
    %v478 = vperm.slane %v472, %v477
    %v480 = vunpack.c.l.s4 1983009808
    %v481 = vunpack.c.0.s8 %v480
    %v482 = vperm.slane %v474, %v481
    %v483 = vrot.slane %v93, 4
    %v484 = vsel %vm135, %v483, %v89
    %v485 = vrot.slane %v89, 4
    %v486 = vsel %vm135, %v93, %v485
    %v488 = vunpack.c.l.s4 1983009808
    %v489 = vunpack.c.0.s8 %v488
    %v490 = vperm.slane %v484, %v489
    %v492 = vunpack.c.l.s4 1983009808
    %v493 = vunpack.c.0.s8 %v492
    %v494 = vperm.slane %v486, %v493
    %v495 = vrot.slane %v99, 4
    %v496 = vsel %vm135, %v495, %v95
    %v497 = vrot.slane %v95, 4
    %v498 = vsel %vm135, %v99, %v497
    %v500 = vunpack.c.l.s4 1983009808
    %v501 = vunpack.c.0.s8 %v500
    %v502 = vperm.slane %v496, %v501
    %v504 = vunpack.c.l.s4 1983009808
    %v505 = vunpack.c.0.s8 %v504
    %v506 = vperm.slane %v498, %v505
    %v507 = vrot.slane %v101, 4
    %v508 = vsel %vm135, %v507, %v97
    %v509 = vrot.slane %v97, 4
    %v510 = vsel %vm135, %v101, %v509
    %v512 = vunpack.c.l.s4 1983009808
    %v513 = vunpack.c.0.s8 %v512
    %v514 = vperm.slane %v508, %v513
    %v516 = vunpack.c.l.s4 1983009808
    %v517 = vunpack.c.0.s8 %v516
    %v518 = vperm.slane %v510, %v517
    %v519 = vrot.slane %v490, 4
    %v520 = vsel %vm135, %v519, %v478
    %v521 = vrot.slane %v478, 4
    %v522 = vsel %vm135, %v490, %v521
    %v524 = vunpack.c.l.s4 1934713408
    %v525 = vunpack.c.0.s8 %v524
    %v526 = vperm.slane %v520, %v525
    %v528 = vunpack.c.l.s4 1934713408
    %v529 = vunpack.c.0.s8 %v528
    %v530 = vperm.slane %v522, %v529
    %v531 = vrot.slane %v494, 4
    %v532 = vsel %vm135, %v531, %v482
    %v533 = vrot.slane %v482, 4
    %v534 = vsel %vm135, %v494, %v533
    %v536 = vunpack.c.l.s4 1934713408
    %v537 = vunpack.c.0.s8 %v536
    %v538 = vperm.slane %v532, %v537
    %v540 = vunpack.c.l.s4 1934713408
    %v541 = vunpack.c.0.s8 %v540
    %v542 = vperm.slane %v534, %v541
    %v543 = vrot.slane %v514, 4
    %v544 = vsel %vm135, %v543, %v502
    %v545 = vrot.slane %v502, 4
    %v546 = vsel %vm135, %v514, %v545
    %v548 = vunpack.c.l.s4 1934713408
    %v549 = vunpack.c.0.s8 %v548
    %v550 = vperm.slane %v544, %v549
    %v552 = vunpack.c.l.s4 1934713408
    %v553 = vunpack.c.0.s8 %v552
    %v554 = vperm.slane %v546, %v553
    %v555 = vrot.slane %v518, 4
    %v556 = vsel %vm135, %v555, %v506
    %v557 = vrot.slane %v506, 4
    %v558 = vsel %vm135, %v518, %v557
    %v560 = vunpack.c.l.s4 1934713408
    %v561 = vunpack.c.0.s8 %v560
    %v562 = vperm.slane %v556, %v561
    %v564 = vunpack.c.l.s4 1934713408
    %v565 = vunpack.c.0.s8 %v564
    %v566 = vperm.slane %v558, %v565
    %v567 = vrot.slane %v550, 4
    %v568 = vsel %vm135, %v567, %v526
    %v569 = vrot.slane %v526, 4
    %v570 = vsel %vm135, %v550, %v569
    %v571 = vrot.slane %v554, 4
    %v572 = vsel %vm135, %v571, %v530
    %v573 = vrot.slane %v530, 4
    %v574 = vsel %vm135, %v554, %v573
    %v575 = vrot.slane %v562, 4
    %v576 = vsel %vm135, %v575, %v538
    %v577 = vrot.slane %v538, 4
    %v578 = vsel %vm135, %v562, %v577
    %v579 = vrot.slane %v566, 4
    %v580 = vsel %vm135, %v579, %v542
    %v581 = vrot.slane %v542, 4
    %v582 = vsel %vm135, %v566, %v581
    %v583 = vrot.slane %v106, 4
    %v584 = vsel %vm135, %v583, %v102
    %v585 = vrot.slane %v102, 4
    %v586 = vsel %vm135, %v106, %v585
    %v588 = vunpack.c.l.s4 1983009808
    %v589 = vunpack.c.0.s8 %v588
    %v590 = vperm.slane %v584, %v589
    %v592 = vunpack.c.l.s4 1983009808
    %v593 = vunpack.c.0.s8 %v592
    %v594 = vperm.slane %v586, %v593
    %v595 = vrot.slane %v108, 4
    %v596 = vsel %vm135, %v595, %v104
    %v597 = vrot.slane %v104, 4
    %v598 = vsel %vm135, %v108, %v597
    %v600 = vunpack.c.l.s4 1983009808
    %v601 = vunpack.c.0.s8 %v600
    %v602 = vperm.slane %v596, %v601
    %v604 = vunpack.c.l.s4 1983009808
    %v605 = vunpack.c.0.s8 %v604
    %v606 = vperm.slane %v598, %v605
    %v607 = vrot.slane %v114, 4
    %v608 = vsel %vm135, %v607, %v110
    %v609 = vrot.slane %v110, 4
    %v610 = vsel %vm135, %v114, %v609
    %v612 = vunpack.c.l.s4 1983009808
    %v613 = vunpack.c.0.s8 %v612
    %v614 = vperm.slane %v608, %v613
    %v616 = vunpack.c.l.s4 1983009808
    %v617 = vunpack.c.0.s8 %v616
    %v618 = vperm.slane %v610, %v617
    %v619 = vrot.slane %v116, 4
    %v620 = vsel %vm135, %v619, %v112
    %v621 = vrot.slane %v112, 4
    %v622 = vsel %vm135, %v116, %v621
    %v624 = vunpack.c.l.s4 1983009808
    %v625 = vunpack.c.0.s8 %v624
    %v626 = vperm.slane %v620, %v625
    %v628 = vunpack.c.l.s4 1983009808
    %v629 = vunpack.c.0.s8 %v628
    %v630 = vperm.slane %v622, %v629
    %v631 = vrot.slane %v602, 4
    %v632 = vsel %vm135, %v631, %v590
    %v633 = vrot.slane %v590, 4
    %v634 = vsel %vm135, %v602, %v633
    %v636 = vunpack.c.l.s4 1934713408
    %v637 = vunpack.c.0.s8 %v636
    %v638 = vperm.slane %v632, %v637
    %v640 = vunpack.c.l.s4 1934713408
    %v641 = vunpack.c.0.s8 %v640
    %v642 = vperm.slane %v634, %v641
    %v643 = vrot.slane %v606, 4
    %v644 = vsel %vm135, %v643, %v594
    %v645 = vrot.slane %v594, 4
    %v646 = vsel %vm135, %v606, %v645
    %v648 = vunpack.c.l.s4 1934713408
    %v649 = vunpack.c.0.s8 %v648
    %v650 = vperm.slane %v644, %v649
    %v652 = vunpack.c.l.s4 1934713408
    %v653 = vunpack.c.0.s8 %v652
    %v654 = vperm.slane %v646, %v653
    %v655 = vrot.slane %v626, 4
    %v656 = vsel %vm135, %v655, %v614
    %v657 = vrot.slane %v614, 4
    %v658 = vsel %vm135, %v626, %v657
    %v660 = vunpack.c.l.s4 1934713408
    %v661 = vunpack.c.0.s8 %v660
    %v662 = vperm.slane %v656, %v661
    %v664 = vunpack.c.l.s4 1934713408
    %v665 = vunpack.c.0.s8 %v664
    %v666 = vperm.slane %v658, %v665
    %v667 = vrot.slane %v630, 4
    %v668 = vsel %vm135, %v667, %v618
    %v669 = vrot.slane %v618, 4
    %v670 = vsel %vm135, %v630, %v669
    %v672 = vunpack.c.l.s4 1934713408
    %v673 = vunpack.c.0.s8 %v672
    %v674 = vperm.slane %v668, %v673
    %v676 = vunpack.c.l.s4 1934713408
    %v677 = vunpack.c.0.s8 %v676
    %v678 = vperm.slane %v670, %v677
    %v679 = vrot.slane %v662, 4
    %v680 = vsel %vm135, %v679, %v638
    %v681 = vrot.slane %v638, 4
    %v682 = vsel %vm135, %v662, %v681
    %v683 = vrot.slane %v666, 4
    %v684 = vsel %vm135, %v683, %v642
    %v685 = vrot.slane %v642, 4
    %v686 = vsel %vm135, %v666, %v685
    %v687 = vrot.slane %v674, 4
    %v688 = vsel %vm135, %v687, %v650
    %v689 = vrot.slane %v650, 4
    %v690 = vsel %vm135, %v674, %v689
    %v691 = vrot.slane %v678, 4
    %v692 = vsel %vm135, %v691, %v654
    %v693 = vrot.slane %v654, 4
    %v694 = vsel %vm135, %v678, %v693
    %v695 = vrot.slane %v122, 4
    %v696 = vsel %vm135, %v695, %v118
    %v697 = vrot.slane %v118, 4
    %v698 = vsel %vm135, %v122, %v697
    %v700 = vunpack.c.l.s4 1983009808
    %v701 = vunpack.c.0.s8 %v700
    %v702 = vperm.slane %v696, %v701
    %v704 = vunpack.c.l.s4 1983009808
    %v705 = vunpack.c.0.s8 %v704
    %v706 = vperm.slane %v698, %v705
    %v707 = vrot.slane %v124, 4
    %v708 = vsel %vm135, %v707, %v120
    %v709 = vrot.slane %v120, 4
    %v710 = vsel %vm135, %v124, %v709
    %v712 = vunpack.c.l.s4 1983009808
    %v713 = vunpack.c.0.s8 %v712
    %v714 = vperm.slane %v708, %v713
    %v716 = vunpack.c.l.s4 1983009808
    %v717 = vunpack.c.0.s8 %v716
    %v718 = vperm.slane %v710, %v717
    %v719 = vrot.slane %v130, 4
    %v720 = vsel %vm135, %v719, %v126
    %v721 = vrot.slane %v126, 4
    %v722 = vsel %vm135, %v130, %v721
    %v724 = vunpack.c.l.s4 1983009808
    %v725 = vunpack.c.0.s8 %v724
    %v726 = vperm.slane %v720, %v725
    %v728 = vunpack.c.l.s4 1983009808
    %v729 = vunpack.c.0.s8 %v728
    %v730 = vperm.slane %v722, %v729
    %v731 = vrot.slane %v132, 4
    %v732 = vsel %vm135, %v731, %v128
    %v733 = vrot.slane %v128, 4
    %v734 = vsel %vm135, %v132, %v733
    %v736 = vunpack.c.l.s4 1983009808
    %v737 = vunpack.c.0.s8 %v736
    %v738 = vperm.slane %v732, %v737
    %v740 = vunpack.c.l.s4 1983009808
    %v741 = vunpack.c.0.s8 %v740
    %v742 = vperm.slane %v734, %v741
    %v743 = vrot.slane %v714, 4
    %v744 = vsel %vm135, %v743, %v702
    %v745 = vrot.slane %v702, 4
    %v746 = vsel %vm135, %v714, %v745
    %v748 = vunpack.c.l.s4 1934713408
    %v749 = vunpack.c.0.s8 %v748
    %v750 = vperm.slane %v744, %v749
    %v752 = vunpack.c.l.s4 1934713408
    %v753 = vunpack.c.0.s8 %v752
    %v754 = vperm.slane %v746, %v753
    %v755 = vrot.slane %v718, 4
    %v756 = vsel %vm135, %v755, %v706
    %v757 = vrot.slane %v706, 4
    %v758 = vsel %vm135, %v718, %v757
    %v760 = vunpack.c.l.s4 1934713408
    %v761 = vunpack.c.0.s8 %v760
    %v762 = vperm.slane %v756, %v761
    %v764 = vunpack.c.l.s4 1934713408
    %v765 = vunpack.c.0.s8 %v764
    %v766 = vperm.slane %v758, %v765
    %v767 = vrot.slane %v738, 4
    %v768 = vsel %vm135, %v767, %v726
    %v769 = vrot.slane %v726, 4
    %v770 = vsel %vm135, %v738, %v769
    %v772 = vunpack.c.l.s4 1934713408
    %v773 = vunpack.c.0.s8 %v772
    %v774 = vperm.slane %v768, %v773
    %v776 = vunpack.c.l.s4 1934713408
    %v777 = vunpack.c.0.s8 %v776
    %v778 = vperm.slane %v770, %v777
    %v779 = vrot.slane %v742, 4
    %v780 = vsel %vm135, %v779, %v730
    %v781 = vrot.slane %v730, 4
    %v782 = vsel %vm135, %v742, %v781
    %v784 = vunpack.c.l.s4 1934713408
    %v785 = vunpack.c.0.s8 %v784
    %v786 = vperm.slane %v780, %v785
    %v788 = vunpack.c.l.s4 1934713408
    %v789 = vunpack.c.0.s8 %v788
    %v790 = vperm.slane %v782, %v789
    %v791 = vrot.slane %v774, 4
    %v792 = vsel %vm135, %v791, %v750
    %v793 = vrot.slane %v750, 4
    %v794 = vsel %vm135, %v774, %v793
    %v795 = vrot.slane %v778, 4
    %v796 = vsel %vm135, %v795, %v754
    %v797 = vrot.slane %v754, 4
    %v798 = vsel %vm135, %v778, %v797
    %v799 = vrot.slane %v786, 4
    %v800 = vsel %vm135, %v799, %v762
    %v801 = vrot.slane %v762, 4
    %v802 = vsel %vm135, %v786, %v801
    %v803 = vrot.slane %v790, 4
    %v804 = vsel %vm135, %v803, %v766
    %v805 = vrot.slane %v766, 4
    %v806 = vsel %vm135, %v790, %v805
    %v807 = vrot.slane %v107, 4
    %v808 = vsel %vm135, %v807, %v103
    %v809 = vrot.slane %v103, 4
    %v810 = vsel %vm135, %v107, %v809
    %v812 = vunpack.c.l.s4 1983009808
    %v813 = vunpack.c.0.s8 %v812
    %v814 = vperm.slane %v808, %v813
    %v816 = vunpack.c.l.s4 1983009808
    %v817 = vunpack.c.0.s8 %v816
    %v818 = vperm.slane %v810, %v817
    %v819 = vrot.slane %v109, 4
    %v820 = vsel %vm135, %v819, %v105
    %v821 = vrot.slane %v105, 4
    %v822 = vsel %vm135, %v109, %v821
    %v824 = vunpack.c.l.s4 1983009808
    %v825 = vunpack.c.0.s8 %v824
    %v826 = vperm.slane %v820, %v825
    %v828 = vunpack.c.l.s4 1983009808
    %v829 = vunpack.c.0.s8 %v828
    %v830 = vperm.slane %v822, %v829
    %v831 = vrot.slane %v115, 4
    %v832 = vsel %vm135, %v831, %v111
    %v833 = vrot.slane %v111, 4
    %v834 = vsel %vm135, %v115, %v833
    %v836 = vunpack.c.l.s4 1983009808
    %v837 = vunpack.c.0.s8 %v836
    %v838 = vperm.slane %v832, %v837
    %v840 = vunpack.c.l.s4 1983009808
    %v841 = vunpack.c.0.s8 %v840
    %v842 = vperm.slane %v834, %v841
    %v843 = vrot.slane %v117, 4
    %v844 = vsel %vm135, %v843, %v113
    %v845 = vrot.slane %v113, 4
    %v846 = vsel %vm135, %v117, %v845
    %v848 = vunpack.c.l.s4 1983009808
    %v849 = vunpack.c.0.s8 %v848
    %v850 = vperm.slane %v844, %v849
    %v852 = vunpack.c.l.s4 1983009808
    %v853 = vunpack.c.0.s8 %v852
    %v854 = vperm.slane %v846, %v853
    %v855 = vrot.slane %v826, 4
    %v856 = vsel %vm135, %v855, %v814
    %v857 = vrot.slane %v814, 4
    %v858 = vsel %vm135, %v826, %v857
    %v860 = vunpack.c.l.s4 1934713408
    %v861 = vunpack.c.0.s8 %v860
    %v862 = vperm.slane %v856, %v861
    %v864 = vunpack.c.l.s4 1934713408
    %v865 = vunpack.c.0.s8 %v864
    %v866 = vperm.slane %v858, %v865
    %v867 = vrot.slane %v830, 4
    %v868 = vsel %vm135, %v867, %v818
    %v869 = vrot.slane %v818, 4
    %v870 = vsel %vm135, %v830, %v869
    %v872 = vunpack.c.l.s4 1934713408
    %v873 = vunpack.c.0.s8 %v872
    %v874 = vperm.slane %v868, %v873
    %v876 = vunpack.c.l.s4 1934713408
    %v877 = vunpack.c.0.s8 %v876
    %v878 = vperm.slane %v870, %v877
    %v879 = vrot.slane %v850, 4
    %v880 = vsel %vm135, %v879, %v838
    %v881 = vrot.slane %v838, 4
    %v882 = vsel %vm135, %v850, %v881
    %v884 = vunpack.c.l.s4 1934713408
    %v885 = vunpack.c.0.s8 %v884
    %v886 = vperm.slane %v880, %v885
    %v888 = vunpack.c.l.s4 1934713408
    %v889 = vunpack.c.0.s8 %v888
    %v890 = vperm.slane %v882, %v889
    %v891 = vrot.slane %v854, 4
    %v892 = vsel %vm135, %v891, %v842
    %v893 = vrot.slane %v842, 4
    %v894 = vsel %vm135, %v854, %v893
    %v896 = vunpack.c.l.s4 1934713408
    %v897 = vunpack.c.0.s8 %v896
    %v898 = vperm.slane %v892, %v897
    %v900 = vunpack.c.l.s4 1934713408
    %v901 = vunpack.c.0.s8 %v900
    %v902 = vperm.slane %v894, %v901
    %v903 = vrot.slane %v886, 4
    %v904 = vsel %vm135, %v903, %v862
    %v905 = vrot.slane %v862, 4
    %v906 = vsel %vm135, %v886, %v905
    %v907 = vrot.slane %v890, 4
    %v908 = vsel %vm135, %v907, %v866
    %v909 = vrot.slane %v866, 4
    %v910 = vsel %vm135, %v890, %v909
    %v911 = vrot.slane %v898, 4
    %v912 = vsel %vm135, %v911, %v874
    %v913 = vrot.slane %v874, 4
    %v914 = vsel %vm135, %v898, %v913
    %v915 = vrot.slane %v902, 4
    %v916 = vsel %vm135, %v915, %v878
    %v917 = vrot.slane %v878, 4
    %v918 = vsel %vm135, %v902, %v917
    %v919 = vrot.slane %v123, 4
    %v920 = vsel %vm135, %v919, %v119
    %v921 = vrot.slane %v119, 4
    %v922 = vsel %vm135, %v123, %v921
    %v924 = vunpack.c.l.s4 1983009808
    %v925 = vunpack.c.0.s8 %v924
    %v926 = vperm.slane %v920, %v925
    %v928 = vunpack.c.l.s4 1983009808
    %v929 = vunpack.c.0.s8 %v928
    %v930 = vperm.slane %v922, %v929
    %v931 = vrot.slane %v125, 4
    %v932 = vsel %vm135, %v931, %v121
    %v933 = vrot.slane %v121, 4
    %v934 = vsel %vm135, %v125, %v933
    %v936 = vunpack.c.l.s4 1983009808
    %v937 = vunpack.c.0.s8 %v936
    %v938 = vperm.slane %v932, %v937
    %v940 = vunpack.c.l.s4 1983009808
    %v941 = vunpack.c.0.s8 %v940
    %v942 = vperm.slane %v934, %v941
    %v943 = vrot.slane %v131, 4
    %v944 = vsel %vm135, %v943, %v127
    %v945 = vrot.slane %v127, 4
    %v946 = vsel %vm135, %v131, %v945
    %v948 = vunpack.c.l.s4 1983009808
    %v949 = vunpack.c.0.s8 %v948
    %v950 = vperm.slane %v944, %v949
    %v952 = vunpack.c.l.s4 1983009808
    %v953 = vunpack.c.0.s8 %v952
    %v954 = vperm.slane %v946, %v953
    %v955 = vrot.slane %v133, 4
    %v956 = vsel %vm135, %v955, %v129
    %v957 = vrot.slane %v129, 4
    %v958 = vsel %vm135, %v133, %v957
    %v960 = vunpack.c.l.s4 1983009808
    %v961 = vunpack.c.0.s8 %v960
    %v962 = vperm.slane %v956, %v961
    %v964 = vunpack.c.l.s4 1983009808
    %v965 = vunpack.c.0.s8 %v964
    %v966 = vperm.slane %v958, %v965
    %v967 = vrot.slane %v938, 4
    %v968 = vsel %vm135, %v967, %v926
    %v969 = vrot.slane %v926, 4
    %v970 = vsel %vm135, %v938, %v969
    %v972 = vunpack.c.l.s4 1934713408
    %v973 = vunpack.c.0.s8 %v972
    %v974 = vperm.slane %v968, %v973
    %v976 = vunpack.c.l.s4 1934713408
    %v977 = vunpack.c.0.s8 %v976
    %v978 = vperm.slane %v970, %v977
    %v979 = vrot.slane %v942, 4
    %v980 = vsel %vm135, %v979, %v930
    %v981 = vrot.slane %v930, 4
    %v982 = vsel %vm135, %v942, %v981
    %v984 = vunpack.c.l.s4 1934713408
    %v985 = vunpack.c.0.s8 %v984
    %v986 = vperm.slane %v980, %v985
    %v988 = vunpack.c.l.s4 1934713408
    %v989 = vunpack.c.0.s8 %v988
    %v990 = vperm.slane %v982, %v989
    %v991 = vrot.slane %v962, 4
    %v992 = vsel %vm135, %v991, %v950
    %v993 = vrot.slane %v950, 4
    %v994 = vsel %vm135, %v962, %v993
    %v996 = vunpack.c.l.s4 1934713408
    %v997 = vunpack.c.0.s8 %v996
    %v998 = vperm.slane %v992, %v997
    %v1000 = vunpack.c.l.s4 1934713408
    %v1001 = vunpack.c.0.s8 %v1000
    %v1002 = vperm.slane %v994, %v1001
    %v1003 = vrot.slane %v966, 4
    %v1004 = vsel %vm135, %v1003, %v954
    %v1005 = vrot.slane %v954, 4
    %v1006 = vsel %vm135, %v966, %v1005
    %v1008 = vunpack.c.l.s4 1934713408
    %v1009 = vunpack.c.0.s8 %v1008
    %v1010 = vperm.slane %v1004, %v1009
    %v1012 = vunpack.c.l.s4 1934713408
    %v1013 = vunpack.c.0.s8 %v1012
    %v1014 = vperm.slane %v1006, %v1013
    %v1015 = vrot.slane %v998, 4
    %v1016 = vsel %vm135, %v1015, %v974
    %v1017 = vrot.slane %v974, 4
    %v1018 = vsel %vm135, %v998, %v1017
    %v1019 = vrot.slane %v1002, 4
    %v1020 = vsel %vm135, %v1019, %v978
    %v1021 = vrot.slane %v978, 4
    %v1022 = vsel %vm135, %v1002, %v1021
    %v1023 = vrot.slane %v1010, 4
    %v1024 = vsel %vm135, %v1023, %v986
    %v1025 = vrot.slane %v986, 4
    %v1026 = vsel %vm135, %v1010, %v1025
    %v1027 = vrot.slane %v1014, 4
    %v1028 = vsel %vm135, %v1027, %v990
    %v1029 = vrot.slane %v990, 4
    %v1030 = vsel %vm135, %v1014, %v1029
    %v1031 = vpack.c.bf16 %v71, %v70
    %v1032 = vpack.c.bf16 %v73, %v72
    %v1033 = vpack.c.bf16 %v75, %v74
    %v1034 = vpack.c.bf16 %v77, %v76
    %v1035 = vpack.c.bf16 %v79, %v78
    %v1036 = vpack.c.bf16 %v81, %v80
    %v1037 = vpack.c.bf16 %v83, %v82
    %v1038 = vpack.c.bf16 %v85, %v84
    %v1039 = vpack.c.bf16 %v87, %v86
    %v1040 = vpack.c.bf16 %v89, %v88
    %v1041 = vpack.c.bf16 %v91, %v90
    %v1042 = vpack.c.bf16 %v93, %v92
    %v1043 = vpack.c.bf16 %v95, %v94
    %v1044 = vpack.c.bf16 %v97, %v96
    %v1045 = vpack.c.bf16 %v99, %v98
    %v1046 = vpack.c.bf16 %v101, %v100
    %v1047 = vpack.c.bf16 %v103, %v102
    %v1048 = vpack.c.bf16 %v105, %v104
    %v1049 = vpack.c.bf16 %v107, %v106
    %v1050 = vpack.c.bf16 %v109, %v108
    %v1051 = vpack.c.bf16 %v111, %v110
    %v1052 = vpack.c.bf16 %v113, %v112
    %v1053 = vpack.c.bf16 %v115, %v114
    %v1054 = vpack.c.bf16 %v117, %v116
    %v1055 = vpack.c.bf16 %v119, %v118
    %v1056 = vpack.c.bf16 %v121, %v120
    %v1057 = vpack.c.bf16 %v123, %v122
    %v1058 = vpack.c.bf16 %v125, %v124
    %v1059 = vpack.c.bf16 %v127, %v126
    %v1060 = vpack.c.bf16 %v129, %v128
    %v1061 = vpack.c.bf16 %v131, %v130
    %v1062 = vpack.c.bf16 %v133, %v132
    %v1063 = vpack.c.bf16 %v344, %v232
    %v1064 = vpack.c.bf16 %v346, %v234
    %v1065 = vpack.c.bf16 %v348, %v236
    %v1066 = vpack.c.bf16 %v350, %v238
    %v1067 = vpack.c.bf16 %v352, %v240
    %v1068 = vpack.c.bf16 %v354, %v242
    %v1069 = vpack.c.bf16 %v356, %v244
    %v1070 = vpack.c.bf16 %v358, %v246
    %v1071 = vpack.c.bf16 %v568, %v456
    %v1072 = vpack.c.bf16 %v570, %v458
    %v1073 = vpack.c.bf16 %v572, %v460
    %v1074 = vpack.c.bf16 %v574, %v462
    %v1075 = vpack.c.bf16 %v576, %v464
    %v1076 = vpack.c.bf16 %v578, %v466
    %v1077 = vpack.c.bf16 %v580, %v468
    %v1078 = vpack.c.bf16 %v582, %v470
    %v1079 = vpack.c.bf16 %v792, %v680
    %v1080 = vpack.c.bf16 %v794, %v682
    %v1081 = vpack.c.bf16 %v796, %v684
    %v1082 = vpack.c.bf16 %v798, %v686
    %v1083 = vpack.c.bf16 %v800, %v688
    %v1084 = vpack.c.bf16 %v802, %v690
    %v1085 = vpack.c.bf16 %v804, %v692
    %v1086 = vpack.c.bf16 %v806, %v694
    %v1087 = vpack.c.bf16 %v1016, %v904
    %v1088 = vpack.c.bf16 %v1018, %v906
    %v1089 = vpack.c.bf16 %v1020, %v908
    %v1090 = vpack.c.bf16 %v1022, %v910
    %v1091 = vpack.c.bf16 %v1024, %v912
    %v1092 = vpack.c.bf16 %v1026, %v914
    %v1093 = vpack.c.bf16 %v1028, %v916
    %v1094 = vpack.c.bf16 %v1030, %v918
    %v1095 = vld [vmem:[#allocation6] sm:$0xf]
    %v1096 = vld [vmem:[#allocation6 + $0x4] sm:$0xf]
    %v1097 = vld [vmem:[#allocation6 + $0x8] sm:$0xf]
    %v1098 = vld [vmem:[#allocation6 + $0xc] sm:$0xf]
    %v1099 = vld [vmem:[#allocation6 + $0x10] sm:$0xf]
    %v1100 = vld [vmem:[#allocation6 + $0x14] sm:$0xf]
    %v1101 = vld [vmem:[#allocation6 + $0x18] sm:$0xf]
    %v1102 = vld [vmem:[#allocation6 + $0x1c] sm:$0xf]
    %v1103 = vld [vmem:[%s2] sm:$0x1]
    %v1105 = vperm.slane %v1103, 0
    %v1115 = vunpack.c.l.b16 %v1095
    %v1116 = vunpack.c.l.b16 %v1096
    %v1117 = vunpack.c.l.b16 %v1097
    %v1118 = vunpack.c.l.b16 %v1098
    %v1119 = vunpack.c.l.b16 %v1099
    %v1120 = vunpack.c.l.b16 %v1100
    %v1121 = vunpack.c.l.b16 %v1101
    %v1122 = vunpack.c.l.b16 %v1102
    %v1123 = vpack.c.b16 %v1116, %v1115
    %v1124 = vpack.c.b16 %v1118, %v1117
    %v1125 = vpack.c.b16 %v1120, %v1119
    %v1126 = vpack.c.b16 %v1122, %v1121
    %vm1131 = vcmask 523264
    %v1133 = vsel %vm1131, %v1031, 0
    %v1136 = vsel %vm1131, %v1032, 0
    %v1139 = vsel %vm1131, %v1033, 0
    %v1142 = vsel %vm1131, %v1034, 0
    %v1145 = vsel %vm1131, %v1035, 0
    %v1148 = vsel %vm1131, %v1036, 0
    %v1151 = vsel %vm1131, %v1037, 0
    %v1154 = vsel %vm1131, %v1038, 0
    %v1157 = vsel %vm1131, %v1039, 0
    %v1160 = vsel %vm1131, %v1040, 0
    %v1163 = vsel %vm1131, %v1041, 0
    %v1166 = vsel %vm1131, %v1042, 0
    %v1169 = vsel %vm1131, %v1043, 0
    %v1172 = vsel %vm1131, %v1044, 0
    %v1175 = vsel %vm1131, %v1045, 0
    %v1178 = vsel %vm1131, %v1046, 0
    %v1181 = vsel %vm1131, %v1047, 0
    %v1184 = vsel %vm1131, %v1048, 0
    %v1187 = vsel %vm1131, %v1049, 0
    %v1190 = vsel %vm1131, %v1050, 0
    %v1193 = vsel %vm1131, %v1051, 0
    %v1196 = vsel %vm1131, %v1052, 0
    %v1199 = vsel %vm1131, %v1053, 0
    %v1202 = vsel %vm1131, %v1054, 0
    %v1205 = vsel %vm1131, %v1055, 0
    %v1208 = vsel %vm1131, %v1056, 0
    %v1211 = vsel %vm1131, %v1057, 0
    %v1214 = vsel %vm1131, %v1058, 0
    %v1217 = vsel %vm1131, %v1059, 0
    %v1220 = vsel %vm1131, %v1060, 0
    %v1223 = vsel %vm1131, %v1061, 0
    %v1226 = vsel %vm1131, %v1062, 0
    %v1229 = vsel %vm1131, %v1063, 0
    %v1232 = vsel %vm1131, %v1064, 0
    %v1235 = vsel %vm1131, %v1065, 0
    %v1238 = vsel %vm1131, %v1066, 0
    %v1241 = vsel %vm1131, %v1067, 0
    %v1244 = vsel %vm1131, %v1068, 0
    %v1247 = vsel %vm1131, %v1069, 0
    %v1250 = vsel %vm1131, %v1070, 0
    %v1253 = vsel %vm1131, %v1071, 0
    %v1256 = vsel %vm1131, %v1072, 0
    %v1259 = vsel %vm1131, %v1073, 0
    %v1262 = vsel %vm1131, %v1074, 0
    %v1265 = vsel %vm1131, %v1075, 0
    %v1268 = vsel %vm1131, %v1076, 0
    %v1271 = vsel %vm1131, %v1077, 0
    %v1274 = vsel %vm1131, %v1078, 0
    %v1277 = vsel %vm1131, %v1079, 0
    %v1280 = vsel %vm1131, %v1080, 0
    %v1283 = vsel %vm1131, %v1081, 0
    %v1286 = vsel %vm1131, %v1082, 0
    %v1289 = vsel %vm1131, %v1083, 0
    %v1292 = vsel %vm1131, %v1084, 0
    %v1295 = vsel %vm1131, %v1085, 0
    %v1298 = vsel %vm1131, %v1086, 0
    %v1301 = vsel %vm1131, %v1087, 0
    %v1304 = vsel %vm1131, %v1088, 0
    %v1307 = vsel %vm1131, %v1089, 0
    %v1310 = vsel %vm1131, %v1090, 0
    %v1313 = vsel %vm1131, %v1091, 0
    %v1316 = vsel %vm1131, %v1092, 0
    %v1319 = vsel %vm1131, %v1093, 0
    %v1322 = vsel %vm1131, %v1094, 0
    %1324 = vmatpush.bf16.msra.mxu0 0
    %1325 = vmatpush.bf16.msra.mxu0 0
    %1326 = vmatpush.bf16.msra.mxu0 0
    %1327 = vmatpush.bf16.msra.mxu0 0
    %1328 = vmatpush.bf16.msra.mxu0 %v1126
    %1329 = vmatpush.bf16.msra.mxu0 %v1125
    %1330 = vmatpush.bf16.msra.mxu0 %v1124
    %1331 = vmatpush.bf16.msra.mxu0 %v1123
    %1332 = vmatmul.bf16.gmra.mxu0 %v1133
    %v1333 = vpop.f32.mrf.mxu0
    %v1334 = vadd.f32 %v1105, %v1333
    %v1335 = vpop.f32.mrf.mxu0
    %v1336 = vadd.f32 %v1105, %v1335
    %1337 = vmatmul.bf16.gmra.mxu0 %v1136
    %v1338 = vpop.f32.mrf.mxu0
    %v1339 = vadd.f32 %v1105, %v1338
    %v1340 = vpop.f32.mrf.mxu0
    %v1341 = vadd.f32 %v1105, %v1340
    %1342 = vmatmul.bf16.gmra.mxu0 %v1139
    %v1343 = vpop.f32.mrf.mxu0
    %v1344 = vadd.f32 %v1105, %v1343
    %v1345 = vpop.f32.mrf.mxu0
    %v1346 = vadd.f32 %v1105, %v1345
    %1347 = vmatmul.bf16.gmra.mxu0 %v1142
    %v1348 = vpop.f32.mrf.mxu0
    %v1349 = vadd.f32 %v1105, %v1348
    %v1350 = vpop.f32.mrf.mxu0
    %v1351 = vadd.f32 %v1105, %v1350
    %1352 = vmatmul.bf16.gmra.mxu0 %v1145
    %v1353 = vpop.f32.mrf.mxu0
    %v1354 = vadd.f32 %v1105, %v1353
    %v1355 = vpop.f32.mrf.mxu0
    %v1356 = vadd.f32 %v1105, %v1355
    %1357 = vmatmul.bf16.gmra.mxu0 %v1148
    %v1358 = vpop.f32.mrf.mxu0
    %v1359 = vadd.f32 %v1105, %v1358
    %v1360 = vpop.f32.mrf.mxu0
    %v1361 = vadd.f32 %v1105, %v1360
    %1362 = vmatmul.bf16.gmra.mxu0 %v1151
    %v1363 = vpop.f32.mrf.mxu0
    %v1364 = vadd.f32 %v1105, %v1363
    %v1365 = vpop.f32.mrf.mxu0
    %v1366 = vadd.f32 %v1105, %v1365
    %1367 = vmatmul.bf16.gmra.mxu0 %v1154
    %v1368 = vpop.f32.mrf.mxu0
    %v1369 = vadd.f32 %v1105, %v1368
    %v1370 = vpop.f32.mrf.mxu0
    %v1371 = vadd.f32 %v1105, %v1370
    %1372 = vmatmul.bf16.gmra.mxu0 %v1157
    %v1373 = vpop.f32.mrf.mxu0
    %v1374 = vadd.f32 %v1105, %v1373
    %v1375 = vpop.f32.mrf.mxu0
    %v1376 = vadd.f32 %v1105, %v1375
    %1377 = vmatmul.bf16.gmra.mxu0 %v1160
    %v1378 = vpop.f32.mrf.mxu0
    %v1379 = vadd.f32 %v1105, %v1378
    %v1380 = vpop.f32.mrf.mxu0
    %v1381 = vadd.f32 %v1105, %v1380
    %1382 = vmatmul.bf16.gmra.mxu0 %v1163
    %v1383 = vpop.f32.mrf.mxu0
    %v1384 = vadd.f32 %v1105, %v1383
    %v1385 = vpop.f32.mrf.mxu0
    %v1386 = vadd.f32 %v1105, %v1385
    %1387 = vmatmul.bf16.gmra.mxu0 %v1166
    %v1388 = vpop.f32.mrf.mxu0
    %v1389 = vadd.f32 %v1105, %v1388
    %v1390 = vpop.f32.mrf.mxu0
    %v1391 = vadd.f32 %v1105, %v1390
    %1392 = vmatmul.bf16.gmra.mxu0 %v1169
    %v1393 = vpop.f32.mrf.mxu0
    %v1394 = vadd.f32 %v1105, %v1393
    %v1395 = vpop.f32.mrf.mxu0
    %v1396 = vadd.f32 %v1105, %v1395
    %1397 = vmatmul.bf16.gmra.mxu0 %v1172
    %v1398 = vpop.f32.mrf.mxu0
    %v1399 = vadd.f32 %v1105, %v1398
    %v1400 = vpop.f32.mrf.mxu0
    %v1401 = vadd.f32 %v1105, %v1400
    %1402 = vmatmul.bf16.gmra.mxu0 %v1175
    %v1403 = vpop.f32.mrf.mxu0
    %v1404 = vadd.f32 %v1105, %v1403
    %v1405 = vpop.f32.mrf.mxu0
    %v1406 = vadd.f32 %v1105, %v1405
    %1407 = vmatmul.bf16.gmra.mxu0 %v1178
    %v1408 = vpop.f32.mrf.mxu0
    %v1409 = vadd.f32 %v1105, %v1408
    %v1410 = vpop.f32.mrf.mxu0
    %v1411 = vadd.f32 %v1105, %v1410
    %1412 = vmatmul.bf16.gmra.mxu0 %v1181
    %v1413 = vpop.f32.mrf.mxu0
    %v1414 = vadd.f32 %v1105, %v1413
    %v1415 = vpop.f32.mrf.mxu0
    %v1416 = vadd.f32 %v1105, %v1415
    %1417 = vmatmul.bf16.gmra.mxu0 %v1184
    %v1418 = vpop.f32.mrf.mxu0
    %v1419 = vadd.f32 %v1105, %v1418
    %v1420 = vpop.f32.mrf.mxu0
    %v1421 = vadd.f32 %v1105, %v1420
    %1422 = vmatmul.bf16.gmra.mxu0 %v1187
    %v1423 = vpop.f32.mrf.mxu0
    %v1424 = vadd.f32 %v1105, %v1423
    %v1425 = vpop.f32.mrf.mxu0
    %v1426 = vadd.f32 %v1105, %v1425
    %1427 = vmatmul.bf16.gmra.mxu0 %v1190
    %v1428 = vpop.f32.mrf.mxu0
    %v1429 = vadd.f32 %v1105, %v1428
    %v1430 = vpop.f32.mrf.mxu0
    %v1431 = vadd.f32 %v1105, %v1430
    %1432 = vmatmul.bf16.gmra.mxu0 %v1193
    %v1433 = vpop.f32.mrf.mxu0
    %v1434 = vadd.f32 %v1105, %v1433
    %v1435 = vpop.f32.mrf.mxu0
    %v1436 = vadd.f32 %v1105, %v1435
    %1437 = vmatmul.bf16.gmra.mxu0 %v1196
    %v1438 = vpop.f32.mrf.mxu0
    %v1439 = vadd.f32 %v1105, %v1438
    %v1440 = vpop.f32.mrf.mxu0
    %v1441 = vadd.f32 %v1105, %v1440
    %1442 = vmatmul.bf16.gmra.mxu0 %v1199
    %v1443 = vpop.f32.mrf.mxu0
    %v1444 = vadd.f32 %v1105, %v1443
    %v1445 = vpop.f32.mrf.mxu0
    %v1446 = vadd.f32 %v1105, %v1445
    %1447 = vmatmul.bf16.gmra.mxu0 %v1202
    %v1448 = vpop.f32.mrf.mxu0
    %v1449 = vadd.f32 %v1105, %v1448
    %v1450 = vpop.f32.mrf.mxu0
    %v1451 = vadd.f32 %v1105, %v1450
    %1452 = vmatmul.bf16.gmra.mxu0 %v1205
    %v1453 = vpop.f32.mrf.mxu0
    %v1454 = vadd.f32 %v1105, %v1453
    %v1455 = vpop.f32.mrf.mxu0
    %v1456 = vadd.f32 %v1105, %v1455
    %1457 = vmatmul.bf16.gmra.mxu0 %v1208
    %v1458 = vpop.f32.mrf.mxu0
    %v1459 = vadd.f32 %v1105, %v1458
    %v1460 = vpop.f32.mrf.mxu0
    %v1461 = vadd.f32 %v1105, %v1460
    %1462 = vmatmul.bf16.gmra.mxu0 %v1211
    %v1463 = vpop.f32.mrf.mxu0
    %v1464 = vadd.f32 %v1105, %v1463
    %v1465 = vpop.f32.mrf.mxu0
    %v1466 = vadd.f32 %v1105, %v1465
    %1467 = vmatmul.bf16.gmra.mxu0 %v1214
    %v1468 = vpop.f32.mrf.mxu0
    %v1469 = vadd.f32 %v1105, %v1468
    %v1470 = vpop.f32.mrf.mxu0
    %v1471 = vadd.f32 %v1105, %v1470
    %1472 = vmatmul.bf16.gmra.mxu0 %v1217
    %v1473 = vpop.f32.mrf.mxu0
    %v1474 = vadd.f32 %v1105, %v1473
    %v1475 = vpop.f32.mrf.mxu0
    %v1476 = vadd.f32 %v1105, %v1475
    %1477 = vmatmul.bf16.gmra.mxu0 %v1220
    %v1478 = vpop.f32.mrf.mxu0
    %v1479 = vadd.f32 %v1105, %v1478
    %v1480 = vpop.f32.mrf.mxu0
    %v1481 = vadd.f32 %v1105, %v1480
    %1482 = vmatmul.bf16.gmra.mxu0 %v1223
    %v1483 = vpop.f32.mrf.mxu0
    %v1484 = vadd.f32 %v1105, %v1483
    %v1485 = vpop.f32.mrf.mxu0
    %v1486 = vadd.f32 %v1105, %v1485
    %1487 = vmatmul.bf16.gmra.mxu0 %v1226
    %v1488 = vpop.f32.mrf.mxu0
    %v1489 = vadd.f32 %v1105, %v1488
    %v1490 = vpop.f32.mrf.mxu0
    %v1491 = vadd.f32 %v1105, %v1490
    %1492 = vmatmul.bf16.gmra.mxu0 %v1229
    %v1493 = vpop.f32.mrf.mxu0
    %v1494 = vadd.f32 %v1105, %v1493
    %v1495 = vpop.f32.mrf.mxu0
    %v1496 = vadd.f32 %v1105, %v1495
    %1497 = vmatmul.bf16.gmra.mxu0 %v1232
    %v1498 = vpop.f32.mrf.mxu0
    %v1499 = vadd.f32 %v1105, %v1498
    %v1500 = vpop.f32.mrf.mxu0
    %v1501 = vadd.f32 %v1105, %v1500
    %1502 = vmatmul.bf16.gmra.mxu0 %v1235
    %v1503 = vpop.f32.mrf.mxu0
    %v1504 = vadd.f32 %v1105, %v1503
    %v1505 = vpop.f32.mrf.mxu0
    %v1506 = vadd.f32 %v1105, %v1505
    %1507 = vmatmul.bf16.gmra.mxu0 %v1238
    %v1508 = vpop.f32.mrf.mxu0
    %v1509 = vadd.f32 %v1105, %v1508
    %v1510 = vpop.f32.mrf.mxu0
    %v1511 = vadd.f32 %v1105, %v1510
    %1512 = vmatmul.bf16.gmra.mxu0 %v1241
    %v1513 = vpop.f32.mrf.mxu0
    %v1514 = vadd.f32 %v1105, %v1513
    %v1515 = vpop.f32.mrf.mxu0
    %v1516 = vadd.f32 %v1105, %v1515
    %1517 = vmatmul.bf16.gmra.mxu0 %v1244
    %v1518 = vpop.f32.mrf.mxu0
    %v1519 = vadd.f32 %v1105, %v1518
    %v1520 = vpop.f32.mrf.mxu0
    %v1521 = vadd.f32 %v1105, %v1520
    %1522 = vmatmul.bf16.gmra.mxu0 %v1247
    %v1523 = vpop.f32.mrf.mxu0
    %v1524 = vadd.f32 %v1105, %v1523
    %v1525 = vpop.f32.mrf.mxu0
    %v1526 = vadd.f32 %v1105, %v1525
    %1527 = vmatmul.bf16.gmra.mxu0 %v1250
    %v1528 = vpop.f32.mrf.mxu0
    %v1529 = vadd.f32 %v1105, %v1528
    %v1530 = vpop.f32.mrf.mxu0
    %v1531 = vadd.f32 %v1105, %v1530
    %1532 = vmatmul.bf16.gmra.mxu0 %v1253
    %v1533 = vpop.f32.mrf.mxu0
    %v1534 = vadd.f32 %v1105, %v1533
    %v1535 = vpop.f32.mrf.mxu0
    %v1536 = vadd.f32 %v1105, %v1535
    %1537 = vmatmul.bf16.gmra.mxu0 %v1256
    %v1538 = vpop.f32.mrf.mxu0
    %v1539 = vadd.f32 %v1105, %v1538
    %v1540 = vpop.f32.mrf.mxu0
    %v1541 = vadd.f32 %v1105, %v1540
    %1542 = vmatmul.bf16.gmra.mxu0 %v1259
    %v1543 = vpop.f32.mrf.mxu0
    %v1544 = vadd.f32 %v1105, %v1543
    %v1545 = vpop.f32.mrf.mxu0
    %v1546 = vadd.f32 %v1105, %v1545
    %1547 = vmatmul.bf16.gmra.mxu0 %v1262
    %v1548 = vpop.f32.mrf.mxu0
    %v1549 = vadd.f32 %v1105, %v1548
    %v1550 = vpop.f32.mrf.mxu0
    %v1551 = vadd.f32 %v1105, %v1550
    %1552 = vmatmul.bf16.gmra.mxu0 %v1265
    %v1553 = vpop.f32.mrf.mxu0
    %v1554 = vadd.f32 %v1105, %v1553
    %v1555 = vpop.f32.mrf.mxu0
    %v1556 = vadd.f32 %v1105, %v1555
    %1557 = vmatmul.bf16.gmra.mxu0 %v1268
    %v1558 = vpop.f32.mrf.mxu0
    %v1559 = vadd.f32 %v1105, %v1558
    %v1560 = vpop.f32.mrf.mxu0
    %v1561 = vadd.f32 %v1105, %v1560
    %1562 = vmatmul.bf16.gmra.mxu0 %v1271
    %v1563 = vpop.f32.mrf.mxu0
    %v1564 = vadd.f32 %v1105, %v1563
    %v1565 = vpop.f32.mrf.mxu0
    %v1566 = vadd.f32 %v1105, %v1565
    %1567 = vmatmul.bf16.gmra.mxu0 %v1274
    %v1568 = vpop.f32.mrf.mxu0
    %v1569 = vadd.f32 %v1105, %v1568
    %v1570 = vpop.f32.mrf.mxu0
    %v1571 = vadd.f32 %v1105, %v1570
    %1572 = vmatmul.bf16.gmra.mxu0 %v1277
    %v1573 = vpop.f32.mrf.mxu0
    %v1574 = vadd.f32 %v1105, %v1573
    %v1575 = vpop.f32.mrf.mxu0
    %v1576 = vadd.f32 %v1105, %v1575
    %1577 = vmatmul.bf16.gmra.mxu0 %v1280
    %v1578 = vpop.f32.mrf.mxu0
    %v1579 = vadd.f32 %v1105, %v1578
    %v1580 = vpop.f32.mrf.mxu0
    %v1581 = vadd.f32 %v1105, %v1580
    %1582 = vmatmul.bf16.gmra.mxu0 %v1283
    %v1583 = vpop.f32.mrf.mxu0
    %v1584 = vadd.f32 %v1105, %v1583
    %v1585 = vpop.f32.mrf.mxu0
    %v1586 = vadd.f32 %v1105, %v1585
    %1587 = vmatmul.bf16.gmra.mxu0 %v1286
    %v1588 = vpop.f32.mrf.mxu0
    %v1589 = vadd.f32 %v1105, %v1588
    %v1590 = vpop.f32.mrf.mxu0
    %v1591 = vadd.f32 %v1105, %v1590
    %1592 = vmatmul.bf16.gmra.mxu0 %v1289
    %v1593 = vpop.f32.mrf.mxu0
    %v1594 = vadd.f32 %v1105, %v1593
    %v1595 = vpop.f32.mrf.mxu0
    %v1596 = vadd.f32 %v1105, %v1595
    %1597 = vmatmul.bf16.gmra.mxu0 %v1292
    %v1598 = vpop.f32.mrf.mxu0
    %v1599 = vadd.f32 %v1105, %v1598
    %v1600 = vpop.f32.mrf.mxu0
    %v1601 = vadd.f32 %v1105, %v1600
    %1602 = vmatmul.bf16.gmra.mxu0 %v1295
    %v1603 = vpop.f32.mrf.mxu0
    %v1604 = vadd.f32 %v1105, %v1603
    %v1605 = vpop.f32.mrf.mxu0
    %v1606 = vadd.f32 %v1105, %v1605
    %1607 = vmatmul.bf16.gmra.mxu0 %v1298
    %v1608 = vpop.f32.mrf.mxu0
    %v1609 = vadd.f32 %v1105, %v1608
    %v1610 = vpop.f32.mrf.mxu0
    %v1611 = vadd.f32 %v1105, %v1610
    %1612 = vmatmul.bf16.gmra.mxu0 %v1301
    %v1613 = vpop.f32.mrf.mxu0
    %v1614 = vadd.f32 %v1105, %v1613
    %v1615 = vpop.f32.mrf.mxu0
    %v1616 = vadd.f32 %v1105, %v1615
    %1617 = vmatmul.bf16.gmra.mxu0 %v1304
    %v1618 = vpop.f32.mrf.mxu0
    %v1619 = vadd.f32 %v1105, %v1618
    %v1620 = vpop.f32.mrf.mxu0
    %v1621 = vadd.f32 %v1105, %v1620
    %1622 = vmatmul.bf16.gmra.mxu0 %v1307
    %v1623 = vpop.f32.mrf.mxu0
    %v1624 = vadd.f32 %v1105, %v1623
    %v1625 = vpop.f32.mrf.mxu0
    %v1626 = vadd.f32 %v1105, %v1625
    %1627 = vmatmul.bf16.gmra.mxu0 %v1310
    %v1628 = vpop.f32.mrf.mxu0
    %v1629 = vadd.f32 %v1105, %v1628
    %v1630 = vpop.f32.mrf.mxu0
    %v1631 = vadd.f32 %v1105, %v1630
    %1632 = vmatmul.bf16.gmra.mxu0 %v1313
    %v1633 = vpop.f32.mrf.mxu0
    %v1634 = vadd.f32 %v1105, %v1633
    %v1635 = vpop.f32.mrf.mxu0
    %v1636 = vadd.f32 %v1105, %v1635
    %1637 = vmatmul.bf16.gmra.mxu0 %v1316
    %v1638 = vpop.f32.mrf.mxu0
    %v1639 = vadd.f32 %v1105, %v1638
    %v1640 = vpop.f32.mrf.mxu0
    %v1641 = vadd.f32 %v1105, %v1640
    %1642 = vmatmul.bf16.gmra.mxu0 %v1319
    %v1643 = vpop.f32.mrf.mxu0
    %v1644 = vadd.f32 %v1105, %v1643
    %v1645 = vpop.f32.mrf.mxu0
    %v1646 = vadd.f32 %v1105, %v1645
    %1647 = vmatmul.bf16.gmra.mxu0 %v1322
    %v1648 = vpop.f32.mrf.mxu0
    %v1649 = vadd.f32 %v1105, %v1648
    %v1650 = vpop.f32.mrf.mxu0
    %v1651 = vadd.f32 %v1105, %v1650
    %1652 = vdwg.mxu0
    %v1653 = vld [vmem:[#allocation8] sm:$0xff]
    %v1654 = vld [vmem:[#allocation8 + $0x8] sm:$0xff]
    %v1655 = vpack.c.bf16 %v1334, %v1334
    %v1656 = vpack.c.bf16 %v1336, %v1336
    %v1657 = vpack.c.bf16 %v1339, %v1339
    %v1658 = vpack.c.bf16 %v1341, %v1341
    %v1659 = vpack.c.bf16 %v1344, %v1344
    %v1660 = vpack.c.bf16 %v1346, %v1346
    %v1661 = vpack.c.bf16 %v1349, %v1349
    %v1662 = vpack.c.bf16 %v1351, %v1351
    %v1663 = vpack.c.bf16 %v1354, %v1354
    %v1664 = vpack.c.bf16 %v1356, %v1356
    %v1665 = vpack.c.bf16 %v1359, %v1359
    %v1666 = vpack.c.bf16 %v1361, %v1361
    %v1667 = vpack.c.bf16 %v1364, %v1364
    %v1668 = vpack.c.bf16 %v1366, %v1366
    %v1669 = vpack.c.bf16 %v1369, %v1369
    %v1670 = vpack.c.bf16 %v1371, %v1371
    %v1671 = vpack.c.bf16 %v1374, %v1374
    %v1672 = vpack.c.bf16 %v1376, %v1376
    %v1673 = vpack.c.bf16 %v1379, %v1379
    %v1674 = vpack.c.bf16 %v1381, %v1381
    %v1675 = vpack.c.bf16 %v1384, %v1384
    %v1676 = vpack.c.bf16 %v1386, %v1386
    %v1677 = vpack.c.bf16 %v1389, %v1389
    %v1678 = vpack.c.bf16 %v1391, %v1391
    %v1679 = vpack.c.bf16 %v1394, %v1394
    %v1680 = vpack.c.bf16 %v1396, %v1396
    %v1681 = vpack.c.bf16 %v1399, %v1399
    %v1682 = vpack.c.bf16 %v1401, %v1401
    %v1683 = vpack.c.bf16 %v1404, %v1404
    %v1684 = vpack.c.bf16 %v1406, %v1406
    %v1685 = vpack.c.bf16 %v1409, %v1409
    %v1686 = vpack.c.bf16 %v1411, %v1411
    %v1687 = vpack.c.bf16 %v1414, %v1414
    %v1688 = vpack.c.bf16 %v1416, %v1416
    %v1689 = vpack.c.bf16 %v1419, %v1419
    %v1690 = vpack.c.bf16 %v1421, %v1421
    %v1691 = vpack.c.bf16 %v1424, %v1424
    %v1692 = vpack.c.bf16 %v1426, %v1426
    %v1693 = vpack.c.bf16 %v1429, %v1429
    %v1694 = vpack.c.bf16 %v1431, %v1431
    %v1695 = vpack.c.bf16 %v1434, %v1434
    %v1696 = vpack.c.bf16 %v1436, %v1436
    %v1697 = vpack.c.bf16 %v1439, %v1439
    %v1698 = vpack.c.bf16 %v1441, %v1441
    %v1699 = vpack.c.bf16 %v1444, %v1444
    %v1700 = vpack.c.bf16 %v1446, %v1446
    %v1701 = vpack.c.bf16 %v1449, %v1449
    %v1702 = vpack.c.bf16 %v1451, %v1451
    %v1703 = vpack.c.bf16 %v1454, %v1454
    %v1704 = vpack.c.bf16 %v1456, %v1456
    %v1705 = vpack.c.bf16 %v1459, %v1459
    %v1706 = vpack.c.bf16 %v1461, %v1461
    %v1707 = vpack.c.bf16 %v1464, %v1464
    %v1708 = vpack.c.bf16 %v1466, %v1466
    %v1709 = vpack.c.bf16 %v1469, %v1469
    %v1710 = vpack.c.bf16 %v1471, %v1471
    %v1711 = vpack.c.bf16 %v1474, %v1474
    %v1712 = vpack.c.bf16 %v1476, %v1476
    %v1713 = vpack.c.bf16 %v1479, %v1479
    %v1714 = vpack.c.bf16 %v1481, %v1481
    %v1715 = vpack.c.bf16 %v1484, %v1484
    %v1716 = vpack.c.bf16 %v1486, %v1486
    %v1717 = vpack.c.bf16 %v1489, %v1489
    %v1718 = vpack.c.bf16 %v1491, %v1491
    %v1719 = vpack.c.bf16 %v1494, %v1494
    %v1720 = vpack.c.bf16 %v1496, %v1496
    %v1721 = vpack.c.bf16 %v1499, %v1499
    %v1722 = vpack.c.bf16 %v1501, %v1501
    %v1723 = vpack.c.bf16 %v1504, %v1504
    %v1724 = vpack.c.bf16 %v1506, %v1506
    %v1725 = vpack.c.bf16 %v1509, %v1509
    %v1726 = vpack.c.bf16 %v1511, %v1511
    %v1727 = vpack.c.bf16 %v1514, %v1514
    %v1728 = vpack.c.bf16 %v1516, %v1516
    %v1729 = vpack.c.bf16 %v1519, %v1519
    %v1730 = vpack.c.bf16 %v1521, %v1521
    %v1731 = vpack.c.bf16 %v1524, %v1524
    %v1732 = vpack.c.bf16 %v1526, %v1526
    %v1733 = vpack.c.bf16 %v1529, %v1529
    %v1734 = vpack.c.bf16 %v1531, %v1531
    %v1735 = vpack.c.bf16 %v1534, %v1534
    %v1736 = vpack.c.bf16 %v1536, %v1536
    %v1737 = vpack.c.bf16 %v1539, %v1539
    %v1738 = vpack.c.bf16 %v1541, %v1541
    %v1739 = vpack.c.bf16 %v1544, %v1544
    %v1740 = vpack.c.bf16 %v1546, %v1546
    %v1741 = vpack.c.bf16 %v1549, %v1549
    %v1742 = vpack.c.bf16 %v1551, %v1551
    %v1743 = vpack.c.bf16 %v1554, %v1554
    %v1744 = vpack.c.bf16 %v1556, %v1556
    %v1745 = vpack.c.bf16 %v1559, %v1559
    %v1746 = vpack.c.bf16 %v1561, %v1561
    %v1747 = vpack.c.bf16 %v1564, %v1564
    %v1748 = vpack.c.bf16 %v1566, %v1566
    %v1749 = vpack.c.bf16 %v1569, %v1569
    %v1750 = vpack.c.bf16 %v1571, %v1571
    %v1751 = vpack.c.bf16 %v1574, %v1574
    %v1752 = vpack.c.bf16 %v1576, %v1576
    %v1753 = vpack.c.bf16 %v1579, %v1579
    %v1754 = vpack.c.bf16 %v1581, %v1581
    %v1755 = vpack.c.bf16 %v1584, %v1584
    %v1756 = vpack.c.bf16 %v1586, %v1586
    %v1757 = vpack.c.bf16 %v1589, %v1589
    %v1758 = vpack.c.bf16 %v1591, %v1591
    %v1759 = vpack.c.bf16 %v1594, %v1594
    %v1760 = vpack.c.bf16 %v1596, %v1596
    %v1761 = vpack.c.bf16 %v1599, %v1599
    %v1762 = vpack.c.bf16 %v1601, %v1601
    %v1763 = vpack.c.bf16 %v1604, %v1604
    %v1764 = vpack.c.bf16 %v1606, %v1606
    %v1765 = vpack.c.bf16 %v1609, %v1609
    %v1766 = vpack.c.bf16 %v1611, %v1611
    %v1767 = vpack.c.bf16 %v1614, %v1614
    %v1768 = vpack.c.bf16 %v1616, %v1616
    %v1769 = vpack.c.bf16 %v1619, %v1619
    %v1770 = vpack.c.bf16 %v1621, %v1621
    %v1771 = vpack.c.bf16 %v1624, %v1624
    %v1772 = vpack.c.bf16 %v1626, %v1626
    %v1773 = vpack.c.bf16 %v1629, %v1629
    %v1774 = vpack.c.bf16 %v1631, %v1631
    %v1775 = vpack.c.bf16 %v1634, %v1634
    %v1776 = vpack.c.bf16 %v1636, %v1636
    %v1777 = vpack.c.bf16 %v1639, %v1639
    %v1778 = vpack.c.bf16 %v1641, %v1641
    %v1779 = vpack.c.bf16 %v1644, %v1644
    %v1780 = vpack.c.bf16 %v1646, %v1646
    %v1781 = vpack.c.bf16 %v1649, %v1649
    %v1782 = vpack.c.bf16 %v1651, %v1651
    %v1785 = vunpack.c.l.b16 %v1655
    %v1786 = vunpack.c.l.b16 %v1656
    %v1787 = vpack.c.b16 %v1786, %v1785
    %1788 = vrot.lane.b32.xlu0 %v1787, 64
    %v1789 = vpop.permute.xlu0 %1788
    %1790 = vrot.lane.b32.xlu0 %v1787, 56
    %v1791 = vpop.permute.xlu0 %1790
    %vm1792 = vcmask 64512
    %v1794 = vsel %vm1792, %v1789, 0
    %v1797 = vsel %vm1792, %v1791, 0
    %1799 = vmatpush.bf16.xpose.msra.mxu0 0
    %1800 = vmatpush.bf16.xpose.msra.mxu0 0
    %1801 = vmatpush.bf16.xpose.msra.mxu0 0
    %1802 = vmatpush.bf16.xpose.msra.mxu0 0
    %1803 = vmatpush.bf16.xpose.msra.mxu0 0
    %1804 = vmatpush.bf16.xpose.msra.mxu0 0
    %1805 = vmatpush.bf16.xpose.msra.mxu0 0
    %1806 = vmatpush.bf16.xpose.msra.mxu0 %v1797
    %1807 = vmatmul.bf16.gmra.mxu0 %v1794
    %v1808 = vpop.f32.mrf.mxu0
    %v1809 = vadd.f32 0.0, %v1808
    %v1810 = vpop.f32.mrf.mxu0
    %v1811 = vadd.f32 0.0, %v1810
    %1812 = vdwg.mxu0
    %v1815 = vunpack.c.l.b16 %v1657
    %v1816 = vunpack.c.l.b16 %v1658
    %v1817 = vpack.c.b16 %v1816, %v1815
    %1818 = vrot.lane.b32.xlu0 %v1817, 64
    %v1819 = vpop.permute.xlu0 %1818
    %1820 = vrot.lane.b32.xlu0 %v1817, 56
    %v1821 = vpop.permute.xlu0 %1820
    %v1823 = vsel %vm1792, %v1819, 0
    %v1826 = vsel %vm1792, %v1821, 0
    %1828 = vmatpush.bf16.xpose.msra.mxu0 0
    %1829 = vmatpush.bf16.xpose.msra.mxu0 0
    %1830 = vmatpush.bf16.xpose.msra.mxu0 0
    %1831 = vmatpush.bf16.xpose.msra.mxu0 0
    %1832 = vmatpush.bf16.xpose.msra.mxu0 0
    %1833 = vmatpush.bf16.xpose.msra.mxu0 0
    %1834 = vmatpush.bf16.xpose.msra.mxu0 0
    %1835 = vmatpush.bf16.xpose.msra.mxu0 %v1826
    %1836 = vmatmul.bf16.gmra.mxu0 %v1823
    %v1837 = vpop.f32.mrf.mxu0
    %v1838 = vadd.f32 0.0, %v1837
    %v1839 = vpop.f32.mrf.mxu0
    %v1840 = vadd.f32 0.0, %v1839
    %1841 = vdwg.mxu0
    %v1844 = vunpack.c.l.b16 %v1659
    %v1845 = vunpack.c.l.b16 %v1660
    %v1846 = vpack.c.b16 %v1845, %v1844
    %1847 = vrot.lane.b32.xlu0 %v1846, 64
    %v1848 = vpop.permute.xlu0 %1847
    %1849 = vrot.lane.b32.xlu0 %v1846, 56
    %v1850 = vpop.permute.xlu0 %1849
    %v1852 = vsel %vm1792, %v1848, 0
    %v1855 = vsel %vm1792, %v1850, 0
    %1857 = vmatpush.bf16.xpose.msra.mxu0 0
    %1858 = vmatpush.bf16.xpose.msra.mxu0 0
    %1859 = vmatpush.bf16.xpose.msra.mxu0 0
    %1860 = vmatpush.bf16.xpose.msra.mxu0 0
    %1861 = vmatpush.bf16.xpose.msra.mxu0 0
    %1862 = vmatpush.bf16.xpose.msra.mxu0 0
    %1863 = vmatpush.bf16.xpose.msra.mxu0 0
    %1864 = vmatpush.bf16.xpose.msra.mxu0 %v1855
    %1865 = vmatmul.bf16.gmra.mxu0 %v1852
    %v1866 = vpop.f32.mrf.mxu0
    %v1867 = vadd.f32 0.0, %v1866
    %v1868 = vpop.f32.mrf.mxu0
    %v1869 = vadd.f32 0.0, %v1868
    %1870 = vdwg.mxu0
    %v1873 = vunpack.c.l.b16 %v1661
    %v1874 = vunpack.c.l.b16 %v1662
    %v1875 = vpack.c.b16 %v1874, %v1873
    %1876 = vrot.lane.b32.xlu0 %v1875, 64
    %v1877 = vpop.permute.xlu0 %1876
    %1878 = vrot.lane.b32.xlu0 %v1875, 56
    %v1879 = vpop.permute.xlu0 %1878
    %v1881 = vsel %vm1792, %v1877, 0
    %v1884 = vsel %vm1792, %v1879, 0
    %1886 = vmatpush.bf16.xpose.msra.mxu0 0
    %1887 = vmatpush.bf16.xpose.msra.mxu0 0
    %1888 = vmatpush.bf16.xpose.msra.mxu0 0
    %1889 = vmatpush.bf16.xpose.msra.mxu0 0
    %1890 = vmatpush.bf16.xpose.msra.mxu0 0
    %1891 = vmatpush.bf16.xpose.msra.mxu0 0
    %1892 = vmatpush.bf16.xpose.msra.mxu0 0
    %1893 = vmatpush.bf16.xpose.msra.mxu0 %v1884
    %1894 = vmatmul.bf16.gmra.mxu0 %v1881
    %v1895 = vpop.f32.mrf.mxu0
    %v1896 = vadd.f32 0.0, %v1895
    %v1897 = vpop.f32.mrf.mxu0
    %v1898 = vadd.f32 0.0, %v1897
    %1899 = vdwg.mxu0
    %v1902 = vunpack.c.l.b16 %v1663
    %v1903 = vunpack.c.l.b16 %v1664
    %v1904 = vpack.c.b16 %v1903, %v1902
    %1905 = vrot.lane.b32.xlu0 %v1904, 64
    %v1906 = vpop.permute.xlu0 %1905
    %1907 = vrot.lane.b32.xlu0 %v1904, 56
    %v1908 = vpop.permute.xlu0 %1907
    %v1910 = vsel %vm1792, %v1906, 0
    %v1913 = vsel %vm1792, %v1908, 0
    %1915 = vmatpush.bf16.xpose.msra.mxu0 0
    %1916 = vmatpush.bf16.xpose.msra.mxu0 0
    %1917 = vmatpush.bf16.xpose.msra.mxu0 0
    %1918 = vmatpush.bf16.xpose.msra.mxu0 0
    %1919 = vmatpush.bf16.xpose.msra.mxu0 0
    %1920 = vmatpush.bf16.xpose.msra.mxu0 0
    %1921 = vmatpush.bf16.xpose.msra.mxu0 0
    %1922 = vmatpush.bf16.xpose.msra.mxu0 %v1913
    %1923 = vmatmul.bf16.gmra.mxu0 %v1910
    %v1924 = vpop.f32.mrf.mxu0
    %v1925 = vadd.f32 0.0, %v1924
    %v1926 = vpop.f32.mrf.mxu0
    %v1927 = vadd.f32 0.0, %v1926
    %1928 = vdwg.mxu0
    %v1931 = vunpack.c.l.b16 %v1665
    %v1932 = vunpack.c.l.b16 %v1666
    %v1933 = vpack.c.b16 %v1932, %v1931
    %1934 = vrot.lane.b32.xlu0 %v1933, 64
    %v1935 = vpop.permute.xlu0 %1934
    %1936 = vrot.lane.b32.xlu0 %v1933, 56
    %v1937 = vpop.permute.xlu0 %1936
    %v1939 = vsel %vm1792, %v1935, 0
    %v1942 = vsel %vm1792, %v1937, 0
    %1944 = vmatpush.bf16.xpose.msra.mxu0 0
    %1945 = vmatpush.bf16.xpose.msra.mxu0 0
    %1946 = vmatpush.bf16.xpose.msra.mxu0 0
    %1947 = vmatpush.bf16.xpose.msra.mxu0 0
    %1948 = vmatpush.bf16.xpose.msra.mxu0 0
    %1949 = vmatpush.bf16.xpose.msra.mxu0 0
    %1950 = vmatpush.bf16.xpose.msra.mxu0 0
    %1951 = vmatpush.bf16.xpose.msra.mxu0 %v1942
    %1952 = vmatmul.bf16.gmra.mxu0 %v1939
    %v1953 = vpop.f32.mrf.mxu0
    %v1954 = vadd.f32 0.0, %v1953
    %v1955 = vpop.f32.mrf.mxu0
    %v1956 = vadd.f32 0.0, %v1955
    %1957 = vdwg.mxu0
    %v1960 = vunpack.c.l.b16 %v1667
    %v1961 = vunpack.c.l.b16 %v1668
    %v1962 = vpack.c.b16 %v1961, %v1960
    %1963 = vrot.lane.b32.xlu0 %v1962, 64
    %v1964 = vpop.permute.xlu0 %1963
    %1965 = vrot.lane.b32.xlu0 %v1962, 56
    %v1966 = vpop.permute.xlu0 %1965
    %v1968 = vsel %vm1792, %v1964, 0
    %v1971 = vsel %vm1792, %v1966, 0
    %1973 = vmatpush.bf16.xpose.msra.mxu0 0
    %1974 = vmatpush.bf16.xpose.msra.mxu0 0
    %1975 = vmatpush.bf16.xpose.msra.mxu0 0
    %1976 = vmatpush.bf16.xpose.msra.mxu0 0
    %1977 = vmatpush.bf16.xpose.msra.mxu0 0
    %1978 = vmatpush.bf16.xpose.msra.mxu0 0
    %1979 = vmatpush.bf16.xpose.msra.mxu0 0
    %1980 = vmatpush.bf16.xpose.msra.mxu0 %v1971
    %1981 = vmatmul.bf16.gmra.mxu0 %v1968
    %v1982 = vpop.f32.mrf.mxu0
    %v1983 = vadd.f32 0.0, %v1982
    %v1984 = vpop.f32.mrf.mxu0
    %v1985 = vadd.f32 0.0, %v1984
    %1986 = vdwg.mxu0
    %v1989 = vunpack.c.l.b16 %v1669
    %v1990 = vunpack.c.l.b16 %v1670
    %v1991 = vpack.c.b16 %v1990, %v1989
    %1992 = vrot.lane.b32.xlu0 %v1991, 64
    %v1993 = vpop.permute.xlu0 %1992
    %1994 = vrot.lane.b32.xlu0 %v1991, 56
    %v1995 = vpop.permute.xlu0 %1994
    %v1997 = vsel %vm1792, %v1993, 0
    %v2000 = vsel %vm1792, %v1995, 0
    %2002 = vmatpush.bf16.xpose.msra.mxu0 0
    %2003 = vmatpush.bf16.xpose.msra.mxu0 0
    %2004 = vmatpush.bf16.xpose.msra.mxu0 0
    %2005 = vmatpush.bf16.xpose.msra.mxu0 0
    %2006 = vmatpush.bf16.xpose.msra.mxu0 0
    %2007 = vmatpush.bf16.xpose.msra.mxu0 0
    %2008 = vmatpush.bf16.xpose.msra.mxu0 0
    %2009 = vmatpush.bf16.xpose.msra.mxu0 %v2000
    %2010 = vmatmul.bf16.gmra.mxu0 %v1997
    %v2011 = vpop.f32.mrf.mxu0
    %v2012 = vadd.f32 0.0, %v2011
    %v2013 = vpop.f32.mrf.mxu0
    %v2014 = vadd.f32 0.0, %v2013
    %2015 = vdwg.mxu0
    %v2018 = vunpack.c.l.b16 %v1671
    %v2019 = vunpack.c.l.b16 %v1672
    %v2020 = vpack.c.b16 %v2019, %v2018
    %2021 = vrot.lane.b32.xlu0 %v2020, 64
    %v2022 = vpop.permute.xlu0 %2021
    %2023 = vrot.lane.b32.xlu0 %v2020, 56
    %v2024 = vpop.permute.xlu0 %2023
    %v2026 = vsel %vm1792, %v2022, 0
    %v2029 = vsel %vm1792, %v2024, 0
    %2031 = vmatpush.bf16.xpose.msra.mxu0 0
    %2032 = vmatpush.bf16.xpose.msra.mxu0 0
    %2033 = vmatpush.bf16.xpose.msra.mxu0 0
    %2034 = vmatpush.bf16.xpose.msra.mxu0 0
    %2035 = vmatpush.bf16.xpose.msra.mxu0 0
    %2036 = vmatpush.bf16.xpose.msra.mxu0 0
    %2037 = vmatpush.bf16.xpose.msra.mxu0 0
    %2038 = vmatpush.bf16.xpose.msra.mxu0 %v2029
    %2039 = vmatmul.bf16.gmra.mxu0 %v2026
    %v2040 = vpop.f32.mrf.mxu0
    %v2041 = vadd.f32 0.0, %v2040
    %v2042 = vpop.f32.mrf.mxu0
    %v2043 = vadd.f32 0.0, %v2042
    %2044 = vdwg.mxu0
    %v2047 = vunpack.c.l.b16 %v1673
    %v2048 = vunpack.c.l.b16 %v1674
    %v2049 = vpack.c.b16 %v2048, %v2047
    %2050 = vrot.lane.b32.xlu0 %v2049, 64
    %v2051 = vpop.permute.xlu0 %2050
    %2052 = vrot.lane.b32.xlu0 %v2049, 56
    %v2053 = vpop.permute.xlu0 %2052
    %v2055 = vsel %vm1792, %v2051, 0
    %v2058 = vsel %vm1792, %v2053, 0
    %2060 = vmatpush.bf16.xpose.msra.mxu0 0
    %2061 = vmatpush.bf16.xpose.msra.mxu0 0
    %2062 = vmatpush.bf16.xpose.msra.mxu0 0
    %2063 = vmatpush.bf16.xpose.msra.mxu0 0
    %2064 = vmatpush.bf16.xpose.msra.mxu0 0
    %2065 = vmatpush.bf16.xpose.msra.mxu0 0
    %2066 = vmatpush.bf16.xpose.msra.mxu0 0
    %2067 = vmatpush.bf16.xpose.msra.mxu0 %v2058
    %2068 = vmatmul.bf16.gmra.mxu0 %v2055
    %v2069 = vpop.f32.mrf.mxu0
    %v2070 = vadd.f32 0.0, %v2069
    %v2071 = vpop.f32.mrf.mxu0
    %v2072 = vadd.f32 0.0, %v2071
    %2073 = vdwg.mxu0
    %v2076 = vunpack.c.l.b16 %v1675
    %v2077 = vunpack.c.l.b16 %v1676
    %v2078 = vpack.c.b16 %v2077, %v2076
    %2079 = vrot.lane.b32.xlu0 %v2078, 64
    %v2080 = vpop.permute.xlu0 %2079
    %2081 = vrot.lane.b32.xlu0 %v2078, 56
    %v2082 = vpop.permute.xlu0 %2081
    %v2084 = vsel %vm1792, %v2080, 0
    %v2087 = vsel %vm1792, %v2082, 0
    %2089 = vmatpush.bf16.xpose.msra.mxu0 0
    %2090 = vmatpush.bf16.xpose.msra.mxu0 0
    %2091 = vmatpush.bf16.xpose.msra.mxu0 0
    %2092 = vmatpush.bf16.xpose.msra.mxu0 0
    %2093 = vmatpush.bf16.xpose.msra.mxu0 0
    %2094 = vmatpush.bf16.xpose.msra.mxu0 0
    %2095 = vmatpush.bf16.xpose.msra.mxu0 0
    %2096 = vmatpush.bf16.xpose.msra.mxu0 %v2087
    %2097 = vmatmul.bf16.gmra.mxu0 %v2084
    %v2098 = vpop.f32.mrf.mxu0
    %v2099 = vadd.f32 0.0, %v2098
    %v2100 = vpop.f32.mrf.mxu0
    %v2101 = vadd.f32 0.0, %v2100
    %2102 = vdwg.mxu0
    %v2105 = vunpack.c.l.b16 %v1677
    %v2106 = vunpack.c.l.b16 %v1678
    %v2107 = vpack.c.b16 %v2106, %v2105
    %2108 = vrot.lane.b32.xlu0 %v2107, 64
    %v2109 = vpop.permute.xlu0 %2108
    %2110 = vrot.lane.b32.xlu0 %v2107, 56
    %v2111 = vpop.permute.xlu0 %2110
    %v2113 = vsel %vm1792, %v2109, 0
    %v2116 = vsel %vm1792, %v2111, 0
    %2118 = vmatpush.bf16.xpose.msra.mxu0 0
    %2119 = vmatpush.bf16.xpose.msra.mxu0 0
    %2120 = vmatpush.bf16.xpose.msra.mxu0 0
    %2121 = vmatpush.bf16.xpose.msra.mxu0 0
    %2122 = vmatpush.bf16.xpose.msra.mxu0 0
    %2123 = vmatpush.bf16.xpose.msra.mxu0 0
    %2124 = vmatpush.bf16.xpose.msra.mxu0 0
    %2125 = vmatpush.bf16.xpose.msra.mxu0 %v2116
    %2126 = vmatmul.bf16.gmra.mxu0 %v2113
    %v2127 = vpop.f32.mrf.mxu0
    %v2128 = vadd.f32 0.0, %v2127
    %v2129 = vpop.f32.mrf.mxu0
    %v2130 = vadd.f32 0.0, %v2129
    %2131 = vdwg.mxu0
    %v2134 = vunpack.c.l.b16 %v1679
    %v2135 = vunpack.c.l.b16 %v1680
    %v2136 = vpack.c.b16 %v2135, %v2134
    %2137 = vrot.lane.b32.xlu0 %v2136, 64
    %v2138 = vpop.permute.xlu0 %2137
    %2139 = vrot.lane.b32.xlu0 %v2136, 56
    %v2140 = vpop.permute.xlu0 %2139
    %v2142 = vsel %vm1792, %v2138, 0
    %v2145 = vsel %vm1792, %v2140, 0
    %2147 = vmatpush.bf16.xpose.msra.mxu0 0
    %2148 = vmatpush.bf16.xpose.msra.mxu0 0
    %2149 = vmatpush.bf16.xpose.msra.mxu0 0
    %2150 = vmatpush.bf16.xpose.msra.mxu0 0
    %2151 = vmatpush.bf16.xpose.msra.mxu0 0
    %2152 = vmatpush.bf16.xpose.msra.mxu0 0
    %2153 = vmatpush.bf16.xpose.msra.mxu0 0
    %2154 = vmatpush.bf16.xpose.msra.mxu0 %v2145
    %2155 = vmatmul.bf16.gmra.mxu0 %v2142
    %v2156 = vpop.f32.mrf.mxu0
    %v2157 = vadd.f32 0.0, %v2156
    %v2158 = vpop.f32.mrf.mxu0
    %v2159 = vadd.f32 0.0, %v2158
    %2160 = vdwg.mxu0
    %v2163 = vunpack.c.l.b16 %v1681
    %v2164 = vunpack.c.l.b16 %v1682
    %v2165 = vpack.c.b16 %v2164, %v2163
    %2166 = vrot.lane.b32.xlu0 %v2165, 64
    %v2167 = vpop.permute.xlu0 %2166
    %2168 = vrot.lane.b32.xlu0 %v2165, 56
    %v2169 = vpop.permute.xlu0 %2168
    %v2171 = vsel %vm1792, %v2167, 0
    %v2174 = vsel %vm1792, %v2169, 0
    %2176 = vmatpush.bf16.xpose.msra.mxu0 0
    %2177 = vmatpush.bf16.xpose.msra.mxu0 0
    %2178 = vmatpush.bf16.xpose.msra.mxu0 0
    %2179 = vmatpush.bf16.xpose.msra.mxu0 0
    %2180 = vmatpush.bf16.xpose.msra.mxu0 0
    %2181 = vmatpush.bf16.xpose.msra.mxu0 0
    %2182 = vmatpush.bf16.xpose.msra.mxu0 0
    %2183 = vmatpush.bf16.xpose.msra.mxu0 %v2174
    %2184 = vmatmul.bf16.gmra.mxu0 %v2171
    %v2185 = vpop.f32.mrf.mxu0
    %v2186 = vadd.f32 0.0, %v2185
    %v2187 = vpop.f32.mrf.mxu0
    %v2188 = vadd.f32 0.0, %v2187
    %2189 = vdwg.mxu0
    %v2192 = vunpack.c.l.b16 %v1683
    %v2193 = vunpack.c.l.b16 %v1684
    %v2194 = vpack.c.b16 %v2193, %v2192
    %2195 = vrot.lane.b32.xlu0 %v2194, 64
    %v2196 = vpop.permute.xlu0 %2195
    %2197 = vrot.lane.b32.xlu0 %v2194, 56
    %v2198 = vpop.permute.xlu0 %2197
    %v2200 = vsel %vm1792, %v2196, 0
    %v2203 = vsel %vm1792, %v2198, 0
    %2205 = vmatpush.bf16.xpose.msra.mxu0 0
    %2206 = vmatpush.bf16.xpose.msra.mxu0 0
    %2207 = vmatpush.bf16.xpose.msra.mxu0 0
    %2208 = vmatpush.bf16.xpose.msra.mxu0 0
    %2209 = vmatpush.bf16.xpose.msra.mxu0 0
    %2210 = vmatpush.bf16.xpose.msra.mxu0 0
    %2211 = vmatpush.bf16.xpose.msra.mxu0 0
    %2212 = vmatpush.bf16.xpose.msra.mxu0 %v2203
    %2213 = vmatmul.bf16.gmra.mxu0 %v2200
    %v2214 = vpop.f32.mrf.mxu0
    %v2215 = vadd.f32 0.0, %v2214
    %v2216 = vpop.f32.mrf.mxu0
    %v2217 = vadd.f32 0.0, %v2216
    %2218 = vdwg.mxu0
    %v2221 = vunpack.c.l.b16 %v1685
    %v2222 = vunpack.c.l.b16 %v1686
    %v2223 = vpack.c.b16 %v2222, %v2221
    %2224 = vrot.lane.b32.xlu0 %v2223, 64
    %v2225 = vpop.permute.xlu0 %2224
    %2226 = vrot.lane.b32.xlu0 %v2223, 56
    %v2227 = vpop.permute.xlu0 %2226
    %v2229 = vsel %vm1792, %v2225, 0
    %v2232 = vsel %vm1792, %v2227, 0
    %2234 = vmatpush.bf16.xpose.msra.mxu0 0
    %2235 = vmatpush.bf16.xpose.msra.mxu0 0
    %2236 = vmatpush.bf16.xpose.msra.mxu0 0
    %2237 = vmatpush.bf16.xpose.msra.mxu0 0
    %2238 = vmatpush.bf16.xpose.msra.mxu0 0
    %2239 = vmatpush.bf16.xpose.msra.mxu0 0
    %2240 = vmatpush.bf16.xpose.msra.mxu0 0
    %2241 = vmatpush.bf16.xpose.msra.mxu0 %v2232
    %2242 = vmatmul.bf16.gmra.mxu0 %v2229
    %v2243 = vpop.f32.mrf.mxu0
    %v2244 = vadd.f32 0.0, %v2243
    %v2245 = vpop.f32.mrf.mxu0
    %v2246 = vadd.f32 0.0, %v2245
    %2247 = vdwg.mxu0
    %v2250 = vunpack.c.l.b16 %v1687
    %v2251 = vunpack.c.l.b16 %v1688
    %v2252 = vpack.c.b16 %v2251, %v2250
    %2253 = vrot.lane.b32.xlu0 %v2252, 64
    %v2254 = vpop.permute.xlu0 %2253
    %2255 = vrot.lane.b32.xlu0 %v2252, 56
    %v2256 = vpop.permute.xlu0 %2255
    %v2258 = vsel %vm1792, %v2254, 0
    %v2261 = vsel %vm1792, %v2256, 0
    %2263 = vmatpush.bf16.xpose.msra.mxu0 0
    %2264 = vmatpush.bf16.xpose.msra.mxu0 0
    %2265 = vmatpush.bf16.xpose.msra.mxu0 0
    %2266 = vmatpush.bf16.xpose.msra.mxu0 0
    %2267 = vmatpush.bf16.xpose.msra.mxu0 0
    %2268 = vmatpush.bf16.xpose.msra.mxu0 0
    %2269 = vmatpush.bf16.xpose.msra.mxu0 0
    %2270 = vmatpush.bf16.xpose.msra.mxu0 %v2261
    %2271 = vmatmul.bf16.gmra.mxu0 %v2258
    %v2272 = vpop.f32.mrf.mxu0
    %v2273 = vadd.f32 0.0, %v2272
    %v2274 = vpop.f32.mrf.mxu0
    %v2275 = vadd.f32 0.0, %v2274
    %2276 = vdwg.mxu0
    %v2279 = vunpack.c.l.b16 %v1689
    %v2280 = vunpack.c.l.b16 %v1690
    %v2281 = vpack.c.b16 %v2280, %v2279
    %2282 = vrot.lane.b32.xlu0 %v2281, 64
    %v2283 = vpop.permute.xlu0 %2282
    %2284 = vrot.lane.b32.xlu0 %v2281, 56
    %v2285 = vpop.permute.xlu0 %2284
    %v2287 = vsel %vm1792, %v2283, 0
    %v2290 = vsel %vm1792, %v2285, 0
    %2292 = vmatpush.bf16.xpose.msra.mxu0 0
    %2293 = vmatpush.bf16.xpose.msra.mxu0 0
    %2294 = vmatpush.bf16.xpose.msra.mxu0 0
    %2295 = vmatpush.bf16.xpose.msra.mxu0 0
    %2296 = vmatpush.bf16.xpose.msra.mxu0 0
    %2297 = vmatpush.bf16.xpose.msra.mxu0 0
    %2298 = vmatpush.bf16.xpose.msra.mxu0 0
    %2299 = vmatpush.bf16.xpose.msra.mxu0 %v2290
    %2300 = vmatmul.bf16.gmra.mxu0 %v2287
    %v2301 = vpop.f32.mrf.mxu0
    %v2302 = vadd.f32 0.0, %v2301
    %v2303 = vpop.f32.mrf.mxu0
    %v2304 = vadd.f32 0.0, %v2303
    %2305 = vdwg.mxu0
    %v2308 = vunpack.c.l.b16 %v1691
    %v2309 = vunpack.c.l.b16 %v1692
    %v2310 = vpack.c.b16 %v2309, %v2308
    %2311 = vrot.lane.b32.xlu0 %v2310, 64
    %v2312 = vpop.permute.xlu0 %2311
    %2313 = vrot.lane.b32.xlu0 %v2310, 56
    %v2314 = vpop.permute.xlu0 %2313
    %v2316 = vsel %vm1792, %v2312, 0
    %v2319 = vsel %vm1792, %v2314, 0
    %2321 = vmatpush.bf16.xpose.msra.mxu0 0
    %2322 = vmatpush.bf16.xpose.msra.mxu0 0
    %2323 = vmatpush.bf16.xpose.msra.mxu0 0
    %2324 = vmatpush.bf16.xpose.msra.mxu0 0
    %2325 = vmatpush.bf16.xpose.msra.mxu0 0
    %2326 = vmatpush.bf16.xpose.msra.mxu0 0
    %2327 = vmatpush.bf16.xpose.msra.mxu0 0
    %2328 = vmatpush.bf16.xpose.msra.mxu0 %v2319
    %2329 = vmatmul.bf16.gmra.mxu0 %v2316
    %v2330 = vpop.f32.mrf.mxu0
    %v2331 = vadd.f32 0.0, %v2330
    %v2332 = vpop.f32.mrf.mxu0
    %v2333 = vadd.f32 0.0, %v2332
    %2334 = vdwg.mxu0
    %v2337 = vunpack.c.l.b16 %v1693
    %v2338 = vunpack.c.l.b16 %v1694
    %v2339 = vpack.c.b16 %v2338, %v2337
    %2340 = vrot.lane.b32.xlu0 %v2339, 64
    %v2341 = vpop.permute.xlu0 %2340
    %2342 = vrot.lane.b32.xlu0 %v2339, 56
    %v2343 = vpop.permute.xlu0 %2342
    %v2345 = vsel %vm1792, %v2341, 0
    %v2348 = vsel %vm1792, %v2343, 0
    %2350 = vmatpush.bf16.xpose.msra.mxu0 0
    %2351 = vmatpush.bf16.xpose.msra.mxu0 0
    %2352 = vmatpush.bf16.xpose.msra.mxu0 0
    %2353 = vmatpush.bf16.xpose.msra.mxu0 0
    %2354 = vmatpush.bf16.xpose.msra.mxu0 0
    %2355 = vmatpush.bf16.xpose.msra.mxu0 0
    %2356 = vmatpush.bf16.xpose.msra.mxu0 0
    %2357 = vmatpush.bf16.xpose.msra.mxu0 %v2348
    %2358 = vmatmul.bf16.gmra.mxu0 %v2345
    %v2359 = vpop.f32.mrf.mxu0
    %v2360 = vadd.f32 0.0, %v2359
    %v2361 = vpop.f32.mrf.mxu0
    %v2362 = vadd.f32 0.0, %v2361
    %2363 = vdwg.mxu0
    %v2366 = vunpack.c.l.b16 %v1695
    %v2367 = vunpack.c.l.b16 %v1696
    %v2368 = vpack.c.b16 %v2367, %v2366
    %2369 = vrot.lane.b32.xlu0 %v2368, 64
    %v2370 = vpop.permute.xlu0 %2369
    %2371 = vrot.lane.b32.xlu0 %v2368, 56
    %v2372 = vpop.permute.xlu0 %2371
    %v2374 = vsel %vm1792, %v2370, 0
    %v2377 = vsel %vm1792, %v2372, 0
    %2379 = vmatpush.bf16.xpose.msra.mxu0 0
    %2380 = vmatpush.bf16.xpose.msra.mxu0 0
    %2381 = vmatpush.bf16.xpose.msra.mxu0 0
    %2382 = vmatpush.bf16.xpose.msra.mxu0 0
    %2383 = vmatpush.bf16.xpose.msra.mxu0 0
    %2384 = vmatpush.bf16.xpose.msra.mxu0 0
    %2385 = vmatpush.bf16.xpose.msra.mxu0 0
    %2386 = vmatpush.bf16.xpose.msra.mxu0 %v2377
    %2387 = vmatmul.bf16.gmra.mxu0 %v2374
    %v2388 = vpop.f32.mrf.mxu0
    %v2389 = vadd.f32 0.0, %v2388
    %v2390 = vpop.f32.mrf.mxu0
    %v2391 = vadd.f32 0.0, %v2390
    %2392 = vdwg.mxu0
    %v2395 = vunpack.c.l.b16 %v1697
    %v2396 = vunpack.c.l.b16 %v1698
    %v2397 = vpack.c.b16 %v2396, %v2395
    %2398 = vrot.lane.b32.xlu0 %v2397, 64
    %v2399 = vpop.permute.xlu0 %2398
    %2400 = vrot.lane.b32.xlu0 %v2397, 56
    %v2401 = vpop.permute.xlu0 %2400
    %v2403 = vsel %vm1792, %v2399, 0
    %v2406 = vsel %vm1792, %v2401, 0
    %2408 = vmatpush.bf16.xpose.msra.mxu0 0
    %2409 = vmatpush.bf16.xpose.msra.mxu0 0
    %2410 = vmatpush.bf16.xpose.msra.mxu0 0
    %2411 = vmatpush.bf16.xpose.msra.mxu0 0
    %2412 = vmatpush.bf16.xpose.msra.mxu0 0
    %2413 = vmatpush.bf16.xpose.msra.mxu0 0
    %2414 = vmatpush.bf16.xpose.msra.mxu0 0
    %2415 = vmatpush.bf16.xpose.msra.mxu0 %v2406
    %2416 = vmatmul.bf16.gmra.mxu0 %v2403
    %v2417 = vpop.f32.mrf.mxu0
    %v2418 = vadd.f32 0.0, %v2417
    %v2419 = vpop.f32.mrf.mxu0
    %v2420 = vadd.f32 0.0, %v2419
    %2421 = vdwg.mxu0
    %v2424 = vunpack.c.l.b16 %v1699
    %v2425 = vunpack.c.l.b16 %v1700
    %v2426 = vpack.c.b16 %v2425, %v2424
    %2427 = vrot.lane.b32.xlu0 %v2426, 64
    %v2428 = vpop.permute.xlu0 %2427
    %2429 = vrot.lane.b32.xlu0 %v2426, 56
    %v2430 = vpop.permute.xlu0 %2429
    %v2432 = vsel %vm1792, %v2428, 0
    %v2435 = vsel %vm1792, %v2430, 0
    %2437 = vmatpush.bf16.xpose.msra.mxu0 0
    %2438 = vmatpush.bf16.xpose.msra.mxu0 0
    %2439 = vmatpush.bf16.xpose.msra.mxu0 0
    %2440 = vmatpush.bf16.xpose.msra.mxu0 0
    %2441 = vmatpush.bf16.xpose.msra.mxu0 0
    %2442 = vmatpush.bf16.xpose.msra.mxu0 0
    %2443 = vmatpush.bf16.xpose.msra.mxu0 0
    %2444 = vmatpush.bf16.xpose.msra.mxu0 %v2435
    %2445 = vmatmul.bf16.gmra.mxu0 %v2432
    %v2446 = vpop.f32.mrf.mxu0
    %v2447 = vadd.f32 0.0, %v2446
    %v2448 = vpop.f32.mrf.mxu0
    %v2449 = vadd.f32 0.0, %v2448
    %2450 = vdwg.mxu0
    %v2453 = vunpack.c.l.b16 %v1701
    %v2454 = vunpack.c.l.b16 %v1702
    %v2455 = vpack.c.b16 %v2454, %v2453
    %2456 = vrot.lane.b32.xlu0 %v2455, 64
    %v2457 = vpop.permute.xlu0 %2456
    %2458 = vrot.lane.b32.xlu0 %v2455, 56
    %v2459 = vpop.permute.xlu0 %2458
    %v2461 = vsel %vm1792, %v2457, 0
    %v2464 = vsel %vm1792, %v2459, 0
    %2466 = vmatpush.bf16.xpose.msra.mxu0 0
    %2467 = vmatpush.bf16.xpose.msra.mxu0 0
    %2468 = vmatpush.bf16.xpose.msra.mxu0 0
    %2469 = vmatpush.bf16.xpose.msra.mxu0 0
    %2470 = vmatpush.bf16.xpose.msra.mxu0 0
    %2471 = vmatpush.bf16.xpose.msra.mxu0 0
    %2472 = vmatpush.bf16.xpose.msra.mxu0 0
    %2473 = vmatpush.bf16.xpose.msra.mxu0 %v2464
    %2474 = vmatmul.bf16.gmra.mxu0 %v2461
    %v2475 = vpop.f32.mrf.mxu0
    %v2476 = vadd.f32 0.0, %v2475
    %v2477 = vpop.f32.mrf.mxu0
    %v2478 = vadd.f32 0.0, %v2477
    %2479 = vdwg.mxu0
    %v2482 = vunpack.c.l.b16 %v1703
    %v2483 = vunpack.c.l.b16 %v1704
    %v2484 = vpack.c.b16 %v2483, %v2482
    %2485 = vrot.lane.b32.xlu0 %v2484, 64
    %v2486 = vpop.permute.xlu0 %2485
    %2487 = vrot.lane.b32.xlu0 %v2484, 56
    %v2488 = vpop.permute.xlu0 %2487
    %v2490 = vsel %vm1792, %v2486, 0
    %v2493 = vsel %vm1792, %v2488, 0
    %2495 = vmatpush.bf16.xpose.msra.mxu0 0
    %2496 = vmatpush.bf16.xpose.msra.mxu0 0
    %2497 = vmatpush.bf16.xpose.msra.mxu0 0
    %2498 = vmatpush.bf16.xpose.msra.mxu0 0
    %2499 = vmatpush.bf16.xpose.msra.mxu0 0
    %2500 = vmatpush.bf16.xpose.msra.mxu0 0
    %2501 = vmatpush.bf16.xpose.msra.mxu0 0
    %2502 = vmatpush.bf16.xpose.msra.mxu0 %v2493
    %2503 = vmatmul.bf16.gmra.mxu0 %v2490
    %v2504 = vpop.f32.mrf.mxu0
    %v2505 = vadd.f32 0.0, %v2504
    %v2506 = vpop.f32.mrf.mxu0
    %v2507 = vadd.f32 0.0, %v2506
    %2508 = vdwg.mxu0
    %v2511 = vunpack.c.l.b16 %v1705
    %v2512 = vunpack.c.l.b16 %v1706
    %v2513 = vpack.c.b16 %v2512, %v2511
    %2514 = vrot.lane.b32.xlu0 %v2513, 64
    %v2515 = vpop.permute.xlu0 %2514
    %2516 = vrot.lane.b32.xlu0 %v2513, 56
    %v2517 = vpop.permute.xlu0 %2516
    %v2519 = vsel %vm1792, %v2515, 0
    %v2522 = vsel %vm1792, %v2517, 0
    %2524 = vmatpush.bf16.xpose.msra.mxu0 0
    %2525 = vmatpush.bf16.xpose.msra.mxu0 0
    %2526 = vmatpush.bf16.xpose.msra.mxu0 0
    %2527 = vmatpush.bf16.xpose.msra.mxu0 0
    %2528 = vmatpush.bf16.xpose.msra.mxu0 0
    %2529 = vmatpush.bf16.xpose.msra.mxu0 0
    %2530 = vmatpush.bf16.xpose.msra.mxu0 0
    %2531 = vmatpush.bf16.xpose.msra.mxu0 %v2522
    %2532 = vmatmul.bf16.gmra.mxu0 %v2519
    %v2533 = vpop.f32.mrf.mxu0
    %v2534 = vadd.f32 0.0, %v2533
    %v2535 = vpop.f32.mrf.mxu0
    %v2536 = vadd.f32 0.0, %v2535
    %2537 = vdwg.mxu0
    %v2540 = vunpack.c.l.b16 %v1707
    %v2541 = vunpack.c.l.b16 %v1708
    %v2542 = vpack.c.b16 %v2541, %v2540
    %2543 = vrot.lane.b32.xlu0 %v2542, 64
    %v2544 = vpop.permute.xlu0 %2543
    %2545 = vrot.lane.b32.xlu0 %v2542, 56
    %v2546 = vpop.permute.xlu0 %2545
    %v2548 = vsel %vm1792, %v2544, 0
    %v2551 = vsel %vm1792, %v2546, 0
    %2553 = vmatpush.bf16.xpose.msra.mxu0 0
    %2554 = vmatpush.bf16.xpose.msra.mxu0 0
    %2555 = vmatpush.bf16.xpose.msra.mxu0 0
    %2556 = vmatpush.bf16.xpose.msra.mxu0 0
    %2557 = vmatpush.bf16.xpose.msra.mxu0 0
    %2558 = vmatpush.bf16.xpose.msra.mxu0 0
    %2559 = vmatpush.bf16.xpose.msra.mxu0 0
    %2560 = vmatpush.bf16.xpose.msra.mxu0 %v2551
    %2561 = vmatmul.bf16.gmra.mxu0 %v2548
    %v2562 = vpop.f32.mrf.mxu0
    %v2563 = vadd.f32 0.0, %v2562
    %v2564 = vpop.f32.mrf.mxu0
    %v2565 = vadd.f32 0.0, %v2564
    %2566 = vdwg.mxu0
    %v2569 = vunpack.c.l.b16 %v1709
    %v2570 = vunpack.c.l.b16 %v1710
    %v2571 = vpack.c.b16 %v2570, %v2569
    %2572 = vrot.lane.b32.xlu0 %v2571, 64
    %v2573 = vpop.permute.xlu0 %2572
    %2574 = vrot.lane.b32.xlu0 %v2571, 56
    %v2575 = vpop.permute.xlu0 %2574
    %v2577 = vsel %vm1792, %v2573, 0
    %v2580 = vsel %vm1792, %v2575, 0
    %2582 = vmatpush.bf16.xpose.msra.mxu0 0
    %2583 = vmatpush.bf16.xpose.msra.mxu0 0
    %2584 = vmatpush.bf16.xpose.msra.mxu0 0
    %2585 = vmatpush.bf16.xpose.msra.mxu0 0
    %2586 = vmatpush.bf16.xpose.msra.mxu0 0
    %2587 = vmatpush.bf16.xpose.msra.mxu0 0
    %2588 = vmatpush.bf16.xpose.msra.mxu0 0
    %2589 = vmatpush.bf16.xpose.msra.mxu0 %v2580
    %2590 = vmatmul.bf16.gmra.mxu0 %v2577
    %v2591 = vpop.f32.mrf.mxu0
    %v2592 = vadd.f32 0.0, %v2591
    %v2593 = vpop.f32.mrf.mxu0
    %v2594 = vadd.f32 0.0, %v2593
    %2595 = vdwg.mxu0
    %v2598 = vunpack.c.l.b16 %v1711
    %v2599 = vunpack.c.l.b16 %v1712
    %v2600 = vpack.c.b16 %v2599, %v2598
    %2601 = vrot.lane.b32.xlu0 %v2600, 64
    %v2602 = vpop.permute.xlu0 %2601
    %2603 = vrot.lane.b32.xlu0 %v2600, 56
    %v2604 = vpop.permute.xlu0 %2603
    %v2606 = vsel %vm1792, %v2602, 0
    %v2609 = vsel %vm1792, %v2604, 0
    %2611 = vmatpush.bf16.xpose.msra.mxu0 0
    %2612 = vmatpush.bf16.xpose.msra.mxu0 0
    %2613 = vmatpush.bf16.xpose.msra.mxu0 0
    %2614 = vmatpush.bf16.xpose.msra.mxu0 0
    %2615 = vmatpush.bf16.xpose.msra.mxu0 0
    %2616 = vmatpush.bf16.xpose.msra.mxu0 0
    %2617 = vmatpush.bf16.xpose.msra.mxu0 0
    %2618 = vmatpush.bf16.xpose.msra.mxu0 %v2609
    %2619 = vmatmul.bf16.gmra.mxu0 %v2606
    %v2620 = vpop.f32.mrf.mxu0
    %v2621 = vadd.f32 0.0, %v2620
    %v2622 = vpop.f32.mrf.mxu0
    %v2623 = vadd.f32 0.0, %v2622
    %2624 = vdwg.mxu0
    %v2627 = vunpack.c.l.b16 %v1713
    %v2628 = vunpack.c.l.b16 %v1714
    %v2629 = vpack.c.b16 %v2628, %v2627
    %2630 = vrot.lane.b32.xlu0 %v2629, 64
    %v2631 = vpop.permute.xlu0 %2630
    %2632 = vrot.lane.b32.xlu0 %v2629, 56
    %v2633 = vpop.permute.xlu0 %2632
    %v2635 = vsel %vm1792, %v2631, 0
    %v2638 = vsel %vm1792, %v2633, 0
    %2640 = vmatpush.bf16.xpose.msra.mxu0 0
    %2641 = vmatpush.bf16.xpose.msra.mxu0 0
    %2642 = vmatpush.bf16.xpose.msra.mxu0 0
    %2643 = vmatpush.bf16.xpose.msra.mxu0 0
    %2644 = vmatpush.bf16.xpose.msra.mxu0 0
    %2645 = vmatpush.bf16.xpose.msra.mxu0 0
    %2646 = vmatpush.bf16.xpose.msra.mxu0 0
    %2647 = vmatpush.bf16.xpose.msra.mxu0 %v2638
    %2648 = vmatmul.bf16.gmra.mxu0 %v2635
    %v2649 = vpop.f32.mrf.mxu0
    %v2650 = vadd.f32 0.0, %v2649
    %v2651 = vpop.f32.mrf.mxu0
    %v2652 = vadd.f32 0.0, %v2651
    %2653 = vdwg.mxu0
    %v2656 = vunpack.c.l.b16 %v1715
    %v2657 = vunpack.c.l.b16 %v1716
    %v2658 = vpack.c.b16 %v2657, %v2656
    %2659 = vrot.lane.b32.xlu0 %v2658, 64
    %v2660 = vpop.permute.xlu0 %2659
    %2661 = vrot.lane.b32.xlu0 %v2658, 56
    %v2662 = vpop.permute.xlu0 %2661
    %v2664 = vsel %vm1792, %v2660, 0
    %v2667 = vsel %vm1792, %v2662, 0
    %2669 = vmatpush.bf16.xpose.msra.mxu0 0
    %2670 = vmatpush.bf16.xpose.msra.mxu0 0
    %2671 = vmatpush.bf16.xpose.msra.mxu0 0
    %2672 = vmatpush.bf16.xpose.msra.mxu0 0
    %2673 = vmatpush.bf16.xpose.msra.mxu0 0
    %2674 = vmatpush.bf16.xpose.msra.mxu0 0
    %2675 = vmatpush.bf16.xpose.msra.mxu0 0
    %2676 = vmatpush.bf16.xpose.msra.mxu0 %v2667
    %2677 = vmatmul.bf16.gmra.mxu0 %v2664
    %v2678 = vpop.f32.mrf.mxu0
    %v2679 = vadd.f32 0.0, %v2678
    %v2680 = vpop.f32.mrf.mxu0
    %v2681 = vadd.f32 0.0, %v2680
    %2682 = vdwg.mxu0
    %v2685 = vunpack.c.l.b16 %v1717
    %v2686 = vunpack.c.l.b16 %v1718
    %v2687 = vpack.c.b16 %v2686, %v2685
    %2688 = vrot.lane.b32.xlu0 %v2687, 64
    %v2689 = vpop.permute.xlu0 %2688
    %2690 = vrot.lane.b32.xlu0 %v2687, 56
    %v2691 = vpop.permute.xlu0 %2690
    %v2693 = vsel %vm1792, %v2689, 0
    %v2696 = vsel %vm1792, %v2691, 0
    %2698 = vmatpush.bf16.xpose.msra.mxu0 0
    %2699 = vmatpush.bf16.xpose.msra.mxu0 0
    %2700 = vmatpush.bf16.xpose.msra.mxu0 0
    %2701 = vmatpush.bf16.xpose.msra.mxu0 0
    %2702 = vmatpush.bf16.xpose.msra.mxu0 0
    %2703 = vmatpush.bf16.xpose.msra.mxu0 0
    %2704 = vmatpush.bf16.xpose.msra.mxu0 0
    %2705 = vmatpush.bf16.xpose.msra.mxu0 %v2696
    %2706 = vmatmul.bf16.gmra.mxu0 %v2693
    %v2707 = vpop.f32.mrf.mxu0
    %v2708 = vadd.f32 0.0, %v2707
    %v2709 = vpop.f32.mrf.mxu0
    %v2710 = vadd.f32 0.0, %v2709
    %2711 = vdwg.mxu0
    %v2714 = vunpack.c.l.b16 %v1719
    %v2715 = vunpack.c.l.b16 %v1720
    %v2716 = vpack.c.b16 %v2715, %v2714
    %2717 = vrot.lane.b32.xlu0 %v2716, 64
    %v2718 = vpop.permute.xlu0 %2717
    %2719 = vrot.lane.b32.xlu0 %v2716, 56
    %v2720 = vpop.permute.xlu0 %2719
    %v2722 = vsel %vm1792, %v2718, 0
    %v2725 = vsel %vm1792, %v2720, 0
    %2727 = vmatpush.bf16.xpose.msra.mxu0 0
    %2728 = vmatpush.bf16.xpose.msra.mxu0 0
    %2729 = vmatpush.bf16.xpose.msra.mxu0 0
    %2730 = vmatpush.bf16.xpose.msra.mxu0 0
    %2731 = vmatpush.bf16.xpose.msra.mxu0 0
    %2732 = vmatpush.bf16.xpose.msra.mxu0 0
    %2733 = vmatpush.bf16.xpose.msra.mxu0 0
    %2734 = vmatpush.bf16.xpose.msra.mxu0 %v2725
    %2735 = vmatmul.bf16.gmra.mxu0 %v2722
    %v2736 = vpop.f32.mrf.mxu0
    %v2737 = vadd.f32 0.0, %v2736
    %v2738 = vpop.f32.mrf.mxu0
    %v2739 = vadd.f32 0.0, %v2738
    %2740 = vdwg.mxu0
    %v2743 = vunpack.c.l.b16 %v1721
    %v2744 = vunpack.c.l.b16 %v1722
    %v2745 = vpack.c.b16 %v2744, %v2743
    %2746 = vrot.lane.b32.xlu0 %v2745, 64
    %v2747 = vpop.permute.xlu0 %2746
    %2748 = vrot.lane.b32.xlu0 %v2745, 56
    %v2749 = vpop.permute.xlu0 %2748
    %v2751 = vsel %vm1792, %v2747, 0
    %v2754 = vsel %vm1792, %v2749, 0
    %2756 = vmatpush.bf16.xpose.msra.mxu0 0
    %2757 = vmatpush.bf16.xpose.msra.mxu0 0
    %2758 = vmatpush.bf16.xpose.msra.mxu0 0
    %2759 = vmatpush.bf16.xpose.msra.mxu0 0
    %2760 = vmatpush.bf16.xpose.msra.mxu0 0
    %2761 = vmatpush.bf16.xpose.msra.mxu0 0
    %2762 = vmatpush.bf16.xpose.msra.mxu0 0
    %2763 = vmatpush.bf16.xpose.msra.mxu0 %v2754
    %2764 = vmatmul.bf16.gmra.mxu0 %v2751
    %v2765 = vpop.f32.mrf.mxu0
    %v2766 = vadd.f32 0.0, %v2765
    %v2767 = vpop.f32.mrf.mxu0
    %v2768 = vadd.f32 0.0, %v2767
    %2769 = vdwg.mxu0
    %v2772 = vunpack.c.l.b16 %v1723
    %v2773 = vunpack.c.l.b16 %v1724
    %v2774 = vpack.c.b16 %v2773, %v2772
    %2775 = vrot.lane.b32.xlu0 %v2774, 64
    %v2776 = vpop.permute.xlu0 %2775
    %2777 = vrot.lane.b32.xlu0 %v2774, 56
    %v2778 = vpop.permute.xlu0 %2777
    %v2780 = vsel %vm1792, %v2776, 0
    %v2783 = vsel %vm1792, %v2778, 0
    %2785 = vmatpush.bf16.xpose.msra.mxu0 0
    %2786 = vmatpush.bf16.xpose.msra.mxu0 0
    %2787 = vmatpush.bf16.xpose.msra.mxu0 0
    %2788 = vmatpush.bf16.xpose.msra.mxu0 0
    %2789 = vmatpush.bf16.xpose.msra.mxu0 0
    %2790 = vmatpush.bf16.xpose.msra.mxu0 0
    %2791 = vmatpush.bf16.xpose.msra.mxu0 0
    %2792 = vmatpush.bf16.xpose.msra.mxu0 %v2783
    %2793 = vmatmul.bf16.gmra.mxu0 %v2780
    %v2794 = vpop.f32.mrf.mxu0
    %v2795 = vadd.f32 0.0, %v2794
    %v2796 = vpop.f32.mrf.mxu0
    %v2797 = vadd.f32 0.0, %v2796
    %2798 = vdwg.mxu0
    %v2801 = vunpack.c.l.b16 %v1725
    %v2802 = vunpack.c.l.b16 %v1726
    %v2803 = vpack.c.b16 %v2802, %v2801
    %2804 = vrot.lane.b32.xlu0 %v2803, 64
    %v2805 = vpop.permute.xlu0 %2804
    %2806 = vrot.lane.b32.xlu0 %v2803, 56
    %v2807 = vpop.permute.xlu0 %2806
    %v2809 = vsel %vm1792, %v2805, 0
    %v2812 = vsel %vm1792, %v2807, 0
    %2814 = vmatpush.bf16.xpose.msra.mxu0 0
    %2815 = vmatpush.bf16.xpose.msra.mxu0 0
    %2816 = vmatpush.bf16.xpose.msra.mxu0 0
    %2817 = vmatpush.bf16.xpose.msra.mxu0 0
    %2818 = vmatpush.bf16.xpose.msra.mxu0 0
    %2819 = vmatpush.bf16.xpose.msra.mxu0 0
    %2820 = vmatpush.bf16.xpose.msra.mxu0 0
    %2821 = vmatpush.bf16.xpose.msra.mxu0 %v2812
    %2822 = vmatmul.bf16.gmra.mxu0 %v2809
    %v2823 = vpop.f32.mrf.mxu0
    %v2824 = vadd.f32 0.0, %v2823
    %v2825 = vpop.f32.mrf.mxu0
    %v2826 = vadd.f32 0.0, %v2825
    %2827 = vdwg.mxu0
    %v2830 = vunpack.c.l.b16 %v1727
    %v2831 = vunpack.c.l.b16 %v1728
    %v2832 = vpack.c.b16 %v2831, %v2830
    %2833 = vrot.lane.b32.xlu0 %v2832, 64
    %v2834 = vpop.permute.xlu0 %2833
    %2835 = vrot.lane.b32.xlu0 %v2832, 56
    %v2836 = vpop.permute.xlu0 %2835
    %v2838 = vsel %vm1792, %v2834, 0
    %v2841 = vsel %vm1792, %v2836, 0
    %2843 = vmatpush.bf16.xpose.msra.mxu0 0
    %2844 = vmatpush.bf16.xpose.msra.mxu0 0
    %2845 = vmatpush.bf16.xpose.msra.mxu0 0
    %2846 = vmatpush.bf16.xpose.msra.mxu0 0
    %2847 = vmatpush.bf16.xpose.msra.mxu0 0
    %2848 = vmatpush.bf16.xpose.msra.mxu0 0
    %2849 = vmatpush.bf16.xpose.msra.mxu0 0
    %2850 = vmatpush.bf16.xpose.msra.mxu0 %v2841
    %2851 = vmatmul.bf16.gmra.mxu0 %v2838
    %v2852 = vpop.f32.mrf.mxu0
    %v2853 = vadd.f32 0.0, %v2852
    %v2854 = vpop.f32.mrf.mxu0
    %v2855 = vadd.f32 0.0, %v2854
    %2856 = vdwg.mxu0
    %v2859 = vunpack.c.l.b16 %v1729
    %v2860 = vunpack.c.l.b16 %v1730
    %v2861 = vpack.c.b16 %v2860, %v2859
    %2862 = vrot.lane.b32.xlu0 %v2861, 64
    %v2863 = vpop.permute.xlu0 %2862
    %2864 = vrot.lane.b32.xlu0 %v2861, 56
    %v2865 = vpop.permute.xlu0 %2864
    %v2867 = vsel %vm1792, %v2863, 0
    %v2870 = vsel %vm1792, %v2865, 0
    %2872 = vmatpush.bf16.xpose.msra.mxu0 0
    %2873 = vmatpush.bf16.xpose.msra.mxu0 0
    %2874 = vmatpush.bf16.xpose.msra.mxu0 0
    %2875 = vmatpush.bf16.xpose.msra.mxu0 0
    %2876 = vmatpush.bf16.xpose.msra.mxu0 0
    %2877 = vmatpush.bf16.xpose.msra.mxu0 0
    %2878 = vmatpush.bf16.xpose.msra.mxu0 0
    %2879 = vmatpush.bf16.xpose.msra.mxu0 %v2870
    %2880 = vmatmul.bf16.gmra.mxu0 %v2867
    %v2881 = vpop.f32.mrf.mxu0
    %v2882 = vadd.f32 0.0, %v2881
    %v2883 = vpop.f32.mrf.mxu0
    %v2884 = vadd.f32 0.0, %v2883
    %2885 = vdwg.mxu0
    %v2888 = vunpack.c.l.b16 %v1731
    %v2889 = vunpack.c.l.b16 %v1732
    %v2890 = vpack.c.b16 %v2889, %v2888
    %2891 = vrot.lane.b32.xlu0 %v2890, 64
    %v2892 = vpop.permute.xlu0 %2891
    %2893 = vrot.lane.b32.xlu0 %v2890, 56
    %v2894 = vpop.permute.xlu0 %2893
    %v2896 = vsel %vm1792, %v2892, 0
    %v2899 = vsel %vm1792, %v2894, 0
    %2901 = vmatpush.bf16.xpose.msra.mxu0 0
    %2902 = vmatpush.bf16.xpose.msra.mxu0 0
    %2903 = vmatpush.bf16.xpose.msra.mxu0 0
    %2904 = vmatpush.bf16.xpose.msra.mxu0 0
    %2905 = vmatpush.bf16.xpose.msra.mxu0 0
    %2906 = vmatpush.bf16.xpose.msra.mxu0 0
    %2907 = vmatpush.bf16.xpose.msra.mxu0 0
    %2908 = vmatpush.bf16.xpose.msra.mxu0 %v2899
    %2909 = vmatmul.bf16.gmra.mxu0 %v2896
    %v2910 = vpop.f32.mrf.mxu0
    %v2911 = vadd.f32 0.0, %v2910
    %v2912 = vpop.f32.mrf.mxu0
    %v2913 = vadd.f32 0.0, %v2912
    %2914 = vdwg.mxu0
    %v2917 = vunpack.c.l.b16 %v1733
    %v2918 = vunpack.c.l.b16 %v1734
    %v2919 = vpack.c.b16 %v2918, %v2917
    %2920 = vrot.lane.b32.xlu0 %v2919, 64
    %v2921 = vpop.permute.xlu0 %2920
    %2922 = vrot.lane.b32.xlu0 %v2919, 56
    %v2923 = vpop.permute.xlu0 %2922
    %v2925 = vsel %vm1792, %v2921, 0
    %v2928 = vsel %vm1792, %v2923, 0
    %2930 = vmatpush.bf16.xpose.msra.mxu0 0
    %2931 = vmatpush.bf16.xpose.msra.mxu0 0
    %2932 = vmatpush.bf16.xpose.msra.mxu0 0
    %2933 = vmatpush.bf16.xpose.msra.mxu0 0
    %2934 = vmatpush.bf16.xpose.msra.mxu0 0
    %2935 = vmatpush.bf16.xpose.msra.mxu0 0
    %2936 = vmatpush.bf16.xpose.msra.mxu0 0
    %2937 = vmatpush.bf16.xpose.msra.mxu0 %v2928
    %2938 = vmatmul.bf16.gmra.mxu0 %v2925
    %v2939 = vpop.f32.mrf.mxu0
    %v2940 = vadd.f32 0.0, %v2939
    %v2941 = vpop.f32.mrf.mxu0
    %v2942 = vadd.f32 0.0, %v2941
    %2943 = vdwg.mxu0
    %v2946 = vunpack.c.l.b16 %v1735
    %v2947 = vunpack.c.l.b16 %v1736
    %v2948 = vpack.c.b16 %v2947, %v2946
    %2949 = vrot.lane.b32.xlu0 %v2948, 64
    %v2950 = vpop.permute.xlu0 %2949
    %2951 = vrot.lane.b32.xlu0 %v2948, 56
    %v2952 = vpop.permute.xlu0 %2951
    %v2954 = vsel %vm1792, %v2950, 0
    %v2957 = vsel %vm1792, %v2952, 0
    %2959 = vmatpush.bf16.xpose.msra.mxu0 0
    %2960 = vmatpush.bf16.xpose.msra.mxu0 0
    %2961 = vmatpush.bf16.xpose.msra.mxu0 0
    %2962 = vmatpush.bf16.xpose.msra.mxu0 0
    %2963 = vmatpush.bf16.xpose.msra.mxu0 0
    %2964 = vmatpush.bf16.xpose.msra.mxu0 0
    %2965 = vmatpush.bf16.xpose.msra.mxu0 0
    %2966 = vmatpush.bf16.xpose.msra.mxu0 %v2957
    %2967 = vmatmul.bf16.gmra.mxu0 %v2954
    %v2968 = vpop.f32.mrf.mxu0
    %v2969 = vadd.f32 0.0, %v2968
    %v2970 = vpop.f32.mrf.mxu0
    %v2971 = vadd.f32 0.0, %v2970
    %2972 = vdwg.mxu0
    %v2975 = vunpack.c.l.b16 %v1737
    %v2976 = vunpack.c.l.b16 %v1738
    %v2977 = vpack.c.b16 %v2976, %v2975
    %2978 = vrot.lane.b32.xlu0 %v2977, 64
    %v2979 = vpop.permute.xlu0 %2978
    %2980 = vrot.lane.b32.xlu0 %v2977, 56
    %v2981 = vpop.permute.xlu0 %2980
    %v2983 = vsel %vm1792, %v2979, 0
    %v2986 = vsel %vm1792, %v2981, 0
    %2988 = vmatpush.bf16.xpose.msra.mxu0 0
    %2989 = vmatpush.bf16.xpose.msra.mxu0 0
    %2990 = vmatpush.bf16.xpose.msra.mxu0 0
    %2991 = vmatpush.bf16.xpose.msra.mxu0 0
    %2992 = vmatpush.bf16.xpose.msra.mxu0 0
    %2993 = vmatpush.bf16.xpose.msra.mxu0 0
    %2994 = vmatpush.bf16.xpose.msra.mxu0 0
    %2995 = vmatpush.bf16.xpose.msra.mxu0 %v2986
    %2996 = vmatmul.bf16.gmra.mxu0 %v2983
    %v2997 = vpop.f32.mrf.mxu0
    %v2998 = vadd.f32 0.0, %v2997
    %v2999 = vpop.f32.mrf.mxu0
    %v3000 = vadd.f32 0.0, %v2999
    %3001 = vdwg.mxu0
    %v3004 = vunpack.c.l.b16 %v1739
    %v3005 = vunpack.c.l.b16 %v1740
    %v3006 = vpack.c.b16 %v3005, %v3004
    %3007 = vrot.lane.b32.xlu0 %v3006, 64
    %v3008 = vpop.permute.xlu0 %3007
    %3009 = vrot.lane.b32.xlu0 %v3006, 56
    %v3010 = vpop.permute.xlu0 %3009
    %v3012 = vsel %vm1792, %v3008, 0
    %v3015 = vsel %vm1792, %v3010, 0
    %3017 = vmatpush.bf16.xpose.msra.mxu0 0
    %3018 = vmatpush.bf16.xpose.msra.mxu0 0
    %3019 = vmatpush.bf16.xpose.msra.mxu0 0
    %3020 = vmatpush.bf16.xpose.msra.mxu0 0
    %3021 = vmatpush.bf16.xpose.msra.mxu0 0
    %3022 = vmatpush.bf16.xpose.msra.mxu0 0
    %3023 = vmatpush.bf16.xpose.msra.mxu0 0
    %3024 = vmatpush.bf16.xpose.msra.mxu0 %v3015
    %3025 = vmatmul.bf16.gmra.mxu0 %v3012
    %v3026 = vpop.f32.mrf.mxu0
    %v3027 = vadd.f32 0.0, %v3026
    %v3028 = vpop.f32.mrf.mxu0
    %v3029 = vadd.f32 0.0, %v3028
    %3030 = vdwg.mxu0
    %v3033 = vunpack.c.l.b16 %v1741
    %v3034 = vunpack.c.l.b16 %v1742
    %v3035 = vpack.c.b16 %v3034, %v3033
    %3036 = vrot.lane.b32.xlu0 %v3035, 64
    %v3037 = vpop.permute.xlu0 %3036
    %3038 = vrot.lane.b32.xlu0 %v3035, 56
    %v3039 = vpop.permute.xlu0 %3038
    %v3041 = vsel %vm1792, %v3037, 0
    %v3044 = vsel %vm1792, %v3039, 0
    %3046 = vmatpush.bf16.xpose.msra.mxu0 0
    %3047 = vmatpush.bf16.xpose.msra.mxu0 0
    %3048 = vmatpush.bf16.xpose.msra.mxu0 0
    %3049 = vmatpush.bf16.xpose.msra.mxu0 0
    %3050 = vmatpush.bf16.xpose.msra.mxu0 0
    %3051 = vmatpush.bf16.xpose.msra.mxu0 0
    %3052 = vmatpush.bf16.xpose.msra.mxu0 0
    %3053 = vmatpush.bf16.xpose.msra.mxu0 %v3044
    %3054 = vmatmul.bf16.gmra.mxu0 %v3041
    %v3055 = vpop.f32.mrf.mxu0
    %v3056 = vadd.f32 0.0, %v3055
    %v3057 = vpop.f32.mrf.mxu0
    %v3058 = vadd.f32 0.0, %v3057
    %3059 = vdwg.mxu0
    %v3062 = vunpack.c.l.b16 %v1743
    %v3063 = vunpack.c.l.b16 %v1744
    %v3064 = vpack.c.b16 %v3063, %v3062
    %3065 = vrot.lane.b32.xlu0 %v3064, 64
    %v3066 = vpop.permute.xlu0 %3065
    %3067 = vrot.lane.b32.xlu0 %v3064, 56
    %v3068 = vpop.permute.xlu0 %3067
    %v3070 = vsel %vm1792, %v3066, 0
    %v3073 = vsel %vm1792, %v3068, 0
    %3075 = vmatpush.bf16.xpose.msra.mxu0 0
    %3076 = vmatpush.bf16.xpose.msra.mxu0 0
    %3077 = vmatpush.bf16.xpose.msra.mxu0 0
    %3078 = vmatpush.bf16.xpose.msra.mxu0 0
    %3079 = vmatpush.bf16.xpose.msra.mxu0 0
    %3080 = vmatpush.bf16.xpose.msra.mxu0 0
    %3081 = vmatpush.bf16.xpose.msra.mxu0 0
    %3082 = vmatpush.bf16.xpose.msra.mxu0 %v3073
    %3083 = vmatmul.bf16.gmra.mxu0 %v3070
    %v3084 = vpop.f32.mrf.mxu0
    %v3085 = vadd.f32 0.0, %v3084
    %v3086 = vpop.f32.mrf.mxu0
    %v3087 = vadd.f32 0.0, %v3086
    %3088 = vdwg.mxu0
    %v3091 = vunpack.c.l.b16 %v1745
    %v3092 = vunpack.c.l.b16 %v1746
    %v3093 = vpack.c.b16 %v3092, %v3091
    %3094 = vrot.lane.b32.xlu0 %v3093, 64
    %v3095 = vpop.permute.xlu0 %3094
    %3096 = vrot.lane.b32.xlu0 %v3093, 56
    %v3097 = vpop.permute.xlu0 %3096
    %v3099 = vsel %vm1792, %v3095, 0
    %v3102 = vsel %vm1792, %v3097, 0
    %3104 = vmatpush.bf16.xpose.msra.mxu0 0
    %3105 = vmatpush.bf16.xpose.msra.mxu0 0
    %3106 = vmatpush.bf16.xpose.msra.mxu0 0
    %3107 = vmatpush.bf16.xpose.msra.mxu0 0
    %3108 = vmatpush.bf16.xpose.msra.mxu0 0
    %3109 = vmatpush.bf16.xpose.msra.mxu0 0
    %3110 = vmatpush.bf16.xpose.msra.mxu0 0
    %3111 = vmatpush.bf16.xpose.msra.mxu0 %v3102
    %3112 = vmatmul.bf16.gmra.mxu0 %v3099
    %v3113 = vpop.f32.mrf.mxu0
    %v3114 = vadd.f32 0.0, %v3113
    %v3115 = vpop.f32.mrf.mxu0
    %v3116 = vadd.f32 0.0, %v3115
    %3117 = vdwg.mxu0
    %v3120 = vunpack.c.l.b16 %v1747
    %v3121 = vunpack.c.l.b16 %v1748
    %v3122 = vpack.c.b16 %v3121, %v3120
    %3123 = vrot.lane.b32.xlu0 %v3122, 64
    %v3124 = vpop.permute.xlu0 %3123
    %3125 = vrot.lane.b32.xlu0 %v3122, 56
    %v3126 = vpop.permute.xlu0 %3125
    %v3128 = vsel %vm1792, %v3124, 0
    %v3131 = vsel %vm1792, %v3126, 0
    %3133 = vmatpush.bf16.xpose.msra.mxu0 0
    %3134 = vmatpush.bf16.xpose.msra.mxu0 0
    %3135 = vmatpush.bf16.xpose.msra.mxu0 0
    %3136 = vmatpush.bf16.xpose.msra.mxu0 0
    %3137 = vmatpush.bf16.xpose.msra.mxu0 0
    %3138 = vmatpush.bf16.xpose.msra.mxu0 0
    %3139 = vmatpush.bf16.xpose.msra.mxu0 0
    %3140 = vmatpush.bf16.xpose.msra.mxu0 %v3131
    %3141 = vmatmul.bf16.gmra.mxu0 %v3128
    %v3142 = vpop.f32.mrf.mxu0
    %v3143 = vadd.f32 0.0, %v3142
    %v3144 = vpop.f32.mrf.mxu0
    %v3145 = vadd.f32 0.0, %v3144
    %3146 = vdwg.mxu0
    %v3149 = vunpack.c.l.b16 %v1749
    %v3150 = vunpack.c.l.b16 %v1750
    %v3151 = vpack.c.b16 %v3150, %v3149
    %3152 = vrot.lane.b32.xlu0 %v3151, 64
    %v3153 = vpop.permute.xlu0 %3152
    %3154 = vrot.lane.b32.xlu0 %v3151, 56
    %v3155 = vpop.permute.xlu0 %3154
    %v3157 = vsel %vm1792, %v3153, 0
    %v3160 = vsel %vm1792, %v3155, 0
    %3162 = vmatpush.bf16.xpose.msra.mxu0 0
    %3163 = vmatpush.bf16.xpose.msra.mxu0 0
    %3164 = vmatpush.bf16.xpose.msra.mxu0 0
    %3165 = vmatpush.bf16.xpose.msra.mxu0 0
    %3166 = vmatpush.bf16.xpose.msra.mxu0 0
    %3167 = vmatpush.bf16.xpose.msra.mxu0 0
    %3168 = vmatpush.bf16.xpose.msra.mxu0 0
    %3169 = vmatpush.bf16.xpose.msra.mxu0 %v3160
    %3170 = vmatmul.bf16.gmra.mxu0 %v3157
    %v3171 = vpop.f32.mrf.mxu0
    %v3172 = vadd.f32 0.0, %v3171
    %v3173 = vpop.f32.mrf.mxu0
    %v3174 = vadd.f32 0.0, %v3173
    %3175 = vdwg.mxu0
    %v3178 = vunpack.c.l.b16 %v1751
    %v3179 = vunpack.c.l.b16 %v1752
    %v3180 = vpack.c.b16 %v3179, %v3178
    %3181 = vrot.lane.b32.xlu0 %v3180, 64
    %v3182 = vpop.permute.xlu0 %3181
    %3183 = vrot.lane.b32.xlu0 %v3180, 56
    %v3184 = vpop.permute.xlu0 %3183
    %v3186 = vsel %vm1792, %v3182, 0
    %v3189 = vsel %vm1792, %v3184, 0
    %3191 = vmatpush.bf16.xpose.msra.mxu0 0
    %3192 = vmatpush.bf16.xpose.msra.mxu0 0
    %3193 = vmatpush.bf16.xpose.msra.mxu0 0
    %3194 = vmatpush.bf16.xpose.msra.mxu0 0
    %3195 = vmatpush.bf16.xpose.msra.mxu0 0
    %3196 = vmatpush.bf16.xpose.msra.mxu0 0
    %3197 = vmatpush.bf16.xpose.msra.mxu0 0
    %3198 = vmatpush.bf16.xpose.msra.mxu0 %v3189
    %3199 = vmatmul.bf16.gmra.mxu0 %v3186
    %v3200 = vpop.f32.mrf.mxu0
    %v3201 = vadd.f32 0.0, %v3200
    %v3202 = vpop.f32.mrf.mxu0
    %v3203 = vadd.f32 0.0, %v3202
    %3204 = vdwg.mxu0
    %v3207 = vunpack.c.l.b16 %v1753
    %v3208 = vunpack.c.l.b16 %v1754
    %v3209 = vpack.c.b16 %v3208, %v3207
    %3210 = vrot.lane.b32.xlu0 %v3209, 64
    %v3211 = vpop.permute.xlu0 %3210
    %3212 = vrot.lane.b32.xlu0 %v3209, 56
    %v3213 = vpop.permute.xlu0 %3212
    %v3215 = vsel %vm1792, %v3211, 0
    %v3218 = vsel %vm1792, %v3213, 0
    %3220 = vmatpush.bf16.xpose.msra.mxu0 0
    %3221 = vmatpush.bf16.xpose.msra.mxu0 0
    %3222 = vmatpush.bf16.xpose.msra.mxu0 0
    %3223 = vmatpush.bf16.xpose.msra.mxu0 0
    %3224 = vmatpush.bf16.xpose.msra.mxu0 0
    %3225 = vmatpush.bf16.xpose.msra.mxu0 0
    %3226 = vmatpush.bf16.xpose.msra.mxu0 0
    %3227 = vmatpush.bf16.xpose.msra.mxu0 %v3218
    %3228 = vmatmul.bf16.gmra.mxu0 %v3215
    %v3229 = vpop.f32.mrf.mxu0
    %v3230 = vadd.f32 0.0, %v3229
    %v3231 = vpop.f32.mrf.mxu0
    %v3232 = vadd.f32 0.0, %v3231
    %3233 = vdwg.mxu0
    %v3236 = vunpack.c.l.b16 %v1755
    %v3237 = vunpack.c.l.b16 %v1756
    %v3238 = vpack.c.b16 %v3237, %v3236
    %3239 = vrot.lane.b32.xlu0 %v3238, 64
    %v3240 = vpop.permute.xlu0 %3239
    %3241 = vrot.lane.b32.xlu0 %v3238, 56
    %v3242 = vpop.permute.xlu0 %3241
    %v3244 = vsel %vm1792, %v3240, 0
    %v3247 = vsel %vm1792, %v3242, 0
    %3249 = vmatpush.bf16.xpose.msra.mxu0 0
    %3250 = vmatpush.bf16.xpose.msra.mxu0 0
    %3251 = vmatpush.bf16.xpose.msra.mxu0 0
    %3252 = vmatpush.bf16.xpose.msra.mxu0 0
    %3253 = vmatpush.bf16.xpose.msra.mxu0 0
    %3254 = vmatpush.bf16.xpose.msra.mxu0 0
    %3255 = vmatpush.bf16.xpose.msra.mxu0 0
    %3256 = vmatpush.bf16.xpose.msra.mxu0 %v3247
    %3257 = vmatmul.bf16.gmra.mxu0 %v3244
    %v3258 = vpop.f32.mrf.mxu0
    %v3259 = vadd.f32 0.0, %v3258
    %v3260 = vpop.f32.mrf.mxu0
    %v3261 = vadd.f32 0.0, %v3260
    %3262 = vdwg.mxu0
    %v3265 = vunpack.c.l.b16 %v1757
    %v3266 = vunpack.c.l.b16 %v1758
    %v3267 = vpack.c.b16 %v3266, %v3265
    %3268 = vrot.lane.b32.xlu0 %v3267, 64
    %v3269 = vpop.permute.xlu0 %3268
    %3270 = vrot.lane.b32.xlu0 %v3267, 56
    %v3271 = vpop.permute.xlu0 %3270
    %v3273 = vsel %vm1792, %v3269, 0
    %v3276 = vsel %vm1792, %v3271, 0
    %3278 = vmatpush.bf16.xpose.msra.mxu0 0
    %3279 = vmatpush.bf16.xpose.msra.mxu0 0
    %3280 = vmatpush.bf16.xpose.msra.mxu0 0
    %3281 = vmatpush.bf16.xpose.msra.mxu0 0
    %3282 = vmatpush.bf16.xpose.msra.mxu0 0
    %3283 = vmatpush.bf16.xpose.msra.mxu0 0
    %3284 = vmatpush.bf16.xpose.msra.mxu0 0
    %3285 = vmatpush.bf16.xpose.msra.mxu0 %v3276
    %3286 = vmatmul.bf16.gmra.mxu0 %v3273
    %v3287 = vpop.f32.mrf.mxu0
    %v3288 = vadd.f32 0.0, %v3287
    %v3289 = vpop.f32.mrf.mxu0
    %v3290 = vadd.f32 0.0, %v3289
    %3291 = vdwg.mxu0
    %v3294 = vunpack.c.l.b16 %v1759
    %v3295 = vunpack.c.l.b16 %v1760
    %v3296 = vpack.c.b16 %v3295, %v3294
    %3297 = vrot.lane.b32.xlu0 %v3296, 64
    %v3298 = vpop.permute.xlu0 %3297
    %3299 = vrot.lane.b32.xlu0 %v3296, 56
    %v3300 = vpop.permute.xlu0 %3299
    %v3302 = vsel %vm1792, %v3298, 0
    %v3305 = vsel %vm1792, %v3300, 0
    %3307 = vmatpush.bf16.xpose.msra.mxu0 0
    %3308 = vmatpush.bf16.xpose.msra.mxu0 0
    %3309 = vmatpush.bf16.xpose.msra.mxu0 0
    %3310 = vmatpush.bf16.xpose.msra.mxu0 0
    %3311 = vmatpush.bf16.xpose.msra.mxu0 0
    %3312 = vmatpush.bf16.xpose.msra.mxu0 0
    %3313 = vmatpush.bf16.xpose.msra.mxu0 0
    %3314 = vmatpush.bf16.xpose.msra.mxu0 %v3305
    %3315 = vmatmul.bf16.gmra.mxu0 %v3302
    %v3316 = vpop.f32.mrf.mxu0
    %v3317 = vadd.f32 0.0, %v3316
    %v3318 = vpop.f32.mrf.mxu0
    %v3319 = vadd.f32 0.0, %v3318
    %3320 = vdwg.mxu0
    %v3323 = vunpack.c.l.b16 %v1761
    %v3324 = vunpack.c.l.b16 %v1762
    %v3325 = vpack.c.b16 %v3324, %v3323
    %3326 = vrot.lane.b32.xlu0 %v3325, 64
    %v3327 = vpop.permute.xlu0 %3326
    %3328 = vrot.lane.b32.xlu0 %v3325, 56
    %v3329 = vpop.permute.xlu0 %3328
    %v3331 = vsel %vm1792, %v3327, 0
    %v3334 = vsel %vm1792, %v3329, 0
    %3336 = vmatpush.bf16.xpose.msra.mxu0 0
    %3337 = vmatpush.bf16.xpose.msra.mxu0 0
    %3338 = vmatpush.bf16.xpose.msra.mxu0 0
    %3339 = vmatpush.bf16.xpose.msra.mxu0 0
    %3340 = vmatpush.bf16.xpose.msra.mxu0 0
    %3341 = vmatpush.bf16.xpose.msra.mxu0 0
    %3342 = vmatpush.bf16.xpose.msra.mxu0 0
    %3343 = vmatpush.bf16.xpose.msra.mxu0 %v3334
    %3344 = vmatmul.bf16.gmra.mxu0 %v3331
    %v3345 = vpop.f32.mrf.mxu0
    %v3346 = vadd.f32 0.0, %v3345
    %v3347 = vpop.f32.mrf.mxu0
    %v3348 = vadd.f32 0.0, %v3347
    %3349 = vdwg.mxu0
    %v3352 = vunpack.c.l.b16 %v1763
    %v3353 = vunpack.c.l.b16 %v1764
    %v3354 = vpack.c.b16 %v3353, %v3352
    %3355 = vrot.lane.b32.xlu0 %v3354, 64
    %v3356 = vpop.permute.xlu0 %3355
    %3357 = vrot.lane.b32.xlu0 %v3354, 56
    %v3358 = vpop.permute.xlu0 %3357
    %v3360 = vsel %vm1792, %v3356, 0
    %v3363 = vsel %vm1792, %v3358, 0
    %3365 = vmatpush.bf16.xpose.msra.mxu0 0
    %3366 = vmatpush.bf16.xpose.msra.mxu0 0
    %3367 = vmatpush.bf16.xpose.msra.mxu0 0
    %3368 = vmatpush.bf16.xpose.msra.mxu0 0
    %3369 = vmatpush.bf16.xpose.msra.mxu0 0
    %3370 = vmatpush.bf16.xpose.msra.mxu0 0
    %3371 = vmatpush.bf16.xpose.msra.mxu0 0
    %3372 = vmatpush.bf16.xpose.msra.mxu0 %v3363
    %3373 = vmatmul.bf16.gmra.mxu0 %v3360
    %v3374 = vpop.f32.mrf.mxu0
    %v3375 = vadd.f32 0.0, %v3374
    %v3376 = vpop.f32.mrf.mxu0
    %v3377 = vadd.f32 0.0, %v3376
    %3378 = vdwg.mxu0
    %v3381 = vunpack.c.l.b16 %v1765
    %v3382 = vunpack.c.l.b16 %v1766
    %v3383 = vpack.c.b16 %v3382, %v3381
    %3384 = vrot.lane.b32.xlu0 %v3383, 64
    %v3385 = vpop.permute.xlu0 %3384
    %3386 = vrot.lane.b32.xlu0 %v3383, 56
    %v3387 = vpop.permute.xlu0 %3386
    %v3389 = vsel %vm1792, %v3385, 0
    %v3392 = vsel %vm1792, %v3387, 0
    %3394 = vmatpush.bf16.xpose.msra.mxu0 0
    %3395 = vmatpush.bf16.xpose.msra.mxu0 0
    %3396 = vmatpush.bf16.xpose.msra.mxu0 0
    %3397 = vmatpush.bf16.xpose.msra.mxu0 0
    %3398 = vmatpush.bf16.xpose.msra.mxu0 0
    %3399 = vmatpush.bf16.xpose.msra.mxu0 0
    %3400 = vmatpush.bf16.xpose.msra.mxu0 0
    %3401 = vmatpush.bf16.xpose.msra.mxu0 %v3392
    %3402 = vmatmul.bf16.gmra.mxu0 %v3389
    %v3403 = vpop.f32.mrf.mxu0
    %v3404 = vadd.f32 0.0, %v3403
    %v3405 = vpop.f32.mrf.mxu0
    %v3406 = vadd.f32 0.0, %v3405
    %3407 = vdwg.mxu0
    %v3410 = vunpack.c.l.b16 %v1767
    %v3411 = vunpack.c.l.b16 %v1768
    %v3412 = vpack.c.b16 %v3411, %v3410
    %3413 = vrot.lane.b32.xlu0 %v3412, 64
    %v3414 = vpop.permute.xlu0 %3413
    %3415 = vrot.lane.b32.xlu0 %v3412, 56
    %v3416 = vpop.permute.xlu0 %3415
    %v3418 = vsel %vm1792, %v3414, 0
    %v3421 = vsel %vm1792, %v3416, 0
    %3423 = vmatpush.bf16.xpose.msra.mxu0 0
    %3424 = vmatpush.bf16.xpose.msra.mxu0 0
    %3425 = vmatpush.bf16.xpose.msra.mxu0 0
    %3426 = vmatpush.bf16.xpose.msra.mxu0 0
    %3427 = vmatpush.bf16.xpose.msra.mxu0 0
    %3428 = vmatpush.bf16.xpose.msra.mxu0 0
    %3429 = vmatpush.bf16.xpose.msra.mxu0 0
    %3430 = vmatpush.bf16.xpose.msra.mxu0 %v3421
    %3431 = vmatmul.bf16.gmra.mxu0 %v3418
    %v3432 = vpop.f32.mrf.mxu0
    %v3433 = vadd.f32 0.0, %v3432
    %v3434 = vpop.f32.mrf.mxu0
    %v3435 = vadd.f32 0.0, %v3434
    %3436 = vdwg.mxu0
    %v3439 = vunpack.c.l.b16 %v1769
    %v3440 = vunpack.c.l.b16 %v1770
    %v3441 = vpack.c.b16 %v3440, %v3439
    %3442 = vrot.lane.b32.xlu0 %v3441, 64
    %v3443 = vpop.permute.xlu0 %3442
    %3444 = vrot.lane.b32.xlu0 %v3441, 56
    %v3445 = vpop.permute.xlu0 %3444
    %v3447 = vsel %vm1792, %v3443, 0
    %v3450 = vsel %vm1792, %v3445, 0
    %3452 = vmatpush.bf16.xpose.msra.mxu0 0
    %3453 = vmatpush.bf16.xpose.msra.mxu0 0
    %3454 = vmatpush.bf16.xpose.msra.mxu0 0
    %3455 = vmatpush.bf16.xpose.msra.mxu0 0
    %3456 = vmatpush.bf16.xpose.msra.mxu0 0
    %3457 = vmatpush.bf16.xpose.msra.mxu0 0
    %3458 = vmatpush.bf16.xpose.msra.mxu0 0
    %3459 = vmatpush.bf16.xpose.msra.mxu0 %v3450
    %3460 = vmatmul.bf16.gmra.mxu0 %v3447
    %v3461 = vpop.f32.mrf.mxu0
    %v3462 = vadd.f32 0.0, %v3461
    %v3463 = vpop.f32.mrf.mxu0
    %v3464 = vadd.f32 0.0, %v3463
    %3465 = vdwg.mxu0
    %v3468 = vunpack.c.l.b16 %v1771
    %v3469 = vunpack.c.l.b16 %v1772
    %v3470 = vpack.c.b16 %v3469, %v3468
    %3471 = vrot.lane.b32.xlu0 %v3470, 64
    %v3472 = vpop.permute.xlu0 %3471
    %3473 = vrot.lane.b32.xlu0 %v3470, 56
    %v3474 = vpop.permute.xlu0 %3473
    %v3476 = vsel %vm1792, %v3472, 0
    %v3479 = vsel %vm1792, %v3474, 0
    %3481 = vmatpush.bf16.xpose.msra.mxu0 0
    %3482 = vmatpush.bf16.xpose.msra.mxu0 0
    %3483 = vmatpush.bf16.xpose.msra.mxu0 0
    %3484 = vmatpush.bf16.xpose.msra.mxu0 0
    %3485 = vmatpush.bf16.xpose.msra.mxu0 0
    %3486 = vmatpush.bf16.xpose.msra.mxu0 0
    %3487 = vmatpush.bf16.xpose.msra.mxu0 0
    %3488 = vmatpush.bf16.xpose.msra.mxu0 %v3479
    %3489 = vmatmul.bf16.gmra.mxu0 %v3476
    %v3490 = vpop.f32.mrf.mxu0
    %v3491 = vadd.f32 0.0, %v3490
    %v3492 = vpop.f32.mrf.mxu0
    %v3493 = vadd.f32 0.0, %v3492
    %3494 = vdwg.mxu0
    %v3497 = vunpack.c.l.b16 %v1773
    %v3498 = vunpack.c.l.b16 %v1774
    %v3499 = vpack.c.b16 %v3498, %v3497
    %3500 = vrot.lane.b32.xlu0 %v3499, 64
    %v3501 = vpop.permute.xlu0 %3500
    %3502 = vrot.lane.b32.xlu0 %v3499, 56
    %v3503 = vpop.permute.xlu0 %3502
    %v3505 = vsel %vm1792, %v3501, 0
    %v3508 = vsel %vm1792, %v3503, 0
    %3510 = vmatpush.bf16.xpose.msra.mxu0 0
    %3511 = vmatpush.bf16.xpose.msra.mxu0 0
    %3512 = vmatpush.bf16.xpose.msra.mxu0 0
    %3513 = vmatpush.bf16.xpose.msra.mxu0 0
    %3514 = vmatpush.bf16.xpose.msra.mxu0 0
    %3515 = vmatpush.bf16.xpose.msra.mxu0 0
    %3516 = vmatpush.bf16.xpose.msra.mxu0 0
    %3517 = vmatpush.bf16.xpose.msra.mxu0 %v3508
    %3518 = vmatmul.bf16.gmra.mxu0 %v3505
    %v3519 = vpop.f32.mrf.mxu0
    %v3520 = vadd.f32 0.0, %v3519
    %v3521 = vpop.f32.mrf.mxu0
    %v3522 = vadd.f32 0.0, %v3521
    %3523 = vdwg.mxu0
    %v3526 = vunpack.c.l.b16 %v1775
    %v3527 = vunpack.c.l.b16 %v1776
    %v3528 = vpack.c.b16 %v3527, %v3526
    %3529 = vrot.lane.b32.xlu0 %v3528, 64
    %v3530 = vpop.permute.xlu0 %3529
    %3531 = vrot.lane.b32.xlu0 %v3528, 56
    %v3532 = vpop.permute.xlu0 %3531
    %v3534 = vsel %vm1792, %v3530, 0
    %v3537 = vsel %vm1792, %v3532, 0
    %3539 = vmatpush.bf16.xpose.msra.mxu0 0
    %3540 = vmatpush.bf16.xpose.msra.mxu0 0
    %3541 = vmatpush.bf16.xpose.msra.mxu0 0
    %3542 = vmatpush.bf16.xpose.msra.mxu0 0
    %3543 = vmatpush.bf16.xpose.msra.mxu0 0
    %3544 = vmatpush.bf16.xpose.msra.mxu0 0
    %3545 = vmatpush.bf16.xpose.msra.mxu0 0
    %3546 = vmatpush.bf16.xpose.msra.mxu0 %v3537
    %3547 = vmatmul.bf16.gmra.mxu0 %v3534
    %v3548 = vpop.f32.mrf.mxu0
    %v3549 = vadd.f32 0.0, %v3548
    %v3550 = vpop.f32.mrf.mxu0
    %v3551 = vadd.f32 0.0, %v3550
    %3552 = vdwg.mxu0
    %v3555 = vunpack.c.l.b16 %v1777
    %v3556 = vunpack.c.l.b16 %v1778
    %v3557 = vpack.c.b16 %v3556, %v3555
    %3558 = vrot.lane.b32.xlu0 %v3557, 64
    %v3559 = vpop.permute.xlu0 %3558
    %3560 = vrot.lane.b32.xlu0 %v3557, 56
    %v3561 = vpop.permute.xlu0 %3560
    %v3563 = vsel %vm1792, %v3559, 0
    %v3566 = vsel %vm1792, %v3561, 0
    %3568 = vmatpush.bf16.xpose.msra.mxu0 0
    %3569 = vmatpush.bf16.xpose.msra.mxu0 0
    %3570 = vmatpush.bf16.xpose.msra.mxu0 0
    %3571 = vmatpush.bf16.xpose.msra.mxu0 0
    %3572 = vmatpush.bf16.xpose.msra.mxu0 0
    %3573 = vmatpush.bf16.xpose.msra.mxu0 0
    %3574 = vmatpush.bf16.xpose.msra.mxu0 0
    %3575 = vmatpush.bf16.xpose.msra.mxu0 %v3566
    %3576 = vmatmul.bf16.gmra.mxu0 %v3563
    %v3577 = vpop.f32.mrf.mxu0
    %v3578 = vadd.f32 0.0, %v3577
    %v3579 = vpop.f32.mrf.mxu0
    %v3580 = vadd.f32 0.0, %v3579
    %3581 = vdwg.mxu0
    %v3584 = vunpack.c.l.b16 %v1779
    %v3585 = vunpack.c.l.b16 %v1780
    %v3586 = vpack.c.b16 %v3585, %v3584
    %3587 = vrot.lane.b32.xlu0 %v3586, 64
    %v3588 = vpop.permute.xlu0 %3587
    %3589 = vrot.lane.b32.xlu0 %v3586, 56
    %v3590 = vpop.permute.xlu0 %3589
    %v3592 = vsel %vm1792, %v3588, 0
    %v3595 = vsel %vm1792, %v3590, 0
    %3597 = vmatpush.bf16.xpose.msra.mxu0 0
    %3598 = vmatpush.bf16.xpose.msra.mxu0 0
    %3599 = vmatpush.bf16.xpose.msra.mxu0 0
    %3600 = vmatpush.bf16.xpose.msra.mxu0 0
    %3601 = vmatpush.bf16.xpose.msra.mxu0 0
    %3602 = vmatpush.bf16.xpose.msra.mxu0 0
    %3603 = vmatpush.bf16.xpose.msra.mxu0 0
    %3604 = vmatpush.bf16.xpose.msra.mxu0 %v3595
    %3605 = vmatmul.bf16.gmra.mxu0 %v3592
    %v3606 = vpop.f32.mrf.mxu0
    %v3607 = vadd.f32 0.0, %v3606
    %v3608 = vpop.f32.mrf.mxu0
    %v3609 = vadd.f32 0.0, %v3608
    %3610 = vdwg.mxu0
    %v3613 = vunpack.c.l.b16 %v1781
    %v3614 = vunpack.c.l.b16 %v1782
    %v3615 = vpack.c.b16 %v3614, %v3613
    %3616 = vrot.lane.b32.xlu0 %v3615, 64
    %v3617 = vpop.permute.xlu0 %3616
    %3618 = vrot.lane.b32.xlu0 %v3615, 56
    %v3619 = vpop.permute.xlu0 %3618
    %v3621 = vsel %vm1792, %v3617, 0
    %v3624 = vsel %vm1792, %v3619, 0
    %3626 = vmatpush.bf16.xpose.msra.mxu0 0
    %3627 = vmatpush.bf16.xpose.msra.mxu0 0
    %3628 = vmatpush.bf16.xpose.msra.mxu0 0
    %3629 = vmatpush.bf16.xpose.msra.mxu0 0
    %3630 = vmatpush.bf16.xpose.msra.mxu0 0
    %3631 = vmatpush.bf16.xpose.msra.mxu0 0
    %3632 = vmatpush.bf16.xpose.msra.mxu0 0
    %3633 = vmatpush.bf16.xpose.msra.mxu0 %v3624
    %3634 = vmatmul.bf16.gmra.mxu0 %v3621
    %v3635 = vpop.f32.mrf.mxu0
    %v3636 = vadd.f32 0.0, %v3635
    %v3637 = vpop.f32.mrf.mxu0
    %v3638 = vadd.f32 0.0, %v3637
    %3639 = vdwg.mxu0
    %v3640 = vadd.f32 %v2737, %v1653
    %v3641 = vadd.f32 %v2739, %v1654
    %v3642 = vadd.f32 %v2766, %v1653
    %v3643 = vadd.f32 %v2768, %v1654
    %v3644 = vadd.f32 %v2795, %v1653
    %v3645 = vadd.f32 %v2797, %v1654
    %v3646 = vadd.f32 %v2824, %v1653
    %v3647 = vadd.f32 %v2826, %v1654
    %v3648 = vadd.f32 %v2853, %v1653
    %v3649 = vadd.f32 %v2855, %v1654
    %v3650 = vadd.f32 %v2882, %v1653
    %v3651 = vadd.f32 %v2884, %v1654
    %v3652 = vadd.f32 %v2911, %v1653
    %v3653 = vadd.f32 %v2913, %v1654
    %v3654 = vadd.f32 %v2940, %v1653
    %v3655 = vadd.f32 %v2942, %v1654
    %v3656 = vadd.f32 %v2969, %v1653
    %v3657 = vadd.f32 %v2971, %v1654
    %v3658 = vadd.f32 %v2998, %v1653
    %v3659 = vadd.f32 %v3000, %v1654
    %v3660 = vadd.f32 %v3027, %v1653
    %v3661 = vadd.f32 %v3029, %v1654
    %v3662 = vadd.f32 %v3056, %v1653
    %v3663 = vadd.f32 %v3058, %v1654
    %v3664 = vadd.f32 %v3085, %v1653
    %v3665 = vadd.f32 %v3087, %v1654
    %v3666 = vadd.f32 %v3114, %v1653
    %v3667 = vadd.f32 %v3116, %v1654
    %v3668 = vadd.f32 %v3143, %v1653
    %v3669 = vadd.f32 %v3145, %v1654
    %v3670 = vadd.f32 %v3172, %v1653
    %v3671 = vadd.f32 %v3174, %v1654
    %v3672 = vadd.f32 %v3201, %v1653
    %v3673 = vadd.f32 %v3203, %v1654
    %v3674 = vadd.f32 %v3230, %v1653
    %v3675 = vadd.f32 %v3232, %v1654
    %v3676 = vadd.f32 %v3259, %v1653
    %v3677 = vadd.f32 %v3261, %v1654
    %v3678 = vadd.f32 %v3288, %v1653
    %v3679 = vadd.f32 %v3290, %v1654
    %v3680 = vadd.f32 %v3317, %v1653
    %v3681 = vadd.f32 %v3319, %v1654
    %v3682 = vadd.f32 %v3346, %v1653
    %v3683 = vadd.f32 %v3348, %v1654
    %v3684 = vadd.f32 %v3375, %v1653
    %v3685 = vadd.f32 %v3377, %v1654
    %v3686 = vadd.f32 %v3404, %v1653
    %v3687 = vadd.f32 %v3406, %v1654
    %v3688 = vadd.f32 %v3433, %v1653
    %v3689 = vadd.f32 %v3435, %v1654
    %v3690 = vadd.f32 %v3462, %v1653
    %v3691 = vadd.f32 %v3464, %v1654
    %v3692 = vadd.f32 %v3491, %v1653
    %v3693 = vadd.f32 %v3493, %v1654
    %v3694 = vadd.f32 %v3520, %v1653
    %v3695 = vadd.f32 %v3522, %v1654
    %v3696 = vadd.f32 %v3549, %v1653
    %v3697 = vadd.f32 %v3551, %v1654
    %v3698 = vadd.f32 %v3578, %v1653
    %v3699 = vadd.f32 %v3580, %v1654
    %v3700 = vadd.f32 %v3607, %v1653
    %v3701 = vadd.f32 %v3609, %v1654
    %v3702 = vadd.f32 %v3636, %v1653
    %v3703 = vadd.f32 %v3638, %v1654
    %vm3704 = vcmask 130048
    %v3705 = vsel %vm3704, %v1809, -inf
    %3706 = vmax.xlane.f32.xlu0 %v3705
    %v3707 = vpop.xlane.xlu0 %3706
    %v3708 = vsel %vm3704, %v1811, -inf
    %3709 = vmax.xlane.f32.xlu0 %v3708
    %v3710 = vpop.xlane.xlu0 %3709
    %v3711 = vsel %vm3704, %v1838, -inf
    %3712 = vmax.xlane.f32.xlu0 %v3711
    %v3713 = vpop.xlane.xlu0 %3712
    %v3714 = vsel %vm3704, %v1840, -inf
    %3715 = vmax.xlane.f32.xlu0 %v3714
    %v3716 = vpop.xlane.xlu0 %3715
    %v3717 = vsel %vm3704, %v1867, -inf
    %3718 = vmax.xlane.f32.xlu0 %v3717
    %v3719 = vpop.xlane.xlu0 %3718
    %v3720 = vsel %vm3704, %v1869, -inf
    %3721 = vmax.xlane.f32.xlu0 %v3720
    %v3722 = vpop.xlane.xlu0 %3721
    %v3723 = vsel %vm3704, %v1896, -inf
    %3724 = vmax.xlane.f32.xlu0 %v3723
    %v3725 = vpop.xlane.xlu0 %3724
    %v3726 = vsel %vm3704, %v1898, -inf
    %3727 = vmax.xlane.f32.xlu0 %v3726
    %v3728 = vpop.xlane.xlu0 %3727
    %v3729 = vsel %vm3704, %v1925, -inf
    %3730 = vmax.xlane.f32.xlu0 %v3729
    %v3731 = vpop.xlane.xlu0 %3730
    %v3732 = vsel %vm3704, %v1927, -inf
    %3733 = vmax.xlane.f32.xlu0 %v3732
    %v3734 = vpop.xlane.xlu0 %3733
    %v3735 = vsel %vm3704, %v1954, -inf
    %3736 = vmax.xlane.f32.xlu0 %v3735
    %v3737 = vpop.xlane.xlu0 %3736
    %v3738 = vsel %vm3704, %v1956, -inf
    %3739 = vmax.xlane.f32.xlu0 %v3738
    %v3740 = vpop.xlane.xlu0 %3739
    %v3741 = vsel %vm3704, %v1983, -inf
    %3742 = vmax.xlane.f32.xlu0 %v3741
    %v3743 = vpop.xlane.xlu0 %3742
    %v3744 = vsel %vm3704, %v1985, -inf
    %3745 = vmax.xlane.f32.xlu0 %v3744
    %v3746 = vpop.xlane.xlu0 %3745
    %v3747 = vsel %vm3704, %v2012, -inf
    %3748 = vmax.xlane.f32.xlu0 %v3747
    %v3749 = vpop.xlane.xlu0 %3748
    %v3750 = vsel %vm3704, %v2014, -inf
    %3751 = vmax.xlane.f32.xlu0 %v3750
    %v3752 = vpop.xlane.xlu0 %3751
    %v3753 = vsel %vm3704, %v2041, -inf
    %3754 = vmax.xlane.f32.xlu0 %v3753
    %v3755 = vpop.xlane.xlu0 %3754
    %v3756 = vsel %vm3704, %v2043, -inf
    %3757 = vmax.xlane.f32.xlu0 %v3756
    %v3758 = vpop.xlane.xlu0 %3757
    %v3759 = vsel %vm3704, %v2070, -inf
    %3760 = vmax.xlane.f32.xlu0 %v3759
    %v3761 = vpop.xlane.xlu0 %3760
    %v3762 = vsel %vm3704, %v2072, -inf
    %3763 = vmax.xlane.f32.xlu0 %v3762
    %v3764 = vpop.xlane.xlu0 %3763
    %v3765 = vsel %vm3704, %v2099, -inf
    %3766 = vmax.xlane.f32.xlu0 %v3765
    %v3767 = vpop.xlane.xlu0 %3766
    %v3768 = vsel %vm3704, %v2101, -inf
    %3769 = vmax.xlane.f32.xlu0 %v3768
    %v3770 = vpop.xlane.xlu0 %3769
    %v3771 = vsel %vm3704, %v2128, -inf
    %3772 = vmax.xlane.f32.xlu0 %v3771
    %v3773 = vpop.xlane.xlu0 %3772
    %v3774 = vsel %vm3704, %v2130, -inf
    %3775 = vmax.xlane.f32.xlu0 %v3774
    %v3776 = vpop.xlane.xlu0 %3775
    %v3777 = vsel %vm3704, %v2157, -inf
    %3778 = vmax.xlane.f32.xlu0 %v3777
    %v3779 = vpop.xlane.xlu0 %3778
    %v3780 = vsel %vm3704, %v2159, -inf
    %3781 = vmax.xlane.f32.xlu0 %v3780
    %v3782 = vpop.xlane.xlu0 %3781
    %v3783 = vsel %vm3704, %v2186, -inf
    %3784 = vmax.xlane.f32.xlu0 %v3783
    %v3785 = vpop.xlane.xlu0 %3784
    %v3786 = vsel %vm3704, %v2188, -inf
    %3787 = vmax.xlane.f32.xlu0 %v3786
    %v3788 = vpop.xlane.xlu0 %3787
    %v3789 = vsel %vm3704, %v2215, -inf
    %3790 = vmax.xlane.f32.xlu0 %v3789
    %v3791 = vpop.xlane.xlu0 %3790
    %v3792 = vsel %vm3704, %v2217, -inf
    %3793 = vmax.xlane.f32.xlu0 %v3792
    %v3794 = vpop.xlane.xlu0 %3793
    %v3795 = vsel %vm3704, %v2244, -inf
    %3796 = vmax.xlane.f32.xlu0 %v3795
    %v3797 = vpop.xlane.xlu0 %3796
    %v3798 = vsel %vm3704, %v2246, -inf
    %3799 = vmax.xlane.f32.xlu0 %v3798
    %v3800 = vpop.xlane.xlu0 %3799
    %v3801 = vsel %vm3704, %v2273, -inf
    %3802 = vmax.xlane.f32.xlu0 %v3801
    %v3803 = vpop.xlane.xlu0 %3802
    %v3804 = vsel %vm3704, %v2275, -inf
    %3805 = vmax.xlane.f32.xlu0 %v3804
    %v3806 = vpop.xlane.xlu0 %3805
    %v3807 = vsel %vm3704, %v2302, -inf
    %3808 = vmax.xlane.f32.xlu0 %v3807
    %v3809 = vpop.xlane.xlu0 %3808
    %v3810 = vsel %vm3704, %v2304, -inf
    %3811 = vmax.xlane.f32.xlu0 %v3810
    %v3812 = vpop.xlane.xlu0 %3811
    %v3813 = vsel %vm3704, %v2331, -inf
    %3814 = vmax.xlane.f32.xlu0 %v3813
    %v3815 = vpop.xlane.xlu0 %3814
    %v3816 = vsel %vm3704, %v2333, -inf
    %3817 = vmax.xlane.f32.xlu0 %v3816
    %v3818 = vpop.xlane.xlu0 %3817
    %v3819 = vsel %vm3704, %v2360, -inf
    %3820 = vmax.xlane.f32.xlu0 %v3819
    %v3821 = vpop.xlane.xlu0 %3820
    %v3822 = vsel %vm3704, %v2362, -inf
    %3823 = vmax.xlane.f32.xlu0 %v3822
    %v3824 = vpop.xlane.xlu0 %3823
    %v3825 = vsel %vm3704, %v2389, -inf
    %3826 = vmax.xlane.f32.xlu0 %v3825
    %v3827 = vpop.xlane.xlu0 %3826
    %v3828 = vsel %vm3704, %v2391, -inf
    %3829 = vmax.xlane.f32.xlu0 %v3828
    %v3830 = vpop.xlane.xlu0 %3829
    %v3831 = vsel %vm3704, %v2418, -inf
    %3832 = vmax.xlane.f32.xlu0 %v3831
    %v3833 = vpop.xlane.xlu0 %3832
    %v3834 = vsel %vm3704, %v2420, -inf
    %3835 = vmax.xlane.f32.xlu0 %v3834
    %v3836 = vpop.xlane.xlu0 %3835
    %v3837 = vsel %vm3704, %v2447, -inf
    %3838 = vmax.xlane.f32.xlu0 %v3837
    %v3839 = vpop.xlane.xlu0 %3838
    %v3840 = vsel %vm3704, %v2449, -inf
    %3841 = vmax.xlane.f32.xlu0 %v3840
    %v3842 = vpop.xlane.xlu0 %3841
    %v3843 = vsel %vm3704, %v2476, -inf
    %3844 = vmax.xlane.f32.xlu0 %v3843
    %v3845 = vpop.xlane.xlu0 %3844
    %v3846 = vsel %vm3704, %v2478, -inf
    %3847 = vmax.xlane.f32.xlu0 %v3846
    %v3848 = vpop.xlane.xlu0 %3847
    %v3849 = vsel %vm3704, %v2505, -inf
    %3850 = vmax.xlane.f32.xlu0 %v3849
    %v3851 = vpop.xlane.xlu0 %3850
    %v3852 = vsel %vm3704, %v2507, -inf
    %3853 = vmax.xlane.f32.xlu0 %v3852
    %v3854 = vpop.xlane.xlu0 %3853
    %v3855 = vsel %vm3704, %v2534, -inf
    %3856 = vmax.xlane.f32.xlu0 %v3855
    %v3857 = vpop.xlane.xlu0 %3856
    %v3858 = vsel %vm3704, %v2536, -inf
    %3859 = vmax.xlane.f32.xlu0 %v3858
    %v3860 = vpop.xlane.xlu0 %3859
    %v3861 = vsel %vm3704, %v2563, -inf
    %3862 = vmax.xlane.f32.xlu0 %v3861
    %v3863 = vpop.xlane.xlu0 %3862
    %v3864 = vsel %vm3704, %v2565, -inf
    %3865 = vmax.xlane.f32.xlu0 %v3864
    %v3866 = vpop.xlane.xlu0 %3865
    %v3867 = vsel %vm3704, %v2592, -inf
    %3868 = vmax.xlane.f32.xlu0 %v3867
    %v3869 = vpop.xlane.xlu0 %3868
    %v3870 = vsel %vm3704, %v2594, -inf
    %3871 = vmax.xlane.f32.xlu0 %v3870
    %v3872 = vpop.xlane.xlu0 %3871
    %v3873 = vsel %vm3704, %v2621, -inf
    %3874 = vmax.xlane.f32.xlu0 %v3873
    %v3875 = vpop.xlane.xlu0 %3874
    %v3876 = vsel %vm3704, %v2623, -inf
    %3877 = vmax.xlane.f32.xlu0 %v3876
    %v3878 = vpop.xlane.xlu0 %3877
    %v3879 = vsel %vm3704, %v2650, -inf
    %3880 = vmax.xlane.f32.xlu0 %v3879
    %v3881 = vpop.xlane.xlu0 %3880
    %v3882 = vsel %vm3704, %v2652, -inf
    %3883 = vmax.xlane.f32.xlu0 %v3882
    %v3884 = vpop.xlane.xlu0 %3883
    %v3885 = vsel %vm3704, %v2679, -inf
    %3886 = vmax.xlane.f32.xlu0 %v3885
    %v3887 = vpop.xlane.xlu0 %3886
    %v3888 = vsel %vm3704, %v2681, -inf
    %3889 = vmax.xlane.f32.xlu0 %v3888
    %v3890 = vpop.xlane.xlu0 %3889
    %v3891 = vsel %vm3704, %v2708, -inf
    %3892 = vmax.xlane.f32.xlu0 %v3891
    %v3893 = vpop.xlane.xlu0 %3892
    %v3894 = vsel %vm3704, %v2710, -inf
    %3895 = vmax.xlane.f32.xlu0 %v3894
    %v3896 = vpop.xlane.xlu0 %3895
    %v3897 = vsel %vm3704, %v3640, -inf
    %3898 = vmax.xlane.f32.xlu0 %v3897
    %v3899 = vpop.xlane.xlu0 %3898
    %v3900 = vsel %vm3704, %v3641, -inf
    %3901 = vmax.xlane.f32.xlu0 %v3900
    %v3902 = vpop.xlane.xlu0 %3901
    %v3903 = vsel %vm3704, %v3642, -inf
    %3904 = vmax.xlane.f32.xlu0 %v3903
    %v3905 = vpop.xlane.xlu0 %3904
    %v3906 = vsel %vm3704, %v3643, -inf
    %3907 = vmax.xlane.f32.xlu0 %v3906
    %v3908 = vpop.xlane.xlu0 %3907
    %v3909 = vsel %vm3704, %v3644, -inf
    %3910 = vmax.xlane.f32.xlu0 %v3909
    %v3911 = vpop.xlane.xlu0 %3910
    %v3912 = vsel %vm3704, %v3645, -inf
    %3913 = vmax.xlane.f32.xlu0 %v3912
    %v3914 = vpop.xlane.xlu0 %3913
    %v3915 = vsel %vm3704, %v3646, -inf
    %3916 = vmax.xlane.f32.xlu0 %v3915
    %v3917 = vpop.xlane.xlu0 %3916
    %v3918 = vsel %vm3704, %v3647, -inf
    %3919 = vmax.xlane.f32.xlu0 %v3918
    %v3920 = vpop.xlane.xlu0 %3919
    %v3921 = vsel %vm3704, %v3648, -inf
    %3922 = vmax.xlane.f32.xlu0 %v3921
    %v3923 = vpop.xlane.xlu0 %3922
    %v3924 = vsel %vm3704, %v3649, -inf
    %3925 = vmax.xlane.f32.xlu0 %v3924
    %v3926 = vpop.xlane.xlu0 %3925
    %v3927 = vsel %vm3704, %v3650, -inf
    %3928 = vmax.xlane.f32.xlu0 %v3927
    %v3929 = vpop.xlane.xlu0 %3928
    %v3930 = vsel %vm3704, %v3651, -inf
    %3931 = vmax.xlane.f32.xlu0 %v3930
    %v3932 = vpop.xlane.xlu0 %3931
    %v3933 = vsel %vm3704, %v3652, -inf
    %3934 = vmax.xlane.f32.xlu0 %v3933
    %v3935 = vpop.xlane.xlu0 %3934
    %v3936 = vsel %vm3704, %v3653, -inf
    %3937 = vmax.xlane.f32.xlu0 %v3936
    %v3938 = vpop.xlane.xlu0 %3937
    %v3939 = vsel %vm3704, %v3654, -inf
    %3940 = vmax.xlane.f32.xlu0 %v3939
    %v3941 = vpop.xlane.xlu0 %3940
    %v3942 = vsel %vm3704, %v3655, -inf
    %3943 = vmax.xlane.f32.xlu0 %v3942
    %v3944 = vpop.xlane.xlu0 %3943
    %v3945 = vsel %vm3704, %v3656, -inf
    %3946 = vmax.xlane.f32.xlu0 %v3945
    %v3947 = vpop.xlane.xlu0 %3946
    %v3948 = vsel %vm3704, %v3657, -inf
    %3949 = vmax.xlane.f32.xlu0 %v3948
    %v3950 = vpop.xlane.xlu0 %3949
    %v3951 = vsel %vm3704, %v3658, -inf
    %3952 = vmax.xlane.f32.xlu0 %v3951
    %v3953 = vpop.xlane.xlu0 %3952
    %v3954 = vsel %vm3704, %v3659, -inf
    %3955 = vmax.xlane.f32.xlu0 %v3954
    %v3956 = vpop.xlane.xlu0 %3955
    %v3957 = vsel %vm3704, %v3660, -inf
    %3958 = vmax.xlane.f32.xlu0 %v3957
    %v3959 = vpop.xlane.xlu0 %3958
    %v3960 = vsel %vm3704, %v3661, -inf
    %3961 = vmax.xlane.f32.xlu0 %v3960
    %v3962 = vpop.xlane.xlu0 %3961
    %v3963 = vsel %vm3704, %v3662, -inf
    %3964 = vmax.xlane.f32.xlu0 %v3963
    %v3965 = vpop.xlane.xlu0 %3964
    %v3966 = vsel %vm3704, %v3663, -inf
    %3967 = vmax.xlane.f32.xlu0 %v3966
    %v3968 = vpop.xlane.xlu0 %3967
    %v3969 = vsel %vm3704, %v3664, -inf
    %3970 = vmax.xlane.f32.xlu0 %v3969
    %v3971 = vpop.xlane.xlu0 %3970
    %v3972 = vsel %vm3704, %v3665, -inf
    %3973 = vmax.xlane.f32.xlu0 %v3972
    %v3974 = vpop.xlane.xlu0 %3973
    %v3975 = vsel %vm3704, %v3666, -inf
    %3976 = vmax.xlane.f32.xlu0 %v3975
    %v3977 = vpop.xlane.xlu0 %3976
    %v3978 = vsel %vm3704, %v3667, -inf
    %3979 = vmax.xlane.f32.xlu0 %v3978
    %v3980 = vpop.xlane.xlu0 %3979
    %v3981 = vsel %vm3704, %v3668, -inf
    %3982 = vmax.xlane.f32.xlu0 %v3981
    %v3983 = vpop.xlane.xlu0 %3982
    %v3984 = vsel %vm3704, %v3669, -inf
    %3985 = vmax.xlane.f32.xlu0 %v3984
    %v3986 = vpop.xlane.xlu0 %3985
    %v3987 = vsel %vm3704, %v3670, -inf
    %3988 = vmax.xlane.f32.xlu0 %v3987
    %v3989 = vpop.xlane.xlu0 %3988
    %v3990 = vsel %vm3704, %v3671, -inf
    %3991 = vmax.xlane.f32.xlu0 %v3990
    %v3992 = vpop.xlane.xlu0 %3991
    %v3993 = vsel %vm3704, %v3672, -inf
    %3994 = vmax.xlane.f32.xlu0 %v3993
    %v3995 = vpop.xlane.xlu0 %3994
    %v3996 = vsel %vm3704, %v3673, -inf
    %3997 = vmax.xlane.f32.xlu0 %v3996
    %v3998 = vpop.xlane.xlu0 %3997
    %v3999 = vsel %vm3704, %v3674, -inf
    %4000 = vmax.xlane.f32.xlu0 %v3999
    %v4001 = vpop.xlane.xlu0 %4000
    %v4002 = vsel %vm3704, %v3675, -inf
    %4003 = vmax.xlane.f32.xlu0 %v4002
    %v4004 = vpop.xlane.xlu0 %4003
    %v4005 = vsel %vm3704, %v3676, -inf
    %4006 = vmax.xlane.f32.xlu0 %v4005
    %v4007 = vpop.xlane.xlu0 %4006
    %v4008 = vsel %vm3704, %v3677, -inf
    %4009 = vmax.xlane.f32.xlu0 %v4008
    %v4010 = vpop.xlane.xlu0 %4009
    %v4011 = vsel %vm3704, %v3678, -inf
    %4012 = vmax.xlane.f32.xlu0 %v4011
    %v4013 = vpop.xlane.xlu0 %4012
    %v4014 = vsel %vm3704, %v3679, -inf
    %4015 = vmax.xlane.f32.xlu0 %v4014
    %v4016 = vpop.xlane.xlu0 %4015
    %v4017 = vsel %vm3704, %v3680, -inf
    %4018 = vmax.xlane.f32.xlu0 %v4017
    %v4019 = vpop.xlane.xlu0 %4018
    %v4020 = vsel %vm3704, %v3681, -inf
    %4021 = vmax.xlane.f32.xlu0 %v4020
    %v4022 = vpop.xlane.xlu0 %4021
    %v4023 = vsel %vm3704, %v3682, -inf
    %4024 = vmax.xlane.f32.xlu0 %v4023
    %v4025 = vpop.xlane.xlu0 %4024
    %v4026 = vsel %vm3704, %v3683, -inf
    %4027 = vmax.xlane.f32.xlu0 %v4026
    %v4028 = vpop.xlane.xlu0 %4027
    %v4029 = vsel %vm3704, %v3684, -inf
    %4030 = vmax.xlane.f32.xlu0 %v4029
    %v4031 = vpop.xlane.xlu0 %4030
    %v4032 = vsel %vm3704, %v3685, -inf
    %4033 = vmax.xlane.f32.xlu0 %v4032
    %v4034 = vpop.xlane.xlu0 %4033
    %v4035 = vsel %vm3704, %v3686, -inf
    %4036 = vmax.xlane.f32.xlu0 %v4035
    %v4037 = vpop.xlane.xlu0 %4036
    %v4038 = vsel %vm3704, %v3687, -inf
    %4039 = vmax.xlane.f32.xlu0 %v4038
    %v4040 = vpop.xlane.xlu0 %4039
    %v4041 = vsel %vm3704, %v3688, -inf
    %4042 = vmax.xlane.f32.xlu0 %v4041
    %v4043 = vpop.xlane.xlu0 %4042
    %v4044 = vsel %vm3704, %v3689, -inf
    %4045 = vmax.xlane.f32.xlu0 %v4044
    %v4046 = vpop.xlane.xlu0 %4045
    %v4047 = vsel %vm3704, %v3690, -inf
    %4048 = vmax.xlane.f32.xlu0 %v4047
    %v4049 = vpop.xlane.xlu0 %4048
    %v4050 = vsel %vm3704, %v3691, -inf
    %4051 = vmax.xlane.f32.xlu0 %v4050
    %v4052 = vpop.xlane.xlu0 %4051
    %v4053 = vsel %vm3704, %v3692, -inf
    %4054 = vmax.xlane.f32.xlu0 %v4053
    %v4055 = vpop.xlane.xlu0 %4054
    %v4056 = vsel %vm3704, %v3693, -inf
    %4057 = vmax.xlane.f32.xlu0 %v4056
    %v4058 = vpop.xlane.xlu0 %4057
    %v4059 = vsel %vm3704, %v3694, -inf
    %4060 = vmax.xlane.f32.xlu0 %v4059
    %v4061 = vpop.xlane.xlu0 %4060
    %v4062 = vsel %vm3704, %v3695, -inf
    %4063 = vmax.xlane.f32.xlu0 %v4062
    %v4064 = vpop.xlane.xlu0 %4063
    %v4065 = vsel %vm3704, %v3696, -inf
    %4066 = vmax.xlane.f32.xlu0 %v4065
    %v4067 = vpop.xlane.xlu0 %4066
    %v4068 = vsel %vm3704, %v3697, -inf
    %4069 = vmax.xlane.f32.xlu0 %v4068
    %v4070 = vpop.xlane.xlu0 %4069
    %v4071 = vsel %vm3704, %v3698, -inf
    %4072 = vmax.xlane.f32.xlu0 %v4071
    %v4073 = vpop.xlane.xlu0 %4072
    %v4074 = vsel %vm3704, %v3699, -inf
    %4075 = vmax.xlane.f32.xlu0 %v4074
    %v4076 = vpop.xlane.xlu0 %4075
    %v4077 = vsel %vm3704, %v3700, -inf
    %4078 = vmax.xlane.f32.xlu0 %v4077
    %v4079 = vpop.xlane.xlu0 %4078
    %v4080 = vsel %vm3704, %v3701, -inf
    %4081 = vmax.xlane.f32.xlu0 %v4080
    %v4082 = vpop.xlane.xlu0 %4081
    %v4083 = vsel %vm3704, %v3702, -inf
    %4084 = vmax.xlane.f32.xlu0 %v4083
    %v4085 = vpop.xlane.xlu0 %4084
    %v4086 = vsel %vm3704, %v3703, -inf
    %4087 = vmax.xlane.f32.xlu0 %v4086
    %v4088 = vpop.xlane.xlu0 %4087
    %v4121 = vlaneseq
    %v4122 = vand.u32 %v4121, 127
    %v4123 = vperm.slane %v3899, %v4122
    %v4124 = vadd.s32 %v4122, 4294967288
    %v4125 = vperm.slane %v3902, %v4124
    %vm4126 = vcmask 130112
    %v4127 = vsel %vm4126, %v4125, %v4123
    %v4128 = vperm.slane %v3905, %v4122
    %v4129 = vperm.slane %v3908, %v4124
    %v4130 = vsel %vm4126, %v4129, %v4128
    %v4131 = vperm.slane %v3911, %v4122
    %v4132 = vperm.slane %v3914, %v4124
    %v4133 = vsel %vm4126, %v4132, %v4131
    %v4134 = vperm.slane %v3917, %v4122
    %v4135 = vperm.slane %v3920, %v4124
    %v4136 = vsel %vm4126, %v4135, %v4134
    %v4137 = vperm.slane %v3923, %v4122
    %v4138 = vperm.slane %v3926, %v4124
    %v4139 = vsel %vm4126, %v4138, %v4137
    %v4140 = vperm.slane %v3929, %v4122
    %v4141 = vperm.slane %v3932, %v4124
    %v4142 = vsel %vm4126, %v4141, %v4140
    %v4143 = vperm.slane %v3935, %v4122
    %v4144 = vperm.slane %v3938, %v4124
    %v4145 = vsel %vm4126, %v4144, %v4143
    %v4146 = vperm.slane %v3941, %v4122
    %v4147 = vperm.slane %v3944, %v4124
    %v4148 = vsel %vm4126, %v4147, %v4146
    %v4149 = vperm.slane %v3947, %v4122
    %v4150 = vperm.slane %v3950, %v4124
    %v4151 = vsel %vm4126, %v4150, %v4149
    %v4152 = vperm.slane %v3953, %v4122
    %v4153 = vperm.slane %v3956, %v4124
    %v4154 = vsel %vm4126, %v4153, %v4152
    %v4155 = vperm.slane %v3959, %v4122
    %v4156 = vperm.slane %v3962, %v4124
    %v4157 = vsel %vm4126, %v4156, %v4155
    %v4158 = vperm.slane %v3965, %v4122
    %v4159 = vperm.slane %v3968, %v4124
    %v4160 = vsel %vm4126, %v4159, %v4158
    %v4161 = vperm.slane %v3971, %v4122
    %v4162 = vperm.slane %v3974, %v4124
    %v4163 = vsel %vm4126, %v4162, %v4161
    %v4164 = vperm.slane %v3977, %v4122
    %v4165 = vperm.slane %v3980, %v4124
    %v4166 = vsel %vm4126, %v4165, %v4164
    %v4167 = vperm.slane %v3983, %v4122
    %v4168 = vperm.slane %v3986, %v4124
    %v4169 = vsel %vm4126, %v4168, %v4167
    %v4170 = vperm.slane %v3989, %v4122
    %v4171 = vperm.slane %v3992, %v4124
    %v4172 = vsel %vm4126, %v4171, %v4170
    %vm4173 = vcmask 1041409
    %v4174 = vsel %vm4173, %v4130, %v4127
    %vm4175 = vcmask 1042434
    %v4176 = vsel %vm4175, %v4133, %v4174
    %vm4177 = vcmask 1043459
    %v4178 = vsel %vm4177, %v4136, %v4176
    %vm4179 = vcmask 1044484
    %v4180 = vsel %vm4179, %v4139, %v4178
    %vm4181 = vcmask 1045509
    %v4182 = vsel %vm4181, %v4142, %v4180
    %vm4183 = vcmask 1046534
    %v4184 = vsel %vm4183, %v4145, %v4182
    %vm4185 = vcmask 1047559
    %v4186 = vsel %vm4185, %v4148, %v4184
    %v4187 = vsel %vm4173, %v4154, %v4151
    %v4188 = vsel %vm4175, %v4157, %v4187
    %v4189 = vsel %vm4177, %v4160, %v4188
    %v4190 = vsel %vm4179, %v4163, %v4189
    %v4191 = vsel %vm4181, %v4166, %v4190
    %v4192 = vsel %vm4183, %v4169, %v4191
    %v4193 = vsel %vm4185, %v4172, %v4192
    %4196 = vxpose.xlu0.b32.start [1/16] %v4186, 128
    %4197 = vxpose.xlu0.b32.cont [2/16] %v4193, 128
    %4198 = vxpose.xlu0.b32.cont [3/16] 0.0, 128
    %4199 = vxpose.xlu0.b32.cont [4/16] 0.0, 128
    %4200 = vxpose.xlu0.b32.cont [5/16] 0.0, 128
    %4201 = vxpose.xlu0.b32.cont [6/16] 0.0, 128
    %4202 = vxpose.xlu0.b32.cont [7/16] 0.0, 128
    %4203 = vxpose.xlu0.b32.cont [8/16] 0.0, 128
    %4204 = vxpose.xlu0.b32.cont [9/16] 0.0, 128
    %4205 = vxpose.xlu0.b32.cont [10/16] 0.0, 128
    %4206 = vxpose.xlu0.b32.cont [11/16] 0.0, 128
    %4207 = vxpose.xlu0.b32.cont [12/16] 0.0, 128
    %4208 = vxpose.xlu0.b32.cont [13/16] 0.0, 128
    %4209 = vxpose.xlu0.b32.cont [14/16] 0.0, 128
    %4210 = vxpose.xlu0.b32.cont [15/16] 0.0, 128
    %4211 = vxpose.xlu0.b32.end [16/16] 0.0, 128
    %v4212 = vpop.trf.xlu0
    %v4213 = vpop.trf.xlu0
    %v4214 = vpop.trf.xlu0
    %v4215 = vpop.trf.xlu0
    %v4216 = vpop.trf.xlu0
    %v4217 = vpop.trf.xlu0
    %v4218 = vpop.trf.xlu0
    %v4219 = vpop.trf.xlu0
    %v4220 = vpop.trf.xlu0
    %v4221 = vpop.trf.xlu0
    %v4222 = vpop.trf.xlu0
    %v4223 = vpop.trf.xlu0
    %v4224 = vpop.trf.xlu0
    %v4225 = vpop.trf.xlu0
    %v4226 = vpop.trf.xlu0
    %v4227 = vpop.trf.xlu0
    %v4230 = vperm.slane %v4212, 0
    %v4231 = vlaneseq
    %v4232 = vshrl.u32 %v4231, 7
    %4234 = vset.pattern.permute.xlu0 %v4232
    %4235 = vperm.xlu0 %4234, %v4230
    %v4236 = vpop.permute.xlu0 %4235
    %v4237 = vlaneseq
    %v4238 = vshrl.u32 %v4237, 7
    %v4239 = vadd.s32 %v4238, 8
    %4240 = vset.pattern.permute.xlu0 %v4239
    %4241 = vperm.xlu0 %4240, %v4230
    %v4242 = vpop.permute.xlu0 %4241
    %v4243 = vperm.slane %v4212, 1
    %v4244 = vlaneseq
    %v4245 = vshrl.u32 %v4244, 7
    %4247 = vset.pattern.permute.xlu0 %v4245
    %4248 = vperm.xlu0 %4247, %v4243
    %v4249 = vpop.permute.xlu0 %4248
    %v4250 = vlaneseq
    %v4251 = vshrl.u32 %v4250, 7
    %v4252 = vadd.s32 %v4251, 8
    %4253 = vset.pattern.permute.xlu0 %v4252
    %4254 = vperm.xlu0 %4253, %v4243
    %v4255 = vpop.permute.xlu0 %4254
    %v4256 = vperm.slane %v4212, 2
    %v4257 = vlaneseq
    %v4258 = vshrl.u32 %v4257, 7
    %4260 = vset.pattern.permute.xlu0 %v4258
    %4261 = vperm.xlu0 %4260, %v4256
    %v4262 = vpop.permute.xlu0 %4261
    %v4263 = vlaneseq
    %v4264 = vshrl.u32 %v4263, 7
    %v4265 = vadd.s32 %v4264, 8
    %4266 = vset.pattern.permute.xlu0 %v4265
    %4267 = vperm.xlu0 %4266, %v4256
    %v4268 = vpop.permute.xlu0 %4267
    %v4269 = vperm.slane %v4212, 3
    %v4270 = vlaneseq
    %v4271 = vshrl.u32 %v4270, 7
    %4273 = vset.pattern.permute.xlu0 %v4271
    %4274 = vperm.xlu0 %4273, %v4269
    %v4275 = vpop.permute.xlu0 %4274
    %v4276 = vlaneseq
    %v4277 = vshrl.u32 %v4276, 7
    %v4278 = vadd.s32 %v4277, 8
    %4279 = vset.pattern.permute.xlu0 %v4278
    %4280 = vperm.xlu0 %4279, %v4269
    %v4281 = vpop.permute.xlu0 %4280
    %v4282 = vperm.slane %v4212, 4
    %v4283 = vlaneseq
    %v4284 = vshrl.u32 %v4283, 7
    %4286 = vset.pattern.permute.xlu0 %v4284
    %4287 = vperm.xlu0 %4286, %v4282
    %v4288 = vpop.permute.xlu0 %4287
    %v4289 = vlaneseq
    %v4290 = vshrl.u32 %v4289, 7
    %v4291 = vadd.s32 %v4290, 8
    %4292 = vset.pattern.permute.xlu0 %v4291
    %4293 = vperm.xlu0 %4292, %v4282
    %v4294 = vpop.permute.xlu0 %4293
    %v4295 = vperm.slane %v4212, 5
    %v4296 = vlaneseq
    %v4297 = vshrl.u32 %v4296, 7
    %4299 = vset.pattern.permute.xlu0 %v4297
    %4300 = vperm.xlu0 %4299, %v4295
    %v4301 = vpop.permute.xlu0 %4300
    %v4302 = vlaneseq
    %v4303 = vshrl.u32 %v4302, 7
    %v4304 = vadd.s32 %v4303, 8
    %4305 = vset.pattern.permute.xlu0 %v4304
    %4306 = vperm.xlu0 %4305, %v4295
    %v4307 = vpop.permute.xlu0 %4306
    %v4308 = vperm.slane %v4212, 6
    %v4309 = vlaneseq
    %v4310 = vshrl.u32 %v4309, 7
    %4312 = vset.pattern.permute.xlu0 %v4310
    %4313 = vperm.xlu0 %4312, %v4308
    %v4314 = vpop.permute.xlu0 %4313
    %v4315 = vlaneseq
    %v4316 = vshrl.u32 %v4315, 7
    %v4317 = vadd.s32 %v4316, 8
    %4318 = vset.pattern.permute.xlu0 %v4317
    %4319 = vperm.xlu0 %4318, %v4308
    %v4320 = vpop.permute.xlu0 %4319
    %v4321 = vperm.slane %v4212, 7
    %v4322 = vlaneseq
    %v4323 = vshrl.u32 %v4322, 7
    %4325 = vset.pattern.permute.xlu0 %v4323
    %4326 = vperm.xlu0 %4325, %v4321
    %v4327 = vpop.permute.xlu0 %4326
    %v4328 = vlaneseq
    %v4329 = vshrl.u32 %v4328, 7
    %v4330 = vadd.s32 %v4329, 8
    %4331 = vset.pattern.permute.xlu0 %v4330
    %4332 = vperm.xlu0 %4331, %v4321
    %v4333 = vpop.permute.xlu0 %4332
    %v4334 = vperm.slane %v4213, 0
    %v4335 = vlaneseq
    %v4336 = vshrl.u32 %v4335, 7
    %4338 = vset.pattern.permute.xlu0 %v4336
    %4339 = vperm.xlu0 %4338, %v4334
    %v4340 = vpop.permute.xlu0 %4339
    %v4341 = vlaneseq
    %v4342 = vshrl.u32 %v4341, 7
    %v4343 = vadd.s32 %v4342, 8
    %4344 = vset.pattern.permute.xlu0 %v4343
    %4345 = vperm.xlu0 %4344, %v4334
    %v4346 = vpop.permute.xlu0 %4345
    %v4347 = vperm.slane %v4213, 1
    %v4348 = vlaneseq
    %v4349 = vshrl.u32 %v4348, 7
    %4351 = vset.pattern.permute.xlu0 %v4349
    %4352 = vperm.xlu0 %4351, %v4347
    %v4353 = vpop.permute.xlu0 %4352
    %v4354 = vlaneseq
    %v4355 = vshrl.u32 %v4354, 7
    %v4356 = vadd.s32 %v4355, 8
    %4357 = vset.pattern.permute.xlu0 %v4356
    %4358 = vperm.xlu0 %4357, %v4347
    %v4359 = vpop.permute.xlu0 %4358
    %v4360 = vperm.slane %v4213, 2
    %v4361 = vlaneseq
    %v4362 = vshrl.u32 %v4361, 7
    %4364 = vset.pattern.permute.xlu0 %v4362
    %4365 = vperm.xlu0 %4364, %v4360
    %v4366 = vpop.permute.xlu0 %4365
    %v4367 = vlaneseq
    %v4368 = vshrl.u32 %v4367, 7
    %v4369 = vadd.s32 %v4368, 8
    %4370 = vset.pattern.permute.xlu0 %v4369
    %4371 = vperm.xlu0 %4370, %v4360
    %v4372 = vpop.permute.xlu0 %4371
    %v4373 = vperm.slane %v4213, 3
    %v4374 = vlaneseq
    %v4375 = vshrl.u32 %v4374, 7
    %4377 = vset.pattern.permute.xlu0 %v4375
    %4378 = vperm.xlu0 %4377, %v4373
    %v4379 = vpop.permute.xlu0 %4378
    %v4380 = vlaneseq
    %v4381 = vshrl.u32 %v4380, 7
    %v4382 = vadd.s32 %v4381, 8
    %4383 = vset.pattern.permute.xlu0 %v4382
    %4384 = vperm.xlu0 %4383, %v4373
    %v4385 = vpop.permute.xlu0 %4384
    %v4386 = vperm.slane %v4213, 4
    %v4387 = vlaneseq
    %v4388 = vshrl.u32 %v4387, 7
    %4390 = vset.pattern.permute.xlu0 %v4388
    %4391 = vperm.xlu0 %4390, %v4386
    %v4392 = vpop.permute.xlu0 %4391
    %v4393 = vlaneseq
    %v4394 = vshrl.u32 %v4393, 7
    %v4395 = vadd.s32 %v4394, 8
    %4396 = vset.pattern.permute.xlu0 %v4395
    %4397 = vperm.xlu0 %4396, %v4386
    %v4398 = vpop.permute.xlu0 %4397
    %v4399 = vperm.slane %v4213, 5
    %v4400 = vlaneseq
    %v4401 = vshrl.u32 %v4400, 7
    %4403 = vset.pattern.permute.xlu0 %v4401
    %4404 = vperm.xlu0 %4403, %v4399
    %v4405 = vpop.permute.xlu0 %4404
    %v4406 = vlaneseq
    %v4407 = vshrl.u32 %v4406, 7
    %v4408 = vadd.s32 %v4407, 8
    %4409 = vset.pattern.permute.xlu0 %v4408
    %4410 = vperm.xlu0 %4409, %v4399
    %v4411 = vpop.permute.xlu0 %4410
    %v4412 = vperm.slane %v4213, 6
    %v4413 = vlaneseq
    %v4414 = vshrl.u32 %v4413, 7
    %4416 = vset.pattern.permute.xlu0 %v4414
    %4417 = vperm.xlu0 %4416, %v4412
    %v4418 = vpop.permute.xlu0 %4417
    %v4419 = vlaneseq
    %v4420 = vshrl.u32 %v4419, 7
    %v4421 = vadd.s32 %v4420, 8
    %4422 = vset.pattern.permute.xlu0 %v4421
    %4423 = vperm.xlu0 %4422, %v4412
    %v4424 = vpop.permute.xlu0 %4423
    %v4425 = vperm.slane %v4213, 7
    %v4426 = vlaneseq
    %v4427 = vshrl.u32 %v4426, 7
    %4429 = vset.pattern.permute.xlu0 %v4427
    %4430 = vperm.xlu0 %4429, %v4425
    %v4431 = vpop.permute.xlu0 %4430
    %v4432 = vlaneseq
    %v4433 = vshrl.u32 %v4432, 7
    %v4434 = vadd.s32 %v4433, 8
    %4435 = vset.pattern.permute.xlu0 %v4434
    %4436 = vperm.xlu0 %4435, %v4425
    %v4437 = vpop.permute.xlu0 %4436
    %v4470 = vmax.f32 %v3707, %v4236
    %v4471 = vmax.f32 %v3710, %v4242
    %v4472 = vmax.f32 %v3713, %v4249
    %v4473 = vmax.f32 %v3716, %v4255
    %v4474 = vmax.f32 %v3719, %v4262
    %v4475 = vmax.f32 %v3722, %v4268
    %v4476 = vmax.f32 %v3725, %v4275
    %v4477 = vmax.f32 %v3728, %v4281
    %v4478 = vmax.f32 %v3731, %v4288
    %v4479 = vmax.f32 %v3734, %v4294
    %v4480 = vmax.f32 %v3737, %v4301
    %v4481 = vmax.f32 %v3740, %v4307
    %v4482 = vmax.f32 %v3743, %v4314
    %v4483 = vmax.f32 %v3746, %v4320
    %v4484 = vmax.f32 %v3749, %v4327
    %v4485 = vmax.f32 %v3752, %v4333
    %v4486 = vmax.f32 %v3755, %v4340
    %v4487 = vmax.f32 %v3758, %v4346
    %v4488 = vmax.f32 %v3761, %v4353
    %v4489 = vmax.f32 %v3764, %v4359
    %v4490 = vmax.f32 %v3767, %v4366
    %v4491 = vmax.f32 %v3770, %v4372
    %v4492 = vmax.f32 %v3773, %v4379
    %v4493 = vmax.f32 %v3776, %v4385
    %v4494 = vmax.f32 %v3779, %v4392
    %v4495 = vmax.f32 %v3782, %v4398
    %v4496 = vmax.f32 %v3785, %v4405
    %v4497 = vmax.f32 %v3788, %v4411
    %v4498 = vmax.f32 %v3791, %v4418
    %v4499 = vmax.f32 %v3794, %v4424
    %v4500 = vmax.f32 %v3797, %v4431
    %v4501 = vmax.f32 %v3800, %v4437
    %v4534 = vperm.slane %v3995, %v4122
    %v4535 = vperm.slane %v3998, %v4124
    %v4536 = vsel %vm4126, %v4535, %v4534
    %v4537 = vperm.slane %v4001, %v4122
    %v4538 = vperm.slane %v4004, %v4124
    %v4539 = vsel %vm4126, %v4538, %v4537
    %v4540 = vperm.slane %v4007, %v4122
    %v4541 = vperm.slane %v4010, %v4124
    %v4542 = vsel %vm4126, %v4541, %v4540
    %v4543 = vperm.slane %v4013, %v4122
    %v4544 = vperm.slane %v4016, %v4124
    %v4545 = vsel %vm4126, %v4544, %v4543
    %v4546 = vperm.slane %v4019, %v4122
    %v4547 = vperm.slane %v4022, %v4124
    %v4548 = vsel %vm4126, %v4547, %v4546
    %v4549 = vperm.slane %v4025, %v4122
    %v4550 = vperm.slane %v4028, %v4124
    %v4551 = vsel %vm4126, %v4550, %v4549
    %v4552 = vperm.slane %v4031, %v4122
    %v4553 = vperm.slane %v4034, %v4124
    %v4554 = vsel %vm4126, %v4553, %v4552
    %v4555 = vperm.slane %v4037, %v4122
    %v4556 = vperm.slane %v4040, %v4124
    %v4557 = vsel %vm4126, %v4556, %v4555
    %v4558 = vperm.slane %v4043, %v4122
    %v4559 = vperm.slane %v4046, %v4124
    %v4560 = vsel %vm4126, %v4559, %v4558
    %v4561 = vperm.slane %v4049, %v4122
    %v4562 = vperm.slane %v4052, %v4124
    %v4563 = vsel %vm4126, %v4562, %v4561
    %v4564 = vperm.slane %v4055, %v4122
    %v4565 = vperm.slane %v4058, %v4124
    %v4566 = vsel %vm4126, %v4565, %v4564
    %v4567 = vperm.slane %v4061, %v4122
    %v4568 = vperm.slane %v4064, %v4124
    %v4569 = vsel %vm4126, %v4568, %v4567
    %v4570 = vperm.slane %v4067, %v4122
    %v4571 = vperm.slane %v4070, %v4124
    %v4572 = vsel %vm4126, %v4571, %v4570
    %v4573 = vperm.slane %v4073, %v4122
    %v4574 = vperm.slane %v4076, %v4124
    %v4575 = vsel %vm4126, %v4574, %v4573
    %v4576 = vperm.slane %v4079, %v4122
    %v4577 = vperm.slane %v4082, %v4124
    %v4578 = vsel %vm4126, %v4577, %v4576
    %v4579 = vperm.slane %v4085, %v4122
    %v4580 = vperm.slane %v4088, %v4124
    %v4581 = vsel %vm4126, %v4580, %v4579
    %v4582 = vsel %vm4173, %v4539, %v4536
    %v4583 = vsel %vm4175, %v4542, %v4582
    %v4584 = vsel %vm4177, %v4545, %v4583
    %v4585 = vsel %vm4179, %v4548, %v4584
    %v4586 = vsel %vm4181, %v4551, %v4585
    %v4587 = vsel %vm4183, %v4554, %v4586
    %v4588 = vsel %vm4185, %v4557, %v4587
    %v4589 = vsel %vm4173, %v4563, %v4560
    %v4590 = vsel %vm4175, %v4566, %v4589
    %v4591 = vsel %vm4177, %v4569, %v4590
    %v4592 = vsel %vm4179, %v4572, %v4591
    %v4593 = vsel %vm4181, %v4575, %v4592
    %v4594 = vsel %vm4183, %v4578, %v4593
    %v4595 = vsel %vm4185, %v4581, %v4594
    %4598 = vxpose.xlu0.b32.start [1/16] %v4588, 128
    %4599 = vxpose.xlu0.b32.cont [2/16] %v4595, 128
    %4600 = vxpose.xlu0.b32.cont [3/16] 0.0, 128
    %4601 = vxpose.xlu0.b32.cont [4/16] 0.0, 128
    %4602 = vxpose.xlu0.b32.cont [5/16] 0.0, 128
    %4603 = vxpose.xlu0.b32.cont [6/16] 0.0, 128
    %4604 = vxpose.xlu0.b32.cont [7/16] 0.0, 128
    %4605 = vxpose.xlu0.b32.cont [8/16] 0.0, 128
    %4606 = vxpose.xlu0.b32.cont [9/16] 0.0, 128
    %4607 = vxpose.xlu0.b32.cont [10/16] 0.0, 128
    %4608 = vxpose.xlu0.b32.cont [11/16] 0.0, 128
    %4609 = vxpose.xlu0.b32.cont [12/16] 0.0, 128
    %4610 = vxpose.xlu0.b32.cont [13/16] 0.0, 128
    %4611 = vxpose.xlu0.b32.cont [14/16] 0.0, 128
    %4612 = vxpose.xlu0.b32.cont [15/16] 0.0, 128
    %4613 = vxpose.xlu0.b32.end [16/16] 0.0, 128
    %v4614 = vpop.trf.xlu0
    %v4615 = vpop.trf.xlu0
    %v4616 = vpop.trf.xlu0
    %v4617 = vpop.trf.xlu0
    %v4618 = vpop.trf.xlu0
    %v4619 = vpop.trf.xlu0
    %v4620 = vpop.trf.xlu0
    %v4621 = vpop.trf.xlu0
    %v4622 = vpop.trf.xlu0
    %v4623 = vpop.trf.xlu0
    %v4624 = vpop.trf.xlu0
    %v4625 = vpop.trf.xlu0
    %v4626 = vpop.trf.xlu0
    %v4627 = vpop.trf.xlu0
    %v4628 = vpop.trf.xlu0
    %v4629 = vpop.trf.xlu0
    %v4632 = vperm.slane %v4614, 0
    %v4633 = vlaneseq
    %v4634 = vshrl.u32 %v4633, 7
    %4636 = vset.pattern.permute.xlu0 %v4634
    %4637 = vperm.xlu0 %4636, %v4632
    %v4638 = vpop.permute.xlu0 %4637
    %v4639 = vlaneseq
    %v4640 = vshrl.u32 %v4639, 7
    %v4641 = vadd.s32 %v4640, 8
    %4642 = vset.pattern.permute.xlu0 %v4641
    %4643 = vperm.xlu0 %4642, %v4632
    %v4644 = vpop.permute.xlu0 %4643
    %v4645 = vperm.slane %v4614, 1
    %v4646 = vlaneseq
    %v4647 = vshrl.u32 %v4646, 7
    %4649 = vset.pattern.permute.xlu0 %v4647
    %4650 = vperm.xlu0 %4649, %v4645
    %v4651 = vpop.permute.xlu0 %4650
    %v4652 = vlaneseq
    %v4653 = vshrl.u32 %v4652, 7
    %v4654 = vadd.s32 %v4653, 8
    %4655 = vset.pattern.permute.xlu0 %v4654
    %4656 = vperm.xlu0 %4655, %v4645
    %v4657 = vpop.permute.xlu0 %4656
    %v4658 = vperm.slane %v4614, 2
    %v4659 = vlaneseq
    %v4660 = vshrl.u32 %v4659, 7
    %4662 = vset.pattern.permute.xlu0 %v4660
    %4663 = vperm.xlu0 %4662, %v4658
    %v4664 = vpop.permute.xlu0 %4663
    %v4665 = vlaneseq
    %v4666 = vshrl.u32 %v4665, 7
    %v4667 = vadd.s32 %v4666, 8
    %4668 = vset.pattern.permute.xlu0 %v4667
    %4669 = vperm.xlu0 %4668, %v4658
    %v4670 = vpop.permute.xlu0 %4669
    %v4671 = vperm.slane %v4614, 3
    %v4672 = vlaneseq
    %v4673 = vshrl.u32 %v4672, 7
    %4675 = vset.pattern.permute.xlu0 %v4673
    %4676 = vperm.xlu0 %4675, %v4671
    %v4677 = vpop.permute.xlu0 %4676
    %v4678 = vlaneseq
    %v4679 = vshrl.u32 %v4678, 7
    %v4680 = vadd.s32 %v4679, 8
    %4681 = vset.pattern.permute.xlu0 %v4680
    %4682 = vperm.xlu0 %4681, %v4671
    %v4683 = vpop.permute.xlu0 %4682
    %v4684 = vperm.slane %v4614, 4
    %v4685 = vlaneseq
    %v4686 = vshrl.u32 %v4685, 7
    %4688 = vset.pattern.permute.xlu0 %v4686
    %4689 = vperm.xlu0 %4688, %v4684
    %v4690 = vpop.permute.xlu0 %4689
    %v4691 = vlaneseq
    %v4692 = vshrl.u32 %v4691, 7
    %v4693 = vadd.s32 %v4692, 8
    %4694 = vset.pattern.permute.xlu0 %v4693
    %4695 = vperm.xlu0 %4694, %v4684
    %v4696 = vpop.permute.xlu0 %4695
    %v4697 = vperm.slane %v4614, 5
    %v4698 = vlaneseq
    %v4699 = vshrl.u32 %v4698, 7
    %4701 = vset.pattern.permute.xlu0 %v4699
    %4702 = vperm.xlu0 %4701, %v4697
    %v4703 = vpop.permute.xlu0 %4702
    %v4704 = vlaneseq
    %v4705 = vshrl.u32 %v4704, 7
    %v4706 = vadd.s32 %v4705, 8
    %4707 = vset.pattern.permute.xlu0 %v4706
    %4708 = vperm.xlu0 %4707, %v4697
    %v4709 = vpop.permute.xlu0 %4708
    %v4710 = vperm.slane %v4614, 6
    %v4711 = vlaneseq
    %v4712 = vshrl.u32 %v4711, 7
    %4714 = vset.pattern.permute.xlu0 %v4712
    %4715 = vperm.xlu0 %4714, %v4710
    %v4716 = vpop.permute.xlu0 %4715
    %v4717 = vlaneseq
    %v4718 = vshrl.u32 %v4717, 7
    %v4719 = vadd.s32 %v4718, 8
    %4720 = vset.pattern.permute.xlu0 %v4719
    %4721 = vperm.xlu0 %4720, %v4710
    %v4722 = vpop.permute.xlu0 %4721
    %v4723 = vperm.slane %v4614, 7
    %v4724 = vlaneseq
    %v4725 = vshrl.u32 %v4724, 7
    %4727 = vset.pattern.permute.xlu0 %v4725
    %4728 = vperm.xlu0 %4727, %v4723
    %v4729 = vpop.permute.xlu0 %4728
    %v4730 = vlaneseq
    %v4731 = vshrl.u32 %v4730, 7
    %v4732 = vadd.s32 %v4731, 8
    %4733 = vset.pattern.permute.xlu0 %v4732
    %4734 = vperm.xlu0 %4733, %v4723
    %v4735 = vpop.permute.xlu0 %4734
    %v4736 = vperm.slane %v4615, 0
    %v4737 = vlaneseq
    %v4738 = vshrl.u32 %v4737, 7
    %4740 = vset.pattern.permute.xlu0 %v4738
    %4741 = vperm.xlu0 %4740, %v4736
    %v4742 = vpop.permute.xlu0 %4741
    %v4743 = vlaneseq
    %v4744 = vshrl.u32 %v4743, 7
    %v4745 = vadd.s32 %v4744, 8
    %4746 = vset.pattern.permute.xlu0 %v4745
    %4747 = vperm.xlu0 %4746, %v4736
    %v4748 = vpop.permute.xlu0 %4747
    %v4749 = vperm.slane %v4615, 1
    %v4750 = vlaneseq
    %v4751 = vshrl.u32 %v4750, 7
    %4753 = vset.pattern.permute.xlu0 %v4751
    %4754 = vperm.xlu0 %4753, %v4749
    %v4755 = vpop.permute.xlu0 %4754
    %v4756 = vlaneseq
    %v4757 = vshrl.u32 %v4756, 7
    %v4758 = vadd.s32 %v4757, 8
    %4759 = vset.pattern.permute.xlu0 %v4758
    %4760 = vperm.xlu0 %4759, %v4749
    %v4761 = vpop.permute.xlu0 %4760
    %v4762 = vperm.slane %v4615, 2
    %v4763 = vlaneseq
    %v4764 = vshrl.u32 %v4763, 7
    %4766 = vset.pattern.permute.xlu0 %v4764
    %4767 = vperm.xlu0 %4766, %v4762
    %v4768 = vpop.permute.xlu0 %4767
    %v4769 = vlaneseq
    %v4770 = vshrl.u32 %v4769, 7
    %v4771 = vadd.s32 %v4770, 8
    %4772 = vset.pattern.permute.xlu0 %v4771
    %4773 = vperm.xlu0 %4772, %v4762
    %v4774 = vpop.permute.xlu0 %4773
    %v4775 = vperm.slane %v4615, 3
    %v4776 = vlaneseq
    %v4777 = vshrl.u32 %v4776, 7
    %4779 = vset.pattern.permute.xlu0 %v4777
    %4780 = vperm.xlu0 %4779, %v4775
    %v4781 = vpop.permute.xlu0 %4780
    %v4782 = vlaneseq
    %v4783 = vshrl.u32 %v4782, 7
    %v4784 = vadd.s32 %v4783, 8
    %4785 = vset.pattern.permute.xlu0 %v4784
    %4786 = vperm.xlu0 %4785, %v4775
    %v4787 = vpop.permute.xlu0 %4786
    %v4788 = vperm.slane %v4615, 4
    %v4789 = vlaneseq
    %v4790 = vshrl.u32 %v4789, 7
    %4792 = vset.pattern.permute.xlu0 %v4790
    %4793 = vperm.xlu0 %4792, %v4788
    %v4794 = vpop.permute.xlu0 %4793
    %v4795 = vlaneseq
    %v4796 = vshrl.u32 %v4795, 7
    %v4797 = vadd.s32 %v4796, 8
    %4798 = vset.pattern.permute.xlu0 %v4797
    %4799 = vperm.xlu0 %4798, %v4788
    %v4800 = vpop.permute.xlu0 %4799
    %v4801 = vperm.slane %v4615, 5
    %v4802 = vlaneseq
    %v4803 = vshrl.u32 %v4802, 7
    %4805 = vset.pattern.permute.xlu0 %v4803
    %4806 = vperm.xlu0 %4805, %v4801
    %v4807 = vpop.permute.xlu0 %4806
    %v4808 = vlaneseq
    %v4809 = vshrl.u32 %v4808, 7
    %v4810 = vadd.s32 %v4809, 8
    %4811 = vset.pattern.permute.xlu0 %v4810
    %4812 = vperm.xlu0 %4811, %v4801
    %v4813 = vpop.permute.xlu0 %4812
    %v4814 = vperm.slane %v4615, 6
    %v4815 = vlaneseq
    %v4816 = vshrl.u32 %v4815, 7
    %4818 = vset.pattern.permute.xlu0 %v4816
    %4819 = vperm.xlu0 %4818, %v4814
    %v4820 = vpop.permute.xlu0 %4819
    %v4821 = vlaneseq
    %v4822 = vshrl.u32 %v4821, 7
    %v4823 = vadd.s32 %v4822, 8
    %4824 = vset.pattern.permute.xlu0 %v4823
    %4825 = vperm.xlu0 %4824, %v4814
    %v4826 = vpop.permute.xlu0 %4825
    %v4827 = vperm.slane %v4615, 7
    %v4828 = vlaneseq
    %v4829 = vshrl.u32 %v4828, 7
    %4831 = vset.pattern.permute.xlu0 %v4829
    %4832 = vperm.xlu0 %4831, %v4827
    %v4833 = vpop.permute.xlu0 %4832
    %v4834 = vlaneseq
    %v4835 = vshrl.u32 %v4834, 7
    %v4836 = vadd.s32 %v4835, 8
    %4837 = vset.pattern.permute.xlu0 %v4836
    %4838 = vperm.xlu0 %4837, %v4827
    %v4839 = vpop.permute.xlu0 %4838
    %v4872 = vmax.f32 %v3803, %v4638
    %v4873 = vmax.f32 %v3806, %v4644
    %v4874 = vmax.f32 %v3809, %v4651
    %v4875 = vmax.f32 %v3812, %v4657
    %v4876 = vmax.f32 %v3815, %v4664
    %v4877 = vmax.f32 %v3818, %v4670
    %v4878 = vmax.f32 %v3821, %v4677
    %v4879 = vmax.f32 %v3824, %v4683
    %v4880 = vmax.f32 %v3827, %v4690
    %v4881 = vmax.f32 %v3830, %v4696
    %v4882 = vmax.f32 %v3833, %v4703
    %v4883 = vmax.f32 %v3836, %v4709
    %v4884 = vmax.f32 %v3839, %v4716
    %v4885 = vmax.f32 %v3842, %v4722
    %v4886 = vmax.f32 %v3845, %v4729
    %v4887 = vmax.f32 %v3848, %v4735
    %v4888 = vmax.f32 %v3851, %v4742
    %v4889 = vmax.f32 %v3854, %v4748
    %v4890 = vmax.f32 %v3857, %v4755
    %v4891 = vmax.f32 %v3860, %v4761
    %v4892 = vmax.f32 %v3863, %v4768
    %v4893 = vmax.f32 %v3866, %v4774
    %v4894 = vmax.f32 %v3869, %v4781
    %v4895 = vmax.f32 %v3872, %v4787
    %v4896 = vmax.f32 %v3875, %v4794
    %v4897 = vmax.f32 %v3878, %v4800
    %v4898 = vmax.f32 %v3881, %v4807
    %v4899 = vmax.f32 %v3884, %v4813
    %v4900 = vmax.f32 %v3887, %v4820
    %v4901 = vmax.f32 %v3890, %v4826
    %v4902 = vmax.f32 %v3893, %v4833
    %v4903 = vmax.f32 %v3896, %v4839
    %4936 = vset.pattern.permute.xlu0 0
    %4937 = vperm.xlu0 %4936, %v4470
    %v4938 = vpop.permute.xlu0 %4937
    %4939 = vset.pattern.permute.xlu0 0
    %4940 = vperm.xlu0 %4939, %v4471
    %v4941 = vpop.permute.xlu0 %4940
    %4942 = vset.pattern.permute.xlu0 0
    %4943 = vperm.xlu0 %4942, %v4472
    %v4944 = vpop.permute.xlu0 %4943
    %4945 = vset.pattern.permute.xlu0 0
    %4946 = vperm.xlu0 %4945, %v4473
    %v4947 = vpop.permute.xlu0 %4946
    %4948 = vset.pattern.permute.xlu0 0
    %4949 = vperm.xlu0 %4948, %v4474
    %v4950 = vpop.permute.xlu0 %4949
    %4951 = vset.pattern.permute.xlu0 0
    %4952 = vperm.xlu0 %4951, %v4475
    %v4953 = vpop.permute.xlu0 %4952
    %4954 = vset.pattern.permute.xlu0 0
    %4955 = vperm.xlu0 %4954, %v4476
    %v4956 = vpop.permute.xlu0 %4955
    %4957 = vset.pattern.permute.xlu0 0
    %4958 = vperm.xlu0 %4957, %v4477
    %v4959 = vpop.permute.xlu0 %4958
    %4960 = vset.pattern.permute.xlu0 0
    %4961 = vperm.xlu0 %4960, %v4478
    %v4962 = vpop.permute.xlu0 %4961
    %4963 = vset.pattern.permute.xlu0 0
    %4964 = vperm.xlu0 %4963, %v4479
    %v4965 = vpop.permute.xlu0 %4964
    %4966 = vset.pattern.permute.xlu0 0
    %4967 = vperm.xlu0 %4966, %v4480
    %v4968 = vpop.permute.xlu0 %4967
    %4969 = vset.pattern.permute.xlu0 0
    %4970 = vperm.xlu0 %4969, %v4481
    %v4971 = vpop.permute.xlu0 %4970
    %4972 = vset.pattern.permute.xlu0 0
    %4973 = vperm.xlu0 %4972, %v4482
    %v4974 = vpop.permute.xlu0 %4973
    %4975 = vset.pattern.permute.xlu0 0
    %4976 = vperm.xlu0 %4975, %v4483
    %v4977 = vpop.permute.xlu0 %4976
    %4978 = vset.pattern.permute.xlu0 0
    %4979 = vperm.xlu0 %4978, %v4484
    %v4980 = vpop.permute.xlu0 %4979
    %4981 = vset.pattern.permute.xlu0 0
    %4982 = vperm.xlu0 %4981, %v4485
    %v4983 = vpop.permute.xlu0 %4982
    %4984 = vset.pattern.permute.xlu0 0
    %4985 = vperm.xlu0 %4984, %v4486
    %v4986 = vpop.permute.xlu0 %4985
    %4987 = vset.pattern.permute.xlu0 0
    %4988 = vperm.xlu0 %4987, %v4487
    %v4989 = vpop.permute.xlu0 %4988
    %4990 = vset.pattern.permute.xlu0 0
    %4991 = vperm.xlu0 %4990, %v4488
    %v4992 = vpop.permute.xlu0 %4991
    %4993 = vset.pattern.permute.xlu0 0
    %4994 = vperm.xlu0 %4993, %v4489
    %v4995 = vpop.permute.xlu0 %4994
    %4996 = vset.pattern.permute.xlu0 0
    %4997 = vperm.xlu0 %4996, %v4490
    %v4998 = vpop.permute.xlu0 %4997
    %4999 = vset.pattern.permute.xlu0 0
    %5000 = vperm.xlu0 %4999, %v4491
    %v5001 = vpop.permute.xlu0 %5000
    %5002 = vset.pattern.permute.xlu0 0
    %5003 = vperm.xlu0 %5002, %v4492
    %v5004 = vpop.permute.xlu0 %5003
    %5005 = vset.pattern.permute.xlu0 0
    %5006 = vperm.xlu0 %5005, %v4493
    %v5007 = vpop.permute.xlu0 %5006
    %5008 = vset.pattern.permute.xlu0 0
    %5009 = vperm.xlu0 %5008, %v4494
    %v5010 = vpop.permute.xlu0 %5009
    %5011 = vset.pattern.permute.xlu0 0
    %5012 = vperm.xlu0 %5011, %v4495
    %v5013 = vpop.permute.xlu0 %5012
    %5014 = vset.pattern.permute.xlu0 0
    %5015 = vperm.xlu0 %5014, %v4496
    %v5016 = vpop.permute.xlu0 %5015
    %5017 = vset.pattern.permute.xlu0 0
    %5018 = vperm.xlu0 %5017, %v4497
    %v5019 = vpop.permute.xlu0 %5018
    %5020 = vset.pattern.permute.xlu0 0
    %5021 = vperm.xlu0 %5020, %v4498
    %v5022 = vpop.permute.xlu0 %5021
    %5023 = vset.pattern.permute.xlu0 0
    %5024 = vperm.xlu0 %5023, %v4499
    %v5025 = vpop.permute.xlu0 %5024
    %5026 = vset.pattern.permute.xlu0 0
    %5027 = vperm.xlu0 %5026, %v4500
    %v5028 = vpop.permute.xlu0 %5027
    %5029 = vset.pattern.permute.xlu0 0
    %5030 = vperm.xlu0 %5029, %v4501
    %v5031 = vpop.permute.xlu0 %5030
    %v5032 = vperm.slane %v4938, %v4122
    %v5033 = vperm.slane %v4941, %v4124
    %v5034 = vsel %vm4126, %v5033, %v5032
    %v5035 = vperm.slane %v4944, %v4122
    %v5036 = vperm.slane %v4947, %v4124
    %v5037 = vsel %vm4126, %v5036, %v5035
    %v5038 = vperm.slane %v4950, %v4122
    %v5039 = vperm.slane %v4953, %v4124
    %v5040 = vsel %vm4126, %v5039, %v5038
    %v5041 = vperm.slane %v4956, %v4122
    %v5042 = vperm.slane %v4959, %v4124
    %v5043 = vsel %vm4126, %v5042, %v5041
    %v5044 = vperm.slane %v4962, %v4122
    %v5045 = vperm.slane %v4965, %v4124
    %v5046 = vsel %vm4126, %v5045, %v5044
    %v5047 = vperm.slane %v4968, %v4122
    %v5048 = vperm.slane %v4971, %v4124
    %v5049 = vsel %vm4126, %v5048, %v5047
    %v5050 = vperm.slane %v4974, %v4122
    %v5051 = vperm.slane %v4977, %v4124
    %v5052 = vsel %vm4126, %v5051, %v5050
    %v5053 = vperm.slane %v4980, %v4122
    %v5054 = vperm.slane %v4983, %v4124
    %v5055 = vsel %vm4126, %v5054, %v5053
    %v5056 = vperm.slane %v4986, %v4122
    %v5057 = vperm.slane %v4989, %v4124
    %v5058 = vsel %vm4126, %v5057, %v5056
    %v5059 = vperm.slane %v4992, %v4122
    %v5060 = vperm.slane %v4995, %v4124
    %v5061 = vsel %vm4126, %v5060, %v5059
    %v5062 = vperm.slane %v4998, %v4122
    %v5063 = vperm.slane %v5001, %v4124
    %v5064 = vsel %vm4126, %v5063, %v5062
    %v5065 = vperm.slane %v5004, %v4122
    %v5066 = vperm.slane %v5007, %v4124
    %v5067 = vsel %vm4126, %v5066, %v5065
    %v5068 = vperm.slane %v5010, %v4122
    %v5069 = vperm.slane %v5013, %v4124
    %v5070 = vsel %vm4126, %v5069, %v5068
    %v5071 = vperm.slane %v5016, %v4122
    %v5072 = vperm.slane %v5019, %v4124
    %v5073 = vsel %vm4126, %v5072, %v5071
    %v5074 = vperm.slane %v5022, %v4122
    %v5075 = vperm.slane %v5025, %v4124
    %v5076 = vsel %vm4126, %v5075, %v5074
    %v5077 = vperm.slane %v5028, %v4122
    %v5078 = vperm.slane %v5031, %v4124
    %v5079 = vsel %vm4126, %v5078, %v5077
    %v5080 = vsel %vm4173, %v5037, %v5034
    %v5081 = vsel %vm4175, %v5040, %v5080
    %v5082 = vsel %vm4177, %v5043, %v5081
    %v5083 = vsel %vm4179, %v5046, %v5082
    %v5084 = vsel %vm4181, %v5049, %v5083
    %v5085 = vsel %vm4183, %v5052, %v5084
    %v5086 = vsel %vm4185, %v5055, %v5085
    %v5087 = vsel %vm4173, %v5061, %v5058
    %v5088 = vsel %vm4175, %v5064, %v5087
    %v5089 = vsel %vm4177, %v5067, %v5088
    %v5090 = vsel %vm4179, %v5070, %v5089
    %v5091 = vsel %vm4181, %v5073, %v5090
    %v5092 = vsel %vm4183, %v5076, %v5091
    %v5093 = vsel %vm4185, %v5079, %v5092
    %5128 = vset.pattern.permute.xlu0 0
    %5129 = vperm.xlu0 %5128, %v4872
    %v5130 = vpop.permute.xlu0 %5129
    %5131 = vset.pattern.permute.xlu0 0
    %5132 = vperm.xlu0 %5131, %v4873
    %v5133 = vpop.permute.xlu0 %5132
    %5134 = vset.pattern.permute.xlu0 0
    %5135 = vperm.xlu0 %5134, %v4874
    %v5136 = vpop.permute.xlu0 %5135
    %5137 = vset.pattern.permute.xlu0 0
    %5138 = vperm.xlu0 %5137, %v4875
    %v5139 = vpop.permute.xlu0 %5138
    %5140 = vset.pattern.permute.xlu0 0
    %5141 = vperm.xlu0 %5140, %v4876
    %v5142 = vpop.permute.xlu0 %5141
    %5143 = vset.pattern.permute.xlu0 0
    %5144 = vperm.xlu0 %5143, %v4877
    %v5145 = vpop.permute.xlu0 %5144
    %5146 = vset.pattern.permute.xlu0 0
    %5147 = vperm.xlu0 %5146, %v4878
    %v5148 = vpop.permute.xlu0 %5147
    %5149 = vset.pattern.permute.xlu0 0
    %5150 = vperm.xlu0 %5149, %v4879
    %v5151 = vpop.permute.xlu0 %5150
    %5152 = vset.pattern.permute.xlu0 0
    %5153 = vperm.xlu0 %5152, %v4880
    %v5154 = vpop.permute.xlu0 %5153
    %5155 = vset.pattern.permute.xlu0 0
    %5156 = vperm.xlu0 %5155, %v4881
    %v5157 = vpop.permute.xlu0 %5156
    %5158 = vset.pattern.permute.xlu0 0
    %5159 = vperm.xlu0 %5158, %v4882
    %v5160 = vpop.permute.xlu0 %5159
    %5161 = vset.pattern.permute.xlu0 0
    %5162 = vperm.xlu0 %5161, %v4883
    %v5163 = vpop.permute.xlu0 %5162
    %5164 = vset.pattern.permute.xlu0 0
    %5165 = vperm.xlu0 %5164, %v4884
    %v5166 = vpop.permute.xlu0 %5165
    %5167 = vset.pattern.permute.xlu0 0
    %5168 = vperm.xlu0 %5167, %v4885
    %v5169 = vpop.permute.xlu0 %5168
    %5170 = vset.pattern.permute.xlu0 0
    %5171 = vperm.xlu0 %5170, %v4886
    %v5172 = vpop.permute.xlu0 %5171
    %5173 = vset.pattern.permute.xlu0 0
    %5174 = vperm.xlu0 %5173, %v4887
    %v5175 = vpop.permute.xlu0 %5174
    %5176 = vset.pattern.permute.xlu0 0
    %5177 = vperm.xlu0 %5176, %v4888
    %v5178 = vpop.permute.xlu0 %5177
    %5179 = vset.pattern.permute.xlu0 0
    %5180 = vperm.xlu0 %5179, %v4889
    %v5181 = vpop.permute.xlu0 %5180
    %5182 = vset.pattern.permute.xlu0 0
    %5183 = vperm.xlu0 %5182, %v4890
    %v5184 = vpop.permute.xlu0 %5183
    %5185 = vset.pattern.permute.xlu0 0
    %5186 = vperm.xlu0 %5185, %v4891
    %v5187 = vpop.permute.xlu0 %5186
    %5188 = vset.pattern.permute.xlu0 0
    %5189 = vperm.xlu0 %5188, %v4892
    %v5190 = vpop.permute.xlu0 %5189
    %5191 = vset.pattern.permute.xlu0 0
    %5192 = vperm.xlu0 %5191, %v4893
    %v5193 = vpop.permute.xlu0 %5192
    %5194 = vset.pattern.permute.xlu0 0
    %5195 = vperm.xlu0 %5194, %v4894
    %v5196 = vpop.permute.xlu0 %5195
    %5197 = vset.pattern.permute.xlu0 0
    %5198 = vperm.xlu0 %5197, %v4895
    %v5199 = vpop.permute.xlu0 %5198
    %5200 = vset.pattern.permute.xlu0 0
    %5201 = vperm.xlu0 %5200, %v4896
    %v5202 = vpop.permute.xlu0 %5201
    %5203 = vset.pattern.permute.xlu0 0
    %5204 = vperm.xlu0 %5203, %v4897
    %v5205 = vpop.permute.xlu0 %5204
    %5206 = vset.pattern.permute.xlu0 0
    %5207 = vperm.xlu0 %5206, %v4898
    %v5208 = vpop.permute.xlu0 %5207
    %5209 = vset.pattern.permute.xlu0 0
    %5210 = vperm.xlu0 %5209, %v4899
    %v5211 = vpop.permute.xlu0 %5210
    %5212 = vset.pattern.permute.xlu0 0
    %5213 = vperm.xlu0 %5212, %v4900
    %v5214 = vpop.permute.xlu0 %5213
    %5215 = vset.pattern.permute.xlu0 0
    %5216 = vperm.xlu0 %5215, %v4901
    %v5217 = vpop.permute.xlu0 %5216
    %5218 = vset.pattern.permute.xlu0 0
    %5219 = vperm.xlu0 %5218, %v4902
    %v5220 = vpop.permute.xlu0 %5219
    %5221 = vset.pattern.permute.xlu0 0
    %5222 = vperm.xlu0 %5221, %v4903
    %v5223 = vpop.permute.xlu0 %5222
    %v5224 = vperm.slane %v5130, %v4122
    %v5225 = vperm.slane %v5133, %v4124
    %v5226 = vsel %vm4126, %v5225, %v5224
    %v5227 = vperm.slane %v5136, %v4122
    %v5228 = vperm.slane %v5139, %v4124
    %v5229 = vsel %vm4126, %v5228, %v5227
    %v5230 = vperm.slane %v5142, %v4122
    %v5231 = vperm.slane %v5145, %v4124
    %v5232 = vsel %vm4126, %v5231, %v5230
    %v5233 = vperm.slane %v5148, %v4122
    %v5234 = vperm.slane %v5151, %v4124
    %v5235 = vsel %vm4126, %v5234, %v5233
    %v5236 = vperm.slane %v5154, %v4122
    %v5237 = vperm.slane %v5157, %v4124
    %v5238 = vsel %vm4126, %v5237, %v5236
    %v5239 = vperm.slane %v5160, %v4122
    %v5240 = vperm.slane %v5163, %v4124
    %v5241 = vsel %vm4126, %v5240, %v5239
    %v5242 = vperm.slane %v5166, %v4122
    %v5243 = vperm.slane %v5169, %v4124
    %v5244 = vsel %vm4126, %v5243, %v5242
    %v5245 = vperm.slane %v5172, %v4122
    %v5246 = vperm.slane %v5175, %v4124
    %v5247 = vsel %vm4126, %v5246, %v5245
    %v5248 = vperm.slane %v5178, %v4122
    %v5249 = vperm.slane %v5181, %v4124
    %v5250 = vsel %vm4126, %v5249, %v5248
    %v5251 = vperm.slane %v5184, %v4122
    %v5252 = vperm.slane %v5187, %v4124
    %v5253 = vsel %vm4126, %v5252, %v5251
    %v5254 = vperm.slane %v5190, %v4122
    %v5255 = vperm.slane %v5193, %v4124
    %v5256 = vsel %vm4126, %v5255, %v5254
    %v5257 = vperm.slane %v5196, %v4122
    %v5258 = vperm.slane %v5199, %v4124
    %v5259 = vsel %vm4126, %v5258, %v5257
    %v5260 = vperm.slane %v5202, %v4122
    %v5261 = vperm.slane %v5205, %v4124
    %v5262 = vsel %vm4126, %v5261, %v5260
    %v5263 = vperm.slane %v5208, %v4122
    %v5264 = vperm.slane %v5211, %v4124
    %v5265 = vsel %vm4126, %v5264, %v5263
    %v5266 = vperm.slane %v5214, %v4122
    %v5267 = vperm.slane %v5217, %v4124
    %v5268 = vsel %vm4126, %v5267, %v5266
    %v5269 = vperm.slane %v5220, %v4122
    %v5270 = vperm.slane %v5223, %v4124
    %v5271 = vsel %vm4126, %v5270, %v5269
    %v5272 = vsel %vm4173, %v5229, %v5226
    %v5273 = vsel %vm4175, %v5232, %v5272
    %v5274 = vsel %vm4177, %v5235, %v5273
    %v5275 = vsel %vm4179, %v5238, %v5274
    %v5276 = vsel %vm4181, %v5241, %v5275
    %v5277 = vsel %vm4183, %v5244, %v5276
    %v5278 = vsel %vm4185, %v5247, %v5277
    %v5279 = vsel %vm4173, %v5253, %v5250
    %v5280 = vsel %vm4175, %v5256, %v5279
    %v5281 = vsel %vm4177, %v5259, %v5280
    %v5282 = vsel %vm4179, %v5262, %v5281
    %v5283 = vsel %vm4181, %v5265, %v5282
    %v5284 = vsel %vm4183, %v5268, %v5283
    %v5285 = vsel %vm4185, %v5271, %v5284
    %5288 = vxpose.xlu0.b32.start [1/16] %v5086, 128
    %5289 = vxpose.xlu0.b32.cont [2/16] %v5093, 128
    %5290 = vxpose.xlu0.b32.cont [3/16] 0.0, 128
    %5291 = vxpose.xlu0.b32.cont [4/16] 0.0, 128
    %5292 = vxpose.xlu0.b32.cont [5/16] 0.0, 128
    %5293 = vxpose.xlu0.b32.cont [6/16] 0.0, 128
    %5294 = vxpose.xlu0.b32.cont [7/16] 0.0, 128
    %5295 = vxpose.xlu0.b32.cont [8/16] 0.0, 128
    %5296 = vxpose.xlu0.b32.cont [9/16] 0.0, 128
    %5297 = vxpose.xlu0.b32.cont [10/16] 0.0, 128
    %5298 = vxpose.xlu0.b32.cont [11/16] 0.0, 128
    %5299 = vxpose.xlu0.b32.cont [12/16] 0.0, 128
    %5300 = vxpose.xlu0.b32.cont [13/16] 0.0, 128
    %5301 = vxpose.xlu0.b32.cont [14/16] 0.0, 128
    %5302 = vxpose.xlu0.b32.cont [15/16] 0.0, 128
    %5303 = vxpose.xlu0.b32.end [16/16] 0.0, 128
    %v5304 = vpop.trf.xlu0
    %v5305 = vpop.trf.xlu0
    %v5306 = vpop.trf.xlu0
    %v5307 = vpop.trf.xlu0
    %v5308 = vpop.trf.xlu0
    %v5309 = vpop.trf.xlu0
    %v5310 = vpop.trf.xlu0
    %v5311 = vpop.trf.xlu0
    %v5312 = vpop.trf.xlu0
    %v5313 = vpop.trf.xlu0
    %v5314 = vpop.trf.xlu0
    %v5315 = vpop.trf.xlu0
    %v5316 = vpop.trf.xlu0
    %v5317 = vpop.trf.xlu0
    %v5318 = vpop.trf.xlu0
    %v5319 = vpop.trf.xlu0
    %5320 = vxpose.xlu0.b32.start [1/16] %v5278, 128
    %5321 = vxpose.xlu0.b32.cont [2/16] %v5285, 128
    %5322 = vxpose.xlu0.b32.cont [3/16] 0.0, 128
    %5323 = vxpose.xlu0.b32.cont [4/16] 0.0, 128
    %5324 = vxpose.xlu0.b32.cont [5/16] 0.0, 128
    %5325 = vxpose.xlu0.b32.cont [6/16] 0.0, 128
    %5326 = vxpose.xlu0.b32.cont [7/16] 0.0, 128
    %5327 = vxpose.xlu0.b32.cont [8/16] 0.0, 128
    %5328 = vxpose.xlu0.b32.cont [9/16] 0.0, 128
    %5329 = vxpose.xlu0.b32.cont [10/16] 0.0, 128
    %5330 = vxpose.xlu0.b32.cont [11/16] 0.0, 128
    %5331 = vxpose.xlu0.b32.cont [12/16] 0.0, 128
    %5332 = vxpose.xlu0.b32.cont [13/16] 0.0, 128
    %5333 = vxpose.xlu0.b32.cont [14/16] 0.0, 128
    %5334 = vxpose.xlu0.b32.cont [15/16] 0.0, 128
    %5335 = vxpose.xlu0.b32.end [16/16] 0.0, 128
    %v5336 = vpop.trf.xlu0
    %v5337 = vpop.trf.xlu0
    %v5338 = vpop.trf.xlu0
    %v5339 = vpop.trf.xlu0
    %v5340 = vpop.trf.xlu0
    %v5341 = vpop.trf.xlu0
    %v5342 = vpop.trf.xlu0
    %v5343 = vpop.trf.xlu0
    %v5344 = vpop.trf.xlu0
    %v5345 = vpop.trf.xlu0
    %v5346 = vpop.trf.xlu0
    %v5347 = vpop.trf.xlu0
    %v5348 = vpop.trf.xlu0
    %v5349 = vpop.trf.xlu0
    %v5350 = vpop.trf.xlu0
    %v5351 = vpop.trf.xlu0
    %v5352 = vperm.slane %v5086, 0
    %v5353 = vlaneseq
    %v5354 = vshrl.u32 %v5353, 7
    %5356 = vset.pattern.permute.xlu0 %v5354
    %5357 = vperm.xlu0 %5356, %v5352
    %v5358 = vpop.permute.xlu0 %5357
    %v5359 = vlaneseq
    %v5360 = vshrl.u32 %v5359, 7
    %v5361 = vadd.s32 %v5360, 8
    %5362 = vset.pattern.permute.xlu0 %v5361
    %5363 = vperm.xlu0 %5362, %v5352
    %v5364 = vpop.permute.xlu0 %5363
    %v5365 = vperm.slane %v5086, 1
    %v5366 = vlaneseq
    %v5367 = vshrl.u32 %v5366, 7
    %5369 = vset.pattern.permute.xlu0 %v5367
    %5370 = vperm.xlu0 %5369, %v5365
    %v5371 = vpop.permute.xlu0 %5370
    %v5372 = vlaneseq
    %v5373 = vshrl.u32 %v5372, 7
    %v5374 = vadd.s32 %v5373, 8
    %5375 = vset.pattern.permute.xlu0 %v5374
    %5376 = vperm.xlu0 %5375, %v5365
    %v5377 = vpop.permute.xlu0 %5376
    %v5378 = vperm.slane %v5086, 2
    %v5379 = vlaneseq
    %v5380 = vshrl.u32 %v5379, 7
    %5382 = vset.pattern.permute.xlu0 %v5380
    %5383 = vperm.xlu0 %5382, %v5378
    %v5384 = vpop.permute.xlu0 %5383
    %v5385 = vlaneseq
    %v5386 = vshrl.u32 %v5385, 7
    %v5387 = vadd.s32 %v5386, 8
    %5388 = vset.pattern.permute.xlu0 %v5387
    %5389 = vperm.xlu0 %5388, %v5378
    %v5390 = vpop.permute.xlu0 %5389
    %v5391 = vperm.slane %v5086, 3
    %v5392 = vlaneseq
    %v5393 = vshrl.u32 %v5392, 7
    %5395 = vset.pattern.permute.xlu0 %v5393
    %5396 = vperm.xlu0 %5395, %v5391
    %v5397 = vpop.permute.xlu0 %5396
    %v5398 = vlaneseq
    %v5399 = vshrl.u32 %v5398, 7
    %v5400 = vadd.s32 %v5399, 8
    %5401 = vset.pattern.permute.xlu0 %v5400
    %5402 = vperm.xlu0 %5401, %v5391
    %v5403 = vpop.permute.xlu0 %5402
    %v5404 = vperm.slane %v5086, 4
    %v5405 = vlaneseq
    %v5406 = vshrl.u32 %v5405, 7
    %5408 = vset.pattern.permute.xlu0 %v5406
    %5409 = vperm.xlu0 %5408, %v5404
    %v5410 = vpop.permute.xlu0 %5409
    %v5411 = vlaneseq
    %v5412 = vshrl.u32 %v5411, 7
    %v5413 = vadd.s32 %v5412, 8
    %5414 = vset.pattern.permute.xlu0 %v5413
    %5415 = vperm.xlu0 %5414, %v5404
    %v5416 = vpop.permute.xlu0 %5415
    %v5417 = vperm.slane %v5086, 5
    %v5418 = vlaneseq
    %v5419 = vshrl.u32 %v5418, 7
    %5421 = vset.pattern.permute.xlu0 %v5419
    %5422 = vperm.xlu0 %5421, %v5417
    %v5423 = vpop.permute.xlu0 %5422
    %v5424 = vlaneseq
    %v5425 = vshrl.u32 %v5424, 7
    %v5426 = vadd.s32 %v5425, 8
    %5427 = vset.pattern.permute.xlu0 %v5426
    %5428 = vperm.xlu0 %5427, %v5417
    %v5429 = vpop.permute.xlu0 %5428
    %v5430 = vperm.slane %v5086, 6
    %v5431 = vlaneseq
    %v5432 = vshrl.u32 %v5431, 7
    %5434 = vset.pattern.permute.xlu0 %v5432
    %5435 = vperm.xlu0 %5434, %v5430
    %v5436 = vpop.permute.xlu0 %5435
    %v5437 = vlaneseq
    %v5438 = vshrl.u32 %v5437, 7
    %v5439 = vadd.s32 %v5438, 8
    %5440 = vset.pattern.permute.xlu0 %v5439
    %5441 = vperm.xlu0 %5440, %v5430
    %v5442 = vpop.permute.xlu0 %5441
    %v5443 = vperm.slane %v5086, 7
    %v5444 = vlaneseq
    %v5445 = vshrl.u32 %v5444, 7
    %5447 = vset.pattern.permute.xlu0 %v5445
    %5448 = vperm.xlu0 %5447, %v5443
    %v5449 = vpop.permute.xlu0 %5448
    %v5450 = vlaneseq
    %v5451 = vshrl.u32 %v5450, 7
    %v5452 = vadd.s32 %v5451, 8
    %5453 = vset.pattern.permute.xlu0 %v5452
    %5454 = vperm.xlu0 %5453, %v5443
    %v5455 = vpop.permute.xlu0 %5454
    %v5456 = vperm.slane %v5093, 0
    %v5457 = vlaneseq
    %v5458 = vshrl.u32 %v5457, 7
    %5460 = vset.pattern.permute.xlu0 %v5458
    %5461 = vperm.xlu0 %5460, %v5456
    %v5462 = vpop.permute.xlu0 %5461
    %v5463 = vlaneseq
    %v5464 = vshrl.u32 %v5463, 7
    %v5465 = vadd.s32 %v5464, 8
    %5466 = vset.pattern.permute.xlu0 %v5465
    %5467 = vperm.xlu0 %5466, %v5456
    %v5468 = vpop.permute.xlu0 %5467
    %v5469 = vperm.slane %v5093, 1
    %v5470 = vlaneseq
    %v5471 = vshrl.u32 %v5470, 7
    %5473 = vset.pattern.permute.xlu0 %v5471
    %5474 = vperm.xlu0 %5473, %v5469
    %v5475 = vpop.permute.xlu0 %5474
    %v5476 = vlaneseq
    %v5477 = vshrl.u32 %v5476, 7
    %v5478 = vadd.s32 %v5477, 8
    %5479 = vset.pattern.permute.xlu0 %v5478
    %5480 = vperm.xlu0 %5479, %v5469
    %v5481 = vpop.permute.xlu0 %5480
    %v5482 = vperm.slane %v5093, 2
    %v5483 = vlaneseq
    %v5484 = vshrl.u32 %v5483, 7
    %5486 = vset.pattern.permute.xlu0 %v5484
    %5487 = vperm.xlu0 %5486, %v5482
    %v5488 = vpop.permute.xlu0 %5487
    %v5489 = vlaneseq
    %v5490 = vshrl.u32 %v5489, 7
    %v5491 = vadd.s32 %v5490, 8
    %5492 = vset.pattern.permute.xlu0 %v5491
    %5493 = vperm.xlu0 %5492, %v5482
    %v5494 = vpop.permute.xlu0 %5493
    %v5495 = vperm.slane %v5093, 3
    %v5496 = vlaneseq
    %v5497 = vshrl.u32 %v5496, 7
    %5499 = vset.pattern.permute.xlu0 %v5497
    %5500 = vperm.xlu0 %5499, %v5495
    %v5501 = vpop.permute.xlu0 %5500
    %v5502 = vlaneseq
    %v5503 = vshrl.u32 %v5502, 7
    %v5504 = vadd.s32 %v5503, 8
    %5505 = vset.pattern.permute.xlu0 %v5504
    %5506 = vperm.xlu0 %5505, %v5495
    %v5507 = vpop.permute.xlu0 %5506
    %v5508 = vperm.slane %v5093, 4
    %v5509 = vlaneseq
    %v5510 = vshrl.u32 %v5509, 7
    %5512 = vset.pattern.permute.xlu0 %v5510
    %5513 = vperm.xlu0 %5512, %v5508
    %v5514 = vpop.permute.xlu0 %5513
    %v5515 = vlaneseq
    %v5516 = vshrl.u32 %v5515, 7
    %v5517 = vadd.s32 %v5516, 8
    %5518 = vset.pattern.permute.xlu0 %v5517
    %5519 = vperm.xlu0 %5518, %v5508
    %v5520 = vpop.permute.xlu0 %5519
    %v5521 = vperm.slane %v5093, 5
    %v5522 = vlaneseq
    %v5523 = vshrl.u32 %v5522, 7
    %5525 = vset.pattern.permute.xlu0 %v5523
    %5526 = vperm.xlu0 %5525, %v5521
    %v5527 = vpop.permute.xlu0 %5526
    %v5528 = vlaneseq
    %v5529 = vshrl.u32 %v5528, 7
    %v5530 = vadd.s32 %v5529, 8
    %5531 = vset.pattern.permute.xlu0 %v5530
    %5532 = vperm.xlu0 %5531, %v5521
    %v5533 = vpop.permute.xlu0 %5532
    %v5534 = vperm.slane %v5093, 6
    %v5535 = vlaneseq
    %v5536 = vshrl.u32 %v5535, 7
    %5538 = vset.pattern.permute.xlu0 %v5536
    %5539 = vperm.xlu0 %5538, %v5534
    %v5540 = vpop.permute.xlu0 %5539
    %v5541 = vlaneseq
    %v5542 = vshrl.u32 %v5541, 7
    %v5543 = vadd.s32 %v5542, 8
    %5544 = vset.pattern.permute.xlu0 %v5543
    %5545 = vperm.xlu0 %5544, %v5534
    %v5546 = vpop.permute.xlu0 %5545
    %v5547 = vperm.slane %v5093, 7
    %v5548 = vlaneseq
    %v5549 = vshrl.u32 %v5548, 7
    %5551 = vset.pattern.permute.xlu0 %v5549
    %5552 = vperm.xlu0 %5551, %v5547
    %v5553 = vpop.permute.xlu0 %5552
    %v5554 = vlaneseq
    %v5555 = vshrl.u32 %v5554, 7
    %v5556 = vadd.s32 %v5555, 8
    %5557 = vset.pattern.permute.xlu0 %v5556
    %5558 = vperm.xlu0 %5557, %v5547
    %v5559 = vpop.permute.xlu0 %5558
    %v5560 = vperm.slane %v5278, 0
    %v5561 = vlaneseq
    %v5562 = vshrl.u32 %v5561, 7
    %5564 = vset.pattern.permute.xlu0 %v5562
    %5565 = vperm.xlu0 %5564, %v5560
    %v5566 = vpop.permute.xlu0 %5565
    %v5567 = vlaneseq
    %v5568 = vshrl.u32 %v5567, 7
    %v5569 = vadd.s32 %v5568, 8
    %5570 = vset.pattern.permute.xlu0 %v5569
    %5571 = vperm.xlu0 %5570, %v5560
    %v5572 = vpop.permute.xlu0 %5571
    %v5573 = vperm.slane %v5278, 1
    %v5574 = vlaneseq
    %v5575 = vshrl.u32 %v5574, 7
    %5577 = vset.pattern.permute.xlu0 %v5575
    %5578 = vperm.xlu0 %5577, %v5573
    %v5579 = vpop.permute.xlu0 %5578
    %v5580 = vlaneseq
    %v5581 = vshrl.u32 %v5580, 7
    %v5582 = vadd.s32 %v5581, 8
    %5583 = vset.pattern.permute.xlu0 %v5582
    %5584 = vperm.xlu0 %5583, %v5573
    %v5585 = vpop.permute.xlu0 %5584
    %v5586 = vperm.slane %v5278, 2
    %v5587 = vlaneseq
    %v5588 = vshrl.u32 %v5587, 7
    %5590 = vset.pattern.permute.xlu0 %v5588
    %5591 = vperm.xlu0 %5590, %v5586
    %v5592 = vpop.permute.xlu0 %5591
    %v5593 = vlaneseq
    %v5594 = vshrl.u32 %v5593, 7
    %v5595 = vadd.s32 %v5594, 8
    %5596 = vset.pattern.permute.xlu0 %v5595
    %5597 = vperm.xlu0 %5596, %v5586
    %v5598 = vpop.permute.xlu0 %5597
    %v5599 = vperm.slane %v5278, 3
    %v5600 = vlaneseq
    %v5601 = vshrl.u32 %v5600, 7
    %5603 = vset.pattern.permute.xlu0 %v5601
    %5604 = vperm.xlu0 %5603, %v5599
    %v5605 = vpop.permute.xlu0 %5604
    %v5606 = vlaneseq
    %v5607 = vshrl.u32 %v5606, 7
    %v5608 = vadd.s32 %v5607, 8
    %5609 = vset.pattern.permute.xlu0 %v5608
    %5610 = vperm.xlu0 %5609, %v5599
    %v5611 = vpop.permute.xlu0 %5610
    %v5612 = vperm.slane %v5278, 4
    %v5613 = vlaneseq
    %v5614 = vshrl.u32 %v5613, 7
    %5616 = vset.pattern.permute.xlu0 %v5614
    %5617 = vperm.xlu0 %5616, %v5612
    %v5618 = vpop.permute.xlu0 %5617
    %v5619 = vlaneseq
    %v5620 = vshrl.u32 %v5619, 7
    %v5621 = vadd.s32 %v5620, 8
    %5622 = vset.pattern.permute.xlu0 %v5621
    %5623 = vperm.xlu0 %5622, %v5612
    %v5624 = vpop.permute.xlu0 %5623
    %v5625 = vperm.slane %v5278, 5
    %v5626 = vlaneseq
    %v5627 = vshrl.u32 %v5626, 7
    %5629 = vset.pattern.permute.xlu0 %v5627
    %5630 = vperm.xlu0 %5629, %v5625
    %v5631 = vpop.permute.xlu0 %5630
    %v5632 = vlaneseq
    %v5633 = vshrl.u32 %v5632, 7
    %v5634 = vadd.s32 %v5633, 8
    %5635 = vset.pattern.permute.xlu0 %v5634
    %5636 = vperm.xlu0 %5635, %v5625
    %v5637 = vpop.permute.xlu0 %5636
    %v5638 = vperm.slane %v5278, 6
    %v5639 = vlaneseq
    %v5640 = vshrl.u32 %v5639, 7
    %5642 = vset.pattern.permute.xlu0 %v5640
    %5643 = vperm.xlu0 %5642, %v5638
    %v5644 = vpop.permute.xlu0 %5643
    %v5645 = vlaneseq
    %v5646 = vshrl.u32 %v5645, 7
    %v5647 = vadd.s32 %v5646, 8
    %5648 = vset.pattern.permute.xlu0 %v5647
    %5649 = vperm.xlu0 %5648, %v5638
    %v5650 = vpop.permute.xlu0 %5649
    %v5651 = vperm.slane %v5278, 7
    %v5652 = vlaneseq
    %v5653 = vshrl.u32 %v5652, 7
    %5655 = vset.pattern.permute.xlu0 %v5653
    %5656 = vperm.xlu0 %5655, %v5651
    %v5657 = vpop.permute.xlu0 %5656
    %v5658 = vlaneseq
    %v5659 = vshrl.u32 %v5658, 7
    %v5660 = vadd.s32 %v5659, 8
    %5661 = vset.pattern.permute.xlu0 %v5660
    %5662 = vperm.xlu0 %5661, %v5651
    %v5663 = vpop.permute.xlu0 %5662
    %v5664 = vperm.slane %v5285, 0
    %v5665 = vlaneseq
    %v5666 = vshrl.u32 %v5665, 7
    %5668 = vset.pattern.permute.xlu0 %v5666
    %5669 = vperm.xlu0 %5668, %v5664
    %v5670 = vpop.permute.xlu0 %5669
    %v5671 = vlaneseq
    %v5672 = vshrl.u32 %v5671, 7
    %v5673 = vadd.s32 %v5672, 8
    %5674 = vset.pattern.permute.xlu0 %v5673
    %5675 = vperm.xlu0 %5674, %v5664
    %v5676 = vpop.permute.xlu0 %5675
    %v5677 = vperm.slane %v5285, 1
    %v5678 = vlaneseq
    %v5679 = vshrl.u32 %v5678, 7
    %5681 = vset.pattern.permute.xlu0 %v5679
    %5682 = vperm.xlu0 %5681, %v5677
    %v5683 = vpop.permute.xlu0 %5682
    %v5684 = vlaneseq
    %v5685 = vshrl.u32 %v5684, 7
    %v5686 = vadd.s32 %v5685, 8
    %5687 = vset.pattern.permute.xlu0 %v5686
    %5688 = vperm.xlu0 %5687, %v5677
    %v5689 = vpop.permute.xlu0 %5688
    %v5690 = vperm.slane %v5285, 2
    %v5691 = vlaneseq
    %v5692 = vshrl.u32 %v5691, 7
    %5694 = vset.pattern.permute.xlu0 %v5692
    %5695 = vperm.xlu0 %5694, %v5690
    %v5696 = vpop.permute.xlu0 %5695
    %v5697 = vlaneseq
    %v5698 = vshrl.u32 %v5697, 7
    %v5699 = vadd.s32 %v5698, 8
    %5700 = vset.pattern.permute.xlu0 %v5699
    %5701 = vperm.xlu0 %5700, %v5690
    %v5702 = vpop.permute.xlu0 %5701
    %v5703 = vperm.slane %v5285, 3
    %v5704 = vlaneseq
    %v5705 = vshrl.u32 %v5704, 7
    %5707 = vset.pattern.permute.xlu0 %v5705
    %5708 = vperm.xlu0 %5707, %v5703
    %v5709 = vpop.permute.xlu0 %5708
    %v5710 = vlaneseq
    %v5711 = vshrl.u32 %v5710, 7
    %v5712 = vadd.s32 %v5711, 8
    %5713 = vset.pattern.permute.xlu0 %v5712
    %5714 = vperm.xlu0 %5713, %v5703
    %v5715 = vpop.permute.xlu0 %5714
    %v5716 = vperm.slane %v5285, 4
    %v5717 = vlaneseq
    %v5718 = vshrl.u32 %v5717, 7
    %5720 = vset.pattern.permute.xlu0 %v5718
    %5721 = vperm.xlu0 %5720, %v5716
    %v5722 = vpop.permute.xlu0 %5721
    %v5723 = vlaneseq
    %v5724 = vshrl.u32 %v5723, 7
    %v5725 = vadd.s32 %v5724, 8
    %5726 = vset.pattern.permute.xlu0 %v5725
    %5727 = vperm.xlu0 %5726, %v5716
    %v5728 = vpop.permute.xlu0 %5727
    %v5729 = vperm.slane %v5285, 5
    %v5730 = vlaneseq
    %v5731 = vshrl.u32 %v5730, 7
    %5733 = vset.pattern.permute.xlu0 %v5731
    %5734 = vperm.xlu0 %5733, %v5729
    %v5735 = vpop.permute.xlu0 %5734
    %v5736 = vlaneseq
    %v5737 = vshrl.u32 %v5736, 7
    %v5738 = vadd.s32 %v5737, 8
    %5739 = vset.pattern.permute.xlu0 %v5738
    %5740 = vperm.xlu0 %5739, %v5729
    %v5741 = vpop.permute.xlu0 %5740
    %v5742 = vperm.slane %v5285, 6
    %v5743 = vlaneseq
    %v5744 = vshrl.u32 %v5743, 7
    %5746 = vset.pattern.permute.xlu0 %v5744
    %5747 = vperm.xlu0 %5746, %v5742
    %v5748 = vpop.permute.xlu0 %5747
    %v5749 = vlaneseq
    %v5750 = vshrl.u32 %v5749, 7
    %v5751 = vadd.s32 %v5750, 8
    %5752 = vset.pattern.permute.xlu0 %v5751
    %5753 = vperm.xlu0 %5752, %v5742
    %v5754 = vpop.permute.xlu0 %5753
    %v5755 = vperm.slane %v5285, 7
    %v5756 = vlaneseq
    %v5757 = vshrl.u32 %v5756, 7
    %5759 = vset.pattern.permute.xlu0 %v5757
    %5760 = vperm.xlu0 %5759, %v5755
    %v5761 = vpop.permute.xlu0 %5760
    %v5762 = vlaneseq
    %v5763 = vshrl.u32 %v5762, 7
    %v5764 = vadd.s32 %v5763, 8
    %5765 = vset.pattern.permute.xlu0 %v5764
    %5766 = vperm.xlu0 %5765, %v5755
    %v5767 = vpop.permute.xlu0 %5766
    %v5768 = vsub.f32 %v1809, %v5358
    %v5769 = vsub.f32 %v1811, %v5364
    %v5770 = vsub.f32 %v1838, %v5371
    %v5771 = vsub.f32 %v1840, %v5377
    %v5772 = vsub.f32 %v1867, %v5384
    %v5773 = vsub.f32 %v1869, %v5390
    %v5774 = vsub.f32 %v1896, %v5397
    %v5775 = vsub.f32 %v1898, %v5403
    %v5776 = vsub.f32 %v1925, %v5410
    %v5777 = vsub.f32 %v1927, %v5416
    %v5778 = vsub.f32 %v1954, %v5423
    %v5779 = vsub.f32 %v1956, %v5429
    %v5780 = vsub.f32 %v1983, %v5436
    %v5781 = vsub.f32 %v1985, %v5442
    %v5782 = vsub.f32 %v2012, %v5449
    %v5783 = vsub.f32 %v2014, %v5455
    %v5784 = vsub.f32 %v2041, %v5462
    %v5785 = vsub.f32 %v2043, %v5468
    %v5786 = vsub.f32 %v2070, %v5475
    %v5787 = vsub.f32 %v2072, %v5481
    %v5788 = vsub.f32 %v2099, %v5488
    %v5789 = vsub.f32 %v2101, %v5494
    %v5790 = vsub.f32 %v2128, %v5501
    %v5791 = vsub.f32 %v2130, %v5507
    %v5792 = vsub.f32 %v2157, %v5514
    %v5793 = vsub.f32 %v2159, %v5520
    %v5794 = vsub.f32 %v2186, %v5527
    %v5795 = vsub.f32 %v2188, %v5533
    %v5796 = vsub.f32 %v2215, %v5540
    %v5797 = vsub.f32 %v2217, %v5546
    %v5798 = vsub.f32 %v2244, %v5553
    %v5799 = vsub.f32 %v2246, %v5559
    %v5800 = vsub.f32 %v2273, %v5566
    %v5801 = vsub.f32 %v2275, %v5572
    %v5802 = vsub.f32 %v2302, %v5579
    %v5803 = vsub.f32 %v2304, %v5585
    %v5804 = vsub.f32 %v2331, %v5592
    %v5805 = vsub.f32 %v2333, %v5598
    %v5806 = vsub.f32 %v2360, %v5605
    %v5807 = vsub.f32 %v2362, %v5611
    %v5808 = vsub.f32 %v2389, %v5618
    %v5809 = vsub.f32 %v2391, %v5624
    %v5810 = vsub.f32 %v2418, %v5631
    %v5811 = vsub.f32 %v2420, %v5637
    %v5812 = vsub.f32 %v2447, %v5644
    %v5813 = vsub.f32 %v2449, %v5650
    %v5814 = vsub.f32 %v2476, %v5657
    %v5815 = vsub.f32 %v2478, %v5663
    %v5816 = vsub.f32 %v2505, %v5670
    %v5817 = vsub.f32 %v2507, %v5676
    %v5818 = vsub.f32 %v2534, %v5683
    %v5819 = vsub.f32 %v2536, %v5689
    %v5820 = vsub.f32 %v2563, %v5696
    %v5821 = vsub.f32 %v2565, %v5702
    %v5822 = vsub.f32 %v2592, %v5709
    %v5823 = vsub.f32 %v2594, %v5715
    %v5824 = vsub.f32 %v2621, %v5722
    %v5825 = vsub.f32 %v2623, %v5728
    %v5826 = vsub.f32 %v2650, %v5735
    %v5827 = vsub.f32 %v2652, %v5741
    %v5828 = vsub.f32 %v2679, %v5748
    %v5829 = vsub.f32 %v2681, %v5754
    %v5830 = vsub.f32 %v2708, %v5761
    %v5831 = vsub.f32 %v2710, %v5767
    %v5832 = vmul.f32 %v5768, 1.442695
    %v5833 = vpow.pop %v5832
    %v5834 = vmul.f32 %v5769, 1.442695
    %v5835 = vpow.pop %v5834
    %v5836 = vmul.f32 %v5770, 1.442695
    %v5837 = vpow.pop %v5836
    %v5838 = vmul.f32 %v5771, 1.442695
    %v5839 = vpow.pop %v5838
    %v5840 = vmul.f32 %v5772, 1.442695
    %v5841 = vpow.pop %v5840
    %v5842 = vmul.f32 %v5773, 1.442695
    %v5843 = vpow.pop %v5842
    %v5844 = vmul.f32 %v5774, 1.442695
    %v5845 = vpow.pop %v5844
    %v5846 = vmul.f32 %v5775, 1.442695
    %v5847 = vpow.pop %v5846
    %v5848 = vmul.f32 %v5776, 1.442695
    %v5849 = vpow.pop %v5848
    %v5850 = vmul.f32 %v5777, 1.442695
    %v5851 = vpow.pop %v5850
    %v5852 = vmul.f32 %v5778, 1.442695
    %v5853 = vpow.pop %v5852
    %v5854 = vmul.f32 %v5779, 1.442695
    %v5855 = vpow.pop %v5854
    %v5856 = vmul.f32 %v5780, 1.442695
    %v5857 = vpow.pop %v5856
    %v5858 = vmul.f32 %v5781, 1.442695
    %v5859 = vpow.pop %v5858
    %v5860 = vmul.f32 %v5782, 1.442695
    %v5861 = vpow.pop %v5860
    %v5862 = vmul.f32 %v5783, 1.442695
    %v5863 = vpow.pop %v5862
    %v5864 = vmul.f32 %v5784, 1.442695
    %v5865 = vpow.pop %v5864
    %v5866 = vmul.f32 %v5785, 1.442695
    %v5867 = vpow.pop %v5866
    %v5868 = vmul.f32 %v5786, 1.442695
    %v5869 = vpow.pop %v5868
    %v5870 = vmul.f32 %v5787, 1.442695
    %v5871 = vpow.pop %v5870
    %v5872 = vmul.f32 %v5788, 1.442695
    %v5873 = vpow.pop %v5872
    %v5874 = vmul.f32 %v5789, 1.442695
    %v5875 = vpow.pop %v5874
    %v5876 = vmul.f32 %v5790, 1.442695
    %v5877 = vpow.pop %v5876
    %v5878 = vmul.f32 %v5791, 1.442695
    %v5879 = vpow.pop %v5878
    %v5880 = vmul.f32 %v5792, 1.442695
    %v5881 = vpow.pop %v5880
    %v5882 = vmul.f32 %v5793, 1.442695
    %v5883 = vpow.pop %v5882
    %v5884 = vmul.f32 %v5794, 1.442695
    %v5885 = vpow.pop %v5884
    %v5886 = vmul.f32 %v5795, 1.442695
    %v5887 = vpow.pop %v5886
    %v5888 = vmul.f32 %v5796, 1.442695
    %v5889 = vpow.pop %v5888
    %v5890 = vmul.f32 %v5797, 1.442695
    %v5891 = vpow.pop %v5890
    %v5892 = vmul.f32 %v5798, 1.442695
    %v5893 = vpow.pop %v5892
    %v5894 = vmul.f32 %v5799, 1.442695
    %v5895 = vpow.pop %v5894
    %v5896 = vmul.f32 %v5800, 1.442695
    %v5897 = vpow.pop %v5896
    %v5898 = vmul.f32 %v5801, 1.442695
    %v5899 = vpow.pop %v5898
    %v5900 = vmul.f32 %v5802, 1.442695
    %v5901 = vpow.pop %v5900
    %v5902 = vmul.f32 %v5803, 1.442695
    %v5903 = vpow.pop %v5902
    %v5904 = vmul.f32 %v5804, 1.442695
    %v5905 = vpow.pop %v5904
    %v5906 = vmul.f32 %v5805, 1.442695
    %v5907 = vpow.pop %v5906
    %v5908 = vmul.f32 %v5806, 1.442695
    %v5909 = vpow.pop %v5908
    %v5910 = vmul.f32 %v5807, 1.442695
    %v5911 = vpow.pop %v5910
    %v5912 = vmul.f32 %v5808, 1.442695
    %v5913 = vpow.pop %v5912
    %v5914 = vmul.f32 %v5809, 1.442695
    %v5915 = vpow.pop %v5914
    %v5916 = vmul.f32 %v5810, 1.442695
    %v5917 = vpow.pop %v5916
    %v5918 = vmul.f32 %v5811, 1.442695
    %v5919 = vpow.pop %v5918
    %v5920 = vmul.f32 %v5812, 1.442695
    %v5921 = vpow.pop %v5920
    %v5922 = vmul.f32 %v5813, 1.442695
    %v5923 = vpow.pop %v5922
    %v5924 = vmul.f32 %v5814, 1.442695
    %v5925 = vpow.pop %v5924
    %v5926 = vmul.f32 %v5815, 1.442695
    %v5927 = vpow.pop %v5926
    %v5928 = vmul.f32 %v5816, 1.442695
    %v5929 = vpow.pop %v5928
    %v5930 = vmul.f32 %v5817, 1.442695
    %v5931 = vpow.pop %v5930
    %v5932 = vmul.f32 %v5818, 1.442695
    %v5933 = vpow.pop %v5932
    %v5934 = vmul.f32 %v5819, 1.442695
    %v5935 = vpow.pop %v5934
    %v5936 = vmul.f32 %v5820, 1.442695
    %v5937 = vpow.pop %v5936
    %v5938 = vmul.f32 %v5821, 1.442695
    %v5939 = vpow.pop %v5938
    %v5940 = vmul.f32 %v5822, 1.442695
    %v5941 = vpow.pop %v5940
    %v5942 = vmul.f32 %v5823, 1.442695
    %v5943 = vpow.pop %v5942
    %v5944 = vmul.f32 %v5824, 1.442695
    %v5945 = vpow.pop %v5944
    %v5946 = vmul.f32 %v5825, 1.442695
    %v5947 = vpow.pop %v5946
    %v5948 = vmul.f32 %v5826, 1.442695
    %v5949 = vpow.pop %v5948
    %v5950 = vmul.f32 %v5827, 1.442695
    %v5951 = vpow.pop %v5950
    %v5952 = vmul.f32 %v5828, 1.442695
    %v5953 = vpow.pop %v5952
    %v5954 = vmul.f32 %v5829, 1.442695
    %v5955 = vpow.pop %v5954
    %v5956 = vmul.f32 %v5830, 1.442695
    %v5957 = vpow.pop %v5956
    %v5958 = vmul.f32 %v5831, 1.442695
    %v5959 = vpow.pop %v5958
    %v5960 = vperm.slane %v5304, 0
    %v5961 = vlaneseq
    %v5962 = vshrl.u32 %v5961, 7
    %5964 = vset.pattern.permute.xlu0 %v5962
    %5965 = vperm.xlu0 %5964, %v5960
    %v5966 = vpop.permute.xlu0 %5965
    %v5967 = vlaneseq
    %v5968 = vshrl.u32 %v5967, 7
    %v5969 = vadd.s32 %v5968, 8
    %5970 = vset.pattern.permute.xlu0 %v5969
    %5971 = vperm.xlu0 %5970, %v5960
    %v5972 = vpop.permute.xlu0 %5971
    %v5973 = vperm.slane %v5304, 1
    %v5974 = vlaneseq
    %v5975 = vshrl.u32 %v5974, 7
    %5977 = vset.pattern.permute.xlu0 %v5975
    %5978 = vperm.xlu0 %5977, %v5973
    %v5979 = vpop.permute.xlu0 %5978
    %v5980 = vlaneseq
    %v5981 = vshrl.u32 %v5980, 7
    %v5982 = vadd.s32 %v5981, 8
    %5983 = vset.pattern.permute.xlu0 %v5982
    %5984 = vperm.xlu0 %5983, %v5973
    %v5985 = vpop.permute.xlu0 %5984
    %v5986 = vperm.slane %v5304, 2
    %v5987 = vlaneseq
    %v5988 = vshrl.u32 %v5987, 7
    %5990 = vset.pattern.permute.xlu0 %v5988
    %5991 = vperm.xlu0 %5990, %v5986
    %v5992 = vpop.permute.xlu0 %5991
    %v5993 = vlaneseq
    %v5994 = vshrl.u32 %v5993, 7
    %v5995 = vadd.s32 %v5994, 8
    %5996 = vset.pattern.permute.xlu0 %v5995
    %5997 = vperm.xlu0 %5996, %v5986
    %v5998 = vpop.permute.xlu0 %5997
    %v5999 = vperm.slane %v5304, 3
    %v6000 = vlaneseq
    %v6001 = vshrl.u32 %v6000, 7
    %6003 = vset.pattern.permute.xlu0 %v6001
    %6004 = vperm.xlu0 %6003, %v5999
    %v6005 = vpop.permute.xlu0 %6004
    %v6006 = vlaneseq
    %v6007 = vshrl.u32 %v6006, 7
    %v6008 = vadd.s32 %v6007, 8
    %6009 = vset.pattern.permute.xlu0 %v6008
    %6010 = vperm.xlu0 %6009, %v5999
    %v6011 = vpop.permute.xlu0 %6010
    %v6012 = vperm.slane %v5304, 4
    %v6013 = vlaneseq
    %v6014 = vshrl.u32 %v6013, 7
    %6016 = vset.pattern.permute.xlu0 %v6014
    %6017 = vperm.xlu0 %6016, %v6012
    %v6018 = vpop.permute.xlu0 %6017
    %v6019 = vlaneseq
    %v6020 = vshrl.u32 %v6019, 7
    %v6021 = vadd.s32 %v6020, 8
    %6022 = vset.pattern.permute.xlu0 %v6021
    %6023 = vperm.xlu0 %6022, %v6012
    %v6024 = vpop.permute.xlu0 %6023
    %v6025 = vperm.slane %v5304, 5
    %v6026 = vlaneseq
    %v6027 = vshrl.u32 %v6026, 7
    %6029 = vset.pattern.permute.xlu0 %v6027
    %6030 = vperm.xlu0 %6029, %v6025
    %v6031 = vpop.permute.xlu0 %6030
    %v6032 = vlaneseq
    %v6033 = vshrl.u32 %v6032, 7
    %v6034 = vadd.s32 %v6033, 8
    %6035 = vset.pattern.permute.xlu0 %v6034
    %6036 = vperm.xlu0 %6035, %v6025
    %v6037 = vpop.permute.xlu0 %6036
    %v6038 = vperm.slane %v5304, 6
    %v6039 = vlaneseq
    %v6040 = vshrl.u32 %v6039, 7
    %6042 = vset.pattern.permute.xlu0 %v6040
    %6043 = vperm.xlu0 %6042, %v6038
    %v6044 = vpop.permute.xlu0 %6043
    %v6045 = vlaneseq
    %v6046 = vshrl.u32 %v6045, 7
    %v6047 = vadd.s32 %v6046, 8
    %6048 = vset.pattern.permute.xlu0 %v6047
    %6049 = vperm.xlu0 %6048, %v6038
    %v6050 = vpop.permute.xlu0 %6049
    %v6051 = vperm.slane %v5304, 7
    %v6052 = vlaneseq
    %v6053 = vshrl.u32 %v6052, 7
    %6055 = vset.pattern.permute.xlu0 %v6053
    %6056 = vperm.xlu0 %6055, %v6051
    %v6057 = vpop.permute.xlu0 %6056
    %v6058 = vlaneseq
    %v6059 = vshrl.u32 %v6058, 7
    %v6060 = vadd.s32 %v6059, 8
    %6061 = vset.pattern.permute.xlu0 %v6060
    %6062 = vperm.xlu0 %6061, %v6051
    %v6063 = vpop.permute.xlu0 %6062
    %v6064 = vperm.slane %v5305, 0
    %v6065 = vlaneseq
    %v6066 = vshrl.u32 %v6065, 7
    %6068 = vset.pattern.permute.xlu0 %v6066
    %6069 = vperm.xlu0 %6068, %v6064
    %v6070 = vpop.permute.xlu0 %6069
    %v6071 = vlaneseq
    %v6072 = vshrl.u32 %v6071, 7
    %v6073 = vadd.s32 %v6072, 8
    %6074 = vset.pattern.permute.xlu0 %v6073
    %6075 = vperm.xlu0 %6074, %v6064
    %v6076 = vpop.permute.xlu0 %6075
    %v6077 = vperm.slane %v5305, 1
    %v6078 = vlaneseq
    %v6079 = vshrl.u32 %v6078, 7
    %6081 = vset.pattern.permute.xlu0 %v6079
    %6082 = vperm.xlu0 %6081, %v6077
    %v6083 = vpop.permute.xlu0 %6082
    %v6084 = vlaneseq
    %v6085 = vshrl.u32 %v6084, 7
    %v6086 = vadd.s32 %v6085, 8
    %6087 = vset.pattern.permute.xlu0 %v6086
    %6088 = vperm.xlu0 %6087, %v6077
    %v6089 = vpop.permute.xlu0 %6088
    %v6090 = vperm.slane %v5305, 2
    %v6091 = vlaneseq
    %v6092 = vshrl.u32 %v6091, 7
    %6094 = vset.pattern.permute.xlu0 %v6092
    %6095 = vperm.xlu0 %6094, %v6090
    %v6096 = vpop.permute.xlu0 %6095
    %v6097 = vlaneseq
    %v6098 = vshrl.u32 %v6097, 7
    %v6099 = vadd.s32 %v6098, 8
    %6100 = vset.pattern.permute.xlu0 %v6099
    %6101 = vperm.xlu0 %6100, %v6090
    %v6102 = vpop.permute.xlu0 %6101
    %v6103 = vperm.slane %v5305, 3
    %v6104 = vlaneseq
    %v6105 = vshrl.u32 %v6104, 7
    %6107 = vset.pattern.permute.xlu0 %v6105
    %6108 = vperm.xlu0 %6107, %v6103
    %v6109 = vpop.permute.xlu0 %6108
    %v6110 = vlaneseq
    %v6111 = vshrl.u32 %v6110, 7
    %v6112 = vadd.s32 %v6111, 8
    %6113 = vset.pattern.permute.xlu0 %v6112
    %6114 = vperm.xlu0 %6113, %v6103
    %v6115 = vpop.permute.xlu0 %6114
    %v6116 = vperm.slane %v5305, 4
    %v6117 = vlaneseq
    %v6118 = vshrl.u32 %v6117, 7
    %6120 = vset.pattern.permute.xlu0 %v6118
    %6121 = vperm.xlu0 %6120, %v6116
    %v6122 = vpop.permute.xlu0 %6121
    %v6123 = vlaneseq
    %v6124 = vshrl.u32 %v6123, 7
    %v6125 = vadd.s32 %v6124, 8
    %6126 = vset.pattern.permute.xlu0 %v6125
    %6127 = vperm.xlu0 %6126, %v6116
    %v6128 = vpop.permute.xlu0 %6127
    %v6129 = vperm.slane %v5305, 5
    %v6130 = vlaneseq
    %v6131 = vshrl.u32 %v6130, 7
    %6133 = vset.pattern.permute.xlu0 %v6131
    %6134 = vperm.xlu0 %6133, %v6129
    %v6135 = vpop.permute.xlu0 %6134
    %v6136 = vlaneseq
    %v6137 = vshrl.u32 %v6136, 7
    %v6138 = vadd.s32 %v6137, 8
    %6139 = vset.pattern.permute.xlu0 %v6138
    %6140 = vperm.xlu0 %6139, %v6129
    %v6141 = vpop.permute.xlu0 %6140
    %v6142 = vperm.slane %v5305, 6
    %v6143 = vlaneseq
    %v6144 = vshrl.u32 %v6143, 7
    %6146 = vset.pattern.permute.xlu0 %v6144
    %6147 = vperm.xlu0 %6146, %v6142
    %v6148 = vpop.permute.xlu0 %6147
    %v6149 = vlaneseq
    %v6150 = vshrl.u32 %v6149, 7
    %v6151 = vadd.s32 %v6150, 8
    %6152 = vset.pattern.permute.xlu0 %v6151
    %6153 = vperm.xlu0 %6152, %v6142
    %v6154 = vpop.permute.xlu0 %6153
    %v6155 = vperm.slane %v5305, 7
    %v6156 = vlaneseq
    %v6157 = vshrl.u32 %v6156, 7
    %6159 = vset.pattern.permute.xlu0 %v6157
    %6160 = vperm.xlu0 %6159, %v6155
    %v6161 = vpop.permute.xlu0 %6160
    %v6162 = vlaneseq
    %v6163 = vshrl.u32 %v6162, 7
    %v6164 = vadd.s32 %v6163, 8
    %6165 = vset.pattern.permute.xlu0 %v6164
    %6166 = vperm.xlu0 %6165, %v6155
    %v6167 = vpop.permute.xlu0 %6166
    %v6168 = vperm.slane %v5336, 0
    %v6169 = vlaneseq
    %v6170 = vshrl.u32 %v6169, 7
    %6172 = vset.pattern.permute.xlu0 %v6170
    %6173 = vperm.xlu0 %6172, %v6168
    %v6174 = vpop.permute.xlu0 %6173
    %v6175 = vlaneseq
    %v6176 = vshrl.u32 %v6175, 7
    %v6177 = vadd.s32 %v6176, 8
    %6178 = vset.pattern.permute.xlu0 %v6177
    %6179 = vperm.xlu0 %6178, %v6168
    %v6180 = vpop.permute.xlu0 %6179
    %v6181 = vperm.slane %v5336, 1
    %v6182 = vlaneseq
    %v6183 = vshrl.u32 %v6182, 7
    %6185 = vset.pattern.permute.xlu0 %v6183
    %6186 = vperm.xlu0 %6185, %v6181
    %v6187 = vpop.permute.xlu0 %6186
    %v6188 = vlaneseq
    %v6189 = vshrl.u32 %v6188, 7
    %v6190 = vadd.s32 %v6189, 8
    %6191 = vset.pattern.permute.xlu0 %v6190
    %6192 = vperm.xlu0 %6191, %v6181
    %v6193 = vpop.permute.xlu0 %6192
    %v6194 = vperm.slane %v5336, 2
    %v6195 = vlaneseq
    %v6196 = vshrl.u32 %v6195, 7
    %6198 = vset.pattern.permute.xlu0 %v6196
    %6199 = vperm.xlu0 %6198, %v6194
    %v6200 = vpop.permute.xlu0 %6199
    %v6201 = vlaneseq
    %v6202 = vshrl.u32 %v6201, 7
    %v6203 = vadd.s32 %v6202, 8
    %6204 = vset.pattern.permute.xlu0 %v6203
    %6205 = vperm.xlu0 %6204, %v6194
    %v6206 = vpop.permute.xlu0 %6205
    %v6207 = vperm.slane %v5336, 3
    %v6208 = vlaneseq
    %v6209 = vshrl.u32 %v6208, 7
    %6211 = vset.pattern.permute.xlu0 %v6209
    %6212 = vperm.xlu0 %6211, %v6207
    %v6213 = vpop.permute.xlu0 %6212
    %v6214 = vlaneseq
    %v6215 = vshrl.u32 %v6214, 7
    %v6216 = vadd.s32 %v6215, 8
    %6217 = vset.pattern.permute.xlu0 %v6216
    %6218 = vperm.xlu0 %6217, %v6207
    %v6219 = vpop.permute.xlu0 %6218
    %v6220 = vperm.slane %v5336, 4
    %v6221 = vlaneseq
    %v6222 = vshrl.u32 %v6221, 7
    %6224 = vset.pattern.permute.xlu0 %v6222
    %6225 = vperm.xlu0 %6224, %v6220
    %v6226 = vpop.permute.xlu0 %6225
    %v6227 = vlaneseq
    %v6228 = vshrl.u32 %v6227, 7
    %v6229 = vadd.s32 %v6228, 8
    %6230 = vset.pattern.permute.xlu0 %v6229
    %6231 = vperm.xlu0 %6230, %v6220
    %v6232 = vpop.permute.xlu0 %6231
    %v6233 = vperm.slane %v5336, 5
    %v6234 = vlaneseq
    %v6235 = vshrl.u32 %v6234, 7
    %6237 = vset.pattern.permute.xlu0 %v6235
    %6238 = vperm.xlu0 %6237, %v6233
    %v6239 = vpop.permute.xlu0 %6238
    %v6240 = vlaneseq
    %v6241 = vshrl.u32 %v6240, 7
    %v6242 = vadd.s32 %v6241, 8
    %6243 = vset.pattern.permute.xlu0 %v6242
    %6244 = vperm.xlu0 %6243, %v6233
    %v6245 = vpop.permute.xlu0 %6244
    %v6246 = vperm.slane %v5336, 6
    %v6247 = vlaneseq
    %v6248 = vshrl.u32 %v6247, 7
    %6250 = vset.pattern.permute.xlu0 %v6248
    %6251 = vperm.xlu0 %6250, %v6246
    %v6252 = vpop.permute.xlu0 %6251
    %v6253 = vlaneseq
    %v6254 = vshrl.u32 %v6253, 7
    %v6255 = vadd.s32 %v6254, 8
    %6256 = vset.pattern.permute.xlu0 %v6255
    %6257 = vperm.xlu0 %6256, %v6246
    %v6258 = vpop.permute.xlu0 %6257
    %v6259 = vperm.slane %v5336, 7
    %v6260 = vlaneseq
    %v6261 = vshrl.u32 %v6260, 7
    %6263 = vset.pattern.permute.xlu0 %v6261
    %6264 = vperm.xlu0 %6263, %v6259
    %v6265 = vpop.permute.xlu0 %6264
    %v6266 = vlaneseq
    %v6267 = vshrl.u32 %v6266, 7
    %v6268 = vadd.s32 %v6267, 8
    %6269 = vset.pattern.permute.xlu0 %v6268
    %6270 = vperm.xlu0 %6269, %v6259
    %v6271 = vpop.permute.xlu0 %6270
    %v6272 = vperm.slane %v5337, 0
    %v6273 = vlaneseq
    %v6274 = vshrl.u32 %v6273, 7
    %6276 = vset.pattern.permute.xlu0 %v6274
    %6277 = vperm.xlu0 %6276, %v6272
    %v6278 = vpop.permute.xlu0 %6277
    %v6279 = vlaneseq
    %v6280 = vshrl.u32 %v6279, 7
    %v6281 = vadd.s32 %v6280, 8
    %6282 = vset.pattern.permute.xlu0 %v6281
    %6283 = vperm.xlu0 %6282, %v6272
    %v6284 = vpop.permute.xlu0 %6283
    %v6285 = vperm.slane %v5337, 1
    %v6286 = vlaneseq
    %v6287 = vshrl.u32 %v6286, 7
    %6289 = vset.pattern.permute.xlu0 %v6287
    %6290 = vperm.xlu0 %6289, %v6285
    %v6291 = vpop.permute.xlu0 %6290
    %v6292 = vlaneseq
    %v6293 = vshrl.u32 %v6292, 7
    %v6294 = vadd.s32 %v6293, 8
    %6295 = vset.pattern.permute.xlu0 %v6294
    %6296 = vperm.xlu0 %6295, %v6285
    %v6297 = vpop.permute.xlu0 %6296
    %v6298 = vperm.slane %v5337, 2
    %v6299 = vlaneseq
    %v6300 = vshrl.u32 %v6299, 7
    %6302 = vset.pattern.permute.xlu0 %v6300
    %6303 = vperm.xlu0 %6302, %v6298
    %v6304 = vpop.permute.xlu0 %6303
    %v6305 = vlaneseq
    %v6306 = vshrl.u32 %v6305, 7
    %v6307 = vadd.s32 %v6306, 8
    %6308 = vset.pattern.permute.xlu0 %v6307
    %6309 = vperm.xlu0 %6308, %v6298
    %v6310 = vpop.permute.xlu0 %6309
    %v6311 = vperm.slane %v5337, 3
    %v6312 = vlaneseq
    %v6313 = vshrl.u32 %v6312, 7
    %6315 = vset.pattern.permute.xlu0 %v6313
    %6316 = vperm.xlu0 %6315, %v6311
    %v6317 = vpop.permute.xlu0 %6316
    %v6318 = vlaneseq
    %v6319 = vshrl.u32 %v6318, 7
    %v6320 = vadd.s32 %v6319, 8
    %6321 = vset.pattern.permute.xlu0 %v6320
    %6322 = vperm.xlu0 %6321, %v6311
    %v6323 = vpop.permute.xlu0 %6322
    %v6324 = vperm.slane %v5337, 4
    %v6325 = vlaneseq
    %v6326 = vshrl.u32 %v6325, 7
    %6328 = vset.pattern.permute.xlu0 %v6326
    %6329 = vperm.xlu0 %6328, %v6324
    %v6330 = vpop.permute.xlu0 %6329
    %v6331 = vlaneseq
    %v6332 = vshrl.u32 %v6331, 7
    %v6333 = vadd.s32 %v6332, 8
    %6334 = vset.pattern.permute.xlu0 %v6333
    %6335 = vperm.xlu0 %6334, %v6324
    %v6336 = vpop.permute.xlu0 %6335
    %v6337 = vperm.slane %v5337, 5
    %v6338 = vlaneseq
    %v6339 = vshrl.u32 %v6338, 7
    %6341 = vset.pattern.permute.xlu0 %v6339
    %6342 = vperm.xlu0 %6341, %v6337
    %v6343 = vpop.permute.xlu0 %6342
    %v6344 = vlaneseq
    %v6345 = vshrl.u32 %v6344, 7
    %v6346 = vadd.s32 %v6345, 8
    %6347 = vset.pattern.permute.xlu0 %v6346
    %6348 = vperm.xlu0 %6347, %v6337
    %v6349 = vpop.permute.xlu0 %6348
    %v6350 = vperm.slane %v5337, 6
    %v6351 = vlaneseq
    %v6352 = vshrl.u32 %v6351, 7
    %6354 = vset.pattern.permute.xlu0 %v6352
    %6355 = vperm.xlu0 %6354, %v6350
    %v6356 = vpop.permute.xlu0 %6355
    %v6357 = vlaneseq
    %v6358 = vshrl.u32 %v6357, 7
    %v6359 = vadd.s32 %v6358, 8
    %6360 = vset.pattern.permute.xlu0 %v6359
    %6361 = vperm.xlu0 %6360, %v6350
    %v6362 = vpop.permute.xlu0 %6361
    %v6363 = vperm.slane %v5337, 7
    %v6364 = vlaneseq
    %v6365 = vshrl.u32 %v6364, 7
    %6367 = vset.pattern.permute.xlu0 %v6365
    %6368 = vperm.xlu0 %6367, %v6363
    %v6369 = vpop.permute.xlu0 %6368
    %v6370 = vlaneseq
    %v6371 = vshrl.u32 %v6370, 7
    %v6372 = vadd.s32 %v6371, 8
    %6373 = vset.pattern.permute.xlu0 %v6372
    %6374 = vperm.xlu0 %6373, %v6363
    %v6375 = vpop.permute.xlu0 %6374
    %v6376 = vsub.f32 %v3640, %v5966
    %v6377 = vsub.f32 %v3641, %v5972
    %v6378 = vsub.f32 %v3642, %v5979
    %v6379 = vsub.f32 %v3643, %v5985
    %v6380 = vsub.f32 %v3644, %v5992
    %v6381 = vsub.f32 %v3645, %v5998
    %v6382 = vsub.f32 %v3646, %v6005
    %v6383 = vsub.f32 %v3647, %v6011
    %v6384 = vsub.f32 %v3648, %v6018
    %v6385 = vsub.f32 %v3649, %v6024
    %v6386 = vsub.f32 %v3650, %v6031
    %v6387 = vsub.f32 %v3651, %v6037
    %v6388 = vsub.f32 %v3652, %v6044
    %v6389 = vsub.f32 %v3653, %v6050
    %v6390 = vsub.f32 %v3654, %v6057
    %v6391 = vsub.f32 %v3655, %v6063
    %v6392 = vsub.f32 %v3656, %v6070
    %v6393 = vsub.f32 %v3657, %v6076
    %v6394 = vsub.f32 %v3658, %v6083
    %v6395 = vsub.f32 %v3659, %v6089
    %v6396 = vsub.f32 %v3660, %v6096
    %v6397 = vsub.f32 %v3661, %v6102
    %v6398 = vsub.f32 %v3662, %v6109
    %v6399 = vsub.f32 %v3663, %v6115
    %v6400 = vsub.f32 %v3664, %v6122
    %v6401 = vsub.f32 %v3665, %v6128
    %v6402 = vsub.f32 %v3666, %v6135
    %v6403 = vsub.f32 %v3667, %v6141
    %v6404 = vsub.f32 %v3668, %v6148
    %v6405 = vsub.f32 %v3669, %v6154
    %v6406 = vsub.f32 %v3670, %v6161
    %v6407 = vsub.f32 %v3671, %v6167
    %v6408 = vsub.f32 %v3672, %v6174
    %v6409 = vsub.f32 %v3673, %v6180
    %v6410 = vsub.f32 %v3674, %v6187
    %v6411 = vsub.f32 %v3675, %v6193
    %v6412 = vsub.f32 %v3676, %v6200
    %v6413 = vsub.f32 %v3677, %v6206
    %v6414 = vsub.f32 %v3678, %v6213
    %v6415 = vsub.f32 %v3679, %v6219
    %v6416 = vsub.f32 %v3680, %v6226
    %v6417 = vsub.f32 %v3681, %v6232
    %v6418 = vsub.f32 %v3682, %v6239
    %v6419 = vsub.f32 %v3683, %v6245
    %v6420 = vsub.f32 %v3684, %v6252
    %v6421 = vsub.f32 %v3685, %v6258
    %v6422 = vsub.f32 %v3686, %v6265
    %v6423 = vsub.f32 %v3687, %v6271
    %v6424 = vsub.f32 %v3688, %v6278
    %v6425 = vsub.f32 %v3689, %v6284
    %v6426 = vsub.f32 %v3690, %v6291
    %v6427 = vsub.f32 %v3691, %v6297
    %v6428 = vsub.f32 %v3692, %v6304
    %v6429 = vsub.f32 %v3693, %v6310
    %v6430 = vsub.f32 %v3694, %v6317
    %v6431 = vsub.f32 %v3695, %v6323
    %v6432 = vsub.f32 %v3696, %v6330
    %v6433 = vsub.f32 %v3697, %v6336
    %v6434 = vsub.f32 %v3698, %v6343
    %v6435 = vsub.f32 %v3699, %v6349
    %v6436 = vsub.f32 %v3700, %v6356
    %v6437 = vsub.f32 %v3701, %v6362
    %v6438 = vsub.f32 %v3702, %v6369
    %v6439 = vsub.f32 %v3703, %v6375
    %v6440 = vmul.f32 %v6376, 1.442695
    %v6441 = vpow.pop %v6440
    %v6442 = vmul.f32 %v6377, 1.442695
    %v6443 = vpow.pop %v6442
    %v6444 = vmul.f32 %v6378, 1.442695
    %v6445 = vpow.pop %v6444
    %v6446 = vmul.f32 %v6379, 1.442695
    %v6447 = vpow.pop %v6446
    %v6448 = vmul.f32 %v6380, 1.442695
    %v6449 = vpow.pop %v6448
    %v6450 = vmul.f32 %v6381, 1.442695
    %v6451 = vpow.pop %v6450
    %v6452 = vmul.f32 %v6382, 1.442695
    %v6453 = vpow.pop %v6452
    %v6454 = vmul.f32 %v6383, 1.442695
    %v6455 = vpow.pop %v6454
    %v6456 = vmul.f32 %v6384, 1.442695
    %v6457 = vpow.pop %v6456
    %v6458 = vmul.f32 %v6385, 1.442695
    %v6459 = vpow.pop %v6458
    %v6460 = vmul.f32 %v6386, 1.442695
    %v6461 = vpow.pop %v6460
    %v6462 = vmul.f32 %v6387, 1.442695
    %v6463 = vpow.pop %v6462
    %v6464 = vmul.f32 %v6388, 1.442695
    %v6465 = vpow.pop %v6464
    %v6466 = vmul.f32 %v6389, 1.442695
    %v6467 = vpow.pop %v6466
    %v6468 = vmul.f32 %v6390, 1.442695
    %v6469 = vpow.pop %v6468
    %v6470 = vmul.f32 %v6391, 1.442695
    %v6471 = vpow.pop %v6470
    %v6472 = vmul.f32 %v6392, 1.442695
    %v6473 = vpow.pop %v6472
    %v6474 = vmul.f32 %v6393, 1.442695
    %v6475 = vpow.pop %v6474
    %v6476 = vmul.f32 %v6394, 1.442695
    %v6477 = vpow.pop %v6476
    %v6478 = vmul.f32 %v6395, 1.442695
    %v6479 = vpow.pop %v6478
    %v6480 = vmul.f32 %v6396, 1.442695
    %v6481 = vpow.pop %v6480
    %v6482 = vmul.f32 %v6397, 1.442695
    %v6483 = vpow.pop %v6482
    %v6484 = vmul.f32 %v6398, 1.442695
    %v6485 = vpow.pop %v6484
    %v6486 = vmul.f32 %v6399, 1.442695
    %v6487 = vpow.pop %v6486
    %v6488 = vmul.f32 %v6400, 1.442695
    %v6489 = vpow.pop %v6488
    %v6490 = vmul.f32 %v6401, 1.442695
    %v6491 = vpow.pop %v6490
    %v6492 = vmul.f32 %v6402, 1.442695
    %v6493 = vpow.pop %v6492
    %v6494 = vmul.f32 %v6403, 1.442695
    %v6495 = vpow.pop %v6494
    %v6496 = vmul.f32 %v6404, 1.442695
    %v6497 = vpow.pop %v6496
    %v6498 = vmul.f32 %v6405, 1.442695
    %v6499 = vpow.pop %v6498
    %v6500 = vmul.f32 %v6406, 1.442695
    %v6501 = vpow.pop %v6500
    %v6502 = vmul.f32 %v6407, 1.442695
    %v6503 = vpow.pop %v6502
    %v6504 = vmul.f32 %v6408, 1.442695
    %v6505 = vpow.pop %v6504
    %v6506 = vmul.f32 %v6409, 1.442695
    %v6507 = vpow.pop %v6506
    %v6508 = vmul.f32 %v6410, 1.442695
    %v6509 = vpow.pop %v6508
    %v6510 = vmul.f32 %v6411, 1.442695
    %v6511 = vpow.pop %v6510
    %v6512 = vmul.f32 %v6412, 1.442695
    %v6513 = vpow.pop %v6512
    %v6514 = vmul.f32 %v6413, 1.442695
    %v6515 = vpow.pop %v6514
    %v6516 = vmul.f32 %v6414, 1.442695
    %v6517 = vpow.pop %v6516
    %v6518 = vmul.f32 %v6415, 1.442695
    %v6519 = vpow.pop %v6518
    %v6520 = vmul.f32 %v6416, 1.442695
    %v6521 = vpow.pop %v6520
    %v6522 = vmul.f32 %v6417, 1.442695
    %v6523 = vpow.pop %v6522
    %v6524 = vmul.f32 %v6418, 1.442695
    %v6525 = vpow.pop %v6524
    %v6526 = vmul.f32 %v6419, 1.442695
    %v6527 = vpow.pop %v6526
    %v6528 = vmul.f32 %v6420, 1.442695
    %v6529 = vpow.pop %v6528
    %v6530 = vmul.f32 %v6421, 1.442695
    %v6531 = vpow.pop %v6530
    %v6532 = vmul.f32 %v6422, 1.442695
    %v6533 = vpow.pop %v6532
    %v6534 = vmul.f32 %v6423, 1.442695
    %v6535 = vpow.pop %v6534
    %v6536 = vmul.f32 %v6424, 1.442695
    %v6537 = vpow.pop %v6536
    %v6538 = vmul.f32 %v6425, 1.442695
    %v6539 = vpow.pop %v6538
    %v6540 = vmul.f32 %v6426, 1.442695
    %v6541 = vpow.pop %v6540
    %v6542 = vmul.f32 %v6427, 1.442695
    %v6543 = vpow.pop %v6542
    %v6544 = vmul.f32 %v6428, 1.442695
    %v6545 = vpow.pop %v6544
    %v6546 = vmul.f32 %v6429, 1.442695
    %v6547 = vpow.pop %v6546
    %v6548 = vmul.f32 %v6430, 1.442695
    %v6549 = vpow.pop %v6548
    %v6550 = vmul.f32 %v6431, 1.442695
    %v6551 = vpow.pop %v6550
    %v6552 = vmul.f32 %v6432, 1.442695
    %v6553 = vpow.pop %v6552
    %v6554 = vmul.f32 %v6433, 1.442695
    %v6555 = vpow.pop %v6554
    %v6556 = vmul.f32 %v6434, 1.442695
    %v6557 = vpow.pop %v6556
    %v6558 = vmul.f32 %v6435, 1.442695
    %v6559 = vpow.pop %v6558
    %v6560 = vmul.f32 %v6436, 1.442695
    %v6561 = vpow.pop %v6560
    %v6562 = vmul.f32 %v6437, 1.442695
    %v6563 = vpow.pop %v6562
    %v6564 = vmul.f32 %v6438, 1.442695
    %v6565 = vpow.pop %v6564
    %v6566 = vmul.f32 %v6439, 1.442695
    %v6567 = vpow.pop %v6566
    %v6568 = vsel %vm3704, %v5833, 0.0
    %6569 = vadd.xlane.f32.xlu0 %v6568
    %v6570 = vpop.xlane.xlu0 %6569
    %v6571 = vsel %vm3704, %v5835, 0.0
    %6572 = vadd.xlane.f32.xlu0 %v6571
    %v6573 = vpop.xlane.xlu0 %6572
    %v6574 = vsel %vm3704, %v5837, 0.0
    %6575 = vadd.xlane.f32.xlu0 %v6574
    %v6576 = vpop.xlane.xlu0 %6575
    %v6577 = vsel %vm3704, %v5839, 0.0
    %6578 = vadd.xlane.f32.xlu0 %v6577
    %v6579 = vpop.xlane.xlu0 %6578
    %v6580 = vsel %vm3704, %v5841, 0.0
    %6581 = vadd.xlane.f32.xlu0 %v6580
    %v6582 = vpop.xlane.xlu0 %6581
    %v6583 = vsel %vm3704, %v5843, 0.0
    %6584 = vadd.xlane.f32.xlu0 %v6583
    %v6585 = vpop.xlane.xlu0 %6584
    %v6586 = vsel %vm3704, %v5845, 0.0
    %6587 = vadd.xlane.f32.xlu0 %v6586
    %v6588 = vpop.xlane.xlu0 %6587
    %v6589 = vsel %vm3704, %v5847, 0.0
    %6590 = vadd.xlane.f32.xlu0 %v6589
    %v6591 = vpop.xlane.xlu0 %6590
    %v6592 = vsel %vm3704, %v5849, 0.0
    %6593 = vadd.xlane.f32.xlu0 %v6592
    %v6594 = vpop.xlane.xlu0 %6593
    %v6595 = vsel %vm3704, %v5851, 0.0
    %6596 = vadd.xlane.f32.xlu0 %v6595
    %v6597 = vpop.xlane.xlu0 %6596
    %v6598 = vsel %vm3704, %v5853, 0.0
    %6599 = vadd.xlane.f32.xlu0 %v6598
    %v6600 = vpop.xlane.xlu0 %6599
    %v6601 = vsel %vm3704, %v5855, 0.0
    %6602 = vadd.xlane.f32.xlu0 %v6601
    %v6603 = vpop.xlane.xlu0 %6602
    %v6604 = vsel %vm3704, %v5857, 0.0
    %6605 = vadd.xlane.f32.xlu0 %v6604
    %v6606 = vpop.xlane.xlu0 %6605
    %v6607 = vsel %vm3704, %v5859, 0.0
    %6608 = vadd.xlane.f32.xlu0 %v6607
    %v6609 = vpop.xlane.xlu0 %6608
    %v6610 = vsel %vm3704, %v5861, 0.0
    %6611 = vadd.xlane.f32.xlu0 %v6610
    %v6612 = vpop.xlane.xlu0 %6611
    %v6613 = vsel %vm3704, %v5863, 0.0
    %6614 = vadd.xlane.f32.xlu0 %v6613
    %v6615 = vpop.xlane.xlu0 %6614
    %v6616 = vsel %vm3704, %v5865, 0.0
    %6617 = vadd.xlane.f32.xlu0 %v6616
    %v6618 = vpop.xlane.xlu0 %6617
    %v6619 = vsel %vm3704, %v5867, 0.0
    %6620 = vadd.xlane.f32.xlu0 %v6619
    %v6621 = vpop.xlane.xlu0 %6620
    %v6622 = vsel %vm3704, %v5869, 0.0
    %6623 = vadd.xlane.f32.xlu0 %v6622
    %v6624 = vpop.xlane.xlu0 %6623
    %v6625 = vsel %vm3704, %v5871, 0.0
    %6626 = vadd.xlane.f32.xlu0 %v6625
    %v6627 = vpop.xlane.xlu0 %6626
    %v6628 = vsel %vm3704, %v5873, 0.0
    %6629 = vadd.xlane.f32.xlu0 %v6628
    %v6630 = vpop.xlane.xlu0 %6629
    %v6631 = vsel %vm3704, %v5875, 0.0
    %6632 = vadd.xlane.f32.xlu0 %v6631
    %v6633 = vpop.xlane.xlu0 %6632
    %v6634 = vsel %vm3704, %v5877, 0.0
    %6635 = vadd.xlane.f32.xlu0 %v6634
    %v6636 = vpop.xlane.xlu0 %6635
    %v6637 = vsel %vm3704, %v5879, 0.0
    %6638 = vadd.xlane.f32.xlu0 %v6637
    %v6639 = vpop.xlane.xlu0 %6638
    %v6640 = vsel %vm3704, %v5881, 0.0
    %6641 = vadd.xlane.f32.xlu0 %v6640
    %v6642 = vpop.xlane.xlu0 %6641
    %v6643 = vsel %vm3704, %v5883, 0.0
    %6644 = vadd.xlane.f32.xlu0 %v6643
    %v6645 = vpop.xlane.xlu0 %6644
    %v6646 = vsel %vm3704, %v5885, 0.0
    %6647 = vadd.xlane.f32.xlu0 %v6646
    %v6648 = vpop.xlane.xlu0 %6647
    %v6649 = vsel %vm3704, %v5887, 0.0
    %6650 = vadd.xlane.f32.xlu0 %v6649
    %v6651 = vpop.xlane.xlu0 %6650
    %v6652 = vsel %vm3704, %v5889, 0.0
    %6653 = vadd.xlane.f32.xlu0 %v6652
    %v6654 = vpop.xlane.xlu0 %6653
    %v6655 = vsel %vm3704, %v5891, 0.0
    %6656 = vadd.xlane.f32.xlu0 %v6655
    %v6657 = vpop.xlane.xlu0 %6656
    %v6658 = vsel %vm3704, %v5893, 0.0
    %6659 = vadd.xlane.f32.xlu0 %v6658
    %v6660 = vpop.xlane.xlu0 %6659
    %v6661 = vsel %vm3704, %v5895, 0.0
    %6662 = vadd.xlane.f32.xlu0 %v6661
    %v6663 = vpop.xlane.xlu0 %6662
    %v6664 = vsel %vm3704, %v5897, 0.0
    %6665 = vadd.xlane.f32.xlu0 %v6664
    %v6666 = vpop.xlane.xlu0 %6665
    %v6667 = vsel %vm3704, %v5899, 0.0
    %6668 = vadd.xlane.f32.xlu0 %v6667
    %v6669 = vpop.xlane.xlu0 %6668
    %v6670 = vsel %vm3704, %v5901, 0.0
    %6671 = vadd.xlane.f32.xlu0 %v6670
    %v6672 = vpop.xlane.xlu0 %6671
    %v6673 = vsel %vm3704, %v5903, 0.0
    %6674 = vadd.xlane.f32.xlu0 %v6673
    %v6675 = vpop.xlane.xlu0 %6674
    %v6676 = vsel %vm3704, %v5905, 0.0
    %6677 = vadd.xlane.f32.xlu0 %v6676
    %v6678 = vpop.xlane.xlu0 %6677
    %v6679 = vsel %vm3704, %v5907, 0.0
    %6680 = vadd.xlane.f32.xlu0 %v6679
    %v6681 = vpop.xlane.xlu0 %6680
    %v6682 = vsel %vm3704, %v5909, 0.0
    %6683 = vadd.xlane.f32.xlu0 %v6682
    %v6684 = vpop.xlane.xlu0 %6683
    %v6685 = vsel %vm3704, %v5911, 0.0
    %6686 = vadd.xlane.f32.xlu0 %v6685
    %v6687 = vpop.xlane.xlu0 %6686
    %v6688 = vsel %vm3704, %v5913, 0.0
    %6689 = vadd.xlane.f32.xlu0 %v6688
    %v6690 = vpop.xlane.xlu0 %6689
    %v6691 = vsel %vm3704, %v5915, 0.0
    %6692 = vadd.xlane.f32.xlu0 %v6691
    %v6693 = vpop.xlane.xlu0 %6692
    %v6694 = vsel %vm3704, %v5917, 0.0
    %6695 = vadd.xlane.f32.xlu0 %v6694
    %v6696 = vpop.xlane.xlu0 %6695
    %v6697 = vsel %vm3704, %v5919, 0.0
    %6698 = vadd.xlane.f32.xlu0 %v6697
    %v6699 = vpop.xlane.xlu0 %6698
    %v6700 = vsel %vm3704, %v5921, 0.0
    %6701 = vadd.xlane.f32.xlu0 %v6700
    %v6702 = vpop.xlane.xlu0 %6701
    %v6703 = vsel %vm3704, %v5923, 0.0
    %6704 = vadd.xlane.f32.xlu0 %v6703
    %v6705 = vpop.xlane.xlu0 %6704
    %v6706 = vsel %vm3704, %v5925, 0.0
    %6707 = vadd.xlane.f32.xlu0 %v6706
    %v6708 = vpop.xlane.xlu0 %6707
    %v6709 = vsel %vm3704, %v5927, 0.0
    %6710 = vadd.xlane.f32.xlu0 %v6709
    %v6711 = vpop.xlane.xlu0 %6710
    %v6712 = vsel %vm3704, %v5929, 0.0
    %6713 = vadd.xlane.f32.xlu0 %v6712
    %v6714 = vpop.xlane.xlu0 %6713
    %v6715 = vsel %vm3704, %v5931, 0.0
    %6716 = vadd.xlane.f32.xlu0 %v6715
    %v6717 = vpop.xlane.xlu0 %6716
    %v6718 = vsel %vm3704, %v5933, 0.0
    %6719 = vadd.xlane.f32.xlu0 %v6718
    %v6720 = vpop.xlane.xlu0 %6719
    %v6721 = vsel %vm3704, %v5935, 0.0
    %6722 = vadd.xlane.f32.xlu0 %v6721
    %v6723 = vpop.xlane.xlu0 %6722
    %v6724 = vsel %vm3704, %v5937, 0.0
    %6725 = vadd.xlane.f32.xlu0 %v6724
    %v6726 = vpop.xlane.xlu0 %6725
    %v6727 = vsel %vm3704, %v5939, 0.0
    %6728 = vadd.xlane.f32.xlu0 %v6727
    %v6729 = vpop.xlane.xlu0 %6728
    %v6730 = vsel %vm3704, %v5941, 0.0
    %6731 = vadd.xlane.f32.xlu0 %v6730
    %v6732 = vpop.xlane.xlu0 %6731
    %v6733 = vsel %vm3704, %v5943, 0.0
    %6734 = vadd.xlane.f32.xlu0 %v6733
    %v6735 = vpop.xlane.xlu0 %6734
    %v6736 = vsel %vm3704, %v5945, 0.0
    %6737 = vadd.xlane.f32.xlu0 %v6736
    %v6738 = vpop.xlane.xlu0 %6737
    %v6739 = vsel %vm3704, %v5947, 0.0
    %6740 = vadd.xlane.f32.xlu0 %v6739
    %v6741 = vpop.xlane.xlu0 %6740
    %v6742 = vsel %vm3704, %v5949, 0.0
    %6743 = vadd.xlane.f32.xlu0 %v6742
    %v6744 = vpop.xlane.xlu0 %6743
    %v6745 = vsel %vm3704, %v5951, 0.0
    %6746 = vadd.xlane.f32.xlu0 %v6745
    %v6747 = vpop.xlane.xlu0 %6746
    %v6748 = vsel %vm3704, %v5953, 0.0
    %6749 = vadd.xlane.f32.xlu0 %v6748
    %v6750 = vpop.xlane.xlu0 %6749
    %v6751 = vsel %vm3704, %v5955, 0.0
    %6752 = vadd.xlane.f32.xlu0 %v6751
    %v6753 = vpop.xlane.xlu0 %6752
    %v6754 = vsel %vm3704, %v5957, 0.0
    %6755 = vadd.xlane.f32.xlu0 %v6754
    %v6756 = vpop.xlane.xlu0 %6755
    %v6757 = vsel %vm3704, %v5959, 0.0
    %6758 = vadd.xlane.f32.xlu0 %v6757
    %v6759 = vpop.xlane.xlu0 %6758
    %v6760 = vsel %vm3704, %v6441, 0.0
    %6761 = vadd.xlane.f32.xlu0 %v6760
    %v6762 = vpop.xlane.xlu0 %6761
    %v6763 = vsel %vm3704, %v6443, 0.0
    %6764 = vadd.xlane.f32.xlu0 %v6763
    %v6765 = vpop.xlane.xlu0 %6764
    %v6766 = vsel %vm3704, %v6445, 0.0
    %6767 = vadd.xlane.f32.xlu0 %v6766
    %v6768 = vpop.xlane.xlu0 %6767
    %v6769 = vsel %vm3704, %v6447, 0.0
    %6770 = vadd.xlane.f32.xlu0 %v6769
    %v6771 = vpop.xlane.xlu0 %6770
    %v6772 = vsel %vm3704, %v6449, 0.0
    %6773 = vadd.xlane.f32.xlu0 %v6772
    %v6774 = vpop.xlane.xlu0 %6773
    %v6775 = vsel %vm3704, %v6451, 0.0
    %6776 = vadd.xlane.f32.xlu0 %v6775
    %v6777 = vpop.xlane.xlu0 %6776
    %v6778 = vsel %vm3704, %v6453, 0.0
    %6779 = vadd.xlane.f32.xlu0 %v6778
    %v6780 = vpop.xlane.xlu0 %6779
    %v6781 = vsel %vm3704, %v6455, 0.0
    %6782 = vadd.xlane.f32.xlu0 %v6781
    %v6783 = vpop.xlane.xlu0 %6782
    %v6784 = vsel %vm3704, %v6457, 0.0
    %6785 = vadd.xlane.f32.xlu0 %v6784
    %v6786 = vpop.xlane.xlu0 %6785
    %v6787 = vsel %vm3704, %v6459, 0.0
    %6788 = vadd.xlane.f32.xlu0 %v6787
    %v6789 = vpop.xlane.xlu0 %6788
    %v6790 = vsel %vm3704, %v6461, 0.0
    %6791 = vadd.xlane.f32.xlu0 %v6790
    %v6792 = vpop.xlane.xlu0 %6791
    %v6793 = vsel %vm3704, %v6463, 0.0
    %6794 = vadd.xlane.f32.xlu0 %v6793
    %v6795 = vpop.xlane.xlu0 %6794
    %v6796 = vsel %vm3704, %v6465, 0.0
    %6797 = vadd.xlane.f32.xlu0 %v6796
    %v6798 = vpop.xlane.xlu0 %6797
    %v6799 = vsel %vm3704, %v6467, 0.0
    %6800 = vadd.xlane.f32.xlu0 %v6799
    %v6801 = vpop.xlane.xlu0 %6800
    %v6802 = vsel %vm3704, %v6469, 0.0
    %6803 = vadd.xlane.f32.xlu0 %v6802
    %v6804 = vpop.xlane.xlu0 %6803
    %v6805 = vsel %vm3704, %v6471, 0.0
    %6806 = vadd.xlane.f32.xlu0 %v6805
    %v6807 = vpop.xlane.xlu0 %6806
    %v6808 = vsel %vm3704, %v6473, 0.0
    %6809 = vadd.xlane.f32.xlu0 %v6808
    %v6810 = vpop.xlane.xlu0 %6809
    %v6811 = vsel %vm3704, %v6475, 0.0
    %6812 = vadd.xlane.f32.xlu0 %v6811
    %v6813 = vpop.xlane.xlu0 %6812
    %v6814 = vsel %vm3704, %v6477, 0.0
    %6815 = vadd.xlane.f32.xlu0 %v6814
    %v6816 = vpop.xlane.xlu0 %6815
    %v6817 = vsel %vm3704, %v6479, 0.0
    %6818 = vadd.xlane.f32.xlu0 %v6817
    %v6819 = vpop.xlane.xlu0 %6818
    %v6820 = vsel %vm3704, %v6481, 0.0
    %6821 = vadd.xlane.f32.xlu0 %v6820
    %v6822 = vpop.xlane.xlu0 %6821
    %v6823 = vsel %vm3704, %v6483, 0.0
    %6824 = vadd.xlane.f32.xlu0 %v6823
    %v6825 = vpop.xlane.xlu0 %6824
    %v6826 = vsel %vm3704, %v6485, 0.0
    %6827 = vadd.xlane.f32.xlu0 %v6826
    %v6828 = vpop.xlane.xlu0 %6827
    %v6829 = vsel %vm3704, %v6487, 0.0
    %6830 = vadd.xlane.f32.xlu0 %v6829
    %v6831 = vpop.xlane.xlu0 %6830
    %v6832 = vsel %vm3704, %v6489, 0.0
    %6833 = vadd.xlane.f32.xlu0 %v6832
    %v6834 = vpop.xlane.xlu0 %6833
    %v6835 = vsel %vm3704, %v6491, 0.0
    %6836 = vadd.xlane.f32.xlu0 %v6835
    %v6837 = vpop.xlane.xlu0 %6836
    %v6838 = vsel %vm3704, %v6493, 0.0
    %6839 = vadd.xlane.f32.xlu0 %v6838
    %v6840 = vpop.xlane.xlu0 %6839
    %v6841 = vsel %vm3704, %v6495, 0.0
    %6842 = vadd.xlane.f32.xlu0 %v6841
    %v6843 = vpop.xlane.xlu0 %6842
    %v6844 = vsel %vm3704, %v6497, 0.0
    %6845 = vadd.xlane.f32.xlu0 %v6844
    %v6846 = vpop.xlane.xlu0 %6845
    %v6847 = vsel %vm3704, %v6499, 0.0
    %6848 = vadd.xlane.f32.xlu0 %v6847
    %v6849 = vpop.xlane.xlu0 %6848
    %v6850 = vsel %vm3704, %v6501, 0.0
    %6851 = vadd.xlane.f32.xlu0 %v6850
    %v6852 = vpop.xlane.xlu0 %6851
    %v6853 = vsel %vm3704, %v6503, 0.0
    %6854 = vadd.xlane.f32.xlu0 %v6853
    %v6855 = vpop.xlane.xlu0 %6854
    %v6856 = vsel %vm3704, %v6505, 0.0
    %6857 = vadd.xlane.f32.xlu0 %v6856
    %v6858 = vpop.xlane.xlu0 %6857
    %v6859 = vsel %vm3704, %v6507, 0.0
    %6860 = vadd.xlane.f32.xlu0 %v6859
    %v6861 = vpop.xlane.xlu0 %6860
    %v6862 = vsel %vm3704, %v6509, 0.0
    %6863 = vadd.xlane.f32.xlu0 %v6862
    %v6864 = vpop.xlane.xlu0 %6863
    %v6865 = vsel %vm3704, %v6511, 0.0
    %6866 = vadd.xlane.f32.xlu0 %v6865
    %v6867 = vpop.xlane.xlu0 %6866
    %v6868 = vsel %vm3704, %v6513, 0.0
    %6869 = vadd.xlane.f32.xlu0 %v6868
    %v6870 = vpop.xlane.xlu0 %6869
    %v6871 = vsel %vm3704, %v6515, 0.0
    %6872 = vadd.xlane.f32.xlu0 %v6871
    %v6873 = vpop.xlane.xlu0 %6872
    %v6874 = vsel %vm3704, %v6517, 0.0
    %6875 = vadd.xlane.f32.xlu0 %v6874
    %v6876 = vpop.xlane.xlu0 %6875
    %v6877 = vsel %vm3704, %v6519, 0.0
    %6878 = vadd.xlane.f32.xlu0 %v6877
    %v6879 = vpop.xlane.xlu0 %6878
    %v6880 = vsel %vm3704, %v6521, 0.0
    %6881 = vadd.xlane.f32.xlu0 %v6880
    %v6882 = vpop.xlane.xlu0 %6881
    %v6883 = vsel %vm3704, %v6523, 0.0
    %6884 = vadd.xlane.f32.xlu0 %v6883
    %v6885 = vpop.xlane.xlu0 %6884
    %v6886 = vsel %vm3704, %v6525, 0.0
    %6887 = vadd.xlane.f32.xlu0 %v6886
    %v6888 = vpop.xlane.xlu0 %6887
    %v6889 = vsel %vm3704, %v6527, 0.0
    %6890 = vadd.xlane.f32.xlu0 %v6889
    %v6891 = vpop.xlane.xlu0 %6890
    %v6892 = vsel %vm3704, %v6529, 0.0
    %6893 = vadd.xlane.f32.xlu0 %v6892
    %v6894 = vpop.xlane.xlu0 %6893
    %v6895 = vsel %vm3704, %v6531, 0.0
    %6896 = vadd.xlane.f32.xlu0 %v6895
    %v6897 = vpop.xlane.xlu0 %6896
    %v6898 = vsel %vm3704, %v6533, 0.0
    %6899 = vadd.xlane.f32.xlu0 %v6898
    %v6900 = vpop.xlane.xlu0 %6899
    %v6901 = vsel %vm3704, %v6535, 0.0
    %6902 = vadd.xlane.f32.xlu0 %v6901
    %v6903 = vpop.xlane.xlu0 %6902
    %v6904 = vsel %vm3704, %v6537, 0.0
    %6905 = vadd.xlane.f32.xlu0 %v6904
    %v6906 = vpop.xlane.xlu0 %6905
    %v6907 = vsel %vm3704, %v6539, 0.0
    %6908 = vadd.xlane.f32.xlu0 %v6907
    %v6909 = vpop.xlane.xlu0 %6908
    %v6910 = vsel %vm3704, %v6541, 0.0
    %6911 = vadd.xlane.f32.xlu0 %v6910
    %v6912 = vpop.xlane.xlu0 %6911
    %v6913 = vsel %vm3704, %v6543, 0.0
    %6914 = vadd.xlane.f32.xlu0 %v6913
    %v6915 = vpop.xlane.xlu0 %6914
    %v6916 = vsel %vm3704, %v6545, 0.0
    %6917 = vadd.xlane.f32.xlu0 %v6916
    %v6918 = vpop.xlane.xlu0 %6917
    %v6919 = vsel %vm3704, %v6547, 0.0
    %6920 = vadd.xlane.f32.xlu0 %v6919
    %v6921 = vpop.xlane.xlu0 %6920
    %v6922 = vsel %vm3704, %v6549, 0.0
    %6923 = vadd.xlane.f32.xlu0 %v6922
    %v6924 = vpop.xlane.xlu0 %6923
    %v6925 = vsel %vm3704, %v6551, 0.0
    %6926 = vadd.xlane.f32.xlu0 %v6925
    %v6927 = vpop.xlane.xlu0 %6926
    %v6928 = vsel %vm3704, %v6553, 0.0
    %6929 = vadd.xlane.f32.xlu0 %v6928
    %v6930 = vpop.xlane.xlu0 %6929
    %v6931 = vsel %vm3704, %v6555, 0.0
    %6932 = vadd.xlane.f32.xlu0 %v6931
    %v6933 = vpop.xlane.xlu0 %6932
    %v6934 = vsel %vm3704, %v6557, 0.0
    %6935 = vadd.xlane.f32.xlu0 %v6934
    %v6936 = vpop.xlane.xlu0 %6935
    %v6937 = vsel %vm3704, %v6559, 0.0
    %6938 = vadd.xlane.f32.xlu0 %v6937
    %v6939 = vpop.xlane.xlu0 %6938
    %v6940 = vsel %vm3704, %v6561, 0.0
    %6941 = vadd.xlane.f32.xlu0 %v6940
    %v6942 = vpop.xlane.xlu0 %6941
    %v6943 = vsel %vm3704, %v6563, 0.0
    %6944 = vadd.xlane.f32.xlu0 %v6943
    %v6945 = vpop.xlane.xlu0 %6944
    %v6946 = vsel %vm3704, %v6565, 0.0
    %6947 = vadd.xlane.f32.xlu0 %v6946
    %v6948 = vpop.xlane.xlu0 %6947
    %v6949 = vsel %vm3704, %v6567, 0.0
    %6950 = vadd.xlane.f32.xlu0 %v6949
    %v6951 = vpop.xlane.xlu0 %6950
    %v6984 = vperm.slane %v6762, %v4122
    %v6985 = vperm.slane %v6765, %v4124
    %v6986 = vsel %vm4126, %v6985, %v6984
    %v6987 = vperm.slane %v6768, %v4122
    %v6988 = vperm.slane %v6771, %v4124
    %v6989 = vsel %vm4126, %v6988, %v6987
    %v6990 = vperm.slane %v6774, %v4122
    %v6991 = vperm.slane %v6777, %v4124
    %v6992 = vsel %vm4126, %v6991, %v6990
    %v6993 = vperm.slane %v6780, %v4122
    %v6994 = vperm.slane %v6783, %v4124
    %v6995 = vsel %vm4126, %v6994, %v6993
    %v6996 = vperm.slane %v6786, %v4122
    %v6997 = vperm.slane %v6789, %v4124
    %v6998 = vsel %vm4126, %v6997, %v6996
    %v6999 = vperm.slane %v6792, %v4122
    %v7000 = vperm.slane %v6795, %v4124
    %v7001 = vsel %vm4126, %v7000, %v6999
    %v7002 = vperm.slane %v6798, %v4122
    %v7003 = vperm.slane %v6801, %v4124
    %v7004 = vsel %vm4126, %v7003, %v7002
    %v7005 = vperm.slane %v6804, %v4122
    %v7006 = vperm.slane %v6807, %v4124
    %v7007 = vsel %vm4126, %v7006, %v7005
    %v7008 = vperm.slane %v6810, %v4122
    %v7009 = vperm.slane %v6813, %v4124
    %v7010 = vsel %vm4126, %v7009, %v7008
    %v7011 = vperm.slane %v6816, %v4122
    %v7012 = vperm.slane %v6819, %v4124
    %v7013 = vsel %vm4126, %v7012, %v7011
    %v7014 = vperm.slane %v6822, %v4122
    %v7015 = vperm.slane %v6825, %v4124
    %v7016 = vsel %vm4126, %v7015, %v7014
    %v7017 = vperm.slane %v6828, %v4122
    %v7018 = vperm.slane %v6831, %v4124
    %v7019 = vsel %vm4126, %v7018, %v7017
    %v7020 = vperm.slane %v6834, %v4122
    %v7021 = vperm.slane %v6837, %v4124
    %v7022 = vsel %vm4126, %v7021, %v7020
    %v7023 = vperm.slane %v6840, %v4122
    %v7024 = vperm.slane %v6843, %v4124
    %v7025 = vsel %vm4126, %v7024, %v7023
    %v7026 = vperm.slane %v6846, %v4122
    %v7027 = vperm.slane %v6849, %v4124
    %v7028 = vsel %vm4126, %v7027, %v7026
    %v7029 = vperm.slane %v6852, %v4122
    %v7030 = vperm.slane %v6855, %v4124
    %v7031 = vsel %vm4126, %v7030, %v7029
    %v7032 = vsel %vm4173, %v6989, %v6986
    %v7033 = vsel %vm4175, %v6992, %v7032
    %v7034 = vsel %vm4177, %v6995, %v7033
    %v7035 = vsel %vm4179, %v6998, %v7034
    %v7036 = vsel %vm4181, %v7001, %v7035
    %v7037 = vsel %vm4183, %v7004, %v7036
    %v7038 = vsel %vm4185, %v7007, %v7037
    %v7039 = vsel %vm4173, %v7013, %v7010
    %v7040 = vsel %vm4175, %v7016, %v7039
    %v7041 = vsel %vm4177, %v7019, %v7040
    %v7042 = vsel %vm4179, %v7022, %v7041
    %v7043 = vsel %vm4181, %v7025, %v7042
    %v7044 = vsel %vm4183, %v7028, %v7043
    %v7045 = vsel %vm4185, %v7031, %v7044
    %7048 = vxpose.xlu0.b32.start [1/16] %v7038, 128
    %7049 = vxpose.xlu0.b32.cont [2/16] %v7045, 128
    %7050 = vxpose.xlu0.b32.cont [3/16] 0.0, 128
    %7051 = vxpose.xlu0.b32.cont [4/16] 0.0, 128
    %7052 = vxpose.xlu0.b32.cont [5/16] 0.0, 128
    %7053 = vxpose.xlu0.b32.cont [6/16] 0.0, 128
    %7054 = vxpose.xlu0.b32.cont [7/16] 0.0, 128
    %7055 = vxpose.xlu0.b32.cont [8/16] 0.0, 128
    %7056 = vxpose.xlu0.b32.cont [9/16] 0.0, 128
    %7057 = vxpose.xlu0.b32.cont [10/16] 0.0, 128
    %7058 = vxpose.xlu0.b32.cont [11/16] 0.0, 128
    %7059 = vxpose.xlu0.b32.cont [12/16] 0.0, 128
    %7060 = vxpose.xlu0.b32.cont [13/16] 0.0, 128
    %7061 = vxpose.xlu0.b32.cont [14/16] 0.0, 128
    %7062 = vxpose.xlu0.b32.cont [15/16] 0.0, 128
    %7063 = vxpose.xlu0.b32.end [16/16] 0.0, 128
    %v7064 = vpop.trf.xlu0
    %v7065 = vpop.trf.xlu0
    %v7066 = vpop.trf.xlu0
    %v7067 = vpop.trf.xlu0
    %v7068 = vpop.trf.xlu0
    %v7069 = vpop.trf.xlu0
    %v7070 = vpop.trf.xlu0
    %v7071 = vpop.trf.xlu0
    %v7072 = vpop.trf.xlu0
    %v7073 = vpop.trf.xlu0
    %v7074 = vpop.trf.xlu0
    %v7075 = vpop.trf.xlu0
    %v7076 = vpop.trf.xlu0
    %v7077 = vpop.trf.xlu0
    %v7078 = vpop.trf.xlu0
    %v7079 = vpop.trf.xlu0
    %v7082 = vperm.slane %v7064, 0
    %v7083 = vlaneseq
    %v7084 = vshrl.u32 %v7083, 7
    %7086 = vset.pattern.permute.xlu0 %v7084
    %7087 = vperm.xlu0 %7086, %v7082
    %v7088 = vpop.permute.xlu0 %7087
    %v7089 = vlaneseq
    %v7090 = vshrl.u32 %v7089, 7
    %v7091 = vadd.s32 %v7090, 8
    %7092 = vset.pattern.permute.xlu0 %v7091
    %7093 = vperm.xlu0 %7092, %v7082
    %v7094 = vpop.permute.xlu0 %7093
    %v7095 = vperm.slane %v7064, 1
    %v7096 = vlaneseq
    %v7097 = vshrl.u32 %v7096, 7
    %7099 = vset.pattern.permute.xlu0 %v7097
    %7100 = vperm.xlu0 %7099, %v7095
    %v7101 = vpop.permute.xlu0 %7100
    %v7102 = vlaneseq
    %v7103 = vshrl.u32 %v7102, 7
    %v7104 = vadd.s32 %v7103, 8
    %7105 = vset.pattern.permute.xlu0 %v7104
    %7106 = vperm.xlu0 %7105, %v7095
    %v7107 = vpop.permute.xlu0 %7106
    %v7108 = vperm.slane %v7064, 2
    %v7109 = vlaneseq
    %v7110 = vshrl.u32 %v7109, 7
    %7112 = vset.pattern.permute.xlu0 %v7110
    %7113 = vperm.xlu0 %7112, %v7108
    %v7114 = vpop.permute.xlu0 %7113
    %v7115 = vlaneseq
    %v7116 = vshrl.u32 %v7115, 7
    %v7117 = vadd.s32 %v7116, 8
    %7118 = vset.pattern.permute.xlu0 %v7117
    %7119 = vperm.xlu0 %7118, %v7108
    %v7120 = vpop.permute.xlu0 %7119
    %v7121 = vperm.slane %v7064, 3
    %v7122 = vlaneseq
    %v7123 = vshrl.u32 %v7122, 7
    %7125 = vset.pattern.permute.xlu0 %v7123
    %7126 = vperm.xlu0 %7125, %v7121
    %v7127 = vpop.permute.xlu0 %7126
    %v7128 = vlaneseq
    %v7129 = vshrl.u32 %v7128, 7
    %v7130 = vadd.s32 %v7129, 8
    %7131 = vset.pattern.permute.xlu0 %v7130
    %7132 = vperm.xlu0 %7131, %v7121
    %v7133 = vpop.permute.xlu0 %7132
    %v7134 = vperm.slane %v7064, 4
    %v7135 = vlaneseq
    %v7136 = vshrl.u32 %v7135, 7
    %7138 = vset.pattern.permute.xlu0 %v7136
    %7139 = vperm.xlu0 %7138, %v7134
    %v7140 = vpop.permute.xlu0 %7139
    %v7141 = vlaneseq
    %v7142 = vshrl.u32 %v7141, 7
    %v7143 = vadd.s32 %v7142, 8
    %7144 = vset.pattern.permute.xlu0 %v7143
    %7145 = vperm.xlu0 %7144, %v7134
    %v7146 = vpop.permute.xlu0 %7145
    %v7147 = vperm.slane %v7064, 5
    %v7148 = vlaneseq
    %v7149 = vshrl.u32 %v7148, 7
    %7151 = vset.pattern.permute.xlu0 %v7149
    %7152 = vperm.xlu0 %7151, %v7147
    %v7153 = vpop.permute.xlu0 %7152
    %v7154 = vlaneseq
    %v7155 = vshrl.u32 %v7154, 7
    %v7156 = vadd.s32 %v7155, 8
    %7157 = vset.pattern.permute.xlu0 %v7156
    %7158 = vperm.xlu0 %7157, %v7147
    %v7159 = vpop.permute.xlu0 %7158
    %v7160 = vperm.slane %v7064, 6
    %v7161 = vlaneseq
    %v7162 = vshrl.u32 %v7161, 7
    %7164 = vset.pattern.permute.xlu0 %v7162
    %7165 = vperm.xlu0 %7164, %v7160
    %v7166 = vpop.permute.xlu0 %7165
    %v7167 = vlaneseq
    %v7168 = vshrl.u32 %v7167, 7
    %v7169 = vadd.s32 %v7168, 8
    %7170 = vset.pattern.permute.xlu0 %v7169
    %7171 = vperm.xlu0 %7170, %v7160
    %v7172 = vpop.permute.xlu0 %7171
    %v7173 = vperm.slane %v7064, 7
    %v7174 = vlaneseq
    %v7175 = vshrl.u32 %v7174, 7
    %7177 = vset.pattern.permute.xlu0 %v7175
    %7178 = vperm.xlu0 %7177, %v7173
    %v7179 = vpop.permute.xlu0 %7178
    %v7180 = vlaneseq
    %v7181 = vshrl.u32 %v7180, 7
    %v7182 = vadd.s32 %v7181, 8
    %7183 = vset.pattern.permute.xlu0 %v7182
    %7184 = vperm.xlu0 %7183, %v7173
    %v7185 = vpop.permute.xlu0 %7184
    %v7186 = vperm.slane %v7065, 0
    %v7187 = vlaneseq
    %v7188 = vshrl.u32 %v7187, 7
    %7190 = vset.pattern.permute.xlu0 %v7188
    %7191 = vperm.xlu0 %7190, %v7186
    %v7192 = vpop.permute.xlu0 %7191
    %v7193 = vlaneseq
    %v7194 = vshrl.u32 %v7193, 7
    %v7195 = vadd.s32 %v7194, 8
    %7196 = vset.pattern.permute.xlu0 %v7195
    %7197 = vperm.xlu0 %7196, %v7186
    %v7198 = vpop.permute.xlu0 %7197
    %v7199 = vperm.slane %v7065, 1
    %v7200 = vlaneseq
    %v7201 = vshrl.u32 %v7200, 7
    %7203 = vset.pattern.permute.xlu0 %v7201
    %7204 = vperm.xlu0 %7203, %v7199
    %v7205 = vpop.permute.xlu0 %7204
    %v7206 = vlaneseq
    %v7207 = vshrl.u32 %v7206, 7
    %v7208 = vadd.s32 %v7207, 8
    %7209 = vset.pattern.permute.xlu0 %v7208
    %7210 = vperm.xlu0 %7209, %v7199
    %v7211 = vpop.permute.xlu0 %7210
    %v7212 = vperm.slane %v7065, 2
    %v7213 = vlaneseq
    %v7214 = vshrl.u32 %v7213, 7
    %7216 = vset.pattern.permute.xlu0 %v7214
    %7217 = vperm.xlu0 %7216, %v7212
    %v7218 = vpop.permute.xlu0 %7217
    %v7219 = vlaneseq
    %v7220 = vshrl.u32 %v7219, 7
    %v7221 = vadd.s32 %v7220, 8
    %7222 = vset.pattern.permute.xlu0 %v7221
    %7223 = vperm.xlu0 %7222, %v7212
    %v7224 = vpop.permute.xlu0 %7223
    %v7225 = vperm.slane %v7065, 3
    %v7226 = vlaneseq
    %v7227 = vshrl.u32 %v7226, 7
    %7229 = vset.pattern.permute.xlu0 %v7227
    %7230 = vperm.xlu0 %7229, %v7225
    %v7231 = vpop.permute.xlu0 %7230
    %v7232 = vlaneseq
    %v7233 = vshrl.u32 %v7232, 7
    %v7234 = vadd.s32 %v7233, 8
    %7235 = vset.pattern.permute.xlu0 %v7234
    %7236 = vperm.xlu0 %7235, %v7225
    %v7237 = vpop.permute.xlu0 %7236
    %v7238 = vperm.slane %v7065, 4
    %v7239 = vlaneseq
    %v7240 = vshrl.u32 %v7239, 7
    %7242 = vset.pattern.permute.xlu0 %v7240
    %7243 = vperm.xlu0 %7242, %v7238
    %v7244 = vpop.permute.xlu0 %7243
    %v7245 = vlaneseq
    %v7246 = vshrl.u32 %v7245, 7
    %v7247 = vadd.s32 %v7246, 8
    %7248 = vset.pattern.permute.xlu0 %v7247
    %7249 = vperm.xlu0 %7248, %v7238
    %v7250 = vpop.permute.xlu0 %7249
    %v7251 = vperm.slane %v7065, 5
    %v7252 = vlaneseq
    %v7253 = vshrl.u32 %v7252, 7
    %7255 = vset.pattern.permute.xlu0 %v7253
    %7256 = vperm.xlu0 %7255, %v7251
    %v7257 = vpop.permute.xlu0 %7256
    %v7258 = vlaneseq
    %v7259 = vshrl.u32 %v7258, 7
    %v7260 = vadd.s32 %v7259, 8
    %7261 = vset.pattern.permute.xlu0 %v7260
    %7262 = vperm.xlu0 %7261, %v7251
    %v7263 = vpop.permute.xlu0 %7262
    %v7264 = vperm.slane %v7065, 6
    %v7265 = vlaneseq
    %v7266 = vshrl.u32 %v7265, 7
    %7268 = vset.pattern.permute.xlu0 %v7266
    %7269 = vperm.xlu0 %7268, %v7264
    %v7270 = vpop.permute.xlu0 %7269
    %v7271 = vlaneseq
    %v7272 = vshrl.u32 %v7271, 7
    %v7273 = vadd.s32 %v7272, 8
    %7274 = vset.pattern.permute.xlu0 %v7273
    %7275 = vperm.xlu0 %7274, %v7264
    %v7276 = vpop.permute.xlu0 %7275
    %v7277 = vperm.slane %v7065, 7
    %v7278 = vlaneseq
    %v7279 = vshrl.u32 %v7278, 7
    %7281 = vset.pattern.permute.xlu0 %v7279
    %7282 = vperm.xlu0 %7281, %v7277
    %v7283 = vpop.permute.xlu0 %7282
    %v7284 = vlaneseq
    %v7285 = vshrl.u32 %v7284, 7
    %v7286 = vadd.s32 %v7285, 8
    %7287 = vset.pattern.permute.xlu0 %v7286
    %7288 = vperm.xlu0 %7287, %v7277
    %v7289 = vpop.permute.xlu0 %7288
    %v7322 = vadd.f32 %v6570, %v7088
    %v7323 = vadd.f32 %v6573, %v7094
    %v7324 = vadd.f32 %v6576, %v7101
    %v7325 = vadd.f32 %v6579, %v7107
    %v7326 = vadd.f32 %v6582, %v7114
    %v7327 = vadd.f32 %v6585, %v7120
    %v7328 = vadd.f32 %v6588, %v7127
    %v7329 = vadd.f32 %v6591, %v7133
    %v7330 = vadd.f32 %v6594, %v7140
    %v7331 = vadd.f32 %v6597, %v7146
    %v7332 = vadd.f32 %v6600, %v7153
    %v7333 = vadd.f32 %v6603, %v7159
    %v7334 = vadd.f32 %v6606, %v7166
    %v7335 = vadd.f32 %v6609, %v7172
    %v7336 = vadd.f32 %v6612, %v7179
    %v7337 = vadd.f32 %v6615, %v7185
    %v7338 = vadd.f32 %v6618, %v7192
    %v7339 = vadd.f32 %v6621, %v7198
    %v7340 = vadd.f32 %v6624, %v7205
    %v7341 = vadd.f32 %v6627, %v7211
    %v7342 = vadd.f32 %v6630, %v7218
    %v7343 = vadd.f32 %v6633, %v7224
    %v7344 = vadd.f32 %v6636, %v7231
    %v7345 = vadd.f32 %v6639, %v7237
    %v7346 = vadd.f32 %v6642, %v7244
    %v7347 = vadd.f32 %v6645, %v7250
    %v7348 = vadd.f32 %v6648, %v7257
    %v7349 = vadd.f32 %v6651, %v7263
    %v7350 = vadd.f32 %v6654, %v7270
    %v7351 = vadd.f32 %v6657, %v7276
    %v7352 = vadd.f32 %v6660, %v7283
    %v7353 = vadd.f32 %v6663, %v7289
    %v7354 = vrcp.pop %v7322
    %v7355 = vrcp.pop %v7323
    %v7356 = vrcp.pop %v7324
    %v7357 = vrcp.pop %v7325
    %v7358 = vrcp.pop %v7326
    %v7359 = vrcp.pop %v7327
    %v7360 = vrcp.pop %v7328
    %v7361 = vrcp.pop %v7329
    %v7362 = vrcp.pop %v7330
    %v7363 = vrcp.pop %v7331
    %v7364 = vrcp.pop %v7332
    %v7365 = vrcp.pop %v7333
    %v7366 = vrcp.pop %v7334
    %v7367 = vrcp.pop %v7335
    %v7368 = vrcp.pop %v7336
    %v7369 = vrcp.pop %v7337
    %v7370 = vrcp.pop %v7338
    %v7371 = vrcp.pop %v7339
    %v7372 = vrcp.pop %v7340
    %v7373 = vrcp.pop %v7341
    %v7374 = vrcp.pop %v7342
    %v7375 = vrcp.pop %v7343
    %v7376 = vrcp.pop %v7344
    %v7377 = vrcp.pop %v7345
    %v7378 = vrcp.pop %v7346
    %v7379 = vrcp.pop %v7347
    %v7380 = vrcp.pop %v7348
    %v7381 = vrcp.pop %v7349
    %v7382 = vrcp.pop %v7350
    %v7383 = vrcp.pop %v7351
    %v7384 = vrcp.pop %v7352
    %v7385 = vrcp.pop %v7353
    %v7418 = vperm.slane %v6858, %v4122
    %v7419 = vperm.slane %v6861, %v4124
    %v7420 = vsel %vm4126, %v7419, %v7418
    %v7421 = vperm.slane %v6864, %v4122
    %v7422 = vperm.slane %v6867, %v4124
    %v7423 = vsel %vm4126, %v7422, %v7421
    %v7424 = vperm.slane %v6870, %v4122
    %v7425 = vperm.slane %v6873, %v4124
    %v7426 = vsel %vm4126, %v7425, %v7424
    %v7427 = vperm.slane %v6876, %v4122
    %v7428 = vperm.slane %v6879, %v4124
    %v7429 = vsel %vm4126, %v7428, %v7427
    %v7430 = vperm.slane %v6882, %v4122
    %v7431 = vperm.slane %v6885, %v4124
    %v7432 = vsel %vm4126, %v7431, %v7430
    %v7433 = vperm.slane %v6888, %v4122
    %v7434 = vperm.slane %v6891, %v4124
    %v7435 = vsel %vm4126, %v7434, %v7433
    %v7436 = vperm.slane %v6894, %v4122
    %v7437 = vperm.slane %v6897, %v4124
    %v7438 = vsel %vm4126, %v7437, %v7436
    %v7439 = vperm.slane %v6900, %v4122
    %v7440 = vperm.slane %v6903, %v4124
    %v7441 = vsel %vm4126, %v7440, %v7439
    %v7442 = vperm.slane %v6906, %v4122
    %v7443 = vperm.slane %v6909, %v4124
    %v7444 = vsel %vm4126, %v7443, %v7442
    %v7445 = vperm.slane %v6912, %v4122
    %v7446 = vperm.slane %v6915, %v4124
    %v7447 = vsel %vm4126, %v7446, %v7445
    %v7448 = vperm.slane %v6918, %v4122
    %v7449 = vperm.slane %v6921, %v4124
    %v7450 = vsel %vm4126, %v7449, %v7448
    %v7451 = vperm.slane %v6924, %v4122
    %v7452 = vperm.slane %v6927, %v4124
    %v7453 = vsel %vm4126, %v7452, %v7451
    %v7454 = vperm.slane %v6930, %v4122
    %v7455 = vperm.slane %v6933, %v4124
    %v7456 = vsel %vm4126, %v7455, %v7454
    %v7457 = vperm.slane %v6936, %v4122
    %v7458 = vperm.slane %v6939, %v4124
    %v7459 = vsel %vm4126, %v7458, %v7457
    %v7460 = vperm.slane %v6942, %v4122
    %v7461 = vperm.slane %v6945, %v4124
    %v7462 = vsel %vm4126, %v7461, %v7460
    %v7463 = vperm.slane %v6948, %v4122
    %v7464 = vperm.slane %v6951, %v4124
    %v7465 = vsel %vm4126, %v7464, %v7463
    %v7466 = vsel %vm4173, %v7423, %v7420
    %v7467 = vsel %vm4175, %v7426, %v7466
    %v7468 = vsel %vm4177, %v7429, %v7467
    %v7469 = vsel %vm4179, %v7432, %v7468
    %v7470 = vsel %vm4181, %v7435, %v7469
    %v7471 = vsel %vm4183, %v7438, %v7470
    %v7472 = vsel %vm4185, %v7441, %v7471
    %v7473 = vsel %vm4173, %v7447, %v7444
    %v7474 = vsel %vm4175, %v7450, %v7473
    %v7475 = vsel %vm4177, %v7453, %v7474
    %v7476 = vsel %vm4179, %v7456, %v7475
    %v7477 = vsel %vm4181, %v7459, %v7476
    %v7478 = vsel %vm4183, %v7462, %v7477
    %v7479 = vsel %vm4185, %v7465, %v7478
    %7482 = vxpose.xlu0.b32.start [1/16] %v7472, 128
    %7483 = vxpose.xlu0.b32.cont [2/16] %v7479, 128
    %7484 = vxpose.xlu0.b32.cont [3/16] 0.0, 128
    %7485 = vxpose.xlu0.b32.cont [4/16] 0.0, 128
    %7486 = vxpose.xlu0.b32.cont [5/16] 0.0, 128
    %7487 = vxpose.xlu0.b32.cont [6/16] 0.0, 128
    %7488 = vxpose.xlu0.b32.cont [7/16] 0.0, 128
    %7489 = vxpose.xlu0.b32.cont [8/16] 0.0, 128
    %7490 = vxpose.xlu0.b32.cont [9/16] 0.0, 128
    %7491 = vxpose.xlu0.b32.cont [10/16] 0.0, 128
    %7492 = vxpose.xlu0.b32.cont [11/16] 0.0, 128
    %7493 = vxpose.xlu0.b32.cont [12/16] 0.0, 128
    %7494 = vxpose.xlu0.b32.cont [13/16] 0.0, 128
    %7495 = vxpose.xlu0.b32.cont [14/16] 0.0, 128
    %7496 = vxpose.xlu0.b32.cont [15/16] 0.0, 128
    %7497 = vxpose.xlu0.b32.end [16/16] 0.0, 128
    %v7498 = vpop.trf.xlu0
    %v7499 = vpop.trf.xlu0
    %v7500 = vpop.trf.xlu0
    %v7501 = vpop.trf.xlu0
    %v7502 = vpop.trf.xlu0
    %v7503 = vpop.trf.xlu0
    %v7504 = vpop.trf.xlu0
    %v7505 = vpop.trf.xlu0
    %v7506 = vpop.trf.xlu0
    %v7507 = vpop.trf.xlu0
    %v7508 = vpop.trf.xlu0
    %v7509 = vpop.trf.xlu0
    %v7510 = vpop.trf.xlu0
    %v7511 = vpop.trf.xlu0
    %v7512 = vpop.trf.xlu0
    %v7513 = vpop.trf.xlu0
    %v7516 = vperm.slane %v7498, 0
    %v7517 = vlaneseq
    %v7518 = vshrl.u32 %v7517, 7
    %7520 = vset.pattern.permute.xlu0 %v7518
    %7521 = vperm.xlu0 %7520, %v7516
    %v7522 = vpop.permute.xlu0 %7521
    %v7523 = vlaneseq
    %v7524 = vshrl.u32 %v7523, 7
    %v7525 = vadd.s32 %v7524, 8
    %7526 = vset.pattern.permute.xlu0 %v7525
    %7527 = vperm.xlu0 %7526, %v7516
    %v7528 = vpop.permute.xlu0 %7527
    %v7529 = vperm.slane %v7498, 1
    %v7530 = vlaneseq
    %v7531 = vshrl.u32 %v7530, 7
    %7533 = vset.pattern.permute.xlu0 %v7531
    %7534 = vperm.xlu0 %7533, %v7529
    %v7535 = vpop.permute.xlu0 %7534
    %v7536 = vlaneseq
    %v7537 = vshrl.u32 %v7536, 7
    %v7538 = vadd.s32 %v7537, 8
    %7539 = vset.pattern.permute.xlu0 %v7538
    %7540 = vperm.xlu0 %7539, %v7529
    %v7541 = vpop.permute.xlu0 %7540
    %v7542 = vperm.slane %v7498, 2
    %v7543 = vlaneseq
    %v7544 = vshrl.u32 %v7543, 7
    %7546 = vset.pattern.permute.xlu0 %v7544
    %7547 = vperm.xlu0 %7546, %v7542
    %v7548 = vpop.permute.xlu0 %7547
    %v7549 = vlaneseq
    %v7550 = vshrl.u32 %v7549, 7
    %v7551 = vadd.s32 %v7550, 8
    %7552 = vset.pattern.permute.xlu0 %v7551
    %7553 = vperm.xlu0 %7552, %v7542
    %v7554 = vpop.permute.xlu0 %7553
    %v7555 = vperm.slane %v7498, 3
    %v7556 = vlaneseq
    %v7557 = vshrl.u32 %v7556, 7
    %7559 = vset.pattern.permute.xlu0 %v7557
    %7560 = vperm.xlu0 %7559, %v7555
    %v7561 = vpop.permute.xlu0 %7560
    %v7562 = vlaneseq
    %v7563 = vshrl.u32 %v7562, 7
    %v7564 = vadd.s32 %v7563, 8
    %7565 = vset.pattern.permute.xlu0 %v7564
    %7566 = vperm.xlu0 %7565, %v7555
    %v7567 = vpop.permute.xlu0 %7566
    %v7568 = vperm.slane %v7498, 4
    %v7569 = vlaneseq
    %v7570 = vshrl.u32 %v7569, 7
    %7572 = vset.pattern.permute.xlu0 %v7570
    %7573 = vperm.xlu0 %7572, %v7568
    %v7574 = vpop.permute.xlu0 %7573
    %v7575 = vlaneseq
    %v7576 = vshrl.u32 %v7575, 7
    %v7577 = vadd.s32 %v7576, 8
    %7578 = vset.pattern.permute.xlu0 %v7577
    %7579 = vperm.xlu0 %7578, %v7568
    %v7580 = vpop.permute.xlu0 %7579
    %v7581 = vperm.slane %v7498, 5
    %v7582 = vlaneseq
    %v7583 = vshrl.u32 %v7582, 7
    %7585 = vset.pattern.permute.xlu0 %v7583
    %7586 = vperm.xlu0 %7585, %v7581
    %v7587 = vpop.permute.xlu0 %7586
    %v7588 = vlaneseq
    %v7589 = vshrl.u32 %v7588, 7
    %v7590 = vadd.s32 %v7589, 8
    %7591 = vset.pattern.permute.xlu0 %v7590
    %7592 = vperm.xlu0 %7591, %v7581
    %v7593 = vpop.permute.xlu0 %7592
    %v7594 = vperm.slane %v7498, 6
    %v7595 = vlaneseq
    %v7596 = vshrl.u32 %v7595, 7
    %7598 = vset.pattern.permute.xlu0 %v7596
    %7599 = vperm.xlu0 %7598, %v7594
    %v7600 = vpop.permute.xlu0 %7599
    %v7601 = vlaneseq
    %v7602 = vshrl.u32 %v7601, 7
    %v7603 = vadd.s32 %v7602, 8
    %7604 = vset.pattern.permute.xlu0 %v7603
    %7605 = vperm.xlu0 %7604, %v7594
    %v7606 = vpop.permute.xlu0 %7605
    %v7607 = vperm.slane %v7498, 7
    %v7608 = vlaneseq
    %v7609 = vshrl.u32 %v7608, 7
    %7611 = vset.pattern.permute.xlu0 %v7609
    %7612 = vperm.xlu0 %7611, %v7607
    %v7613 = vpop.permute.xlu0 %7612
    %v7614 = vlaneseq
    %v7615 = vshrl.u32 %v7614, 7
    %v7616 = vadd.s32 %v7615, 8
    %7617 = vset.pattern.permute.xlu0 %v7616
    %7618 = vperm.xlu0 %7617, %v7607
    %v7619 = vpop.permute.xlu0 %7618
    %v7620 = vperm.slane %v7499, 0
    %v7621 = vlaneseq
    %v7622 = vshrl.u32 %v7621, 7
    %7624 = vset.pattern.permute.xlu0 %v7622
    %7625 = vperm.xlu0 %7624, %v7620
    %v7626 = vpop.permute.xlu0 %7625
    %v7627 = vlaneseq
    %v7628 = vshrl.u32 %v7627, 7
    %v7629 = vadd.s32 %v7628, 8
    %7630 = vset.pattern.permute.xlu0 %v7629
    %7631 = vperm.xlu0 %7630, %v7620
    %v7632 = vpop.permute.xlu0 %7631
    %v7633 = vperm.slane %v7499, 1
    %v7634 = vlaneseq
    %v7635 = vshrl.u32 %v7634, 7
    %7637 = vset.pattern.permute.xlu0 %v7635
    %7638 = vperm.xlu0 %7637, %v7633
    %v7639 = vpop.permute.xlu0 %7638
    %v7640 = vlaneseq
    %v7641 = vshrl.u32 %v7640, 7
    %v7642 = vadd.s32 %v7641, 8
    %7643 = vset.pattern.permute.xlu0 %v7642
    %7644 = vperm.xlu0 %7643, %v7633
    %v7645 = vpop.permute.xlu0 %7644
    %v7646 = vperm.slane %v7499, 2
    %v7647 = vlaneseq
    %v7648 = vshrl.u32 %v7647, 7
    %7650 = vset.pattern.permute.xlu0 %v7648
    %7651 = vperm.xlu0 %7650, %v7646
    %v7652 = vpop.permute.xlu0 %7651
    %v7653 = vlaneseq
    %v7654 = vshrl.u32 %v7653, 7
    %v7655 = vadd.s32 %v7654, 8
    %7656 = vset.pattern.permute.xlu0 %v7655
    %7657 = vperm.xlu0 %7656, %v7646
    %v7658 = vpop.permute.xlu0 %7657
    %v7659 = vperm.slane %v7499, 3
    %v7660 = vlaneseq
    %v7661 = vshrl.u32 %v7660, 7
    %7663 = vset.pattern.permute.xlu0 %v7661
    %7664 = vperm.xlu0 %7663, %v7659
    %v7665 = vpop.permute.xlu0 %7664
    %v7666 = vlaneseq
    %v7667 = vshrl.u32 %v7666, 7
    %v7668 = vadd.s32 %v7667, 8
    %7669 = vset.pattern.permute.xlu0 %v7668
    %7670 = vperm.xlu0 %7669, %v7659
    %v7671 = vpop.permute.xlu0 %7670
    %v7672 = vperm.slane %v7499, 4
    %v7673 = vlaneseq
    %v7674 = vshrl.u32 %v7673, 7
    %7676 = vset.pattern.permute.xlu0 %v7674
    %7677 = vperm.xlu0 %7676, %v7672
    %v7678 = vpop.permute.xlu0 %7677
    %v7679 = vlaneseq
    %v7680 = vshrl.u32 %v7679, 7
    %v7681 = vadd.s32 %v7680, 8
    %7682 = vset.pattern.permute.xlu0 %v7681
    %7683 = vperm.xlu0 %7682, %v7672
    %v7684 = vpop.permute.xlu0 %7683
    %v7685 = vperm.slane %v7499, 5
    %v7686 = vlaneseq
    %v7687 = vshrl.u32 %v7686, 7
    %7689 = vset.pattern.permute.xlu0 %v7687
    %7690 = vperm.xlu0 %7689, %v7685
    %v7691 = vpop.permute.xlu0 %7690
    %v7692 = vlaneseq
    %v7693 = vshrl.u32 %v7692, 7
    %v7694 = vadd.s32 %v7693, 8
    %7695 = vset.pattern.permute.xlu0 %v7694
    %7696 = vperm.xlu0 %7695, %v7685
    %v7697 = vpop.permute.xlu0 %7696
    %v7698 = vperm.slane %v7499, 6
    %v7699 = vlaneseq
    %v7700 = vshrl.u32 %v7699, 7
    %7702 = vset.pattern.permute.xlu0 %v7700
    %7703 = vperm.xlu0 %7702, %v7698
    %v7704 = vpop.permute.xlu0 %7703
    %v7705 = vlaneseq
    %v7706 = vshrl.u32 %v7705, 7
    %v7707 = vadd.s32 %v7706, 8
    %7708 = vset.pattern.permute.xlu0 %v7707
    %7709 = vperm.xlu0 %7708, %v7698
    %v7710 = vpop.permute.xlu0 %7709
    %v7711 = vperm.slane %v7499, 7
    %v7712 = vlaneseq
    %v7713 = vshrl.u32 %v7712, 7
    %7715 = vset.pattern.permute.xlu0 %v7713
    %7716 = vperm.xlu0 %7715, %v7711
    %v7717 = vpop.permute.xlu0 %7716
    %v7718 = vlaneseq
    %v7719 = vshrl.u32 %v7718, 7
    %v7720 = vadd.s32 %v7719, 8
    %7721 = vset.pattern.permute.xlu0 %v7720
    %7722 = vperm.xlu0 %7721, %v7711
    %v7723 = vpop.permute.xlu0 %7722
    %v7756 = vadd.f32 %v6666, %v7522
    %v7757 = vadd.f32 %v6669, %v7528
    %v7758 = vadd.f32 %v6672, %v7535
    %v7759 = vadd.f32 %v6675, %v7541
    %v7760 = vadd.f32 %v6678, %v7548
    %v7761 = vadd.f32 %v6681, %v7554
    %v7762 = vadd.f32 %v6684, %v7561
    %v7763 = vadd.f32 %v6687, %v7567
    %v7764 = vadd.f32 %v6690, %v7574
    %v7765 = vadd.f32 %v6693, %v7580
    %v7766 = vadd.f32 %v6696, %v7587
    %v7767 = vadd.f32 %v6699, %v7593
    %v7768 = vadd.f32 %v6702, %v7600
    %v7769 = vadd.f32 %v6705, %v7606
    %v7770 = vadd.f32 %v6708, %v7613
    %v7771 = vadd.f32 %v6711, %v7619
    %v7772 = vadd.f32 %v6714, %v7626
    %v7773 = vadd.f32 %v6717, %v7632
    %v7774 = vadd.f32 %v6720, %v7639
    %v7775 = vadd.f32 %v6723, %v7645
    %v7776 = vadd.f32 %v6726, %v7652
    %v7777 = vadd.f32 %v6729, %v7658
    %v7778 = vadd.f32 %v6732, %v7665
    %v7779 = vadd.f32 %v6735, %v7671
    %v7780 = vadd.f32 %v6738, %v7678
    %v7781 = vadd.f32 %v6741, %v7684
    %v7782 = vadd.f32 %v6744, %v7691
    %v7783 = vadd.f32 %v6747, %v7697
    %v7784 = vadd.f32 %v6750, %v7704
    %v7785 = vadd.f32 %v6753, %v7710
    %v7786 = vadd.f32 %v6756, %v7717
    %v7787 = vadd.f32 %v6759, %v7723
    %v7788 = vrcp.pop %v7756
    %v7789 = vrcp.pop %v7757
    %v7790 = vrcp.pop %v7758
    %v7791 = vrcp.pop %v7759
    %v7792 = vrcp.pop %v7760
    %v7793 = vrcp.pop %v7761
    %v7794 = vrcp.pop %v7762
    %v7795 = vrcp.pop %v7763
    %v7796 = vrcp.pop %v7764
    %v7797 = vrcp.pop %v7765
    %v7798 = vrcp.pop %v7766
    %v7799 = vrcp.pop %v7767
    %v7800 = vrcp.pop %v7768
    %v7801 = vrcp.pop %v7769
    %v7802 = vrcp.pop %v7770
    %v7803 = vrcp.pop %v7771
    %v7804 = vrcp.pop %v7772
    %v7805 = vrcp.pop %v7773
    %v7806 = vrcp.pop %v7774
    %v7807 = vrcp.pop %v7775
    %v7808 = vrcp.pop %v7776
    %v7809 = vrcp.pop %v7777
    %v7810 = vrcp.pop %v7778
    %v7811 = vrcp.pop %v7779
    %v7812 = vrcp.pop %v7780
    %v7813 = vrcp.pop %v7781
    %v7814 = vrcp.pop %v7782
    %v7815 = vrcp.pop %v7783
    %v7816 = vrcp.pop %v7784
    %v7817 = vrcp.pop %v7785
    %v7818 = vrcp.pop %v7786
    %v7819 = vrcp.pop %v7787
    %v7820 = vpack.c.bf16 %v5833, %v5833
    %v7821 = vpack.c.bf16 %v5835, %v5835
    %v7822 = vpack.c.bf16 %v5837, %v5837
    %v7823 = vpack.c.bf16 %v5839, %v5839
    %v7824 = vpack.c.bf16 %v5841, %v5841
    %v7825 = vpack.c.bf16 %v5843, %v5843
    %v7826 = vpack.c.bf16 %v5845, %v5845
    %v7827 = vpack.c.bf16 %v5847, %v5847
    %v7828 = vpack.c.bf16 %v5849, %v5849
    %v7829 = vpack.c.bf16 %v5851, %v5851
    %v7830 = vpack.c.bf16 %v5853, %v5853
    %v7831 = vpack.c.bf16 %v5855, %v5855
    %v7832 = vpack.c.bf16 %v5857, %v5857
    %v7833 = vpack.c.bf16 %v5859, %v5859
    %v7834 = vpack.c.bf16 %v5861, %v5861
    %v7835 = vpack.c.bf16 %v5863, %v5863
    %v7836 = vpack.c.bf16 %v5865, %v5865
    %v7837 = vpack.c.bf16 %v5867, %v5867
    %v7838 = vpack.c.bf16 %v5869, %v5869
    %v7839 = vpack.c.bf16 %v5871, %v5871
    %v7840 = vpack.c.bf16 %v5873, %v5873
    %v7841 = vpack.c.bf16 %v5875, %v5875
    %v7842 = vpack.c.bf16 %v5877, %v5877
    %v7843 = vpack.c.bf16 %v5879, %v5879
    %v7844 = vpack.c.bf16 %v5881, %v5881
    %v7845 = vpack.c.bf16 %v5883, %v5883
    %v7846 = vpack.c.bf16 %v5885, %v5885
    %v7847 = vpack.c.bf16 %v5887, %v5887
    %v7848 = vpack.c.bf16 %v5889, %v5889
    %v7849 = vpack.c.bf16 %v5891, %v5891
    %v7850 = vpack.c.bf16 %v5893, %v5893
    %v7851 = vpack.c.bf16 %v5895, %v5895
    %v7852 = vpack.c.bf16 %v5897, %v5897
    %v7853 = vpack.c.bf16 %v5899, %v5899
    %v7854 = vpack.c.bf16 %v5901, %v5901
    %v7855 = vpack.c.bf16 %v5903, %v5903
    %v7856 = vpack.c.bf16 %v5905, %v5905
    %v7857 = vpack.c.bf16 %v5907, %v5907
    %v7858 = vpack.c.bf16 %v5909, %v5909
    %v7859 = vpack.c.bf16 %v5911, %v5911
    %v7860 = vpack.c.bf16 %v5913, %v5913
    %v7861 = vpack.c.bf16 %v5915, %v5915
    %v7862 = vpack.c.bf16 %v5917, %v5917
    %v7863 = vpack.c.bf16 %v5919, %v5919
    %v7864 = vpack.c.bf16 %v5921, %v5921
    %v7865 = vpack.c.bf16 %v5923, %v5923
    %v7866 = vpack.c.bf16 %v5925, %v5925
    %v7867 = vpack.c.bf16 %v5927, %v5927
    %v7868 = vpack.c.bf16 %v5929, %v5929
    %v7869 = vpack.c.bf16 %v5931, %v5931
    %v7870 = vpack.c.bf16 %v5933, %v5933
    %v7871 = vpack.c.bf16 %v5935, %v5935
    %v7872 = vpack.c.bf16 %v5937, %v5937
    %v7873 = vpack.c.bf16 %v5939, %v5939
    %v7874 = vpack.c.bf16 %v5941, %v5941
    %v7875 = vpack.c.bf16 %v5943, %v5943
    %v7876 = vpack.c.bf16 %v5945, %v5945
    %v7877 = vpack.c.bf16 %v5947, %v5947
    %v7878 = vpack.c.bf16 %v5949, %v5949
    %v7879 = vpack.c.bf16 %v5951, %v5951
    %v7880 = vpack.c.bf16 %v5953, %v5953
    %v7881 = vpack.c.bf16 %v5955, %v5955
    %v7882 = vpack.c.bf16 %v5957, %v5957
    %v7883 = vpack.c.bf16 %v5959, %v5959
    %v7884 = vpack.c.bf16 %v6441, %v6441
    %v7885 = vpack.c.bf16 %v6443, %v6443
    %v7886 = vpack.c.bf16 %v6445, %v6445
    %v7887 = vpack.c.bf16 %v6447, %v6447
    %v7888 = vpack.c.bf16 %v6449, %v6449
    %v7889 = vpack.c.bf16 %v6451, %v6451
    %v7890 = vpack.c.bf16 %v6453, %v6453
    %v7891 = vpack.c.bf16 %v6455, %v6455
    %v7892 = vpack.c.bf16 %v6457, %v6457
    %v7893 = vpack.c.bf16 %v6459, %v6459
    %v7894 = vpack.c.bf16 %v6461, %v6461
    %v7895 = vpack.c.bf16 %v6463, %v6463
    %v7896 = vpack.c.bf16 %v6465, %v6465
    %v7897 = vpack.c.bf16 %v6467, %v6467
    %v7898 = vpack.c.bf16 %v6469, %v6469
    %v7899 = vpack.c.bf16 %v6471, %v6471
    %v7900 = vpack.c.bf16 %v6473, %v6473
    %v7901 = vpack.c.bf16 %v6475, %v6475
    %v7902 = vpack.c.bf16 %v6477, %v6477
    %v7903 = vpack.c.bf16 %v6479, %v6479
    %v7904 = vpack.c.bf16 %v6481, %v6481
    %v7905 = vpack.c.bf16 %v6483, %v6483
    %v7906 = vpack.c.bf16 %v6485, %v6485
    %v7907 = vpack.c.bf16 %v6487, %v6487
    %v7908 = vpack.c.bf16 %v6489, %v6489
    %v7909 = vpack.c.bf16 %v6491, %v6491
    %v7910 = vpack.c.bf16 %v6493, %v6493
    %v7911 = vpack.c.bf16 %v6495, %v6495
    %v7912 = vpack.c.bf16 %v6497, %v6497
    %v7913 = vpack.c.bf16 %v6499, %v6499
    %v7914 = vpack.c.bf16 %v6501, %v6501
    %v7915 = vpack.c.bf16 %v6503, %v6503
    %v7916 = vpack.c.bf16 %v6505, %v6505
    %v7917 = vpack.c.bf16 %v6507, %v6507
    %v7918 = vpack.c.bf16 %v6509, %v6509
    %v7919 = vpack.c.bf16 %v6511, %v6511
    %v7920 = vpack.c.bf16 %v6513, %v6513
    %v7921 = vpack.c.bf16 %v6515, %v6515
    %v7922 = vpack.c.bf16 %v6517, %v6517
    %v7923 = vpack.c.bf16 %v6519, %v6519
    %v7924 = vpack.c.bf16 %v6521, %v6521
    %v7925 = vpack.c.bf16 %v6523, %v6523
    %v7926 = vpack.c.bf16 %v6525, %v6525
    %v7927 = vpack.c.bf16 %v6527, %v6527
    %v7928 = vpack.c.bf16 %v6529, %v6529
    %v7929 = vpack.c.bf16 %v6531, %v6531
    %v7930 = vpack.c.bf16 %v6533, %v6533
    %v7931 = vpack.c.bf16 %v6535, %v6535
    %v7932 = vpack.c.bf16 %v6537, %v6537
    %v7933 = vpack.c.bf16 %v6539, %v6539
    %v7934 = vpack.c.bf16 %v6541, %v6541
    %v7935 = vpack.c.bf16 %v6543, %v6543
    %v7936 = vpack.c.bf16 %v6545, %v6545
    %v7937 = vpack.c.bf16 %v6547, %v6547
    %v7938 = vpack.c.bf16 %v6549, %v6549
    %v7939 = vpack.c.bf16 %v6551, %v6551
    %v7940 = vpack.c.bf16 %v6553, %v6553
    %v7941 = vpack.c.bf16 %v6555, %v6555
    %v7942 = vpack.c.bf16 %v6557, %v6557
    %v7943 = vpack.c.bf16 %v6559, %v6559
    %v7944 = vpack.c.bf16 %v6561, %v6561
    %v7945 = vpack.c.bf16 %v6563, %v6563
    %v7946 = vpack.c.bf16 %v6565, %v6565
    %v7947 = vpack.c.bf16 %v6567, %v6567
    %v7950 = vunpack.c.l.b16 %v7820
    %v7951 = vunpack.c.l.b16 %v7821
    %v7952 = vpack.c.b16 %v7951, %v7950
    %v7955 = vsel %vm3704, %v7952, 0
    %7957 = vmatpush.bf16.msra.mxu0 0
    %7958 = vmatpush.bf16.msra.mxu0 0
    %7959 = vmatpush.bf16.msra.mxu0 0
    %7960 = vmatpush.bf16.msra.mxu0 0
    %7961 = vmatpush.bf16.msra.mxu0 0
    %7962 = vmatpush.bf16.msra.mxu0 0
    %7963 = vmatpush.bf16.msra.mxu0 0
    %7964 = vmatpush.bf16.msra.mxu0 %v1787
    %7965 = vmatmul.bf16.gmra.mxu0 %v7955
    %v7966 = vpop.f32.mrf.mxu0
    %v7967 = vadd.f32 0.0, %v7966
    %v7968 = vpop.f32.mrf.mxu0
    %v7969 = vadd.f32 0.0, %v7968
    %7970 = vdwg.mxu0
    %v7973 = vunpack.c.l.b16 %v7822
    %v7974 = vunpack.c.l.b16 %v7823
    %v7975 = vpack.c.b16 %v7974, %v7973
    %v7978 = vsel %vm3704, %v7975, 0
    %7980 = vmatpush.bf16.msra.mxu0 0
    %7981 = vmatpush.bf16.msra.mxu0 0
    %7982 = vmatpush.bf16.msra.mxu0 0
    %7983 = vmatpush.bf16.msra.mxu0 0
    %7984 = vmatpush.bf16.msra.mxu0 0
    %7985 = vmatpush.bf16.msra.mxu0 0
    %7986 = vmatpush.bf16.msra.mxu0 0
    %7987 = vmatpush.bf16.msra.mxu0 %v1817
    %7988 = vmatmul.bf16.gmra.mxu0 %v7978
    %v7989 = vpop.f32.mrf.mxu0
    %v7990 = vadd.f32 0.0, %v7989
    %v7991 = vpop.f32.mrf.mxu0
    %v7992 = vadd.f32 0.0, %v7991
    %7993 = vdwg.mxu0
    %v7996 = vunpack.c.l.b16 %v7824
    %v7997 = vunpack.c.l.b16 %v7825
    %v7998 = vpack.c.b16 %v7997, %v7996
    %v8001 = vsel %vm3704, %v7998, 0
    %8003 = vmatpush.bf16.msra.mxu0 0
    %8004 = vmatpush.bf16.msra.mxu0 0
    %8005 = vmatpush.bf16.msra.mxu0 0
    %8006 = vmatpush.bf16.msra.mxu0 0
    %8007 = vmatpush.bf16.msra.mxu0 0
    %8008 = vmatpush.bf16.msra.mxu0 0
    %8009 = vmatpush.bf16.msra.mxu0 0
    %8010 = vmatpush.bf16.msra.mxu0 %v1846
    %8011 = vmatmul.bf16.gmra.mxu0 %v8001
    %v8012 = vpop.f32.mrf.mxu0
    %v8013 = vadd.f32 0.0, %v8012
    %v8014 = vpop.f32.mrf.mxu0
    %v8015 = vadd.f32 0.0, %v8014
    %8016 = vdwg.mxu0
    %v8019 = vunpack.c.l.b16 %v7826
    %v8020 = vunpack.c.l.b16 %v7827
    %v8021 = vpack.c.b16 %v8020, %v8019
    %v8024 = vsel %vm3704, %v8021, 0
    %8026 = vmatpush.bf16.msra.mxu0 0
    %8027 = vmatpush.bf16.msra.mxu0 0
    %8028 = vmatpush.bf16.msra.mxu0 0
    %8029 = vmatpush.bf16.msra.mxu0 0
    %8030 = vmatpush.bf16.msra.mxu0 0
    %8031 = vmatpush.bf16.msra.mxu0 0
    %8032 = vmatpush.bf16.msra.mxu0 0
    %8033 = vmatpush.bf16.msra.mxu0 %v1875
    %8034 = vmatmul.bf16.gmra.mxu0 %v8024
    %v8035 = vpop.f32.mrf.mxu0
    %v8036 = vadd.f32 0.0, %v8035
    %v8037 = vpop.f32.mrf.mxu0
    %v8038 = vadd.f32 0.0, %v8037
    %8039 = vdwg.mxu0
    %v8042 = vunpack.c.l.b16 %v7828
    %v8043 = vunpack.c.l.b16 %v7829
    %v8044 = vpack.c.b16 %v8043, %v8042
    %v8047 = vsel %vm3704, %v8044, 0
    %8049 = vmatpush.bf16.msra.mxu0 0
    %8050 = vmatpush.bf16.msra.mxu0 0
    %8051 = vmatpush.bf16.msra.mxu0 0
    %8052 = vmatpush.bf16.msra.mxu0 0
    %8053 = vmatpush.bf16.msra.mxu0 0
    %8054 = vmatpush.bf16.msra.mxu0 0
    %8055 = vmatpush.bf16.msra.mxu0 0
    %8056 = vmatpush.bf16.msra.mxu0 %v1904
    %8057 = vmatmul.bf16.gmra.mxu0 %v8047
    %v8058 = vpop.f32.mrf.mxu0
    %v8059 = vadd.f32 0.0, %v8058
    %v8060 = vpop.f32.mrf.mxu0
    %v8061 = vadd.f32 0.0, %v8060
    %8062 = vdwg.mxu0
    %v8065 = vunpack.c.l.b16 %v7830
    %v8066 = vunpack.c.l.b16 %v7831
    %v8067 = vpack.c.b16 %v8066, %v8065
    %v8070 = vsel %vm3704, %v8067, 0
    %8072 = vmatpush.bf16.msra.mxu0 0
    %8073 = vmatpush.bf16.msra.mxu0 0
    %8074 = vmatpush.bf16.msra.mxu0 0
    %8075 = vmatpush.bf16.msra.mxu0 0
    %8076 = vmatpush.bf16.msra.mxu0 0
    %8077 = vmatpush.bf16.msra.mxu0 0
    %8078 = vmatpush.bf16.msra.mxu0 0
    %8079 = vmatpush.bf16.msra.mxu0 %v1933
    %8080 = vmatmul.bf16.gmra.mxu0 %v8070
    %v8081 = vpop.f32.mrf.mxu0
    %v8082 = vadd.f32 0.0, %v8081
    %v8083 = vpop.f32.mrf.mxu0
    %v8084 = vadd.f32 0.0, %v8083
    %8085 = vdwg.mxu0
    %v8088 = vunpack.c.l.b16 %v7832
    %v8089 = vunpack.c.l.b16 %v7833
    %v8090 = vpack.c.b16 %v8089, %v8088
    %v8093 = vsel %vm3704, %v8090, 0
    %8095 = vmatpush.bf16.msra.mxu0 0
    %8096 = vmatpush.bf16.msra.mxu0 0
    %8097 = vmatpush.bf16.msra.mxu0 0
    %8098 = vmatpush.bf16.msra.mxu0 0
    %8099 = vmatpush.bf16.msra.mxu0 0
    %8100 = vmatpush.bf16.msra.mxu0 0
    %8101 = vmatpush.bf16.msra.mxu0 0
    %8102 = vmatpush.bf16.msra.mxu0 %v1962
    %8103 = vmatmul.bf16.gmra.mxu0 %v8093
    %v8104 = vpop.f32.mrf.mxu0
    %v8105 = vadd.f32 0.0, %v8104
    %v8106 = vpop.f32.mrf.mxu0
    %v8107 = vadd.f32 0.0, %v8106
    %8108 = vdwg.mxu0
    %v8111 = vunpack.c.l.b16 %v7834
    %v8112 = vunpack.c.l.b16 %v7835
    %v8113 = vpack.c.b16 %v8112, %v8111
    %v8116 = vsel %vm3704, %v8113, 0
    %8118 = vmatpush.bf16.msra.mxu0 0
    %8119 = vmatpush.bf16.msra.mxu0 0
    %8120 = vmatpush.bf16.msra.mxu0 0
    %8121 = vmatpush.bf16.msra.mxu0 0
    %8122 = vmatpush.bf16.msra.mxu0 0
    %8123 = vmatpush.bf16.msra.mxu0 0
    %8124 = vmatpush.bf16.msra.mxu0 0
    %8125 = vmatpush.bf16.msra.mxu0 %v1991
    %8126 = vmatmul.bf16.gmra.mxu0 %v8116
    %v8127 = vpop.f32.mrf.mxu0
    %v8128 = vadd.f32 0.0, %v8127
    %v8129 = vpop.f32.mrf.mxu0
    %v8130 = vadd.f32 0.0, %v8129
    %8131 = vdwg.mxu0
    %v8134 = vunpack.c.l.b16 %v7836
    %v8135 = vunpack.c.l.b16 %v7837
    %v8136 = vpack.c.b16 %v8135, %v8134
    %v8139 = vsel %vm3704, %v8136, 0
    %8141 = vmatpush.bf16.msra.mxu0 0
    %8142 = vmatpush.bf16.msra.mxu0 0
    %8143 = vmatpush.bf16.msra.mxu0 0
    %8144 = vmatpush.bf16.msra.mxu0 0
    %8145 = vmatpush.bf16.msra.mxu0 0
    %8146 = vmatpush.bf16.msra.mxu0 0
    %8147 = vmatpush.bf16.msra.mxu0 0
    %8148 = vmatpush.bf16.msra.mxu0 %v2020
    %8149 = vmatmul.bf16.gmra.mxu0 %v8139
    %v8150 = vpop.f32.mrf.mxu0
    %v8151 = vadd.f32 0.0, %v8150
    %v8152 = vpop.f32.mrf.mxu0
    %v8153 = vadd.f32 0.0, %v8152
    %8154 = vdwg.mxu0
    %v8157 = vunpack.c.l.b16 %v7838
    %v8158 = vunpack.c.l.b16 %v7839
    %v8159 = vpack.c.b16 %v8158, %v8157
    %v8162 = vsel %vm3704, %v8159, 0
    %8164 = vmatpush.bf16.msra.mxu0 0
    %8165 = vmatpush.bf16.msra.mxu0 0
    %8166 = vmatpush.bf16.msra.mxu0 0
    %8167 = vmatpush.bf16.msra.mxu0 0
    %8168 = vmatpush.bf16.msra.mxu0 0
    %8169 = vmatpush.bf16.msra.mxu0 0
    %8170 = vmatpush.bf16.msra.mxu0 0
    %8171 = vmatpush.bf16.msra.mxu0 %v2049
    %8172 = vmatmul.bf16.gmra.mxu0 %v8162
    %v8173 = vpop.f32.mrf.mxu0
    %v8174 = vadd.f32 0.0, %v8173
    %v8175 = vpop.f32.mrf.mxu0
    %v8176 = vadd.f32 0.0, %v8175
    %8177 = vdwg.mxu0
    %v8180 = vunpack.c.l.b16 %v7840
    %v8181 = vunpack.c.l.b16 %v7841
    %v8182 = vpack.c.b16 %v8181, %v8180
    %v8185 = vsel %vm3704, %v8182, 0
    %8187 = vmatpush.bf16.msra.mxu0 0
    %8188 = vmatpush.bf16.msra.mxu0 0
    %8189 = vmatpush.bf16.msra.mxu0 0
    %8190 = vmatpush.bf16.msra.mxu0 0
    %8191 = vmatpush.bf16.msra.mxu0 0
    %8192 = vmatpush.bf16.msra.mxu0 0
    %8193 = vmatpush.bf16.msra.mxu0 0
    %8194 = vmatpush.bf16.msra.mxu0 %v2078
    %8195 = vmatmul.bf16.gmra.mxu0 %v8185
    %v8196 = vpop.f32.mrf.mxu0
    %v8197 = vadd.f32 0.0, %v8196
    %v8198 = vpop.f32.mrf.mxu0
    %v8199 = vadd.f32 0.0, %v8198
    %8200 = vdwg.mxu0
    %v8203 = vunpack.c.l.b16 %v7842
    %v8204 = vunpack.c.l.b16 %v7843
    %v8205 = vpack.c.b16 %v8204, %v8203
    %v8208 = vsel %vm3704, %v8205, 0
    %8210 = vmatpush.bf16.msra.mxu0 0
    %8211 = vmatpush.bf16.msra.mxu0 0
    %8212 = vmatpush.bf16.msra.mxu0 0
    %8213 = vmatpush.bf16.msra.mxu0 0
    %8214 = vmatpush.bf16.msra.mxu0 0
    %8215 = vmatpush.bf16.msra.mxu0 0
    %8216 = vmatpush.bf16.msra.mxu0 0
    %8217 = vmatpush.bf16.msra.mxu0 %v2107
    %8218 = vmatmul.bf16.gmra.mxu0 %v8208
    %v8219 = vpop.f32.mrf.mxu0
    %v8220 = vadd.f32 0.0, %v8219
    %v8221 = vpop.f32.mrf.mxu0
    %v8222 = vadd.f32 0.0, %v8221
    %8223 = vdwg.mxu0
    %v8226 = vunpack.c.l.b16 %v7844
    %v8227 = vunpack.c.l.b16 %v7845
    %v8228 = vpack.c.b16 %v8227, %v8226
    %v8231 = vsel %vm3704, %v8228, 0
    %8233 = vmatpush.bf16.msra.mxu0 0
    %8234 = vmatpush.bf16.msra.mxu0 0
    %8235 = vmatpush.bf16.msra.mxu0 0
    %8236 = vmatpush.bf16.msra.mxu0 0
    %8237 = vmatpush.bf16.msra.mxu0 0
    %8238 = vmatpush.bf16.msra.mxu0 0
    %8239 = vmatpush.bf16.msra.mxu0 0
    %8240 = vmatpush.bf16.msra.mxu0 %v2136
    %8241 = vmatmul.bf16.gmra.mxu0 %v8231
    %v8242 = vpop.f32.mrf.mxu0
    %v8243 = vadd.f32 0.0, %v8242
    %v8244 = vpop.f32.mrf.mxu0
    %v8245 = vadd.f32 0.0, %v8244
    %8246 = vdwg.mxu0
    %v8249 = vunpack.c.l.b16 %v7846
    %v8250 = vunpack.c.l.b16 %v7847
    %v8251 = vpack.c.b16 %v8250, %v8249
    %v8254 = vsel %vm3704, %v8251, 0
    %8256 = vmatpush.bf16.msra.mxu0 0
    %8257 = vmatpush.bf16.msra.mxu0 0
    %8258 = vmatpush.bf16.msra.mxu0 0
    %8259 = vmatpush.bf16.msra.mxu0 0
    %8260 = vmatpush.bf16.msra.mxu0 0
    %8261 = vmatpush.bf16.msra.mxu0 0
    %8262 = vmatpush.bf16.msra.mxu0 0
    %8263 = vmatpush.bf16.msra.mxu0 %v2165
    %8264 = vmatmul.bf16.gmra.mxu0 %v8254
    %v8265 = vpop.f32.mrf.mxu0
    %v8266 = vadd.f32 0.0, %v8265
    %v8267 = vpop.f32.mrf.mxu0
    %v8268 = vadd.f32 0.0, %v8267
    %8269 = vdwg.mxu0
    %v8272 = vunpack.c.l.b16 %v7848
    %v8273 = vunpack.c.l.b16 %v7849
    %v8274 = vpack.c.b16 %v8273, %v8272
    %v8277 = vsel %vm3704, %v8274, 0
    %8279 = vmatpush.bf16.msra.mxu0 0
    %8280 = vmatpush.bf16.msra.mxu0 0
    %8281 = vmatpush.bf16.msra.mxu0 0
    %8282 = vmatpush.bf16.msra.mxu0 0
    %8283 = vmatpush.bf16.msra.mxu0 0
    %8284 = vmatpush.bf16.msra.mxu0 0
    %8285 = vmatpush.bf16.msra.mxu0 0
    %8286 = vmatpush.bf16.msra.mxu0 %v2194
    %8287 = vmatmul.bf16.gmra.mxu0 %v8277
    %v8288 = vpop.f32.mrf.mxu0
    %v8289 = vadd.f32 0.0, %v8288
    %v8290 = vpop.f32.mrf.mxu0
    %v8291 = vadd.f32 0.0, %v8290
    %8292 = vdwg.mxu0
    %v8295 = vunpack.c.l.b16 %v7850
    %v8296 = vunpack.c.l.b16 %v7851
    %v8297 = vpack.c.b16 %v8296, %v8295
    %v8300 = vsel %vm3704, %v8297, 0
    %8302 = vmatpush.bf16.msra.mxu0 0
    %8303 = vmatpush.bf16.msra.mxu0 0
    %8304 = vmatpush.bf16.msra.mxu0 0
    %8305 = vmatpush.bf16.msra.mxu0 0
    %8306 = vmatpush.bf16.msra.mxu0 0
    %8307 = vmatpush.bf16.msra.mxu0 0
    %8308 = vmatpush.bf16.msra.mxu0 0
    %8309 = vmatpush.bf16.msra.mxu0 %v2223
    %8310 = vmatmul.bf16.gmra.mxu0 %v8300
    %v8311 = vpop.f32.mrf.mxu0
    %v8312 = vadd.f32 0.0, %v8311
    %v8313 = vpop.f32.mrf.mxu0
    %v8314 = vadd.f32 0.0, %v8313
    %8315 = vdwg.mxu0
    %v8318 = vunpack.c.l.b16 %v7852
    %v8319 = vunpack.c.l.b16 %v7853
    %v8320 = vpack.c.b16 %v8319, %v8318
    %v8323 = vsel %vm3704, %v8320, 0
    %8325 = vmatpush.bf16.msra.mxu0 0
    %8326 = vmatpush.bf16.msra.mxu0 0
    %8327 = vmatpush.bf16.msra.mxu0 0
    %8328 = vmatpush.bf16.msra.mxu0 0
    %8329 = vmatpush.bf16.msra.mxu0 0
    %8330 = vmatpush.bf16.msra.mxu0 0
    %8331 = vmatpush.bf16.msra.mxu0 0
    %8332 = vmatpush.bf16.msra.mxu0 %v2252
    %8333 = vmatmul.bf16.gmra.mxu0 %v8323
    %v8334 = vpop.f32.mrf.mxu0
    %v8335 = vadd.f32 0.0, %v8334
    %v8336 = vpop.f32.mrf.mxu0
    %v8337 = vadd.f32 0.0, %v8336
    %8338 = vdwg.mxu0
    %v8341 = vunpack.c.l.b16 %v7854
    %v8342 = vunpack.c.l.b16 %v7855
    %v8343 = vpack.c.b16 %v8342, %v8341
    %v8346 = vsel %vm3704, %v8343, 0
    %8348 = vmatpush.bf16.msra.mxu0 0
    %8349 = vmatpush.bf16.msra.mxu0 0
    %8350 = vmatpush.bf16.msra.mxu0 0
    %8351 = vmatpush.bf16.msra.mxu0 0
    %8352 = vmatpush.bf16.msra.mxu0 0
    %8353 = vmatpush.bf16.msra.mxu0 0
    %8354 = vmatpush.bf16.msra.mxu0 0
    %8355 = vmatpush.bf16.msra.mxu0 %v2281
    %8356 = vmatmul.bf16.gmra.mxu0 %v8346
    %v8357 = vpop.f32.mrf.mxu0
    %v8358 = vadd.f32 0.0, %v8357
    %v8359 = vpop.f32.mrf.mxu0
    %v8360 = vadd.f32 0.0, %v8359
    %8361 = vdwg.mxu0
    %v8364 = vunpack.c.l.b16 %v7856
    %v8365 = vunpack.c.l.b16 %v7857
    %v8366 = vpack.c.b16 %v8365, %v8364
    %v8369 = vsel %vm3704, %v8366, 0
    %8371 = vmatpush.bf16.msra.mxu0 0
    %8372 = vmatpush.bf16.msra.mxu0 0
    %8373 = vmatpush.bf16.msra.mxu0 0
    %8374 = vmatpush.bf16.msra.mxu0 0
    %8375 = vmatpush.bf16.msra.mxu0 0
    %8376 = vmatpush.bf16.msra.mxu0 0
    %8377 = vmatpush.bf16.msra.mxu0 0
    %8378 = vmatpush.bf16.msra.mxu0 %v2310
    %8379 = vmatmul.bf16.gmra.mxu0 %v8369
    %v8380 = vpop.f32.mrf.mxu0
    %v8381 = vadd.f32 0.0, %v8380
    %v8382 = vpop.f32.mrf.mxu0
    %v8383 = vadd.f32 0.0, %v8382
    %8384 = vdwg.mxu0
    %v8387 = vunpack.c.l.b16 %v7858
    %v8388 = vunpack.c.l.b16 %v7859
    %v8389 = vpack.c.b16 %v8388, %v8387
    %v8392 = vsel %vm3704, %v8389, 0
    %8394 = vmatpush.bf16.msra.mxu0 0
    %8395 = vmatpush.bf16.msra.mxu0 0
    %8396 = vmatpush.bf16.msra.mxu0 0
    %8397 = vmatpush.bf16.msra.mxu0 0
    %8398 = vmatpush.bf16.msra.mxu0 0
    %8399 = vmatpush.bf16.msra.mxu0 0
    %8400 = vmatpush.bf16.msra.mxu0 0
    %8401 = vmatpush.bf16.msra.mxu0 %v2339
    %8402 = vmatmul.bf16.gmra.mxu0 %v8392
    %v8403 = vpop.f32.mrf.mxu0
    %v8404 = vadd.f32 0.0, %v8403
    %v8405 = vpop.f32.mrf.mxu0
    %v8406 = vadd.f32 0.0, %v8405
    %8407 = vdwg.mxu0
    %v8410 = vunpack.c.l.b16 %v7860
    %v8411 = vunpack.c.l.b16 %v7861
    %v8412 = vpack.c.b16 %v8411, %v8410
    %v8415 = vsel %vm3704, %v8412, 0
    %8417 = vmatpush.bf16.msra.mxu0 0
    %8418 = vmatpush.bf16.msra.mxu0 0
    %8419 = vmatpush.bf16.msra.mxu0 0
    %8420 = vmatpush.bf16.msra.mxu0 0
    %8421 = vmatpush.bf16.msra.mxu0 0
    %8422 = vmatpush.bf16.msra.mxu0 0
    %8423 = vmatpush.bf16.msra.mxu0 0
    %8424 = vmatpush.bf16.msra.mxu0 %v2368
    %8425 = vmatmul.bf16.gmra.mxu0 %v8415
    %v8426 = vpop.f32.mrf.mxu0
    %v8427 = vadd.f32 0.0, %v8426
    %v8428 = vpop.f32.mrf.mxu0
    %v8429 = vadd.f32 0.0, %v8428
    %8430 = vdwg.mxu0
    %v8433 = vunpack.c.l.b16 %v7862
    %v8434 = vunpack.c.l.b16 %v7863
    %v8435 = vpack.c.b16 %v8434, %v8433
    %v8438 = vsel %vm3704, %v8435, 0
    %8440 = vmatpush.bf16.msra.mxu0 0
    %8441 = vmatpush.bf16.msra.mxu0 0
    %8442 = vmatpush.bf16.msra.mxu0 0
    %8443 = vmatpush.bf16.msra.mxu0 0
    %8444 = vmatpush.bf16.msra.mxu0 0
    %8445 = vmatpush.bf16.msra.mxu0 0
    %8446 = vmatpush.bf16.msra.mxu0 0
    %8447 = vmatpush.bf16.msra.mxu0 %v2397
    %8448 = vmatmul.bf16.gmra.mxu0 %v8438
    %v8449 = vpop.f32.mrf.mxu0
    %v8450 = vadd.f32 0.0, %v8449
    %v8451 = vpop.f32.mrf.mxu0
    %v8452 = vadd.f32 0.0, %v8451
    %8453 = vdwg.mxu0
    %v8456 = vunpack.c.l.b16 %v7864
    %v8457 = vunpack.c.l.b16 %v7865
    %v8458 = vpack.c.b16 %v8457, %v8456
    %v8461 = vsel %vm3704, %v8458, 0
    %8463 = vmatpush.bf16.msra.mxu0 0
    %8464 = vmatpush.bf16.msra.mxu0 0
    %8465 = vmatpush.bf16.msra.mxu0 0
    %8466 = vmatpush.bf16.msra.mxu0 0
    %8467 = vmatpush.bf16.msra.mxu0 0
    %8468 = vmatpush.bf16.msra.mxu0 0
    %8469 = vmatpush.bf16.msra.mxu0 0
    %8470 = vmatpush.bf16.msra.mxu0 %v2426
    %8471 = vmatmul.bf16.gmra.mxu0 %v8461
    %v8472 = vpop.f32.mrf.mxu0
    %v8473 = vadd.f32 0.0, %v8472
    %v8474 = vpop.f32.mrf.mxu0
    %v8475 = vadd.f32 0.0, %v8474
    %8476 = vdwg.mxu0
    %v8479 = vunpack.c.l.b16 %v7866
    %v8480 = vunpack.c.l.b16 %v7867
    %v8481 = vpack.c.b16 %v8480, %v8479
    %v8484 = vsel %vm3704, %v8481, 0
    %8486 = vmatpush.bf16.msra.mxu0 0
    %8487 = vmatpush.bf16.msra.mxu0 0
    %8488 = vmatpush.bf16.msra.mxu0 0
    %8489 = vmatpush.bf16.msra.mxu0 0
    %8490 = vmatpush.bf16.msra.mxu0 0
    %8491 = vmatpush.bf16.msra.mxu0 0
    %8492 = vmatpush.bf16.msra.mxu0 0
    %8493 = vmatpush.bf16.msra.mxu0 %v2455
    %8494 = vmatmul.bf16.gmra.mxu0 %v8484
    %v8495 = vpop.f32.mrf.mxu0
    %v8496 = vadd.f32 0.0, %v8495
    %v8497 = vpop.f32.mrf.mxu0
    %v8498 = vadd.f32 0.0, %v8497
    %8499 = vdwg.mxu0
    %v8502 = vunpack.c.l.b16 %v7868
    %v8503 = vunpack.c.l.b16 %v7869
    %v8504 = vpack.c.b16 %v8503, %v8502
    %v8507 = vsel %vm3704, %v8504, 0
    %8509 = vmatpush.bf16.msra.mxu0 0
    %8510 = vmatpush.bf16.msra.mxu0 0
    %8511 = vmatpush.bf16.msra.mxu0 0
    %8512 = vmatpush.bf16.msra.mxu0 0
    %8513 = vmatpush.bf16.msra.mxu0 0
    %8514 = vmatpush.bf16.msra.mxu0 0
    %8515 = vmatpush.bf16.msra.mxu0 0
    %8516 = vmatpush.bf16.msra.mxu0 %v2484
    %8517 = vmatmul.bf16.gmra.mxu0 %v8507
    %v8518 = vpop.f32.mrf.mxu0
    %v8519 = vadd.f32 0.0, %v8518
    %v8520 = vpop.f32.mrf.mxu0
    %v8521 = vadd.f32 0.0, %v8520
    %8522 = vdwg.mxu0
    %v8525 = vunpack.c.l.b16 %v7870
    %v8526 = vunpack.c.l.b16 %v7871
    %v8527 = vpack.c.b16 %v8526, %v8525
    %v8530 = vsel %vm3704, %v8527, 0
    %8532 = vmatpush.bf16.msra.mxu0 0
    %8533 = vmatpush.bf16.msra.mxu0 0
    %8534 = vmatpush.bf16.msra.mxu0 0
    %8535 = vmatpush.bf16.msra.mxu0 0
    %8536 = vmatpush.bf16.msra.mxu0 0
    %8537 = vmatpush.bf16.msra.mxu0 0
    %8538 = vmatpush.bf16.msra.mxu0 0
    %8539 = vmatpush.bf16.msra.mxu0 %v2513
    %8540 = vmatmul.bf16.gmra.mxu0 %v8530
    %v8541 = vpop.f32.mrf.mxu0
    %v8542 = vadd.f32 0.0, %v8541
    %v8543 = vpop.f32.mrf.mxu0
    %v8544 = vadd.f32 0.0, %v8543
    %8545 = vdwg.mxu0
    %v8548 = vunpack.c.l.b16 %v7872
    %v8549 = vunpack.c.l.b16 %v7873
    %v8550 = vpack.c.b16 %v8549, %v8548
    %v8553 = vsel %vm3704, %v8550, 0
    %8555 = vmatpush.bf16.msra.mxu0 0
    %8556 = vmatpush.bf16.msra.mxu0 0
    %8557 = vmatpush.bf16.msra.mxu0 0
    %8558 = vmatpush.bf16.msra.mxu0 0
    %8559 = vmatpush.bf16.msra.mxu0 0
    %8560 = vmatpush.bf16.msra.mxu0 0
    %8561 = vmatpush.bf16.msra.mxu0 0
    %8562 = vmatpush.bf16.msra.mxu0 %v2542
    %8563 = vmatmul.bf16.gmra.mxu0 %v8553
    %v8564 = vpop.f32.mrf.mxu0
    %v8565 = vadd.f32 0.0, %v8564
    %v8566 = vpop.f32.mrf.mxu0
    %v8567 = vadd.f32 0.0, %v8566
    %8568 = vdwg.mxu0
    %v8571 = vunpack.c.l.b16 %v7874
    %v8572 = vunpack.c.l.b16 %v7875
    %v8573 = vpack.c.b16 %v8572, %v8571
    %v8576 = vsel %vm3704, %v8573, 0
    %8578 = vmatpush.bf16.msra.mxu0 0
    %8579 = vmatpush.bf16.msra.mxu0 0
    %8580 = vmatpush.bf16.msra.mxu0 0
    %8581 = vmatpush.bf16.msra.mxu0 0
    %8582 = vmatpush.bf16.msra.mxu0 0
    %8583 = vmatpush.bf16.msra.mxu0 0
    %8584 = vmatpush.bf16.msra.mxu0 0
    %8585 = vmatpush.bf16.msra.mxu0 %v2571
    %8586 = vmatmul.bf16.gmra.mxu0 %v8576
    %v8587 = vpop.f32.mrf.mxu0
    %v8588 = vadd.f32 0.0, %v8587
    %v8589 = vpop.f32.mrf.mxu0
    %v8590 = vadd.f32 0.0, %v8589
    %8591 = vdwg.mxu0
    %v8594 = vunpack.c.l.b16 %v7876
    %v8595 = vunpack.c.l.b16 %v7877
    %v8596 = vpack.c.b16 %v8595, %v8594
    %v8599 = vsel %vm3704, %v8596, 0
    %8601 = vmatpush.bf16.msra.mxu0 0
    %8602 = vmatpush.bf16.msra.mxu0 0
    %8603 = vmatpush.bf16.msra.mxu0 0
    %8604 = vmatpush.bf16.msra.mxu0 0
    %8605 = vmatpush.bf16.msra.mxu0 0
    %8606 = vmatpush.bf16.msra.mxu0 0
    %8607 = vmatpush.bf16.msra.mxu0 0
    %8608 = vmatpush.bf16.msra.mxu0 %v2600
    %8609 = vmatmul.bf16.gmra.mxu0 %v8599
    %v8610 = vpop.f32.mrf.mxu0
    %v8611 = vadd.f32 0.0, %v8610
    %v8612 = vpop.f32.mrf.mxu0
    %v8613 = vadd.f32 0.0, %v8612
    %8614 = vdwg.mxu0
    %v8617 = vunpack.c.l.b16 %v7878
    %v8618 = vunpack.c.l.b16 %v7879
    %v8619 = vpack.c.b16 %v8618, %v8617
    %v8622 = vsel %vm3704, %v8619, 0
    %8624 = vmatpush.bf16.msra.mxu0 0
    %8625 = vmatpush.bf16.msra.mxu0 0
    %8626 = vmatpush.bf16.msra.mxu0 0
    %8627 = vmatpush.bf16.msra.mxu0 0
    %8628 = vmatpush.bf16.msra.mxu0 0
    %8629 = vmatpush.bf16.msra.mxu0 0
    %8630 = vmatpush.bf16.msra.mxu0 0
    %8631 = vmatpush.bf16.msra.mxu0 %v2629
    %8632 = vmatmul.bf16.gmra.mxu0 %v8622
    %v8633 = vpop.f32.mrf.mxu0
    %v8634 = vadd.f32 0.0, %v8633
    %v8635 = vpop.f32.mrf.mxu0
    %v8636 = vadd.f32 0.0, %v8635
    %8637 = vdwg.mxu0
    %v8640 = vunpack.c.l.b16 %v7880
    %v8641 = vunpack.c.l.b16 %v7881
    %v8642 = vpack.c.b16 %v8641, %v8640
    %v8645 = vsel %vm3704, %v8642, 0
    %8647 = vmatpush.bf16.msra.mxu0 0
    %8648 = vmatpush.bf16.msra.mxu0 0
    %8649 = vmatpush.bf16.msra.mxu0 0
    %8650 = vmatpush.bf16.msra.mxu0 0
    %8651 = vmatpush.bf16.msra.mxu0 0
    %8652 = vmatpush.bf16.msra.mxu0 0
    %8653 = vmatpush.bf16.msra.mxu0 0
    %8654 = vmatpush.bf16.msra.mxu0 %v2658
    %8655 = vmatmul.bf16.gmra.mxu0 %v8645
    %v8656 = vpop.f32.mrf.mxu0
    %v8657 = vadd.f32 0.0, %v8656
    %v8658 = vpop.f32.mrf.mxu0
    %v8659 = vadd.f32 0.0, %v8658
    %8660 = vdwg.mxu0
    %v8663 = vunpack.c.l.b16 %v7882
    %v8664 = vunpack.c.l.b16 %v7883
    %v8665 = vpack.c.b16 %v8664, %v8663
    %v8668 = vsel %vm3704, %v8665, 0
    %8670 = vmatpush.bf16.msra.mxu0 0
    %8671 = vmatpush.bf16.msra.mxu0 0
    %8672 = vmatpush.bf16.msra.mxu0 0
    %8673 = vmatpush.bf16.msra.mxu0 0
    %8674 = vmatpush.bf16.msra.mxu0 0
    %8675 = vmatpush.bf16.msra.mxu0 0
    %8676 = vmatpush.bf16.msra.mxu0 0
    %8677 = vmatpush.bf16.msra.mxu0 %v2687
    %8678 = vmatmul.bf16.gmra.mxu0 %v8668
    %v8679 = vpop.f32.mrf.mxu0
    %v8680 = vadd.f32 0.0, %v8679
    %v8681 = vpop.f32.mrf.mxu0
    %v8682 = vadd.f32 0.0, %v8681
    %8683 = vdwg.mxu0
    %v8686 = vunpack.c.l.b16 %v7884
    %v8687 = vunpack.c.l.b16 %v7885
    %v8688 = vpack.c.b16 %v8687, %v8686
    %v8691 = vsel %vm3704, %v8688, 0
    %8693 = vmatpush.bf16.msra.mxu0 0
    %8694 = vmatpush.bf16.msra.mxu0 0
    %8695 = vmatpush.bf16.msra.mxu0 0
    %8696 = vmatpush.bf16.msra.mxu0 0
    %8697 = vmatpush.bf16.msra.mxu0 0
    %8698 = vmatpush.bf16.msra.mxu0 0
    %8699 = vmatpush.bf16.msra.mxu0 0
    %8700 = vmatpush.bf16.msra.mxu0 %v2716
    %8701 = vmatmul.bf16.gmra.mxu0 %v8691
    %v8702 = vpop.f32.mrf.mxu0
    %v8703 = vadd.f32 0.0, %v8702
    %v8704 = vpop.f32.mrf.mxu0
    %v8705 = vadd.f32 0.0, %v8704
    %8706 = vdwg.mxu0
    %v8709 = vunpack.c.l.b16 %v7886
    %v8710 = vunpack.c.l.b16 %v7887
    %v8711 = vpack.c.b16 %v8710, %v8709
    %v8714 = vsel %vm3704, %v8711, 0
    %8716 = vmatpush.bf16.msra.mxu0 0
    %8717 = vmatpush.bf16.msra.mxu0 0
    %8718 = vmatpush.bf16.msra.mxu0 0
    %8719 = vmatpush.bf16.msra.mxu0 0
    %8720 = vmatpush.bf16.msra.mxu0 0
    %8721 = vmatpush.bf16.msra.mxu0 0
    %8722 = vmatpush.bf16.msra.mxu0 0
    %8723 = vmatpush.bf16.msra.mxu0 %v2745
    %8724 = vmatmul.bf16.gmra.mxu0 %v8714
    %v8725 = vpop.f32.mrf.mxu0
    %v8726 = vadd.f32 0.0, %v8725
    %v8727 = vpop.f32.mrf.mxu0
    %v8728 = vadd.f32 0.0, %v8727
    %8729 = vdwg.mxu0
    %v8732 = vunpack.c.l.b16 %v7888
    %v8733 = vunpack.c.l.b16 %v7889
    %v8734 = vpack.c.b16 %v8733, %v8732
    %v8737 = vsel %vm3704, %v8734, 0
    %8739 = vmatpush.bf16.msra.mxu0 0
    %8740 = vmatpush.bf16.msra.mxu0 0
    %8741 = vmatpush.bf16.msra.mxu0 0
    %8742 = vmatpush.bf16.msra.mxu0 0
    %8743 = vmatpush.bf16.msra.mxu0 0
    %8744 = vmatpush.bf16.msra.mxu0 0
    %8745 = vmatpush.bf16.msra.mxu0 0
    %8746 = vmatpush.bf16.msra.mxu0 %v2774
    %8747 = vmatmul.bf16.gmra.mxu0 %v8737
    %v8748 = vpop.f32.mrf.mxu0
    %v8749 = vadd.f32 0.0, %v8748
    %v8750 = vpop.f32.mrf.mxu0
    %v8751 = vadd.f32 0.0, %v8750
    %8752 = vdwg.mxu0
    %v8755 = vunpack.c.l.b16 %v7890
    %v8756 = vunpack.c.l.b16 %v7891
    %v8757 = vpack.c.b16 %v8756, %v8755
    %v8760 = vsel %vm3704, %v8757, 0
    %8762 = vmatpush.bf16.msra.mxu0 0
    %8763 = vmatpush.bf16.msra.mxu0 0
    %8764 = vmatpush.bf16.msra.mxu0 0
    %8765 = vmatpush.bf16.msra.mxu0 0
    %8766 = vmatpush.bf16.msra.mxu0 0
    %8767 = vmatpush.bf16.msra.mxu0 0
    %8768 = vmatpush.bf16.msra.mxu0 0
    %8769 = vmatpush.bf16.msra.mxu0 %v2803
    %8770 = vmatmul.bf16.gmra.mxu0 %v8760
    %v8771 = vpop.f32.mrf.mxu0
    %v8772 = vadd.f32 0.0, %v8771
    %v8773 = vpop.f32.mrf.mxu0
    %v8774 = vadd.f32 0.0, %v8773
    %8775 = vdwg.mxu0
    %v8778 = vunpack.c.l.b16 %v7892
    %v8779 = vunpack.c.l.b16 %v7893
    %v8780 = vpack.c.b16 %v8779, %v8778
    %v8783 = vsel %vm3704, %v8780, 0
    %8785 = vmatpush.bf16.msra.mxu0 0
    %8786 = vmatpush.bf16.msra.mxu0 0
    %8787 = vmatpush.bf16.msra.mxu0 0
    %8788 = vmatpush.bf16.msra.mxu0 0
    %8789 = vmatpush.bf16.msra.mxu0 0
    %8790 = vmatpush.bf16.msra.mxu0 0
    %8791 = vmatpush.bf16.msra.mxu0 0
    %8792 = vmatpush.bf16.msra.mxu0 %v2832
    %8793 = vmatmul.bf16.gmra.mxu0 %v8783
    %v8794 = vpop.f32.mrf.mxu0
    %v8795 = vadd.f32 0.0, %v8794
    %v8796 = vpop.f32.mrf.mxu0
    %v8797 = vadd.f32 0.0, %v8796
    %8798 = vdwg.mxu0
    %v8801 = vunpack.c.l.b16 %v7894
    %v8802 = vunpack.c.l.b16 %v7895
    %v8803 = vpack.c.b16 %v8802, %v8801
    %v8806 = vsel %vm3704, %v8803, 0
    %8808 = vmatpush.bf16.msra.mxu0 0
    %8809 = vmatpush.bf16.msra.mxu0 0
    %8810 = vmatpush.bf16.msra.mxu0 0
    %8811 = vmatpush.bf16.msra.mxu0 0
    %8812 = vmatpush.bf16.msra.mxu0 0
    %8813 = vmatpush.bf16.msra.mxu0 0
    %8814 = vmatpush.bf16.msra.mxu0 0
    %8815 = vmatpush.bf16.msra.mxu0 %v2861
    %8816 = vmatmul.bf16.gmra.mxu0 %v8806
    %v8817 = vpop.f32.mrf.mxu0
    %v8818 = vadd.f32 0.0, %v8817
    %v8819 = vpop.f32.mrf.mxu0
    %v8820 = vadd.f32 0.0, %v8819
    %8821 = vdwg.mxu0
    %v8824 = vunpack.c.l.b16 %v7896
    %v8825 = vunpack.c.l.b16 %v7897
    %v8826 = vpack.c.b16 %v8825, %v8824
    %v8829 = vsel %vm3704, %v8826, 0
    %8831 = vmatpush.bf16.msra.mxu0 0
    %8832 = vmatpush.bf16.msra.mxu0 0
    %8833 = vmatpush.bf16.msra.mxu0 0
    %8834 = vmatpush.bf16.msra.mxu0 0
    %8835 = vmatpush.bf16.msra.mxu0 0
    %8836 = vmatpush.bf16.msra.mxu0 0
    %8837 = vmatpush.bf16.msra.mxu0 0
    %8838 = vmatpush.bf16.msra.mxu0 %v2890
    %8839 = vmatmul.bf16.gmra.mxu0 %v8829
    %v8840 = vpop.f32.mrf.mxu0
    %v8841 = vadd.f32 0.0, %v8840
    %v8842 = vpop.f32.mrf.mxu0
    %v8843 = vadd.f32 0.0, %v8842
    %8844 = vdwg.mxu0
    %v8847 = vunpack.c.l.b16 %v7898
    %v8848 = vunpack.c.l.b16 %v7899
    %v8849 = vpack.c.b16 %v8848, %v8847
    %v8852 = vsel %vm3704, %v8849, 0
    %8854 = vmatpush.bf16.msra.mxu0 0
    %8855 = vmatpush.bf16.msra.mxu0 0
    %8856 = vmatpush.bf16.msra.mxu0 0
    %8857 = vmatpush.bf16.msra.mxu0 0
    %8858 = vmatpush.bf16.msra.mxu0 0
    %8859 = vmatpush.bf16.msra.mxu0 0
    %8860 = vmatpush.bf16.msra.mxu0 0
    %8861 = vmatpush.bf16.msra.mxu0 %v2919
    %8862 = vmatmul.bf16.gmra.mxu0 %v8852
    %v8863 = vpop.f32.mrf.mxu0
    %v8864 = vadd.f32 0.0, %v8863
    %v8865 = vpop.f32.mrf.mxu0
    %v8866 = vadd.f32 0.0, %v8865
    %8867 = vdwg.mxu0
    %v8870 = vunpack.c.l.b16 %v7900
    %v8871 = vunpack.c.l.b16 %v7901
    %v8872 = vpack.c.b16 %v8871, %v8870
    %v8875 = vsel %vm3704, %v8872, 0
    %8877 = vmatpush.bf16.msra.mxu0 0
    %8878 = vmatpush.bf16.msra.mxu0 0
    %8879 = vmatpush.bf16.msra.mxu0 0
    %8880 = vmatpush.bf16.msra.mxu0 0
    %8881 = vmatpush.bf16.msra.mxu0 0
    %8882 = vmatpush.bf16.msra.mxu0 0
    %8883 = vmatpush.bf16.msra.mxu0 0
    %8884 = vmatpush.bf16.msra.mxu0 %v2948
    %8885 = vmatmul.bf16.gmra.mxu0 %v8875
    %v8886 = vpop.f32.mrf.mxu0
    %v8887 = vadd.f32 0.0, %v8886
    %v8888 = vpop.f32.mrf.mxu0
    %v8889 = vadd.f32 0.0, %v8888
    %8890 = vdwg.mxu0
    %v8893 = vunpack.c.l.b16 %v7902
    %v8894 = vunpack.c.l.b16 %v7903
    %v8895 = vpack.c.b16 %v8894, %v8893
    %v8898 = vsel %vm3704, %v8895, 0
    %8900 = vmatpush.bf16.msra.mxu0 0
    %8901 = vmatpush.bf16.msra.mxu0 0
    %8902 = vmatpush.bf16.msra.mxu0 0
    %8903 = vmatpush.bf16.msra.mxu0 0
    %8904 = vmatpush.bf16.msra.mxu0 0
    %8905 = vmatpush.bf16.msra.mxu0 0
    %8906 = vmatpush.bf16.msra.mxu0 0
    %8907 = vmatpush.bf16.msra.mxu0 %v2977
    %8908 = vmatmul.bf16.gmra.mxu0 %v8898
    %v8909 = vpop.f32.mrf.mxu0
    %v8910 = vadd.f32 0.0, %v8909
    %v8911 = vpop.f32.mrf.mxu0
    %v8912 = vadd.f32 0.0, %v8911
    %8913 = vdwg.mxu0
    %v8916 = vunpack.c.l.b16 %v7904
    %v8917 = vunpack.c.l.b16 %v7905
    %v8918 = vpack.c.b16 %v8917, %v8916
    %v8921 = vsel %vm3704, %v8918, 0
    %8923 = vmatpush.bf16.msra.mxu0 0
    %8924 = vmatpush.bf16.msra.mxu0 0
    %8925 = vmatpush.bf16.msra.mxu0 0
    %8926 = vmatpush.bf16.msra.mxu0 0
    %8927 = vmatpush.bf16.msra.mxu0 0
    %8928 = vmatpush.bf16.msra.mxu0 0
    %8929 = vmatpush.bf16.msra.mxu0 0
    %8930 = vmatpush.bf16.msra.mxu0 %v3006
    %8931 = vmatmul.bf16.gmra.mxu0 %v8921
    %v8932 = vpop.f32.mrf.mxu0
    %v8933 = vadd.f32 0.0, %v8932
    %v8934 = vpop.f32.mrf.mxu0
    %v8935 = vadd.f32 0.0, %v8934
    %8936 = vdwg.mxu0
    %v8939 = vunpack.c.l.b16 %v7906
    %v8940 = vunpack.c.l.b16 %v7907
    %v8941 = vpack.c.b16 %v8940, %v8939
    %v8944 = vsel %vm3704, %v8941, 0
    %8946 = vmatpush.bf16.msra.mxu0 0
    %8947 = vmatpush.bf16.msra.mxu0 0
    %8948 = vmatpush.bf16.msra.mxu0 0
    %8949 = vmatpush.bf16.msra.mxu0 0
    %8950 = vmatpush.bf16.msra.mxu0 0
    %8951 = vmatpush.bf16.msra.mxu0 0
    %8952 = vmatpush.bf16.msra.mxu0 0
    %8953 = vmatpush.bf16.msra.mxu0 %v3035
    %8954 = vmatmul.bf16.gmra.mxu0 %v8944
    %v8955 = vpop.f32.mrf.mxu0
    %v8956 = vadd.f32 0.0, %v8955
    %v8957 = vpop.f32.mrf.mxu0
    %v8958 = vadd.f32 0.0, %v8957
    %8959 = vdwg.mxu0
    %v8962 = vunpack.c.l.b16 %v7908
    %v8963 = vunpack.c.l.b16 %v7909
    %v8964 = vpack.c.b16 %v8963, %v8962
    %v8967 = vsel %vm3704, %v8964, 0
    %8969 = vmatpush.bf16.msra.mxu0 0
    %8970 = vmatpush.bf16.msra.mxu0 0
    %8971 = vmatpush.bf16.msra.mxu0 0
    %8972 = vmatpush.bf16.msra.mxu0 0
    %8973 = vmatpush.bf16.msra.mxu0 0
    %8974 = vmatpush.bf16.msra.mxu0 0
    %8975 = vmatpush.bf16.msra.mxu0 0
    %8976 = vmatpush.bf16.msra.mxu0 %v3064
    %8977 = vmatmul.bf16.gmra.mxu0 %v8967
    %v8978 = vpop.f32.mrf.mxu0
    %v8979 = vadd.f32 0.0, %v8978
    %v8980 = vpop.f32.mrf.mxu0
    %v8981 = vadd.f32 0.0, %v8980
    %8982 = vdwg.mxu0
    %v8985 = vunpack.c.l.b16 %v7910
    %v8986 = vunpack.c.l.b16 %v7911
    %v8987 = vpack.c.b16 %v8986, %v8985
    %v8990 = vsel %vm3704, %v8987, 0
    %8992 = vmatpush.bf16.msra.mxu0 0
    %8993 = vmatpush.bf16.msra.mxu0 0
    %8994 = vmatpush.bf16.msra.mxu0 0
    %8995 = vmatpush.bf16.msra.mxu0 0
    %8996 = vmatpush.bf16.msra.mxu0 0
    %8997 = vmatpush.bf16.msra.mxu0 0
    %8998 = vmatpush.bf16.msra.mxu0 0
    %8999 = vmatpush.bf16.msra.mxu0 %v3093
    %9000 = vmatmul.bf16.gmra.mxu0 %v8990
    %v9001 = vpop.f32.mrf.mxu0
    %v9002 = vadd.f32 0.0, %v9001
    %v9003 = vpop.f32.mrf.mxu0
    %v9004 = vadd.f32 0.0, %v9003
    %9005 = vdwg.mxu0
    %v9008 = vunpack.c.l.b16 %v7912
    %v9009 = vunpack.c.l.b16 %v7913
    %v9010 = vpack.c.b16 %v9009, %v9008
    %v9013 = vsel %vm3704, %v9010, 0
    %9015 = vmatpush.bf16.msra.mxu0 0
    %9016 = vmatpush.bf16.msra.mxu0 0
    %9017 = vmatpush.bf16.msra.mxu0 0
    %9018 = vmatpush.bf16.msra.mxu0 0
    %9019 = vmatpush.bf16.msra.mxu0 0
    %9020 = vmatpush.bf16.msra.mxu0 0
    %9021 = vmatpush.bf16.msra.mxu0 0
    %9022 = vmatpush.bf16.msra.mxu0 %v3122
    %9023 = vmatmul.bf16.gmra.mxu0 %v9013
    %v9024 = vpop.f32.mrf.mxu0
    %v9025 = vadd.f32 0.0, %v9024
    %v9026 = vpop.f32.mrf.mxu0
    %v9027 = vadd.f32 0.0, %v9026
    %9028 = vdwg.mxu0
    %v9031 = vunpack.c.l.b16 %v7914
    %v9032 = vunpack.c.l.b16 %v7915
    %v9033 = vpack.c.b16 %v9032, %v9031
    %v9036 = vsel %vm3704, %v9033, 0
    %9038 = vmatpush.bf16.msra.mxu0 0
    %9039 = vmatpush.bf16.msra.mxu0 0
    %9040 = vmatpush.bf16.msra.mxu0 0
    %9041 = vmatpush.bf16.msra.mxu0 0
    %9042 = vmatpush.bf16.msra.mxu0 0
    %9043 = vmatpush.bf16.msra.mxu0 0
    %9044 = vmatpush.bf16.msra.mxu0 0
    %9045 = vmatpush.bf16.msra.mxu0 %v3151
    %9046 = vmatmul.bf16.gmra.mxu0 %v9036
    %v9047 = vpop.f32.mrf.mxu0
    %v9048 = vadd.f32 0.0, %v9047
    %v9049 = vpop.f32.mrf.mxu0
    %v9050 = vadd.f32 0.0, %v9049
    %9051 = vdwg.mxu0
    %v9054 = vunpack.c.l.b16 %v7916
    %v9055 = vunpack.c.l.b16 %v7917
    %v9056 = vpack.c.b16 %v9055, %v9054
    %v9059 = vsel %vm3704, %v9056, 0
    %9061 = vmatpush.bf16.msra.mxu0 0
    %9062 = vmatpush.bf16.msra.mxu0 0
    %9063 = vmatpush.bf16.msra.mxu0 0
    %9064 = vmatpush.bf16.msra.mxu0 0
    %9065 = vmatpush.bf16.msra.mxu0 0
    %9066 = vmatpush.bf16.msra.mxu0 0
    %9067 = vmatpush.bf16.msra.mxu0 0
    %9068 = vmatpush.bf16.msra.mxu0 %v3180
    %9069 = vmatmul.bf16.gmra.mxu0 %v9059
    %v9070 = vpop.f32.mrf.mxu0
    %v9071 = vadd.f32 0.0, %v9070
    %v9072 = vpop.f32.mrf.mxu0
    %v9073 = vadd.f32 0.0, %v9072
    %9074 = vdwg.mxu0
    %v9077 = vunpack.c.l.b16 %v7918
    %v9078 = vunpack.c.l.b16 %v7919
    %v9079 = vpack.c.b16 %v9078, %v9077
    %v9082 = vsel %vm3704, %v9079, 0
    %9084 = vmatpush.bf16.msra.mxu0 0
    %9085 = vmatpush.bf16.msra.mxu0 0
    %9086 = vmatpush.bf16.msra.mxu0 0
    %9087 = vmatpush.bf16.msra.mxu0 0
    %9088 = vmatpush.bf16.msra.mxu0 0
    %9089 = vmatpush.bf16.msra.mxu0 0
    %9090 = vmatpush.bf16.msra.mxu0 0
    %9091 = vmatpush.bf16.msra.mxu0 %v3209
    %9092 = vmatmul.bf16.gmra.mxu0 %v9082
    %v9093 = vpop.f32.mrf.mxu0
    %v9094 = vadd.f32 0.0, %v9093
    %v9095 = vpop.f32.mrf.mxu0
    %v9096 = vadd.f32 0.0, %v9095
    %9097 = vdwg.mxu0
    %v9100 = vunpack.c.l.b16 %v7920
    %v9101 = vunpack.c.l.b16 %v7921
    %v9102 = vpack.c.b16 %v9101, %v9100
    %v9105 = vsel %vm3704, %v9102, 0
    %9107 = vmatpush.bf16.msra.mxu0 0
    %9108 = vmatpush.bf16.msra.mxu0 0
    %9109 = vmatpush.bf16.msra.mxu0 0
    %9110 = vmatpush.bf16.msra.mxu0 0
    %9111 = vmatpush.bf16.msra.mxu0 0
    %9112 = vmatpush.bf16.msra.mxu0 0
    %9113 = vmatpush.bf16.msra.mxu0 0
    %9114 = vmatpush.bf16.msra.mxu0 %v3238
    %9115 = vmatmul.bf16.gmra.mxu0 %v9105
    %v9116 = vpop.f32.mrf.mxu0
    %v9117 = vadd.f32 0.0, %v9116
    %v9118 = vpop.f32.mrf.mxu0
    %v9119 = vadd.f32 0.0, %v9118
    %9120 = vdwg.mxu0
    %v9123 = vunpack.c.l.b16 %v7922
    %v9124 = vunpack.c.l.b16 %v7923
    %v9125 = vpack.c.b16 %v9124, %v9123
    %v9128 = vsel %vm3704, %v9125, 0
    %9130 = vmatpush.bf16.msra.mxu0 0
    %9131 = vmatpush.bf16.msra.mxu0 0
    %9132 = vmatpush.bf16.msra.mxu0 0
    %9133 = vmatpush.bf16.msra.mxu0 0
    %9134 = vmatpush.bf16.msra.mxu0 0
    %9135 = vmatpush.bf16.msra.mxu0 0
    %9136 = vmatpush.bf16.msra.mxu0 0
    %9137 = vmatpush.bf16.msra.mxu0 %v3267
    %9138 = vmatmul.bf16.gmra.mxu0 %v9128
    %v9139 = vpop.f32.mrf.mxu0
    %v9140 = vadd.f32 0.0, %v9139
    %v9141 = vpop.f32.mrf.mxu0
    %v9142 = vadd.f32 0.0, %v9141
    %9143 = vdwg.mxu0
    %v9146 = vunpack.c.l.b16 %v7924
    %v9147 = vunpack.c.l.b16 %v7925
    %v9148 = vpack.c.b16 %v9147, %v9146
    %v9151 = vsel %vm3704, %v9148, 0
    %9153 = vmatpush.bf16.msra.mxu0 0
    %9154 = vmatpush.bf16.msra.mxu0 0
    %9155 = vmatpush.bf16.msra.mxu0 0
    %9156 = vmatpush.bf16.msra.mxu0 0
    %9157 = vmatpush.bf16.msra.mxu0 0
    %9158 = vmatpush.bf16.msra.mxu0 0
    %9159 = vmatpush.bf16.msra.mxu0 0
    %9160 = vmatpush.bf16.msra.mxu0 %v3296
    %9161 = vmatmul.bf16.gmra.mxu0 %v9151
    %v9162 = vpop.f32.mrf.mxu0
    %v9163 = vadd.f32 0.0, %v9162
    %v9164 = vpop.f32.mrf.mxu0
    %v9165 = vadd.f32 0.0, %v9164
    %9166 = vdwg.mxu0
    %v9169 = vunpack.c.l.b16 %v7926
    %v9170 = vunpack.c.l.b16 %v7927
    %v9171 = vpack.c.b16 %v9170, %v9169
    %v9174 = vsel %vm3704, %v9171, 0
    %9176 = vmatpush.bf16.msra.mxu0 0
    %9177 = vmatpush.bf16.msra.mxu0 0
    %9178 = vmatpush.bf16.msra.mxu0 0
    %9179 = vmatpush.bf16.msra.mxu0 0
    %9180 = vmatpush.bf16.msra.mxu0 0
    %9181 = vmatpush.bf16.msra.mxu0 0
    %9182 = vmatpush.bf16.msra.mxu0 0
    %9183 = vmatpush.bf16.msra.mxu0 %v3325
    %9184 = vmatmul.bf16.gmra.mxu0 %v9174
    %v9185 = vpop.f32.mrf.mxu0
    %v9186 = vadd.f32 0.0, %v9185
    %v9187 = vpop.f32.mrf.mxu0
    %v9188 = vadd.f32 0.0, %v9187
    %9189 = vdwg.mxu0
    %v9192 = vunpack.c.l.b16 %v7928
    %v9193 = vunpack.c.l.b16 %v7929
    %v9194 = vpack.c.b16 %v9193, %v9192
    %v9197 = vsel %vm3704, %v9194, 0
    %9199 = vmatpush.bf16.msra.mxu0 0
    %9200 = vmatpush.bf16.msra.mxu0 0
    %9201 = vmatpush.bf16.msra.mxu0 0
    %9202 = vmatpush.bf16.msra.mxu0 0
    %9203 = vmatpush.bf16.msra.mxu0 0
    %9204 = vmatpush.bf16.msra.mxu0 0
    %9205 = vmatpush.bf16.msra.mxu0 0
    %9206 = vmatpush.bf16.msra.mxu0 %v3354
    %9207 = vmatmul.bf16.gmra.mxu0 %v9197
    %v9208 = vpop.f32.mrf.mxu0
    %v9209 = vadd.f32 0.0, %v9208
    %v9210 = vpop.f32.mrf.mxu0
    %v9211 = vadd.f32 0.0, %v9210
    %9212 = vdwg.mxu0
    %v9215 = vunpack.c.l.b16 %v7930
    %v9216 = vunpack.c.l.b16 %v7931
    %v9217 = vpack.c.b16 %v9216, %v9215
    %v9220 = vsel %vm3704, %v9217, 0
    %9222 = vmatpush.bf16.msra.mxu0 0
    %9223 = vmatpush.bf16.msra.mxu0 0
    %9224 = vmatpush.bf16.msra.mxu0 0
    %9225 = vmatpush.bf16.msra.mxu0 0
    %9226 = vmatpush.bf16.msra.mxu0 0
    %9227 = vmatpush.bf16.msra.mxu0 0
    %9228 = vmatpush.bf16.msra.mxu0 0
    %9229 = vmatpush.bf16.msra.mxu0 %v3383
    %9230 = vmatmul.bf16.gmra.mxu0 %v9220
    %v9231 = vpop.f32.mrf.mxu0
    %v9232 = vadd.f32 0.0, %v9231
    %v9233 = vpop.f32.mrf.mxu0
    %v9234 = vadd.f32 0.0, %v9233
    %9235 = vdwg.mxu0
    %v9238 = vunpack.c.l.b16 %v7932
    %v9239 = vunpack.c.l.b16 %v7933
    %v9240 = vpack.c.b16 %v9239, %v9238
    %v9243 = vsel %vm3704, %v9240, 0
    %9245 = vmatpush.bf16.msra.mxu0 0
    %9246 = vmatpush.bf16.msra.mxu0 0
    %9247 = vmatpush.bf16.msra.mxu0 0
    %9248 = vmatpush.bf16.msra.mxu0 0
    %9249 = vmatpush.bf16.msra.mxu0 0
    %9250 = vmatpush.bf16.msra.mxu0 0
    %9251 = vmatpush.bf16.msra.mxu0 0
    %9252 = vmatpush.bf16.msra.mxu0 %v3412
    %9253 = vmatmul.bf16.gmra.mxu0 %v9243
    %v9254 = vpop.f32.mrf.mxu0
    %v9255 = vadd.f32 0.0, %v9254
    %v9256 = vpop.f32.mrf.mxu0
    %v9257 = vadd.f32 0.0, %v9256
    %9258 = vdwg.mxu0
    %v9261 = vunpack.c.l.b16 %v7934
    %v9262 = vunpack.c.l.b16 %v7935
    %v9263 = vpack.c.b16 %v9262, %v9261
    %v9266 = vsel %vm3704, %v9263, 0
    %9268 = vmatpush.bf16.msra.mxu0 0
    %9269 = vmatpush.bf16.msra.mxu0 0
    %9270 = vmatpush.bf16.msra.mxu0 0
    %9271 = vmatpush.bf16.msra.mxu0 0
    %9272 = vmatpush.bf16.msra.mxu0 0
    %9273 = vmatpush.bf16.msra.mxu0 0
    %9274 = vmatpush.bf16.msra.mxu0 0
    %9275 = vmatpush.bf16.msra.mxu0 %v3441
    %9276 = vmatmul.bf16.gmra.mxu0 %v9266
    %v9277 = vpop.f32.mrf.mxu0
    %v9278 = vadd.f32 0.0, %v9277
    %v9279 = vpop.f32.mrf.mxu0
    %v9280 = vadd.f32 0.0, %v9279
    %9281 = vdwg.mxu0
    %v9284 = vunpack.c.l.b16 %v7936
    %v9285 = vunpack.c.l.b16 %v7937
    %v9286 = vpack.c.b16 %v9285, %v9284
    %v9289 = vsel %vm3704, %v9286, 0
    %9291 = vmatpush.bf16.msra.mxu0 0
    %9292 = vmatpush.bf16.msra.mxu0 0
    %9293 = vmatpush.bf16.msra.mxu0 0
    %9294 = vmatpush.bf16.msra.mxu0 0
    %9295 = vmatpush.bf16.msra.mxu0 0
    %9296 = vmatpush.bf16.msra.mxu0 0
    %9297 = vmatpush.bf16.msra.mxu0 0
    %9298 = vmatpush.bf16.msra.mxu0 %v3470
    %9299 = vmatmul.bf16.gmra.mxu0 %v9289
    %v9300 = vpop.f32.mrf.mxu0
    %v9301 = vadd.f32 0.0, %v9300
    %v9302 = vpop.f32.mrf.mxu0
    %v9303 = vadd.f32 0.0, %v9302
    %9304 = vdwg.mxu0
    %v9307 = vunpack.c.l.b16 %v7938
    %v9308 = vunpack.c.l.b16 %v7939
    %v9309 = vpack.c.b16 %v9308, %v9307
    %v9312 = vsel %vm3704, %v9309, 0
    %9314 = vmatpush.bf16.msra.mxu0 0
    %9315 = vmatpush.bf16.msra.mxu0 0
    %9316 = vmatpush.bf16.msra.mxu0 0
    %9317 = vmatpush.bf16.msra.mxu0 0
    %9318 = vmatpush.bf16.msra.mxu0 0
    %9319 = vmatpush.bf16.msra.mxu0 0
    %9320 = vmatpush.bf16.msra.mxu0 0
    %9321 = vmatpush.bf16.msra.mxu0 %v3499
    %9322 = vmatmul.bf16.gmra.mxu0 %v9312
    %v9323 = vpop.f32.mrf.mxu0
    %v9324 = vadd.f32 0.0, %v9323
    %v9325 = vpop.f32.mrf.mxu0
    %v9326 = vadd.f32 0.0, %v9325
    %9327 = vdwg.mxu0
    %v9330 = vunpack.c.l.b16 %v7940
    %v9331 = vunpack.c.l.b16 %v7941
    %v9332 = vpack.c.b16 %v9331, %v9330
    %v9335 = vsel %vm3704, %v9332, 0
    %9337 = vmatpush.bf16.msra.mxu0 0
    %9338 = vmatpush.bf16.msra.mxu0 0
    %9339 = vmatpush.bf16.msra.mxu0 0
    %9340 = vmatpush.bf16.msra.mxu0 0
    %9341 = vmatpush.bf16.msra.mxu0 0
    %9342 = vmatpush.bf16.msra.mxu0 0
    %9343 = vmatpush.bf16.msra.mxu0 0
    %9344 = vmatpush.bf16.msra.mxu0 %v3528
    %9345 = vmatmul.bf16.gmra.mxu0 %v9335
    %v9346 = vpop.f32.mrf.mxu0
    %v9347 = vadd.f32 0.0, %v9346
    %v9348 = vpop.f32.mrf.mxu0
    %v9349 = vadd.f32 0.0, %v9348
    %9350 = vdwg.mxu0
    %v9353 = vunpack.c.l.b16 %v7942
    %v9354 = vunpack.c.l.b16 %v7943
    %v9355 = vpack.c.b16 %v9354, %v9353
    %v9358 = vsel %vm3704, %v9355, 0
    %9360 = vmatpush.bf16.msra.mxu0 0
    %9361 = vmatpush.bf16.msra.mxu0 0
    %9362 = vmatpush.bf16.msra.mxu0 0
    %9363 = vmatpush.bf16.msra.mxu0 0
    %9364 = vmatpush.bf16.msra.mxu0 0
    %9365 = vmatpush.bf16.msra.mxu0 0
    %9366 = vmatpush.bf16.msra.mxu0 0
    %9367 = vmatpush.bf16.msra.mxu0 %v3557
    %9368 = vmatmul.bf16.gmra.mxu0 %v9358
    %v9369 = vpop.f32.mrf.mxu0
    %v9370 = vadd.f32 0.0, %v9369
    %v9371 = vpop.f32.mrf.mxu0
    %v9372 = vadd.f32 0.0, %v9371
    %9373 = vdwg.mxu0
    %v9376 = vunpack.c.l.b16 %v7944
    %v9377 = vunpack.c.l.b16 %v7945
    %v9378 = vpack.c.b16 %v9377, %v9376
    %v9381 = vsel %vm3704, %v9378, 0
    %9383 = vmatpush.bf16.msra.mxu0 0
    %9384 = vmatpush.bf16.msra.mxu0 0
    %9385 = vmatpush.bf16.msra.mxu0 0
    %9386 = vmatpush.bf16.msra.mxu0 0
    %9387 = vmatpush.bf16.msra.mxu0 0
    %9388 = vmatpush.bf16.msra.mxu0 0
    %9389 = vmatpush.bf16.msra.mxu0 0
    %9390 = vmatpush.bf16.msra.mxu0 %v3586
    %9391 = vmatmul.bf16.gmra.mxu0 %v9381
    %v9392 = vpop.f32.mrf.mxu0
    %v9393 = vadd.f32 0.0, %v9392
    %v9394 = vpop.f32.mrf.mxu0
    %v9395 = vadd.f32 0.0, %v9394
    %9396 = vdwg.mxu0
    %v9399 = vunpack.c.l.b16 %v7946
    %v9400 = vunpack.c.l.b16 %v7947
    %v9401 = vpack.c.b16 %v9400, %v9399
    %v9404 = vsel %vm3704, %v9401, 0
    %9406 = vmatpush.bf16.msra.mxu0 0
    %9407 = vmatpush.bf16.msra.mxu0 0
    %9408 = vmatpush.bf16.msra.mxu0 0
    %9409 = vmatpush.bf16.msra.mxu0 0
    %9410 = vmatpush.bf16.msra.mxu0 0
    %9411 = vmatpush.bf16.msra.mxu0 0
    %9412 = vmatpush.bf16.msra.mxu0 0
    %9413 = vmatpush.bf16.msra.mxu0 %v3615
    %9414 = vmatmul.bf16.gmra.mxu0 %v9404
    %v9415 = vpop.f32.mrf.mxu0
    %v9416 = vadd.f32 0.0, %v9415
    %v9417 = vpop.f32.mrf.mxu0
    %v9418 = vadd.f32 0.0, %v9417
    %9419 = vdwg.mxu0
    %s9420 = sld [smem:[#allocation2]]
    %v9421 = vrot.slane %v8749, 4
    %v9422 = vsel %vm135, %v9421, %v8703
    %v9423 = vrot.slane %v8703, 4
    %v9424 = vsel %vm135, %v8749, %v9423
    %v9426 = vunpack.c.l.s4 1983009808
    %v9427 = vunpack.c.0.s8 %v9426
    %v9428 = vperm.slane %v9422, %v9427
    %v9430 = vunpack.c.l.s4 1983009808
    %v9431 = vunpack.c.0.s8 %v9430
    %v9432 = vperm.slane %v9424, %v9431
    %v9433 = vrot.slane %v8772, 4
    %v9434 = vsel %vm135, %v9433, %v8726
    %v9435 = vrot.slane %v8726, 4
    %v9436 = vsel %vm135, %v8772, %v9435
    %v9438 = vunpack.c.l.s4 1983009808
    %v9439 = vunpack.c.0.s8 %v9438
    %v9440 = vperm.slane %v9434, %v9439
    %v9442 = vunpack.c.l.s4 1983009808
    %v9443 = vunpack.c.0.s8 %v9442
    %v9444 = vperm.slane %v9436, %v9443
    %v9445 = vrot.slane %v8841, 4
    %v9446 = vsel %vm135, %v9445, %v8795
    %v9447 = vrot.slane %v8795, 4
    %v9448 = vsel %vm135, %v8841, %v9447
    %v9450 = vunpack.c.l.s4 1983009808
    %v9451 = vunpack.c.0.s8 %v9450
    %v9452 = vperm.slane %v9446, %v9451
    %v9454 = vunpack.c.l.s4 1983009808
    %v9455 = vunpack.c.0.s8 %v9454
    %v9456 = vperm.slane %v9448, %v9455
    %v9457 = vrot.slane %v8864, 4
    %v9458 = vsel %vm135, %v9457, %v8818
    %v9459 = vrot.slane %v8818, 4
    %v9460 = vsel %vm135, %v8864, %v9459
    %v9462 = vunpack.c.l.s4 1983009808
    %v9463 = vunpack.c.0.s8 %v9462
    %v9464 = vperm.slane %v9458, %v9463
    %v9466 = vunpack.c.l.s4 1983009808
    %v9467 = vunpack.c.0.s8 %v9466
    %v9468 = vperm.slane %v9460, %v9467
    %v9469 = vrot.slane %v9440, 4
    %v9470 = vsel %vm135, %v9469, %v9428
    %v9471 = vrot.slane %v9428, 4
    %v9472 = vsel %vm135, %v9440, %v9471
    %v9474 = vunpack.c.l.s4 1934713408
    %v9475 = vunpack.c.0.s8 %v9474
    %v9476 = vperm.slane %v9470, %v9475
    %v9478 = vunpack.c.l.s4 1934713408
    %v9479 = vunpack.c.0.s8 %v9478
    %v9480 = vperm.slane %v9472, %v9479
    %v9481 = vrot.slane %v9444, 4
    %v9482 = vsel %vm135, %v9481, %v9432
    %v9483 = vrot.slane %v9432, 4
    %v9484 = vsel %vm135, %v9444, %v9483
    %v9486 = vunpack.c.l.s4 1934713408
    %v9487 = vunpack.c.0.s8 %v9486
    %v9488 = vperm.slane %v9482, %v9487
    %v9490 = vunpack.c.l.s4 1934713408
    %v9491 = vunpack.c.0.s8 %v9490
    %v9492 = vperm.slane %v9484, %v9491
    %v9493 = vrot.slane %v9464, 4
    %v9494 = vsel %vm135, %v9493, %v9452
    %v9495 = vrot.slane %v9452, 4
    %v9496 = vsel %vm135, %v9464, %v9495
    %v9498 = vunpack.c.l.s4 1934713408
    %v9499 = vunpack.c.0.s8 %v9498
    %v9500 = vperm.slane %v9494, %v9499
    %v9502 = vunpack.c.l.s4 1934713408
    %v9503 = vunpack.c.0.s8 %v9502
    %v9504 = vperm.slane %v9496, %v9503
    %v9505 = vrot.slane %v9468, 4
    %v9506 = vsel %vm135, %v9505, %v9456
    %v9507 = vrot.slane %v9456, 4
    %v9508 = vsel %vm135, %v9468, %v9507
    %v9510 = vunpack.c.l.s4 1934713408
    %v9511 = vunpack.c.0.s8 %v9510
    %v9512 = vperm.slane %v9506, %v9511
    %v9514 = vunpack.c.l.s4 1934713408
    %v9515 = vunpack.c.0.s8 %v9514
    %v9516 = vperm.slane %v9508, %v9515
    %v9517 = vrot.slane %v9500, 4
    %v9518 = vsel %vm135, %v9517, %v9476
    %v9519 = vrot.slane %v9476, 4
    %v9520 = vsel %vm135, %v9500, %v9519
    %v9521 = vrot.slane %v9504, 4
    %v9522 = vsel %vm135, %v9521, %v9480
    %v9523 = vrot.slane %v9480, 4
    %v9524 = vsel %vm135, %v9504, %v9523
    %v9525 = vrot.slane %v9512, 4
    %v9526 = vsel %vm135, %v9525, %v9488
    %v9527 = vrot.slane %v9488, 4
    %v9528 = vsel %vm135, %v9512, %v9527
    %v9529 = vrot.slane %v9516, 4
    %v9530 = vsel %vm135, %v9529, %v9492
    %v9531 = vrot.slane %v9492, 4
    %v9532 = vsel %vm135, %v9516, %v9531
    %v9533 = vrot.slane %v8933, 4
    %v9534 = vsel %vm135, %v9533, %v8887
    %v9535 = vrot.slane %v8887, 4
    %v9536 = vsel %vm135, %v8933, %v9535
    %v9538 = vunpack.c.l.s4 1983009808
    %v9539 = vunpack.c.0.s8 %v9538
    %v9540 = vperm.slane %v9534, %v9539
    %v9542 = vunpack.c.l.s4 1983009808
    %v9543 = vunpack.c.0.s8 %v9542
    %v9544 = vperm.slane %v9536, %v9543
    %v9545 = vrot.slane %v8956, 4
    %v9546 = vsel %vm135, %v9545, %v8910
    %v9547 = vrot.slane %v8910, 4
    %v9548 = vsel %vm135, %v8956, %v9547
    %v9550 = vunpack.c.l.s4 1983009808
    %v9551 = vunpack.c.0.s8 %v9550
    %v9552 = vperm.slane %v9546, %v9551
    %v9554 = vunpack.c.l.s4 1983009808
    %v9555 = vunpack.c.0.s8 %v9554
    %v9556 = vperm.slane %v9548, %v9555
    %v9557 = vrot.slane %v9025, 4
    %v9558 = vsel %vm135, %v9557, %v8979
    %v9559 = vrot.slane %v8979, 4
    %v9560 = vsel %vm135, %v9025, %v9559
    %v9562 = vunpack.c.l.s4 1983009808
    %v9563 = vunpack.c.0.s8 %v9562
    %v9564 = vperm.slane %v9558, %v9563
    %v9566 = vunpack.c.l.s4 1983009808
    %v9567 = vunpack.c.0.s8 %v9566
    %v9568 = vperm.slane %v9560, %v9567
    %v9569 = vrot.slane %v9048, 4
    %v9570 = vsel %vm135, %v9569, %v9002
    %v9571 = vrot.slane %v9002, 4
    %v9572 = vsel %vm135, %v9048, %v9571
    %v9574 = vunpack.c.l.s4 1983009808
    %v9575 = vunpack.c.0.s8 %v9574
    %v9576 = vperm.slane %v9570, %v9575
    %v9578 = vunpack.c.l.s4 1983009808
    %v9579 = vunpack.c.0.s8 %v9578
    %v9580 = vperm.slane %v9572, %v9579
    %v9581 = vrot.slane %v9552, 4
    %v9582 = vsel %vm135, %v9581, %v9540
    %v9583 = vrot.slane %v9540, 4
    %v9584 = vsel %vm135, %v9552, %v9583
    %v9586 = vunpack.c.l.s4 1934713408
    %v9587 = vunpack.c.0.s8 %v9586
    %v9588 = vperm.slane %v9582, %v9587
    %v9590 = vunpack.c.l.s4 1934713408
    %v9591 = vunpack.c.0.s8 %v9590
    %v9592 = vperm.slane %v9584, %v9591
    %v9593 = vrot.slane %v9556, 4
    %v9594 = vsel %vm135, %v9593, %v9544
    %v9595 = vrot.slane %v9544, 4
    %v9596 = vsel %vm135, %v9556, %v9595
    %v9598 = vunpack.c.l.s4 1934713408
    %v9599 = vunpack.c.0.s8 %v9598
    %v9600 = vperm.slane %v9594, %v9599
    %v9602 = vunpack.c.l.s4 1934713408
    %v9603 = vunpack.c.0.s8 %v9602
    %v9604 = vperm.slane %v9596, %v9603
    %v9605 = vrot.slane %v9576, 4
    %v9606 = vsel %vm135, %v9605, %v9564
    %v9607 = vrot.slane %v9564, 4
    %v9608 = vsel %vm135, %v9576, %v9607
    %v9610 = vunpack.c.l.s4 1934713408
    %v9611 = vunpack.c.0.s8 %v9610
    %v9612 = vperm.slane %v9606, %v9611
    %v9614 = vunpack.c.l.s4 1934713408
    %v9615 = vunpack.c.0.s8 %v9614
    %v9616 = vperm.slane %v9608, %v9615
    %v9617 = vrot.slane %v9580, 4
    %v9618 = vsel %vm135, %v9617, %v9568
    %v9619 = vrot.slane %v9568, 4
    %v9620 = vsel %vm135, %v9580, %v9619
    %v9622 = vunpack.c.l.s4 1934713408
    %v9623 = vunpack.c.0.s8 %v9622
    %v9624 = vperm.slane %v9618, %v9623
    %v9626 = vunpack.c.l.s4 1934713408
    %v9627 = vunpack.c.0.s8 %v9626
    %v9628 = vperm.slane %v9620, %v9627
    %v9629 = vrot.slane %v9612, 4
    %v9630 = vsel %vm135, %v9629, %v9588
    %v9631 = vrot.slane %v9588, 4
    %v9632 = vsel %vm135, %v9612, %v9631
    %v9633 = vrot.slane %v9616, 4
    %v9634 = vsel %vm135, %v9633, %v9592
    %v9635 = vrot.slane %v9592, 4
    %v9636 = vsel %vm135, %v9616, %v9635
    %v9637 = vrot.slane %v9624, 4
    %v9638 = vsel %vm135, %v9637, %v9600
    %v9639 = vrot.slane %v9600, 4
    %v9640 = vsel %vm135, %v9624, %v9639
    %v9641 = vrot.slane %v9628, 4
    %v9642 = vsel %vm135, %v9641, %v9604
    %v9643 = vrot.slane %v9604, 4
    %v9644 = vsel %vm135, %v9628, %v9643
    %v9645 = vrot.slane %v8751, 4
    %v9646 = vsel %vm135, %v9645, %v8705
    %v9647 = vrot.slane %v8705, 4
    %v9648 = vsel %vm135, %v8751, %v9647
    %v9650 = vunpack.c.l.s4 1983009808
    %v9651 = vunpack.c.0.s8 %v9650
    %v9652 = vperm.slane %v9646, %v9651
    %v9654 = vunpack.c.l.s4 1983009808
    %v9655 = vunpack.c.0.s8 %v9654
    %v9656 = vperm.slane %v9648, %v9655
    %v9657 = vrot.slane %v8774, 4
    %v9658 = vsel %vm135, %v9657, %v8728
    %v9659 = vrot.slane %v8728, 4
    %v9660 = vsel %vm135, %v8774, %v9659
    %v9662 = vunpack.c.l.s4 1983009808
    %v9663 = vunpack.c.0.s8 %v9662
    %v9664 = vperm.slane %v9658, %v9663
    %v9666 = vunpack.c.l.s4 1983009808
    %v9667 = vunpack.c.0.s8 %v9666
    %v9668 = vperm.slane %v9660, %v9667
    %v9669 = vrot.slane %v8843, 4
    %v9670 = vsel %vm135, %v9669, %v8797
    %v9671 = vrot.slane %v8797, 4
    %v9672 = vsel %vm135, %v8843, %v9671
    %v9674 = vunpack.c.l.s4 1983009808
    %v9675 = vunpack.c.0.s8 %v9674
    %v9676 = vperm.slane %v9670, %v9675
    %v9678 = vunpack.c.l.s4 1983009808
    %v9679 = vunpack.c.0.s8 %v9678
    %v9680 = vperm.slane %v9672, %v9679
    %v9681 = vrot.slane %v8866, 4
    %v9682 = vsel %vm135, %v9681, %v8820
    %v9683 = vrot.slane %v8820, 4
    %v9684 = vsel %vm135, %v8866, %v9683
    %v9686 = vunpack.c.l.s4 1983009808
    %v9687 = vunpack.c.0.s8 %v9686
    %v9688 = vperm.slane %v9682, %v9687
    %v9690 = vunpack.c.l.s4 1983009808
    %v9691 = vunpack.c.0.s8 %v9690
    %v9692 = vperm.slane %v9684, %v9691
    %v9693 = vrot.slane %v9664, 4
    %v9694 = vsel %vm135, %v9693, %v9652
    %v9695 = vrot.slane %v9652, 4
    %v9696 = vsel %vm135, %v9664, %v9695
    %v9698 = vunpack.c.l.s4 1934713408
    %v9699 = vunpack.c.0.s8 %v9698
    %v9700 = vperm.slane %v9694, %v9699
    %v9702 = vunpack.c.l.s4 1934713408
    %v9703 = vunpack.c.0.s8 %v9702
    %v9704 = vperm.slane %v9696, %v9703
    %v9705 = vrot.slane %v9668, 4
    %v9706 = vsel %vm135, %v9705, %v9656
    %v9707 = vrot.slane %v9656, 4
    %v9708 = vsel %vm135, %v9668, %v9707
    %v9710 = vunpack.c.l.s4 1934713408
    %v9711 = vunpack.c.0.s8 %v9710
    %v9712 = vperm.slane %v9706, %v9711
    %v9714 = vunpack.c.l.s4 1934713408
    %v9715 = vunpack.c.0.s8 %v9714
    %v9716 = vperm.slane %v9708, %v9715
    %v9717 = vrot.slane %v9688, 4
    %v9718 = vsel %vm135, %v9717, %v9676
    %v9719 = vrot.slane %v9676, 4
    %v9720 = vsel %vm135, %v9688, %v9719
    %v9722 = vunpack.c.l.s4 1934713408
    %v9723 = vunpack.c.0.s8 %v9722
    %v9724 = vperm.slane %v9718, %v9723
    %v9726 = vunpack.c.l.s4 1934713408
    %v9727 = vunpack.c.0.s8 %v9726
    %v9728 = vperm.slane %v9720, %v9727
    %v9729 = vrot.slane %v9692, 4
    %v9730 = vsel %vm135, %v9729, %v9680
    %v9731 = vrot.slane %v9680, 4
    %v9732 = vsel %vm135, %v9692, %v9731
    %v9734 = vunpack.c.l.s4 1934713408
    %v9735 = vunpack.c.0.s8 %v9734
    %v9736 = vperm.slane %v9730, %v9735
    %v9738 = vunpack.c.l.s4 1934713408
    %v9739 = vunpack.c.0.s8 %v9738
    %v9740 = vperm.slane %v9732, %v9739
    %v9741 = vrot.slane %v9724, 4
    %v9742 = vsel %vm135, %v9741, %v9700
    %v9743 = vrot.slane %v9700, 4
    %v9744 = vsel %vm135, %v9724, %v9743
    %v9745 = vrot.slane %v9728, 4
    %v9746 = vsel %vm135, %v9745, %v9704
    %v9747 = vrot.slane %v9704, 4
    %v9748 = vsel %vm135, %v9728, %v9747
    %v9749 = vrot.slane %v9736, 4
    %v9750 = vsel %vm135, %v9749, %v9712
    %v9751 = vrot.slane %v9712, 4
    %v9752 = vsel %vm135, %v9736, %v9751
    %v9753 = vrot.slane %v9740, 4
    %v9754 = vsel %vm135, %v9753, %v9716
    %v9755 = vrot.slane %v9716, 4
    %v9756 = vsel %vm135, %v9740, %v9755
    %v9757 = vrot.slane %v8935, 4
    %v9758 = vsel %vm135, %v9757, %v8889
    %v9759 = vrot.slane %v8889, 4
    %v9760 = vsel %vm135, %v8935, %v9759
    %v9762 = vunpack.c.l.s4 1983009808
    %v9763 = vunpack.c.0.s8 %v9762
    %v9764 = vperm.slane %v9758, %v9763
    %v9766 = vunpack.c.l.s4 1983009808
    %v9767 = vunpack.c.0.s8 %v9766
    %v9768 = vperm.slane %v9760, %v9767
    %v9769 = vrot.slane %v8958, 4
    %v9770 = vsel %vm135, %v9769, %v8912
    %v9771 = vrot.slane %v8912, 4
    %v9772 = vsel %vm135, %v8958, %v9771
    %v9774 = vunpack.c.l.s4 1983009808
    %v9775 = vunpack.c.0.s8 %v9774
    %v9776 = vperm.slane %v9770, %v9775
    %v9778 = vunpack.c.l.s4 1983009808
    %v9779 = vunpack.c.0.s8 %v9778
    %v9780 = vperm.slane %v9772, %v9779
    %v9781 = vrot.slane %v9027, 4
    %v9782 = vsel %vm135, %v9781, %v8981
    %v9783 = vrot.slane %v8981, 4
    %v9784 = vsel %vm135, %v9027, %v9783
    %v9786 = vunpack.c.l.s4 1983009808
    %v9787 = vunpack.c.0.s8 %v9786
    %v9788 = vperm.slane %v9782, %v9787
    %v9790 = vunpack.c.l.s4 1983009808
    %v9791 = vunpack.c.0.s8 %v9790
    %v9792 = vperm.slane %v9784, %v9791
    %v9793 = vrot.slane %v9050, 4
    %v9794 = vsel %vm135, %v9793, %v9004
    %v9795 = vrot.slane %v9004, 4
    %v9796 = vsel %vm135, %v9050, %v9795
    %v9798 = vunpack.c.l.s4 1983009808
    %v9799 = vunpack.c.0.s8 %v9798
    %v9800 = vperm.slane %v9794, %v9799
    %v9802 = vunpack.c.l.s4 1983009808
    %v9803 = vunpack.c.0.s8 %v9802
    %v9804 = vperm.slane %v9796, %v9803
    %v9805 = vrot.slane %v9776, 4
    %v9806 = vsel %vm135, %v9805, %v9764
    %v9807 = vrot.slane %v9764, 4
    %v9808 = vsel %vm135, %v9776, %v9807
    %v9810 = vunpack.c.l.s4 1934713408
    %v9811 = vunpack.c.0.s8 %v9810
    %v9812 = vperm.slane %v9806, %v9811
    %v9814 = vunpack.c.l.s4 1934713408
    %v9815 = vunpack.c.0.s8 %v9814
    %v9816 = vperm.slane %v9808, %v9815
    %v9817 = vrot.slane %v9780, 4
    %v9818 = vsel %vm135, %v9817, %v9768
    %v9819 = vrot.slane %v9768, 4
    %v9820 = vsel %vm135, %v9780, %v9819
    %v9822 = vunpack.c.l.s4 1934713408
    %v9823 = vunpack.c.0.s8 %v9822
    %v9824 = vperm.slane %v9818, %v9823
    %v9826 = vunpack.c.l.s4 1934713408
    %v9827 = vunpack.c.0.s8 %v9826
    %v9828 = vperm.slane %v9820, %v9827
    %v9829 = vrot.slane %v9800, 4
    %v9830 = vsel %vm135, %v9829, %v9788
    %v9831 = vrot.slane %v9788, 4
    %v9832 = vsel %vm135, %v9800, %v9831
    %v9834 = vunpack.c.l.s4 1934713408
    %v9835 = vunpack.c.0.s8 %v9834
    %v9836 = vperm.slane %v9830, %v9835
    %v9838 = vunpack.c.l.s4 1934713408
    %v9839 = vunpack.c.0.s8 %v9838
    %v9840 = vperm.slane %v9832, %v9839
    %v9841 = vrot.slane %v9804, 4
    %v9842 = vsel %vm135, %v9841, %v9792
    %v9843 = vrot.slane %v9792, 4
    %v9844 = vsel %vm135, %v9804, %v9843
    %v9846 = vunpack.c.l.s4 1934713408
    %v9847 = vunpack.c.0.s8 %v9846
    %v9848 = vperm.slane %v9842, %v9847
    %v9850 = vunpack.c.l.s4 1934713408
    %v9851 = vunpack.c.0.s8 %v9850
    %v9852 = vperm.slane %v9844, %v9851
    %v9853 = vrot.slane %v9836, 4
    %v9854 = vsel %vm135, %v9853, %v9812
    %v9855 = vrot.slane %v9812, 4
    %v9856 = vsel %vm135, %v9836, %v9855
    %v9857 = vrot.slane %v9840, 4
    %v9858 = vsel %vm135, %v9857, %v9816
    %v9859 = vrot.slane %v9816, 4
    %v9860 = vsel %vm135, %v9840, %v9859
    %v9861 = vrot.slane %v9848, 4
    %v9862 = vsel %vm135, %v9861, %v9824
    %v9863 = vrot.slane %v9824, 4
    %v9864 = vsel %vm135, %v9848, %v9863
    %v9865 = vrot.slane %v9852, 4
    %v9866 = vsel %vm135, %v9865, %v9828
    %v9867 = vrot.slane %v9828, 4
    %v9868 = vsel %vm135, %v9852, %v9867
    %v9869 = vadd.f32 %v9518, %v7967
    %v9870 = vadd.f32 %v9630, %v7969
    %v9871 = vadd.f32 %v9520, %v7990
    %v9872 = vadd.f32 %v9632, %v7992
    %v9873 = vadd.f32 %v9522, %v8013
    %v9874 = vadd.f32 %v9634, %v8015
    %v9875 = vadd.f32 %v9524, %v8036
    %v9876 = vadd.f32 %v9636, %v8038
    %v9877 = vadd.f32 %v9526, %v8059
    %v9878 = vadd.f32 %v9638, %v8061
    %v9879 = vadd.f32 %v9528, %v8082
    %v9880 = vadd.f32 %v9640, %v8084
    %v9881 = vadd.f32 %v9530, %v8105
    %v9882 = vadd.f32 %v9642, %v8107
    %v9883 = vadd.f32 %v9532, %v8128
    %v9884 = vadd.f32 %v9644, %v8130
    %v9885 = vadd.f32 %v9742, %v8151
    %v9886 = vadd.f32 %v9854, %v8153
    %v9887 = vadd.f32 %v9744, %v8174
    %v9888 = vadd.f32 %v9856, %v8176
    %v9889 = vadd.f32 %v9746, %v8197
    %v9890 = vadd.f32 %v9858, %v8199
    %v9891 = vadd.f32 %v9748, %v8220
    %v9892 = vadd.f32 %v9860, %v8222
    %v9893 = vadd.f32 %v9750, %v8243
    %v9894 = vadd.f32 %v9862, %v8245
    %v9895 = vadd.f32 %v9752, %v8266
    %v9896 = vadd.f32 %v9864, %v8268
    %v9897 = vadd.f32 %v9754, %v8289
    %v9898 = vadd.f32 %v9866, %v8291
    %v9899 = vadd.f32 %v9756, %v8312
    %v9900 = vadd.f32 %v9868, %v8314
    %9902 = vset.pattern.permute.xlu0 0
    %9903 = vperm.xlu0 %9902, %v7354
    %v9904 = vpop.permute.xlu0 %9903
    %9907 = vset.pattern.permute.xlu0 0
    %9908 = vperm.xlu0 %9907, %v7355
    %v9909 = vpop.permute.xlu0 %9908
    %9912 = vset.pattern.permute.xlu0 0
    %9913 = vperm.xlu0 %9912, %v7356
    %v9914 = vpop.permute.xlu0 %9913
    %9917 = vset.pattern.permute.xlu0 0
    %9918 = vperm.xlu0 %9917, %v7357
    %v9919 = vpop.permute.xlu0 %9918
    %9922 = vset.pattern.permute.xlu0 0
    %9923 = vperm.xlu0 %9922, %v7358
    %v9924 = vpop.permute.xlu0 %9923
    %9927 = vset.pattern.permute.xlu0 0
    %9928 = vperm.xlu0 %9927, %v7359
    %v9929 = vpop.permute.xlu0 %9928
    %9932 = vset.pattern.permute.xlu0 0
    %9933 = vperm.xlu0 %9932, %v7360
    %v9934 = vpop.permute.xlu0 %9933
    %9937 = vset.pattern.permute.xlu0 0
    %9938 = vperm.xlu0 %9937, %v7361
    %v9939 = vpop.permute.xlu0 %9938
    %9942 = vset.pattern.permute.xlu0 0
    %9943 = vperm.xlu0 %9942, %v7362
    %v9944 = vpop.permute.xlu0 %9943
    %9947 = vset.pattern.permute.xlu0 0
    %9948 = vperm.xlu0 %9947, %v7363
    %v9949 = vpop.permute.xlu0 %9948
    %9952 = vset.pattern.permute.xlu0 0
    %9953 = vperm.xlu0 %9952, %v7364
    %v9954 = vpop.permute.xlu0 %9953
    %9957 = vset.pattern.permute.xlu0 0
    %9958 = vperm.xlu0 %9957, %v7365
    %v9959 = vpop.permute.xlu0 %9958
    %9962 = vset.pattern.permute.xlu0 0
    %9963 = vperm.xlu0 %9962, %v7366
    %v9964 = vpop.permute.xlu0 %9963
    %9967 = vset.pattern.permute.xlu0 0
    %9968 = vperm.xlu0 %9967, %v7367
    %v9969 = vpop.permute.xlu0 %9968
    %9972 = vset.pattern.permute.xlu0 0
    %9973 = vperm.xlu0 %9972, %v7368
    %v9974 = vpop.permute.xlu0 %9973
    %9977 = vset.pattern.permute.xlu0 0
    %9978 = vperm.xlu0 %9977, %v7369
    %v9979 = vpop.permute.xlu0 %9978
    %9982 = vset.pattern.permute.xlu0 0
    %9983 = vperm.xlu0 %9982, %v7370
    %v9984 = vpop.permute.xlu0 %9983
    %9987 = vset.pattern.permute.xlu0 0
    %9988 = vperm.xlu0 %9987, %v7371
    %v9989 = vpop.permute.xlu0 %9988
    %9992 = vset.pattern.permute.xlu0 0
    %9993 = vperm.xlu0 %9992, %v7372
    %v9994 = vpop.permute.xlu0 %9993
    %9997 = vset.pattern.permute.xlu0 0
    %9998 = vperm.xlu0 %9997, %v7373
    %v9999 = vpop.permute.xlu0 %9998
    %10002 = vset.pattern.permute.xlu0 0
    %10003 = vperm.xlu0 %10002, %v7374
    %v10004 = vpop.permute.xlu0 %10003
    %10007 = vset.pattern.permute.xlu0 0
    %10008 = vperm.xlu0 %10007, %v7375
    %v10009 = vpop.permute.xlu0 %10008
    %10012 = vset.pattern.permute.xlu0 0
    %10013 = vperm.xlu0 %10012, %v7376
    %v10014 = vpop.permute.xlu0 %10013
    %10017 = vset.pattern.permute.xlu0 0
    %10018 = vperm.xlu0 %10017, %v7377
    %v10019 = vpop.permute.xlu0 %10018
    %10022 = vset.pattern.permute.xlu0 0
    %10023 = vperm.xlu0 %10022, %v7378
    %v10024 = vpop.permute.xlu0 %10023
    %10027 = vset.pattern.permute.xlu0 0
    %10028 = vperm.xlu0 %10027, %v7379
    %v10029 = vpop.permute.xlu0 %10028
    %10032 = vset.pattern.permute.xlu0 0
    %10033 = vperm.xlu0 %10032, %v7380
    %v10034 = vpop.permute.xlu0 %10033
    %10037 = vset.pattern.permute.xlu0 0
    %10038 = vperm.xlu0 %10037, %v7381
    %v10039 = vpop.permute.xlu0 %10038
    %10042 = vset.pattern.permute.xlu0 0
    %10043 = vperm.xlu0 %10042, %v7382
    %v10044 = vpop.permute.xlu0 %10043
    %10047 = vset.pattern.permute.xlu0 0
    %10048 = vperm.xlu0 %10047, %v7383
    %v10049 = vpop.permute.xlu0 %10048
    %10052 = vset.pattern.permute.xlu0 0
    %10053 = vperm.xlu0 %10052, %v7384
    %v10054 = vpop.permute.xlu0 %10053
    %10057 = vset.pattern.permute.xlu0 0
    %10058 = vperm.xlu0 %10057, %v7385
    %v10059 = vpop.permute.xlu0 %10058
    %v10061 = vmul.f32 %v9869, %v9904
    %v10062 = vmul.f32 %v9870, %v9909
    %v10063 = vmul.f32 %v9871, %v9914
    %v10064 = vmul.f32 %v9872, %v9919
    %v10065 = vmul.f32 %v9873, %v9924
    %v10066 = vmul.f32 %v9874, %v9929
    %v10067 = vmul.f32 %v9875, %v9934
    %v10068 = vmul.f32 %v9876, %v9939
    %v10069 = vmul.f32 %v9877, %v9944
    %v10070 = vmul.f32 %v9878, %v9949
    %v10071 = vmul.f32 %v9879, %v9954
    %v10072 = vmul.f32 %v9880, %v9959
    %v10073 = vmul.f32 %v9881, %v9964
    %v10074 = vmul.f32 %v9882, %v9969
    %v10075 = vmul.f32 %v9883, %v9974
    %v10076 = vmul.f32 %v9884, %v9979
    %v10077 = vmul.f32 %v9885, %v9984
    %v10078 = vmul.f32 %v9886, %v9989
    %v10079 = vmul.f32 %v9887, %v9994
    %v10080 = vmul.f32 %v9888, %v9999
    %v10081 = vmul.f32 %v9889, %v10004
    %v10082 = vmul.f32 %v9890, %v10009
    %v10083 = vmul.f32 %v9891, %v10014
    %v10084 = vmul.f32 %v9892, %v10019
    %v10085 = vmul.f32 %v9893, %v10024
    %v10086 = vmul.f32 %v9894, %v10029
    %v10087 = vmul.f32 %v9895, %v10034
    %v10088 = vmul.f32 %v9896, %v10039
    %v10089 = vmul.f32 %v9897, %v10044
    %v10090 = vmul.f32 %v9898, %v10049
    %v10091 = vmul.f32 %v9899, %v10054
    %v10092 = vmul.f32 %v9900, %v10059
    %v10093 = vstv %s9420
    %v10094 = vmul.f32 %v10093, %v10061
    %v10095 = vmul.f32 %v10093, %v10062
    %v10096 = vmul.f32 %v10093, %v10063
    %v10097 = vmul.f32 %v10093, %v10064
    %v10098 = vmul.f32 %v10093, %v10065
    %v10099 = vmul.f32 %v10093, %v10066
    %v10100 = vmul.f32 %v10093, %v10067
    %v10101 = vmul.f32 %v10093, %v10068
    %v10102 = vmul.f32 %v10093, %v10069
    %v10103 = vmul.f32 %v10093, %v10070
    %v10104 = vmul.f32 %v10093, %v10071
    %v10105 = vmul.f32 %v10093, %v10072
    %v10106 = vmul.f32 %v10093, %v10073
    %v10107 = vmul.f32 %v10093, %v10074
    %v10108 = vmul.f32 %v10093, %v10075
    %v10109 = vmul.f32 %v10093, %v10076
    %v10110 = vmul.f32 %v10093, %v10077
    %v10111 = vmul.f32 %v10093, %v10078
    %v10112 = vmul.f32 %v10093, %v10079
    %v10113 = vmul.f32 %v10093, %v10080
    %v10114 = vmul.f32 %v10093, %v10081
    %v10115 = vmul.f32 %v10093, %v10082
    %v10116 = vmul.f32 %v10093, %v10083
    %v10117 = vmul.f32 %v10093, %v10084
    %v10118 = vmul.f32 %v10093, %v10085
    %v10119 = vmul.f32 %v10093, %v10086
    %v10120 = vmul.f32 %v10093, %v10087
    %v10121 = vmul.f32 %v10093, %v10088
    %v10122 = vmul.f32 %v10093, %v10089
    %v10123 = vmul.f32 %v10093, %v10090
    %v10124 = vmul.f32 %v10093, %v10091
    %v10125 = vmul.f32 %v10093, %v10092
    %v10126 = vadd.f32 %v10094, %v70
    %v10127 = vadd.f32 %v10095, %v71
    %v10128 = vadd.f32 %v10096, %v72
    %v10129 = vadd.f32 %v10097, %v73
    %v10130 = vadd.f32 %v10098, %v74
    %v10131 = vadd.f32 %v10099, %v75
    %v10132 = vadd.f32 %v10100, %v76
    %v10133 = vadd.f32 %v10101, %v77
    %v10134 = vadd.f32 %v10102, %v78
    %v10135 = vadd.f32 %v10103, %v79
    %v10136 = vadd.f32 %v10104, %v80
    %v10137 = vadd.f32 %v10105, %v81
    %v10138 = vadd.f32 %v10106, %v82
    %v10139 = vadd.f32 %v10107, %v83
    %v10140 = vadd.f32 %v10108, %v84
    %v10141 = vadd.f32 %v10109, %v85
    %v10142 = vadd.f32 %v10110, %v86
    %v10143 = vadd.f32 %v10111, %v87
    %v10144 = vadd.f32 %v10112, %v88
    %v10145 = vadd.f32 %v10113, %v89
    %v10146 = vadd.f32 %v10114, %v90
    %v10147 = vadd.f32 %v10115, %v91
    %v10148 = vadd.f32 %v10116, %v92
    %v10149 = vadd.f32 %v10117, %v93
    %v10150 = vadd.f32 %v10118, %v94
    %v10151 = vadd.f32 %v10119, %v95
    %v10152 = vadd.f32 %v10120, %v96
    %v10153 = vadd.f32 %v10121, %v97
    %v10154 = vadd.f32 %v10122, %v98
    %v10155 = vadd.f32 %v10123, %v99
    %v10156 = vadd.f32 %v10124, %v100
    %v10157 = vadd.f32 %v10125, %v101
    %10158 = vst.msk [vmem:[#allocation9] sm:$0xff] %vm1131, %v10126
    %10159 = vst.msk [vmem:[#allocation9 + $0x8] sm:$0xff] %vm1131, %v10127
    %10160 = vst.msk [vmem:[#allocation9 + $0x10] sm:$0xff] %vm1131, %v10128
    %10161 = vst.msk [vmem:[#allocation9 + $0x18] sm:$0xff] %vm1131, %v10129
    %10162 = vst.msk [vmem:[#allocation9 + $0x20] sm:$0xff] %vm1131, %v10130
    %10163 = vst.msk [vmem:[#allocation9 + $0x28] sm:$0xff] %vm1131, %v10131
    %10164 = vst.msk [vmem:[#allocation9 + $0x30] sm:$0xff] %vm1131, %v10132
    %10165 = vst.msk [vmem:[#allocation9 + $0x38] sm:$0xff] %vm1131, %v10133
    %10166 = vst.msk [vmem:[#allocation9 + $0x40] sm:$0xff] %vm1131, %v10134
    %10167 = vst.msk [vmem:[#allocation9 + $0x48] sm:$0xff] %vm1131, %v10135
    %10168 = vst.msk [vmem:[#allocation9 + $0x50] sm:$0xff] %vm1131, %v10136
    %10169 = vst.msk [vmem:[#allocation9 + $0x58] sm:$0xff] %vm1131, %v10137
    %10170 = vst.msk [vmem:[#allocation9 + $0x60] sm:$0xff] %vm1131, %v10138
    %10171 = vst.msk [vmem:[#allocation9 + $0x68] sm:$0xff] %vm1131, %v10139
    %10172 = vst.msk [vmem:[#allocation9 + $0x70] sm:$0xff] %vm1131, %v10140
    %10173 = vst.msk [vmem:[#allocation9 + $0x78] sm:$0xff] %vm1131, %v10141
    %10174 = vst.msk [vmem:[#allocation9 + $0x80] sm:$0xff] %vm1131, %v10142
    %10175 = vst.msk [vmem:[#allocation9 + $0x88] sm:$0xff] %vm1131, %v10143
    %10176 = vst.msk [vmem:[#allocation9 + $0x90] sm:$0xff] %vm1131, %v10144
    %10177 = vst.msk [vmem:[#allocation9 + $0x98] sm:$0xff] %vm1131, %v10145
    %10178 = vst.msk [vmem:[#allocation9 + $0xa0] sm:$0xff] %vm1131, %v10146
    %10179 = vst.msk [vmem:[#allocation9 + $0xa8] sm:$0xff] %vm1131, %v10147
    %10180 = vst.msk [vmem:[#allocation9 + $0xb0] sm:$0xff] %vm1131, %v10148
    %10181 = vst.msk [vmem:[#allocation9 + $0xb8] sm:$0xff] %vm1131, %v10149
    %10182 = vst.msk [vmem:[#allocation9 + $0xc0] sm:$0xff] %vm1131, %v10150
    %10183 = vst.msk [vmem:[#allocation9 + $0xc8] sm:$0xff] %vm1131, %v10151
    %10184 = vst.msk [vmem:[#allocation9 + $0xd0] sm:$0xff] %vm1131, %v10152
    %10185 = vst.msk [vmem:[#allocation9 + $0xd8] sm:$0xff] %vm1131, %v10153
    %10186 = vst.msk [vmem:[#allocation9 + $0xe0] sm:$0xff] %vm1131, %v10154
    %10187 = vst.msk [vmem:[#allocation9 + $0xe8] sm:$0xff] %vm1131, %v10155
    %10188 = vst.msk [vmem:[#allocation9 + $0xf0] sm:$0xff] %vm1131, %v10156
    %10189 = vst.msk [vmem:[#allocation9 + $0xf8] sm:$0xff] %vm1131, %v10157
    %v10190 = vrot.slane %v9117, 4
    %v10191 = vsel %vm135, %v10190, %v9071
    %v10192 = vrot.slane %v9071, 4
    %v10193 = vsel %vm135, %v9117, %v10192
    %v10195 = vunpack.c.l.s4 1983009808
    %v10196 = vunpack.c.0.s8 %v10195
    %v10197 = vperm.slane %v10191, %v10196
    %v10199 = vunpack.c.l.s4 1983009808
    %v10200 = vunpack.c.0.s8 %v10199
    %v10201 = vperm.slane %v10193, %v10200
    %v10202 = vrot.slane %v9140, 4
    %v10203 = vsel %vm135, %v10202, %v9094
    %v10204 = vrot.slane %v9094, 4
    %v10205 = vsel %vm135, %v9140, %v10204
    %v10207 = vunpack.c.l.s4 1983009808
    %v10208 = vunpack.c.0.s8 %v10207
    %v10209 = vperm.slane %v10203, %v10208
    %v10211 = vunpack.c.l.s4 1983009808
    %v10212 = vunpack.c.0.s8 %v10211
    %v10213 = vperm.slane %v10205, %v10212
    %v10214 = vrot.slane %v9209, 4
    %v10215 = vsel %vm135, %v10214, %v9163
    %v10216 = vrot.slane %v9163, 4
    %v10217 = vsel %vm135, %v9209, %v10216
    %v10219 = vunpack.c.l.s4 1983009808
    %v10220 = vunpack.c.0.s8 %v10219
    %v10221 = vperm.slane %v10215, %v10220
    %v10223 = vunpack.c.l.s4 1983009808
    %v10224 = vunpack.c.0.s8 %v10223
    %v10225 = vperm.slane %v10217, %v10224
    %v10226 = vrot.slane %v9232, 4
    %v10227 = vsel %vm135, %v10226, %v9186
    %v10228 = vrot.slane %v9186, 4
    %v10229 = vsel %vm135, %v9232, %v10228
    %v10231 = vunpack.c.l.s4 1983009808
    %v10232 = vunpack.c.0.s8 %v10231
    %v10233 = vperm.slane %v10227, %v10232
    %v10235 = vunpack.c.l.s4 1983009808
    %v10236 = vunpack.c.0.s8 %v10235
    %v10237 = vperm.slane %v10229, %v10236
    %v10238 = vrot.slane %v10209, 4
    %v10239 = vsel %vm135, %v10238, %v10197
    %v10240 = vrot.slane %v10197, 4
    %v10241 = vsel %vm135, %v10209, %v10240
    %v10243 = vunpack.c.l.s4 1934713408
    %v10244 = vunpack.c.0.s8 %v10243
    %v10245 = vperm.slane %v10239, %v10244
    %v10247 = vunpack.c.l.s4 1934713408
    %v10248 = vunpack.c.0.s8 %v10247
    %v10249 = vperm.slane %v10241, %v10248
    %v10250 = vrot.slane %v10213, 4
    %v10251 = vsel %vm135, %v10250, %v10201
    %v10252 = vrot.slane %v10201, 4
    %v10253 = vsel %vm135, %v10213, %v10252
    %v10255 = vunpack.c.l.s4 1934713408
    %v10256 = vunpack.c.0.s8 %v10255
    %v10257 = vperm.slane %v10251, %v10256
    %v10259 = vunpack.c.l.s4 1934713408
    %v10260 = vunpack.c.0.s8 %v10259
    %v10261 = vperm.slane %v10253, %v10260
    %v10262 = vrot.slane %v10233, 4
    %v10263 = vsel %vm135, %v10262, %v10221
    %v10264 = vrot.slane %v10221, 4
    %v10265 = vsel %vm135, %v10233, %v10264
    %v10267 = vunpack.c.l.s4 1934713408
    %v10268 = vunpack.c.0.s8 %v10267
    %v10269 = vperm.slane %v10263, %v10268
    %v10271 = vunpack.c.l.s4 1934713408
    %v10272 = vunpack.c.0.s8 %v10271
    %v10273 = vperm.slane %v10265, %v10272
    %v10274 = vrot.slane %v10237, 4
    %v10275 = vsel %vm135, %v10274, %v10225
    %v10276 = vrot.slane %v10225, 4
    %v10277 = vsel %vm135, %v10237, %v10276
    %v10279 = vunpack.c.l.s4 1934713408
    %v10280 = vunpack.c.0.s8 %v10279
    %v10281 = vperm.slane %v10275, %v10280
    %v10283 = vunpack.c.l.s4 1934713408
    %v10284 = vunpack.c.0.s8 %v10283
    %v10285 = vperm.slane %v10277, %v10284
    %v10286 = vrot.slane %v10269, 4
    %v10287 = vsel %vm135, %v10286, %v10245
    %v10288 = vrot.slane %v10245, 4
    %v10289 = vsel %vm135, %v10269, %v10288
    %v10290 = vrot.slane %v10273, 4
    %v10291 = vsel %vm135, %v10290, %v10249
    %v10292 = vrot.slane %v10249, 4
    %v10293 = vsel %vm135, %v10273, %v10292
    %v10294 = vrot.slane %v10281, 4
    %v10295 = vsel %vm135, %v10294, %v10257
    %v10296 = vrot.slane %v10257, 4
    %v10297 = vsel %vm135, %v10281, %v10296
    %v10298 = vrot.slane %v10285, 4
    %v10299 = vsel %vm135, %v10298, %v10261
    %v10300 = vrot.slane %v10261, 4
    %v10301 = vsel %vm135, %v10285, %v10300
    %v10302 = vrot.slane %v9301, 4
    %v10303 = vsel %vm135, %v10302, %v9255
    %v10304 = vrot.slane %v9255, 4
    %v10305 = vsel %vm135, %v9301, %v10304
    %v10307 = vunpack.c.l.s4 1983009808
    %v10308 = vunpack.c.0.s8 %v10307
    %v10309 = vperm.slane %v10303, %v10308
    %v10311 = vunpack.c.l.s4 1983009808
    %v10312 = vunpack.c.0.s8 %v10311
    %v10313 = vperm.slane %v10305, %v10312
    %v10314 = vrot.slane %v9324, 4
    %v10315 = vsel %vm135, %v10314, %v9278
    %v10316 = vrot.slane %v9278, 4
    %v10317 = vsel %vm135, %v9324, %v10316
    %v10319 = vunpack.c.l.s4 1983009808
    %v10320 = vunpack.c.0.s8 %v10319
    %v10321 = vperm.slane %v10315, %v10320
    %v10323 = vunpack.c.l.s4 1983009808
    %v10324 = vunpack.c.0.s8 %v10323
    %v10325 = vperm.slane %v10317, %v10324
    %v10326 = vrot.slane %v9393, 4
    %v10327 = vsel %vm135, %v10326, %v9347
    %v10328 = vrot.slane %v9347, 4
    %v10329 = vsel %vm135, %v9393, %v10328
    %v10331 = vunpack.c.l.s4 1983009808
    %v10332 = vunpack.c.0.s8 %v10331
    %v10333 = vperm.slane %v10327, %v10332
    %v10335 = vunpack.c.l.s4 1983009808
    %v10336 = vunpack.c.0.s8 %v10335
    %v10337 = vperm.slane %v10329, %v10336
    %v10338 = vrot.slane %v9416, 4
    %v10339 = vsel %vm135, %v10338, %v9370
    %v10340 = vrot.slane %v9370, 4
    %v10341 = vsel %vm135, %v9416, %v10340
    %v10343 = vunpack.c.l.s4 1983009808
    %v10344 = vunpack.c.0.s8 %v10343
    %v10345 = vperm.slane %v10339, %v10344
    %v10347 = vunpack.c.l.s4 1983009808
    %v10348 = vunpack.c.0.s8 %v10347
    %v10349 = vperm.slane %v10341, %v10348
    %v10350 = vrot.slane %v10321, 4
    %v10351 = vsel %vm135, %v10350, %v10309
    %v10352 = vrot.slane %v10309, 4
    %v10353 = vsel %vm135, %v10321, %v10352
    %v10355 = vunpack.c.l.s4 1934713408
    %v10356 = vunpack.c.0.s8 %v10355
    %v10357 = vperm.slane %v10351, %v10356
    %v10359 = vunpack.c.l.s4 1934713408
    %v10360 = vunpack.c.0.s8 %v10359
    %v10361 = vperm.slane %v10353, %v10360
    %v10362 = vrot.slane %v10325, 4
    %v10363 = vsel %vm135, %v10362, %v10313
    %v10364 = vrot.slane %v10313, 4
    %v10365 = vsel %vm135, %v10325, %v10364
    %v10367 = vunpack.c.l.s4 1934713408
    %v10368 = vunpack.c.0.s8 %v10367
    %v10369 = vperm.slane %v10363, %v10368
    %v10371 = vunpack.c.l.s4 1934713408
    %v10372 = vunpack.c.0.s8 %v10371
    %v10373 = vperm.slane %v10365, %v10372
    %v10374 = vrot.slane %v10345, 4
    %v10375 = vsel %vm135, %v10374, %v10333
    %v10376 = vrot.slane %v10333, 4
    %v10377 = vsel %vm135, %v10345, %v10376
    %v10379 = vunpack.c.l.s4 1934713408
    %v10380 = vunpack.c.0.s8 %v10379
    %v10381 = vperm.slane %v10375, %v10380
    %v10383 = vunpack.c.l.s4 1934713408
    %v10384 = vunpack.c.0.s8 %v10383
    %v10385 = vperm.slane %v10377, %v10384
    %v10386 = vrot.slane %v10349, 4
    %v10387 = vsel %vm135, %v10386, %v10337
    %v10388 = vrot.slane %v10337, 4
    %v10389 = vsel %vm135, %v10349, %v10388
    %v10391 = vunpack.c.l.s4 1934713408
    %v10392 = vunpack.c.0.s8 %v10391
    %v10393 = vperm.slane %v10387, %v10392
    %v10395 = vunpack.c.l.s4 1934713408
    %v10396 = vunpack.c.0.s8 %v10395
    %v10397 = vperm.slane %v10389, %v10396
    %v10398 = vrot.slane %v10381, 4
    %v10399 = vsel %vm135, %v10398, %v10357
    %v10400 = vrot.slane %v10357, 4
    %v10401 = vsel %vm135, %v10381, %v10400
    %v10402 = vrot.slane %v10385, 4
    %v10403 = vsel %vm135, %v10402, %v10361
    %v10404 = vrot.slane %v10361, 4
    %v10405 = vsel %vm135, %v10385, %v10404
    %v10406 = vrot.slane %v10393, 4
    %v10407 = vsel %vm135, %v10406, %v10369
    %v10408 = vrot.slane %v10369, 4
    %v10409 = vsel %vm135, %v10393, %v10408
    %v10410 = vrot.slane %v10397, 4
    %v10411 = vsel %vm135, %v10410, %v10373
    %v10412 = vrot.slane %v10373, 4
    %v10413 = vsel %vm135, %v10397, %v10412
    %v10414 = vrot.slane %v9119, 4
    %v10415 = vsel %vm135, %v10414, %v9073
    %v10416 = vrot.slane %v9073, 4
    %v10417 = vsel %vm135, %v9119, %v10416
    %v10419 = vunpack.c.l.s4 1983009808
    %v10420 = vunpack.c.0.s8 %v10419
    %v10421 = vperm.slane %v10415, %v10420
    %v10423 = vunpack.c.l.s4 1983009808
    %v10424 = vunpack.c.0.s8 %v10423
    %v10425 = vperm.slane %v10417, %v10424
    %v10426 = vrot.slane %v9142, 4
    %v10427 = vsel %vm135, %v10426, %v9096
    %v10428 = vrot.slane %v9096, 4
    %v10429 = vsel %vm135, %v9142, %v10428
    %v10431 = vunpack.c.l.s4 1983009808
    %v10432 = vunpack.c.0.s8 %v10431
    %v10433 = vperm.slane %v10427, %v10432
    %v10435 = vunpack.c.l.s4 1983009808
    %v10436 = vunpack.c.0.s8 %v10435
    %v10437 = vperm.slane %v10429, %v10436
    %v10438 = vrot.slane %v9211, 4
    %v10439 = vsel %vm135, %v10438, %v9165
    %v10440 = vrot.slane %v9165, 4
    %v10441 = vsel %vm135, %v9211, %v10440
    %v10443 = vunpack.c.l.s4 1983009808
    %v10444 = vunpack.c.0.s8 %v10443
    %v10445 = vperm.slane %v10439, %v10444
    %v10447 = vunpack.c.l.s4 1983009808
    %v10448 = vunpack.c.0.s8 %v10447
    %v10449 = vperm.slane %v10441, %v10448
    %v10450 = vrot.slane %v9234, 4
    %v10451 = vsel %vm135, %v10450, %v9188
    %v10452 = vrot.slane %v9188, 4
    %v10453 = vsel %vm135, %v9234, %v10452
    %v10455 = vunpack.c.l.s4 1983009808
    %v10456 = vunpack.c.0.s8 %v10455
    %v10457 = vperm.slane %v10451, %v10456
    %v10459 = vunpack.c.l.s4 1983009808
    %v10460 = vunpack.c.0.s8 %v10459
    %v10461 = vperm.slane %v10453, %v10460
    %v10462 = vrot.slane %v10433, 4
    %v10463 = vsel %vm135, %v10462, %v10421
    %v10464 = vrot.slane %v10421, 4
    %v10465 = vsel %vm135, %v10433, %v10464
    %v10467 = vunpack.c.l.s4 1934713408
    %v10468 = vunpack.c.0.s8 %v10467
    %v10469 = vperm.slane %v10463, %v10468
    %v10471 = vunpack.c.l.s4 1934713408
    %v10472 = vunpack.c.0.s8 %v10471
    %v10473 = vperm.slane %v10465, %v10472
    %v10474 = vrot.slane %v10437, 4
    %v10475 = vsel %vm135, %v10474, %v10425
    %v10476 = vrot.slane %v10425, 4
    %v10477 = vsel %vm135, %v10437, %v10476
    %v10479 = vunpack.c.l.s4 1934713408
    %v10480 = vunpack.c.0.s8 %v10479
    %v10481 = vperm.slane %v10475, %v10480
    %v10483 = vunpack.c.l.s4 1934713408
    %v10484 = vunpack.c.0.s8 %v10483
    %v10485 = vperm.slane %v10477, %v10484
    %v10486 = vrot.slane %v10457, 4
    %v10487 = vsel %vm135, %v10486, %v10445
    %v10488 = vrot.slane %v10445, 4
    %v10489 = vsel %vm135, %v10457, %v10488
    %v10491 = vunpack.c.l.s4 1934713408
    %v10492 = vunpack.c.0.s8 %v10491
    %v10493 = vperm.slane %v10487, %v10492
    %v10495 = vunpack.c.l.s4 1934713408
    %v10496 = vunpack.c.0.s8 %v10495
    %v10497 = vperm.slane %v10489, %v10496
    %v10498 = vrot.slane %v10461, 4
    %v10499 = vsel %vm135, %v10498, %v10449
    %v10500 = vrot.slane %v10449, 4
    %v10501 = vsel %vm135, %v10461, %v10500
    %v10503 = vunpack.c.l.s4 1934713408
    %v10504 = vunpack.c.0.s8 %v10503
    %v10505 = vperm.slane %v10499, %v10504
    %v10507 = vunpack.c.l.s4 1934713408
    %v10508 = vunpack.c.0.s8 %v10507
    %v10509 = vperm.slane %v10501, %v10508
    %v10510 = vrot.slane %v10493, 4
    %v10511 = vsel %vm135, %v10510, %v10469
    %v10512 = vrot.slane %v10469, 4
    %v10513 = vsel %vm135, %v10493, %v10512
    %v10514 = vrot.slane %v10497, 4
    %v10515 = vsel %vm135, %v10514, %v10473
    %v10516 = vrot.slane %v10473, 4
    %v10517 = vsel %vm135, %v10497, %v10516
    %v10518 = vrot.slane %v10505, 4
    %v10519 = vsel %vm135, %v10518, %v10481
    %v10520 = vrot.slane %v10481, 4
    %v10521 = vsel %vm135, %v10505, %v10520
    %v10522 = vrot.slane %v10509, 4
    %v10523 = vsel %vm135, %v10522, %v10485
    %v10524 = vrot.slane %v10485, 4
    %v10525 = vsel %vm135, %v10509, %v10524
    %v10526 = vrot.slane %v9303, 4
    %v10527 = vsel %vm135, %v10526, %v9257
    %v10528 = vrot.slane %v9257, 4
    %v10529 = vsel %vm135, %v9303, %v10528
    %v10531 = vunpack.c.l.s4 1983009808
    %v10532 = vunpack.c.0.s8 %v10531
    %v10533 = vperm.slane %v10527, %v10532
    %v10535 = vunpack.c.l.s4 1983009808
    %v10536 = vunpack.c.0.s8 %v10535
    %v10537 = vperm.slane %v10529, %v10536
    %v10538 = vrot.slane %v9326, 4
    %v10539 = vsel %vm135, %v10538, %v9280
    %v10540 = vrot.slane %v9280, 4
    %v10541 = vsel %vm135, %v9326, %v10540
    %v10543 = vunpack.c.l.s4 1983009808
    %v10544 = vunpack.c.0.s8 %v10543
    %v10545 = vperm.slane %v10539, %v10544
    %v10547 = vunpack.c.l.s4 1983009808
    %v10548 = vunpack.c.0.s8 %v10547
    %v10549 = vperm.slane %v10541, %v10548
    %v10550 = vrot.slane %v9395, 4
    %v10551 = vsel %vm135, %v10550, %v9349
    %v10552 = vrot.slane %v9349, 4
    %v10553 = vsel %vm135, %v9395, %v10552
    %v10555 = vunpack.c.l.s4 1983009808
    %v10556 = vunpack.c.0.s8 %v10555
    %v10557 = vperm.slane %v10551, %v10556
    %v10559 = vunpack.c.l.s4 1983009808
    %v10560 = vunpack.c.0.s8 %v10559
    %v10561 = vperm.slane %v10553, %v10560
    %v10562 = vrot.slane %v9418, 4
    %v10563 = vsel %vm135, %v10562, %v9372
    %v10564 = vrot.slane %v9372, 4
    %v10565 = vsel %vm135, %v9418, %v10564
    %v10567 = vunpack.c.l.s4 1983009808
    %v10568 = vunpack.c.0.s8 %v10567
    %v10569 = vperm.slane %v10563, %v10568
    %v10571 = vunpack.c.l.s4 1983009808
    %v10572 = vunpack.c.0.s8 %v10571
    %v10573 = vperm.slane %v10565, %v10572
    %v10574 = vrot.slane %v10545, 4
    %v10575 = vsel %vm135, %v10574, %v10533
    %v10576 = vrot.slane %v10533, 4
    %v10577 = vsel %vm135, %v10545, %v10576
    %v10579 = vunpack.c.l.s4 1934713408
    %v10580 = vunpack.c.0.s8 %v10579
    %v10581 = vperm.slane %v10575, %v10580
    %v10583 = vunpack.c.l.s4 1934713408
    %v10584 = vunpack.c.0.s8 %v10583
    %v10585 = vperm.slane %v10577, %v10584
    %v10586 = vrot.slane %v10549, 4
    %v10587 = vsel %vm135, %v10586, %v10537
    %v10588 = vrot.slane %v10537, 4
    %v10589 = vsel %vm135, %v10549, %v10588
    %v10591 = vunpack.c.l.s4 1934713408
    %v10592 = vunpack.c.0.s8 %v10591
    %v10593 = vperm.slane %v10587, %v10592
    %v10595 = vunpack.c.l.s4 1934713408
    %v10596 = vunpack.c.0.s8 %v10595
    %v10597 = vperm.slane %v10589, %v10596
    %v10598 = vrot.slane %v10569, 4
    %v10599 = vsel %vm135, %v10598, %v10557
    %v10600 = vrot.slane %v10557, 4
    %v10601 = vsel %vm135, %v10569, %v10600
    %v10603 = vunpack.c.l.s4 1934713408
    %v10604 = vunpack.c.0.s8 %v10603
    %v10605 = vperm.slane %v10599, %v10604
    %v10607 = vunpack.c.l.s4 1934713408
    %v10608 = vunpack.c.0.s8 %v10607
    %v10609 = vperm.slane %v10601, %v10608
    %v10610 = vrot.slane %v10573, 4
    %v10611 = vsel %vm135, %v10610, %v10561
    %v10612 = vrot.slane %v10561, 4
    %v10613 = vsel %vm135, %v10573, %v10612
    %v10615 = vunpack.c.l.s4 1934713408
    %v10616 = vunpack.c.0.s8 %v10615
    %v10617 = vperm.slane %v10611, %v10616
    %v10619 = vunpack.c.l.s4 1934713408
    %v10620 = vunpack.c.0.s8 %v10619
    %v10621 = vperm.slane %v10613, %v10620
    %v10622 = vrot.slane %v10605, 4
    %v10623 = vsel %vm135, %v10622, %v10581
    %v10624 = vrot.slane %v10581, 4
    %v10625 = vsel %vm135, %v10605, %v10624
    %v10626 = vrot.slane %v10609, 4
    %v10627 = vsel %vm135, %v10626, %v10585
    %v10628 = vrot.slane %v10585, 4
    %v10629 = vsel %vm135, %v10609, %v10628
    %v10630 = vrot.slane %v10617, 4
    %v10631 = vsel %vm135, %v10630, %v10593
    %v10632 = vrot.slane %v10593, 4
    %v10633 = vsel %vm135, %v10617, %v10632
    %v10634 = vrot.slane %v10621, 4
    %v10635 = vsel %vm135, %v10634, %v10597
    %v10636 = vrot.slane %v10597, 4
    %v10637 = vsel %vm135, %v10621, %v10636
    %v10638 = vadd.f32 %v10287, %v8335
    %v10639 = vadd.f32 %v10399, %v8337
    %v10640 = vadd.f32 %v10289, %v8358
    %v10641 = vadd.f32 %v10401, %v8360
    %v10642 = vadd.f32 %v10291, %v8381
    %v10643 = vadd.f32 %v10403, %v8383
    %v10644 = vadd.f32 %v10293, %v8404
    %v10645 = vadd.f32 %v10405, %v8406
    %v10646 = vadd.f32 %v10295, %v8427
    %v10647 = vadd.f32 %v10407, %v8429
    %v10648 = vadd.f32 %v10297, %v8450
    %v10649 = vadd.f32 %v10409, %v8452
    %v10650 = vadd.f32 %v10299, %v8473
    %v10651 = vadd.f32 %v10411, %v8475
    %v10652 = vadd.f32 %v10301, %v8496
    %v10653 = vadd.f32 %v10413, %v8498
    %v10654 = vadd.f32 %v10511, %v8519
    %v10655 = vadd.f32 %v10623, %v8521
    %v10656 = vadd.f32 %v10513, %v8542
    %v10657 = vadd.f32 %v10625, %v8544
    %v10658 = vadd.f32 %v10515, %v8565
    %v10659 = vadd.f32 %v10627, %v8567
    %v10660 = vadd.f32 %v10517, %v8588
    %v10661 = vadd.f32 %v10629, %v8590
    %v10662 = vadd.f32 %v10519, %v8611
    %v10663 = vadd.f32 %v10631, %v8613
    %v10664 = vadd.f32 %v10521, %v8634
    %v10665 = vadd.f32 %v10633, %v8636
    %v10666 = vadd.f32 %v10523, %v8657
    %v10667 = vadd.f32 %v10635, %v8659
    %v10668 = vadd.f32 %v10525, %v8680
    %v10669 = vadd.f32 %v10637, %v8682
    %10671 = vset.pattern.permute.xlu0 0
    %10672 = vperm.xlu0 %10671, %v7788
    %v10673 = vpop.permute.xlu0 %10672
    %10676 = vset.pattern.permute.xlu0 0
    %10677 = vperm.xlu0 %10676, %v7789
    %v10678 = vpop.permute.xlu0 %10677
    %10681 = vset.pattern.permute.xlu0 0
    %10682 = vperm.xlu0 %10681, %v7790
    %v10683 = vpop.permute.xlu0 %10682
    %10686 = vset.pattern.permute.xlu0 0
    %10687 = vperm.xlu0 %10686, %v7791
    %v10688 = vpop.permute.xlu0 %10687
    %10691 = vset.pattern.permute.xlu0 0
    %10692 = vperm.xlu0 %10691, %v7792
    %v10693 = vpop.permute.xlu0 %10692
    %10696 = vset.pattern.permute.xlu0 0
    %10697 = vperm.xlu0 %10696, %v7793
    %v10698 = vpop.permute.xlu0 %10697
    %10701 = vset.pattern.permute.xlu0 0
    %10702 = vperm.xlu0 %10701, %v7794
    %v10703 = vpop.permute.xlu0 %10702
    %10706 = vset.pattern.permute.xlu0 0
    %10707 = vperm.xlu0 %10706, %v7795
    %v10708 = vpop.permute.xlu0 %10707
    %10711 = vset.pattern.permute.xlu0 0
    %10712 = vperm.xlu0 %10711, %v7796
    %v10713 = vpop.permute.xlu0 %10712
    %10716 = vset.pattern.permute.xlu0 0
    %10717 = vperm.xlu0 %10716, %v7797
    %v10718 = vpop.permute.xlu0 %10717
    %10721 = vset.pattern.permute.xlu0 0
    %10722 = vperm.xlu0 %10721, %v7798
    %v10723 = vpop.permute.xlu0 %10722
    %10726 = vset.pattern.permute.xlu0 0
    %10727 = vperm.xlu0 %10726, %v7799
    %v10728 = vpop.permute.xlu0 %10727
    %10731 = vset.pattern.permute.xlu0 0
    %10732 = vperm.xlu0 %10731, %v7800
    %v10733 = vpop.permute.xlu0 %10732
    %10736 = vset.pattern.permute.xlu0 0
    %10737 = vperm.xlu0 %10736, %v7801
    %v10738 = vpop.permute.xlu0 %10737
    %10741 = vset.pattern.permute.xlu0 0
    %10742 = vperm.xlu0 %10741, %v7802
    %v10743 = vpop.permute.xlu0 %10742
    %10746 = vset.pattern.permute.xlu0 0
    %10747 = vperm.xlu0 %10746, %v7803
    %v10748 = vpop.permute.xlu0 %10747
    %10751 = vset.pattern.permute.xlu0 0
    %10752 = vperm.xlu0 %10751, %v7804
    %v10753 = vpop.permute.xlu0 %10752
    %10756 = vset.pattern.permute.xlu0 0
    %10757 = vperm.xlu0 %10756, %v7805
    %v10758 = vpop.permute.xlu0 %10757
    %10761 = vset.pattern.permute.xlu0 0
    %10762 = vperm.xlu0 %10761, %v7806
    %v10763 = vpop.permute.xlu0 %10762
    %10766 = vset.pattern.permute.xlu0 0
    %10767 = vperm.xlu0 %10766, %v7807
    %v10768 = vpop.permute.xlu0 %10767
    %10771 = vset.pattern.permute.xlu0 0
    %10772 = vperm.xlu0 %10771, %v7808
    %v10773 = vpop.permute.xlu0 %10772
    %10776 = vset.pattern.permute.xlu0 0
    %10777 = vperm.xlu0 %10776, %v7809
    %v10778 = vpop.permute.xlu0 %10777
    %10781 = vset.pattern.permute.xlu0 0
    %10782 = vperm.xlu0 %10781, %v7810
    %v10783 = vpop.permute.xlu0 %10782
    %10786 = vset.pattern.permute.xlu0 0
    %10787 = vperm.xlu0 %10786, %v7811
    %v10788 = vpop.permute.xlu0 %10787
    %10791 = vset.pattern.permute.xlu0 0
    %10792 = vperm.xlu0 %10791, %v7812
    %v10793 = vpop.permute.xlu0 %10792
    %10796 = vset.pattern.permute.xlu0 0
    %10797 = vperm.xlu0 %10796, %v7813
    %v10798 = vpop.permute.xlu0 %10797
    %10801 = vset.pattern.permute.xlu0 0
    %10802 = vperm.xlu0 %10801, %v7814
    %v10803 = vpop.permute.xlu0 %10802
    %10806 = vset.pattern.permute.xlu0 0
    %10807 = vperm.xlu0 %10806, %v7815
    %v10808 = vpop.permute.xlu0 %10807
    %10811 = vset.pattern.permute.xlu0 0
    %10812 = vperm.xlu0 %10811, %v7816
    %v10813 = vpop.permute.xlu0 %10812
    %10816 = vset.pattern.permute.xlu0 0
    %10817 = vperm.xlu0 %10816, %v7817
    %v10818 = vpop.permute.xlu0 %10817
    %10821 = vset.pattern.permute.xlu0 0
    %10822 = vperm.xlu0 %10821, %v7818
    %v10823 = vpop.permute.xlu0 %10822
    %10826 = vset.pattern.permute.xlu0 0
    %10827 = vperm.xlu0 %10826, %v7819
    %v10828 = vpop.permute.xlu0 %10827
    %v10830 = vmul.f32 %v10638, %v10673
    %v10831 = vmul.f32 %v10639, %v10678
    %v10832 = vmul.f32 %v10640, %v10683
    %v10833 = vmul.f32 %v10641, %v10688
    %v10834 = vmul.f32 %v10642, %v10693
    %v10835 = vmul.f32 %v10643, %v10698
    %v10836 = vmul.f32 %v10644, %v10703
    %v10837 = vmul.f32 %v10645, %v10708
    %v10838 = vmul.f32 %v10646, %v10713
    %v10839 = vmul.f32 %v10647, %v10718
    %v10840 = vmul.f32 %v10648, %v10723
    %v10841 = vmul.f32 %v10649, %v10728
    %v10842 = vmul.f32 %v10650, %v10733
    %v10843 = vmul.f32 %v10651, %v10738
    %v10844 = vmul.f32 %v10652, %v10743
    %v10845 = vmul.f32 %v10653, %v10748
    %v10846 = vmul.f32 %v10654, %v10753
    %v10847 = vmul.f32 %v10655, %v10758
    %v10848 = vmul.f32 %v10656, %v10763
    %v10849 = vmul.f32 %v10657, %v10768
    %v10850 = vmul.f32 %v10658, %v10773
    %v10851 = vmul.f32 %v10659, %v10778
    %v10852 = vmul.f32 %v10660, %v10783
    %v10853 = vmul.f32 %v10661, %v10788
    %v10854 = vmul.f32 %v10662, %v10793
    %v10855 = vmul.f32 %v10663, %v10798
    %v10856 = vmul.f32 %v10664, %v10803
    %v10857 = vmul.f32 %v10665, %v10808
    %v10858 = vmul.f32 %v10666, %v10813
    %v10859 = vmul.f32 %v10667, %v10818
    %v10860 = vmul.f32 %v10668, %v10823
    %v10861 = vmul.f32 %v10669, %v10828
    %v10862 = vmul.f32 %v10093, %v10830
    %v10863 = vmul.f32 %v10093, %v10831
    %v10864 = vmul.f32 %v10093, %v10832
    %v10865 = vmul.f32 %v10093, %v10833
    %v10866 = vmul.f32 %v10093, %v10834
    %v10867 = vmul.f32 %v10093, %v10835
    %v10868 = vmul.f32 %v10093, %v10836
    %v10869 = vmul.f32 %v10093, %v10837
    %v10870 = vmul.f32 %v10093, %v10838
    %v10871 = vmul.f32 %v10093, %v10839
    %v10872 = vmul.f32 %v10093, %v10840
    %v10873 = vmul.f32 %v10093, %v10841
    %v10874 = vmul.f32 %v10093, %v10842
    %v10875 = vmul.f32 %v10093, %v10843
    %v10876 = vmul.f32 %v10093, %v10844
    %v10877 = vmul.f32 %v10093, %v10845
    %v10878 = vmul.f32 %v10093, %v10846
    %v10879 = vmul.f32 %v10093, %v10847
    %v10880 = vmul.f32 %v10093, %v10848
    %v10881 = vmul.f32 %v10093, %v10849
    %v10882 = vmul.f32 %v10093, %v10850
    %v10883 = vmul.f32 %v10093, %v10851
    %v10884 = vmul.f32 %v10093, %v10852
    %v10885 = vmul.f32 %v10093, %v10853
    %v10886 = vmul.f32 %v10093, %v10854
    %v10887 = vmul.f32 %v10093, %v10855
    %v10888 = vmul.f32 %v10093, %v10856
    %v10889 = vmul.f32 %v10093, %v10857
    %v10890 = vmul.f32 %v10093, %v10858
    %v10891 = vmul.f32 %v10093, %v10859
    %v10892 = vmul.f32 %v10093, %v10860
    %v10893 = vmul.f32 %v10093, %v10861
    %v10894 = vadd.f32 %v10862, %v102
    %v10895 = vadd.f32 %v10863, %v103
    %v10896 = vadd.f32 %v10864, %v104
    %v10897 = vadd.f32 %v10865, %v105
    %v10898 = vadd.f32 %v10866, %v106
    %v10899 = vadd.f32 %v10867, %v107
    %v10900 = vadd.f32 %v10868, %v108
    %v10901 = vadd.f32 %v10869, %v109
    %v10902 = vadd.f32 %v10870, %v110
    %v10903 = vadd.f32 %v10871, %v111
    %v10904 = vadd.f32 %v10872, %v112
    %v10905 = vadd.f32 %v10873, %v113
    %v10906 = vadd.f32 %v10874, %v114
    %v10907 = vadd.f32 %v10875, %v115
    %v10908 = vadd.f32 %v10876, %v116
    %v10909 = vadd.f32 %v10877, %v117
    %v10910 = vadd.f32 %v10878, %v118
    %v10911 = vadd.f32 %v10879, %v119
    %v10912 = vadd.f32 %v10880, %v120
    %v10913 = vadd.f32 %v10881, %v121
    %v10914 = vadd.f32 %v10882, %v122
    %v10915 = vadd.f32 %v10883, %v123
    %v10916 = vadd.f32 %v10884, %v124
    %v10917 = vadd.f32 %v10885, %v125
    %v10918 = vadd.f32 %v10886, %v126
    %v10919 = vadd.f32 %v10887, %v127
    %v10920 = vadd.f32 %v10888, %v128
    %v10921 = vadd.f32 %v10889, %v129
    %v10922 = vadd.f32 %v10890, %v130
    %v10923 = vadd.f32 %v10891, %v131
    %v10924 = vadd.f32 %v10892, %v132
    %v10925 = vadd.f32 %v10893, %v133
    %s10926 = scalar_lea.vmem [#allocation9], 256
    %10927 = vst.msk [vmem:[%s10926] sm:$0xff] %vm1131, %v10894
    %10928 = vst.msk [vmem:[%s10926 + $0x8] sm:$0xff] %vm1131, %v10895
    %10929 = vst.msk [vmem:[%s10926 + $0x10] sm:$0xff] %vm1131, %v10896
    %10930 = vst.msk [vmem:[%s10926 + $0x18] sm:$0xff] %vm1131, %v10897
    %10931 = vst.msk [vmem:[%s10926 + $0x20] sm:$0xff] %vm1131, %v10898
    %10932 = vst.msk [vmem:[%s10926 + $0x28] sm:$0xff] %vm1131, %v10899
    %10933 = vst.msk [vmem:[%s10926 + $0x30] sm:$0xff] %vm1131, %v10900
    %10934 = vst.msk [vmem:[%s10926 + $0x38] sm:$0xff] %vm1131, %v10901
    %10935 = vst.msk [vmem:[%s10926 + $0x40] sm:$0xff] %vm1131, %v10902
    %10936 = vst.msk [vmem:[%s10926 + $0x48] sm:$0xff] %vm1131, %v10903
    %10937 = vst.msk [vmem:[%s10926 + $0x50] sm:$0xff] %vm1131, %v10904
    %10938 = vst.msk [vmem:[%s10926 + $0x58] sm:$0xff] %vm1131, %v10905
    %10939 = vst.msk [vmem:[%s10926 + $0x60] sm:$0xff] %vm1131, %v10906
    %10940 = vst.msk [vmem:[%s10926 + $0x68] sm:$0xff] %vm1131, %v10907
    %10941 = vst.msk [vmem:[%s10926 + $0x70] sm:$0xff] %vm1131, %v10908
    %10942 = vst.msk [vmem:[%s10926 + $0x78] sm:$0xff] %vm1131, %v10909
    %10943 = vst.msk [vmem:[%s10926 + $0x80] sm:$0xff] %vm1131, %v10910
    %10944 = vst.msk [vmem:[%s10926 + $0x88] sm:$0xff] %vm1131, %v10911
    %10945 = vst.msk [vmem:[%s10926 + $0x90] sm:$0xff] %vm1131, %v10912
    %10946 = vst.msk [vmem:[%s10926 + $0x98] sm:$0xff] %vm1131, %v10913
    %10947 = vst.msk [vmem:[%s10926 + $0xa0] sm:$0xff] %vm1131, %v10914
    %10948 = vst.msk [vmem:[%s10926 + $0xa8] sm:$0xff] %vm1131, %v10915
    %10949 = vst.msk [vmem:[%s10926 + $0xb0] sm:$0xff] %vm1131, %v10916
    %10950 = vst.msk [vmem:[%s10926 + $0xb8] sm:$0xff] %vm1131, %v10917
    %10951 = vst.msk [vmem:[%s10926 + $0xc0] sm:$0xff] %vm1131, %v10918
    %10952 = vst.msk [vmem:[%s10926 + $0xc8] sm:$0xff] %vm1131, %v10919
    %10953 = vst.msk [vmem:[%s10926 + $0xd0] sm:$0xff] %vm1131, %v10920
    %10954 = vst.msk [vmem:[%s10926 + $0xd8] sm:$0xff] %vm1131, %v10921
    %10955 = vst.msk [vmem:[%s10926 + $0xe0] sm:$0xff] %vm1131, %v10922
    %10956 = vst.msk [vmem:[%s10926 + $0xe8] sm:$0xff] %vm1131, %v10923
    %10957 = vst.msk [vmem:[%s10926 + $0xf0] sm:$0xff] %vm1131, %v10924
    %10958 = vst.msk [vmem:[%s10926 + $0xf8] sm:$0xff] %vm1131, %v10925
    // Predicated region
    $region34: #{tpu_custom_call.1} parent=1 // pred_check
      _
    $region35: #{tpu_custom_call.1} parent=1 // pred_check_branch
      %10960 = sbr.rel (0) target = $region37
    $region36: #{tpu_custom_call.1} parent=1 // pred_region
      %10962 = vsyncadd [#allocation5], 0
      %s10963 = sshll.u32 [#allocation9], 4
      %s10964 = int_to_ptr.vmem [resolvable:$true] %s10963
      %s10965 = sshll.u32 %s5, 4
      %s10966 = int_to_ptr.hbm [resolvable:$true] %s10965
      %10971 = dma.vmem_to_hbm [thread:$0]  %s10964, 8192, %s10966, [#allocation5], 128, 128, 8
    $region37: #{tpu_custom_call.1} parent=1 // pred_fallthru
      _
    // Predicated region
    $region38: #{tpu_custom_call.1} parent=1 // pred_check
      _
    $region39: #{tpu_custom_call.1} parent=1 // pred_check_branch
      %10973 = sbr.rel (0) target = $region41
    $region40: #{tpu_custom_call.1} parent=1 // pred_region
      %10975 = dma.done [#allocation5], 8192
    $region41: #{tpu_custom_call.1} parent=1 // pred_fallthru
      _
    %10976 = vsyncpa [#allocation4], 1
    %10977 = vsyncpa [#allocation7], 1
    %10978 = vsyncpa [#allocation5], 1

</llo_original>
